<compile_context>
chip_gen: v5e
topology: v5e:2x2
jax: 0.10.0
libtpu: 0.0.40
codegen_flags: <defaults>
</compile_context>

<pallas_src>
import jax
import jax.numpy as jnp
import numpy as np
from jax import lax
from jax.experimental import pallas as pl
from jax.experimental.pallas import tpu as pltpu

HI = jax.lax.Precision.HIGHEST

H = 8     # per-sample halo rows (top & bottom) inside each sample block
G = 16    # global guard rows at top/bottom of the scratch buffer


# ----------------------------------------------------------------------------
# Pallas kernel: full encoder for a tile of Bt samples, fused-phase layout.
# Activations: rows = polyphase time (Lh per sample + halos), lanes = channels.
# ----------------------------------------------------------------------------
def make_kernel(Lh, Bt):
    f32 = jnp.float32
    bf16 = jnp.bfloat16
    stride = Lh + 2 * H          # rows per sample block: [halo | Lh data | halo]
    R = Bt * stride              # rows handled per grid step
    R_buf = R + 2 * G            # scratch rows: [guard | R | guard]

    def kernel(x1_ref,
               w1_ref, b1_ref, g1_ref, be1_ref,
               w2_ref, b2_ref, g2_ref, be2_ref,
               w3_ref, b3_ref, g3_ref, be3_ref,
               w4_ref, b4_ref, g4_ref, be4_ref,
               w5_ref, b5_ref,
               o_ref, scr):

        # Valid-row mask: rows [H, H+Lh) of every per-sample block.
        row = lax.broadcasted_iota(jnp.int32, (stride, 1), 0)
        mask3 = jnp.where((row >= H) & (row < H + Lh), 1.0, 0.0)[None]  # (1,stride,1)

        # Zero guards + halos once per grid step (no stale-data reads, ever).
        scr[...] = jnp.zeros_like(scr)

        def conv_taps(w_ref, ntap, off0):
            """sum_k dot(time-shifted activation rows, W_k); taps read from scr."""
            acc = None
            for k in range(ntap):
                start = G + off0 + k
                tap = scr[start:start + R, :]                        # (R, 64) bf16
                d = jnp.dot(tap, w_ref[k], preferred_element_type=f32)
                acc = d if acc is None else acc + d
            return acc

        def inorm_glu_store(y, g_ref, be_ref, fused):
            """InstanceNorm1d(affine, eps=1e-5) + GLU, per-sample stats,
            masked (halo-zeroing) store into the bf16 scratch."""
            C = y.shape[1]
            yr = y.reshape(Bt, stride, C)
            ym = yr * mask3
            n = 2.0 * Lh if fused else 1.0 * Lh

            def comb(v):                       # (Bt, C) per-lane sums -> per-channel
                if not fused:
                    return v
                t = v[:, 0:32] + v[:, 32:64]   # merge even/odd phase halves
                return jnp.concatenate([t, t], axis=1)

            mean = comb(jnp.sum(ym, axis=1)) * (1.0 / n)             # (Bt, C)
            xc = (yr - mean[:, None, :]) * mask3                     # two-pass var
            var = comb(jnp.sum(xc * xc, axis=1)) * (1.0 / n)
            scale = g_ref[...] * lax.rsqrt(var + 1e-5)               # (Bt, C)
            z = xc * scale[:, None, :] + be_ref[...][None]
            h = z * (1.0 / (1.0 + jnp.exp(-z)))                      # GLU (exact)
            h = (h * mask3).reshape(R, C).astype(bf16)
            scr[G:G + R, :] = h

        # L1: Conv1d(1->32, k=15, p=7) as one matmul over the wrapper im2col;
        #     even & odd output phases fused on the lane axis (32 | 32).
        y1 = jnp.dot(x1_ref[...], w1_ref[...],
                     preferred_element_type=f32) + b1_ref[...]
        inorm_glu_store(y1, g1_ref, be1_ref, fused=True)

        # L2: Conv1d(32->64, k=5, s=2, p=2): 3 per-tap matmuls over fused phases.
        y2 = conv_taps(w2_ref, 3, -1) + b2_ref[...]
        inorm_glu_store(y2, g2_ref, be2_ref, fused=False)

        # L3: Conv1d(64->64, k=5, s=1, p=2): 5 per-tap matmuls.
        y3 = conv_taps(w3_ref, 5, -2) + b3_ref[...]
        inorm_glu_store(y3, g3_ref, be3_ref, fused=False)

        # L4: ConvTranspose1d(64->32, k=5, s=2, p=2, op=1): 3 per-tap matmuls,
        #     even/odd output phases fused on the lane axis.
        y4 = conv_taps(w4_ref, 3, -1) + b4_ref[...]
        inorm_glu_store(y4, g4_ref, be4_ref, fused=True)

        # L5: Conv1d(32->1, k=15, p=7): 9 per-tap matmuls, both phases -> 2 lanes.
        o_ref[...] = (conv_taps(w5_ref, 9, -4) + b5_ref[...]).astype(o_ref.dtype)

    return kernel


# ----------------------------------------------------------------------------
# Parameters (deterministic, PyTorch-default-like uniform init)
# ----------------------------------------------------------------------------
def init_params(seed=0):
    key = jax.random.PRNGKey(seed)
    ks = iter(jax.random.split(key, 32))

    def uni(shape, fan_in):
        bound = 1.0 / np.sqrt(fan_in)
        return jax.random.uniform(next(ks), shape, jnp.float32, -bound, bound)

    tp = {}
    tp['w1'] = uni((32, 1, 15), 1 * 15);   tp['b1'] = uni((32,), 1 * 15)
    tp['g1'] = 1.0 + 0.1 * jax.random.normal(next(ks), (32,), jnp.float32)
    tp['be1'] = 0.1 * jax.random.normal(next(ks), (32,), jnp.float32)

    tp['w2'] = uni((64, 32, 5), 32 * 5);   tp['b2'] = uni((64,), 32 * 5)
    tp['g2'] = 1.0 + 0.1 * jax.random.normal(next(ks), (64,), jnp.float32)
    tp['be2'] = 0.1 * jax.random.normal(next(ks), (64,), jnp.float32)

    tp['w3'] = uni((64, 64, 5), 64 * 5);   tp['b3'] = uni((64,), 64 * 5)
    tp['g3'] = 1.0 + 0.1 * jax.random.normal(next(ks), (64,), jnp.float32)
    tp['be3'] = 0.1 * jax.random.normal(next(ks), (64,), jnp.float32)

    # ConvTranspose1d weight: torch layout (in=64, out=32, K=5)
    tp['w4'] = uni((64, 32, 5), 64 * 5);   tp['b4'] = uni((32,), 64 * 5)
    tp['g4'] = 1.0 + 0.1 * jax.random.normal(next(ks), (32,), jnp.float32)
    tp['be4'] = 0.1 * jax.random.normal(next(ks), (32,), jnp.float32)

    tp['w5'] = uni((1, 32, 15), 32 * 15);  tp['b5'] = uni((1,), 32 * 15)
    return tp


def kernel_params(tp):
    """Build fused-phase per-tap weight matrices (bf16) and (1, C) params."""
    f32, bf16 = jnp.float32, jnp.bfloat16

    def row(v):
        return jnp.asarray(v, f32).reshape(1, -1)

    def dup(v):                              # per-channel -> [even | odd] lanes
        v = jnp.asarray(v, f32).reshape(1, -1)
        return jnp.concatenate([v, v], axis=1)

    # --- Layer 1: im2col lane j holds x[2t + j - 7]; out lanes [even32|odd32].
    W1 = tp['w1']                            # (32, 1, 15)
    w1m = W1[:, 0, :].T                      # (15, 32)
    w1f = jnp.zeros((16, 64), f32)
    w1f = w1f.at[0:15, 0:32].set(w1m)        # even outputs
    w1f = w1f.at[1:16, 32:64].set(w1m)       # odd outputs (shifted by one sample)

    # --- Layer 2: input lanes = [h1e | h1o]; taps at phase offsets -1, 0, +1.
    W2 = tp['w2']                            # (64, 32, 5) (out, in, k)
    z32 = jnp.zeros((32, 64), f32)

    def h2(k):
        return W2[:, :, k].T                 # (in=32, out=64)

    w2s = jnp.stack([
        jnp.concatenate([h2(0), h2(1)], axis=0),      # offset -1
        jnp.concatenate([h2(2), h2(3)], axis=0),      # offset  0
        jnp.concatenate([h2(4), z32], axis=0),        # offset +1
    ])

    # --- Layer 3: plain stride-1 conv, offsets -2..2.
    W3 = tp['w3']                            # (64, 64, 5)
    w3s = jnp.stack([W3[:, :, k].T for k in range(5)])

    # --- Layer 4 (transposed conv): out lanes = [even32 | odd32], offsets -1..1.
    W4 = tp['w4']                            # (64, 32, 5) (in, out, k)
    z64x32 = jnp.zeros((64, 32), f32)
    w4s = jnp.stack([
        jnp.concatenate([W4[:, :, 4], z64x32], axis=1),        # offset -1
        jnp.concatenate([W4[:, :, 2], W4[:, :, 3]], axis=1),   # offset  0
        jnp.concatenate([W4[:, :, 0], W4[:, :, 1]], axis=1),   # offset +1
    ])

    # --- Layer 5: input lanes = [g4e | g4o]; out lanes = [even, odd]; off -4..4.
    W5 = tp['w5'][0]                         # (32, 15)
    w5_taps = []
    for o in range(-4, 5):
        m = jnp.zeros((64, 2), f32)
        a = o + 3
        if 0 <= a <= 6:
            m = m.at[0:32, 0].set(W5[:, 2 * a + 1])    # even out <- g4e
            m = m.at[32:64, 1].set(W5[:, 2 * a + 1])   # odd  out <- g4o
        if 0 <= a <= 7:
            m = m.at[0:32, 1].set(W5[:, 2 * a])        # odd  out <- g4e
        a4 = o + 4
        if 0 <= a4 <= 7:
            m = m.at[32:64, 0].set(W5[:, 2 * a4])      # even out <- g4o
        w5_taps.append(m)
    w5s = jnp.stack(w5_taps)                  # (9, 64, 2)

    return [w1f.astype(bf16), dup(tp['b1']), dup(tp['g1']), dup(tp['be1']),
            w2s.astype(bf16), row(tp['b2']), row(tp['g2']), row(tp['be2']),
            w3s.astype(bf16), row(tp['b3']), row(tp['g3']), row(tp['be3']),
            w4s.astype(bf16), dup(tp['b4']), dup(tp['g4']), dup(tp['be4']),
            w5s.astype(bf16), dup(tp['b5'])]


# ----------------------------------------------------------------------------
# Wrapper
# ----------------------------------------------------------------------------
def _pick_block_b(B, max_bt=8):
    """Largest batch tile <= max_bt dividing B, keeping grid >= 2 when possible
    (so both v7x TensorCores get work)."""
    for cand in range(min(B, max_bt), 0, -1):
        if B % cand == 0 and (B // cand >= 2 or B == 1):
            return cand
    return 1


def conv_reconstruction_forward(x, tp, block_b=None):
    B, T, Fd = x.shape
    L = T * Fd
    assert L % 16 == 0, "flattened length must be a multiple of 16"
    Lh = L // 2
    stride = Lh + 2 * H

    # Layer-1 im2col (16 consecutive padded input samples per output position),
    # built with plain XLA strided slices; zero halo rows per sample.
    x_flat = x.reshape(B, L).astype(jnp.float32)
    x_pad = jnp.pad(x_flat, ((0, 0), (7, 9)))                   # (B, L+16)
    cols = [x_pad[:, j:j + L:2] for j in range(16)]             # 16 x (B, Lh)
    im2 = jnp.stack(cols, axis=-1)                              # (B, Lh, 16)
    im2 = jnp.pad(im2, ((0, 0), (H, H), (0, 0)))                # (B, stride, 16)
    x1 = im2.reshape(B * stride, 16).astype(jnp.bfloat16)

    flat = kernel_params(tp)

    if block_b is None:
        block_b = _pick_block_b(B)
    assert B % block_b == 0
    R = block_b * stride

    in_specs = [pl.BlockSpec((R, 16), lambda i: (i, 0))]
    in_specs += [pl.BlockSpec(p.shape, (lambda i, n=p.ndim: (0,) * n))
                 for p in flat]

    out = pl.pallas_call(
        make_kernel(Lh, block_b),
        grid=(B // block_b,),
        in_specs=in_specs,
        out_specs=pl.BlockSpec((R, 2), lambda i: (i, 0)),
        out_shape=jax.ShapeDtypeStruct((B * stride, 2), jnp.float32),
        scratch_shapes=[pltpu.VMEM((R + 2 * G, 64), jnp.bfloat16)],
        compiler_params=pltpu.CompilerParams(
            dimension_semantics=("parallel",)),
    )(x1, *flat)

    out = out.reshape(B, stride, 2)[:, H:H + Lh, :]             # drop halo rows
    return out.reshape(B, T, Fd)                                # interleave phases


# ----------------------------------------------------------------------------
# Pure-JAX reference (for correctness check only)
# ----------------------------------------------------------------------------
def reference_forward(x, tp):
    B, T, Fd = x.shape
    L = T * Fd
    h = x.reshape(B, 1, L).astype(jnp.float32)

    def conv(h, w, b, stride, pad):
        o = jax.lax.conv_general_dilated(
            h, w, (stride,), [(pad, pad)],
            dimension_numbers=('NCH', 'OIH', 'NCH'), precision=HI)
        return o + b[None, :, None]

    def convtr(h, w, b, stride, pad, opad):
        K = w.shape[-1]
        wf = jnp.flip(w, -1).transpose(1, 0, 2)      # (Cout, Cin, K)
        o = jax.lax.conv_general_dilated(
            h, wf, (1,), [(K - 1 - pad, K - 1 - pad + opad)],
            lhs_dilation=(stride,),
            dimension_numbers=('NCH', 'OIH', 'NCH'), precision=HI)
        return o + b[None, :, None]

    def inorm(h, g, b):
        mu = h.mean(-1, keepdims=True)
        var = ((h - mu) ** 2).mean(-1, keepdims=True)
        return g[None, :, None] * (h - mu) * jax.lax.rsqrt(var + 1e-5) \
            + b[None, :, None]

    def glu(h):
        return h * jax.nn.sigmoid(h)

    h = glu(inorm(conv(h, tp['w1'], tp['b1'], 1, 7), tp['g1'], tp['be1']))
    h = glu(inorm(conv(h, tp['w2'], tp['b2'], 2, 2), tp['g2'], tp['be2']))
    h = glu(inorm(conv(h, tp['w3'], tp['b3'], 1, 2), tp['g3'], tp['be3']))
    h = glu(inorm(convtr(h, tp['w4'], tp['b4'], 2, 2, 1), tp['g4'], tp['be4']))
    h = conv(h, tp['w5'], tp['b5'], 1, 7)
    return h.reshape(B, T, Fd)


# ----------------------------------------------------------------------------
if __name__ == "__main__":
    B, T, Fd = 2, 8, 32          # module input (B, T, F); encoder sees (B, 1, 256)
    key = jax.random.PRNGKey(0)
    x = jax.random.normal(key, (B, T, Fd), jnp.float32)

    tp = init_params(seed=0)

    out = conv_reconstruction_forward(x, tp)
    out = jax.block_until_ready(out)

    ref = reference_forward(x, tp)
    err = float(jnp.max(jnp.abs(out - ref)))
    scale = max(1.0, float(jnp.max(jnp.abs(ref))))
    assert out.shape == (B, T, Fd), out.shape
    assert err < 0.03 * scale, f"mismatch vs reference: max abs err = {err}"

    print("KERNEL_OK")
</pallas_src>

<mosaic_0001>
module attributes {stable_mosaic.version = 11 : i64} {
  func.func @kernel(%arg0: i32, %arg1: memref<144x16xbf16, #tpu.memory_space<vmem>>, %arg2: memref<16x64xbf16, #tpu.memory_space<vmem>>, %arg3: memref<1x64xf32, #tpu.memory_space<vmem>>, %arg4: memref<1x64xf32, #tpu.memory_space<vmem>>, %arg5: memref<1x64xf32, #tpu.memory_space<vmem>>, %arg6: memref<3x64x64xbf16, #tpu.memory_space<vmem>>, %arg7: memref<1x64xf32, #tpu.memory_space<vmem>>, %arg8: memref<1x64xf32, #tpu.memory_space<vmem>>, %arg9: memref<1x64xf32, #tpu.memory_space<vmem>>, %arg10: memref<5x64x64xbf16, #tpu.memory_space<vmem>>, %arg11: memref<1x64xf32, #tpu.memory_space<vmem>>, %arg12: memref<1x64xf32, #tpu.memory_space<vmem>>, %arg13: memref<1x64xf32, #tpu.memory_space<vmem>>, %arg14: memref<3x64x64xbf16, #tpu.memory_space<vmem>>, %arg15: memref<1x64xf32, #tpu.memory_space<vmem>>, %arg16: memref<1x64xf32, #tpu.memory_space<vmem>>, %arg17: memref<1x64xf32, #tpu.memory_space<vmem>>, %arg18: memref<9x64x2xbf16, #tpu.memory_space<vmem>>, %arg19: memref<1x2xf32, #tpu.memory_space<vmem>>, %arg20: memref<144x2xf32, #tpu.memory_space<vmem>>, %arg21: memref<176x64xbf16, #tpu.memory_space<vmem>>) attributes {dimension_semantics = [#tpu.dimension_semantics<parallel>], iteration_bounds = array<i64: 2>, scalar_prefetch = 0 : i64, scratch_operands = 1 : i64, tpu.core_type = #tpu.core_type<tc>, window_params = [{transform_indices = @transform_0, window_bounds = array<i64: 144, 16>}, {pipeline_mode = #tpu.pipeline_mode<synchronous>, transform_indices = @transform_1, window_bounds = array<i64: 16, 64>}, {pipeline_mode = #tpu.pipeline_mode<synchronous>, transform_indices = @transform_2, window_bounds = array<i64: 1, 64>}, {pipeline_mode = #tpu.pipeline_mode<synchronous>, transform_indices = @transform_3, window_bounds = array<i64: 1, 64>}, {pipeline_mode = #tpu.pipeline_mode<synchronous>, transform_indices = @transform_4, window_bounds = array<i64: 1, 64>}, {pipeline_mode = #tpu.pipeline_mode<synchronous>, transform_indices = @transform_5, window_bounds = array<i64: 3, 64, 64>}, {pipeline_mode = #tpu.pipeline_mode<synchronous>, transform_indices = @transform_6, window_bounds = array<i64: 1, 64>}, {pipeline_mode = #tpu.pipeline_mode<synchronous>, transform_indices = @transform_7, window_bounds = array<i64: 1, 64>}, {pipeline_mode = #tpu.pipeline_mode<synchronous>, transform_indices = @transform_8, window_bounds = array<i64: 1, 64>}, {pipeline_mode = #tpu.pipeline_mode<synchronous>, transform_indices = @transform_9, window_bounds = array<i64: 5, 64, 64>}, {pipeline_mode = #tpu.pipeline_mode<synchronous>, transform_indices = @transform_10, window_bounds = array<i64: 1, 64>}, {pipeline_mode = #tpu.pipeline_mode<synchronous>, transform_indices = @transform_11, window_bounds = array<i64: 1, 64>}, {pipeline_mode = #tpu.pipeline_mode<synchronous>, transform_indices = @transform_12, window_bounds = array<i64: 1, 64>}, {pipeline_mode = #tpu.pipeline_mode<synchronous>, transform_indices = @transform_13, window_bounds = array<i64: 3, 64, 64>}, {pipeline_mode = #tpu.pipeline_mode<synchronous>, transform_indices = @transform_14, window_bounds = array<i64: 1, 64>}, {pipeline_mode = #tpu.pipeline_mode<synchronous>, transform_indices = @transform_15, window_bounds = array<i64: 1, 64>}, {pipeline_mode = #tpu.pipeline_mode<synchronous>, transform_indices = @transform_16, window_bounds = array<i64: 1, 64>}, {pipeline_mode = #tpu.pipeline_mode<synchronous>, transform_indices = @transform_17, window_bounds = array<i64: 9, 64, 2>}, {pipeline_mode = #tpu.pipeline_mode<synchronous>, transform_indices = @transform_18, window_bounds = array<i64: 1, 2>}, {transform_indices = @transform_19, window_bounds = array<i64: 144, 2>}]} {
    %0 = tpu.iota {dimensions = array<i32: 0>} : vector<144x1xi32>
    %c8_i32 = arith.constant 8 : i32
    %1 = vector.broadcast %c8_i32 : i32 to vector<144x1xi32>
    %2 = arith.cmpi sge, %0, %1 : vector<144x1xi32>
    %c136_i32 = arith.constant 136 : i32
    %3 = vector.broadcast %c136_i32 : i32 to vector<144x1xi32>
    %4 = arith.cmpi slt, %0, %3 : vector<144x1xi32>
    %5 = arith.andi %2, %4 : vector<144x1xi1>
    %cst = arith.constant 1.000000e+00 : f32
    %cst_0 = arith.constant 0.000000e+00 : f32
    %6 = vector.broadcast %cst : f32 to vector<144x1xf32>
    %7 = vector.broadcast %cst_0 : f32 to vector<144x1xf32>
    %8 = arith.select %5, %6, %7 : vector<144x1xi1>, vector<144x1xf32>
    %9 = vector.shape_cast %8 : vector<144x1xf32> to vector<1x144x1xf32>
    %cst_1 = arith.constant 0.000000e+00 : bf16
    %10 = vector.broadcast %cst_1 : bf16 to vector<176x64xbf16>
    %c0 = arith.constant 0 : index
    %c0_2 = arith.constant 0 : index
    %11 = vector.load %arg21[%c0, %c0_2] : memref<176x64xbf16, #tpu.memory_space<vmem>>, vector<176x64xbf16>
    tpu.vector_store %arg21[%c0, %c0_2], %10 {strides = array<i32>} : memref<176x64xbf16, #tpu.memory_space<vmem>>, vector<176x64xbf16>,
    %c0_3 = arith.constant 0 : index
    %c0_4 = arith.constant 0 : index
    %12 = vector.load %arg1[%c0_3, %c0_4] : memref<144x16xbf16, #tpu.memory_space<vmem>>, vector<144x16xbf16>
    %c0_5 = arith.constant 0 : index
    %c0_6 = arith.constant 0 : index
    %13 = vector.load %arg2[%c0_5, %c0_6] : memref<16x64xbf16, #tpu.memory_space<vmem>>, vector<16x64xbf16>
    %cst_7 = arith.constant dense<0.000000e+00> : vector<144x64xf32>
    %14 = tpu.matmul %12, %13, %cst_7 {dimension_numbers = #tpu.dot_dimension_numbers<[1], [0], [0], [1], [0, 0, 1, 1], [], []>} : vector<144x16xbf16>, vector<16x64xbf16>, vector<144x64xf32> -> vector<144x64xf32>
    %c0_8 = arith.constant 0 : index
    %c0_9 = arith.constant 0 : index
    %15 = vector.load %arg3[%c0_8, %c0_9] : memref<1x64xf32, #tpu.memory_space<vmem>>, vector<1x64xf32>
    %16 = vector.broadcast %15 : vector<1x64xf32> to vector<144x64xf32>
    %17 = arith.addf %14, %16 : vector<144x64xf32>
    %18 = vector.shape_cast %17 : vector<144x64xf32> to vector<1x144x64xf32>
    %19 = vector.broadcast %9 : vector<1x144x1xf32> to vector<1x144x64xf32>
    %20 = arith.mulf %18, %19 : vector<1x144x64xf32>
    %cst_10 = arith.constant dense<0.000000e+00> : vector<1x64xf32>
    %21 = vector.multi_reduction <add>, %20, %cst_10 [1] : vector<1x144x64xf32> to vector<1x64xf32>
    %22 = vector.extract_strided_slice %21 {offsets = [0, 0], sizes = [1, 32], strides = [1, 1]} : vector<1x64xf32> to vector<1x32xf32>
    %23 = vector.extract_strided_slice %21 {offsets = [0, 32], sizes = [1, 32], strides = [1, 1]} : vector<1x64xf32> to vector<1x32xf32>
    %24 = arith.addf %22, %23 : vector<1x32xf32>
    %25 = tpu.concatenate %24, %24 in 1 : vector<1x32xf32>, vector<1x32xf32> -> vector<1x64xf32>
    %cst_11 = arith.constant 3.906250e-03 : f32
    %26 = vector.broadcast %cst_11 : f32 to vector<1x64xf32>
    %27 = arith.mulf %25, %26 : vector<1x64xf32>
    %28 = vector.shape_cast %27 : vector<1x64xf32> to vector<1x1x64xf32>
    %29 = vector.broadcast %28 : vector<1x1x64xf32> to vector<1x144x64xf32>
    %30 = arith.subf %18, %29 : vector<1x144x64xf32>
    %31 = vector.broadcast %9 : vector<1x144x1xf32> to vector<1x144x64xf32>
    %32 = arith.mulf %30, %31 : vector<1x144x64xf32>
    %33 = arith.mulf %32, %32 : vector<1x144x64xf32>
    %cst_12 = arith.constant dense<0.000000e+00> : vector<1x64xf32>
    %34 = vector.multi_reduction <add>, %33, %cst_12 [1] : vector<1x144x64xf32> to vector<1x64xf32>
    %35 = vector.extract_strided_slice %34 {offsets = [0, 0], sizes = [1, 32], strides = [1, 1]} : vector<1x64xf32> to vector<1x32xf32>
    %36 = vector.extract_strided_slice %34 {offsets = [0, 32], sizes = [1, 32], strides = [1, 1]} : vector<1x64xf32> to vector<1x32xf32>
    %37 = arith.addf %35, %36 : vector<1x32xf32>
    %38 = tpu.concatenate %37, %37 in 1 : vector<1x32xf32>, vector<1x32xf32> -> vector<1x64xf32>
    %cst_13 = arith.constant 3.906250e-03 : f32
    %39 = vector.broadcast %cst_13 : f32 to vector<1x64xf32>
    %40 = arith.mulf %38, %39 : vector<1x64xf32>
    %c0_14 = arith.constant 0 : index
    %c0_15 = arith.constant 0 : index
    %41 = vector.load %arg4[%c0_14, %c0_15] : memref<1x64xf32, #tpu.memory_space<vmem>>, vector<1x64xf32>
    %cst_16 = arith.constant 9.99999974E-6 : f32
    %42 = vector.broadcast %cst_16 : f32 to vector<1x64xf32>
    %43 = arith.addf %40, %42 : vector<1x64xf32>
    %44 = math.rsqrt %43 : vector<1x64xf32>
    %45 = arith.mulf %41, %44 : vector<1x64xf32>
    %46 = vector.shape_cast %45 : vector<1x64xf32> to vector<1x1x64xf32>
    %47 = vector.broadcast %46 : vector<1x1x64xf32> to vector<1x144x64xf32>
    %48 = arith.mulf %32, %47 : vector<1x144x64xf32>
    %c0_17 = arith.constant 0 : index
    %c0_18 = arith.constant 0 : index
    %49 = vector.load %arg5[%c0_17, %c0_18] : memref<1x64xf32, #tpu.memory_space<vmem>>, vector<1x64xf32>
    %50 = vector.shape_cast %49 : vector<1x64xf32> to vector<1x1x64xf32>
    %51 = vector.broadcast %50 : vector<1x1x64xf32> to vector<1x144x64xf32>
    %52 = arith.addf %48, %51 : vector<1x144x64xf32>
    %cst_19 = arith.constant 0.000000e+00 : f32
    %53 = vector.broadcast %cst_19 : f32 to vector<1x144x64xf32>
    %54 = arith.subf %53, %52 : vector<1x144x64xf32>
    %55 = math.exp %54 : vector<1x144x64xf32>
    %cst_20 = arith.constant 1.000000e+00 : f32
    %56 = vector.broadcast %cst_20 : f32 to vector<1x144x64xf32>
    %57 = arith.addf %56, %55 : vector<1x144x64xf32>
    %cst_21 = arith.constant 1.000000e+00 : f32
    %58 = vector.broadcast %cst_21 : f32 to vector<1x144x64xf32>
    %59 = arith.divf %58, %57 : vector<1x144x64xf32>
    %60 = arith.mulf %52, %59 : vector<1x144x64xf32>
    %61 = vector.broadcast %9 : vector<1x144x1xf32> to vector<1x144x64xf32>
    %62 = arith.mulf %60, %61 : vector<1x144x64xf32>
    %63 = vector.shape_cast %62 : vector<1x144x64xf32> to vector<144x64xf32>
    %64 = arith.truncf %63 : vector<144x64xf32> to vector<144x64xbf16>
    %c16 = arith.constant 16 : index
    %c0_22 = arith.constant 0 : index
    %65 = vector.load %arg21[%c16, %c0_22] : memref<176x64xbf16, #tpu.memory_space<vmem>>, vector<144x64xbf16>
    tpu.vector_store %arg21[%c16, %c0_22], %64 {strides = array<i32>} : memref<176x64xbf16, #tpu.memory_space<vmem>>, vector<144x64xbf16>,
    %c15 = arith.constant 15 : index
    %c0_23 = arith.constant 0 : index
    %66 = vector.load %arg21[%c15, %c0_23] : memref<176x64xbf16, #tpu.memory_space<vmem>>, vector<144x64xbf16>
    %c0_24 = arith.constant 0 : index
    %c0_25 = arith.constant 0 : index
    %c0_26 = arith.constant 0 : index
    %67 = vector.load %arg6[%c0_24, %c0_25, %c0_26] : memref<3x64x64xbf16, #tpu.memory_space<vmem>>, vector<1x64x64xbf16>
    %68 = vector.shape_cast %67 : vector<1x64x64xbf16> to vector<64x64xbf16>
    %cst_27 = arith.constant dense<0.000000e+00> : vector<144x64xf32>
    %69 = tpu.matmul %66, %68, %cst_27 {dimension_numbers = #tpu.dot_dimension_numbers<[1], [0], [0], [1], [0, 0, 1, 1], [], []>} : vector<144x64xbf16>, vector<64x64xbf16>, vector<144x64xf32> -> vector<144x64xf32>
    %c16_28 = arith.constant 16 : index
    %c0_29 = arith.constant 0 : index
    %70 = vector.load %arg21[%c16_28, %c0_29] : memref<176x64xbf16, #tpu.memory_space<vmem>>, vector<144x64xbf16>
    %c1 = arith.constant 1 : index
    %c0_30 = arith.constant 0 : index
    %c0_31 = arith.constant 0 : index
    %71 = vector.load %arg6[%c1, %c0_30, %c0_31] : memref<3x64x64xbf16, #tpu.memory_space<vmem>>, vector<1x64x64xbf16>
    %72 = vector.shape_cast %71 : vector<1x64x64xbf16> to vector<64x64xbf16>
    %cst_32 = arith.constant dense<0.000000e+00> : vector<144x64xf32>
    %73 = tpu.matmul %70, %72, %cst_32 {dimension_numbers = #tpu.dot_dimension_numbers<[1], [0], [0], [1], [0, 0, 1, 1], [], []>} : vector<144x64xbf16>, vector<64x64xbf16>, vector<144x64xf32> -> vector<144x64xf32>
    %74 = arith.addf %69, %73 : vector<144x64xf32>
    %c17 = arith.constant 17 : index
    %c0_33 = arith.constant 0 : index
    %75 = vector.load %arg21[%c17, %c0_33] : memref<176x64xbf16, #tpu.memory_space<vmem>>, vector<144x64xbf16>
    %c2 = arith.constant 2 : index
    %c0_34 = arith.constant 0 : index
    %c0_35 = arith.constant 0 : index
    %76 = vector.load %arg6[%c2, %c0_34, %c0_35] : memref<3x64x64xbf16, #tpu.memory_space<vmem>>, vector<1x64x64xbf16>
    %77 = vector.shape_cast %76 : vector<1x64x64xbf16> to vector<64x64xbf16>
    %cst_36 = arith.constant dense<0.000000e+00> : vector<144x64xf32>
    %78 = tpu.matmul %75, %77, %cst_36 {dimension_numbers = #tpu.dot_dimension_numbers<[1], [0], [0], [1], [0, 0, 1, 1], [], []>} : vector<144x64xbf16>, vector<64x64xbf16>, vector<144x64xf32> -> vector<144x64xf32>
    %79 = arith.addf %74, %78 : vector<144x64xf32>
    %c0_37 = arith.constant 0 : index
    %c0_38 = arith.constant 0 : index
    %80 = vector.load %arg7[%c0_37, %c0_38] : memref<1x64xf32, #tpu.memory_space<vmem>>, vector<1x64xf32>
    %81 = vector.broadcast %80 : vector<1x64xf32> to vector<144x64xf32>
    %82 = arith.addf %79, %81 : vector<144x64xf32>
    %83 = vector.shape_cast %82 : vector<144x64xf32> to vector<1x144x64xf32>
    %84 = vector.broadcast %9 : vector<1x144x1xf32> to vector<1x144x64xf32>
    %85 = arith.mulf %83, %84 : vector<1x144x64xf32>
    %cst_39 = arith.constant dense<0.000000e+00> : vector<1x64xf32>
    %86 = vector.multi_reduction <add>, %85, %cst_39 [1] : vector<1x144x64xf32> to vector<1x64xf32>
    %cst_40 = arith.constant 7.812500e-03 : f32
    %87 = vector.broadcast %cst_40 : f32 to vector<1x64xf32>
    %88 = arith.mulf %86, %87 : vector<1x64xf32>
    %89 = vector.shape_cast %88 : vector<1x64xf32> to vector<1x1x64xf32>
    %90 = vector.broadcast %89 : vector<1x1x64xf32> to vector<1x144x64xf32>
    %91 = arith.subf %83, %90 : vector<1x144x64xf32>
    %92 = vector.broadcast %9 : vector<1x144x1xf32> to vector<1x144x64xf32>
    %93 = arith.mulf %91, %92 : vector<1x144x64xf32>
    %94 = arith.mulf %93, %93 : vector<1x144x64xf32>
    %cst_41 = arith.constant dense<0.000000e+00> : vector<1x64xf32>
    %95 = vector.multi_reduction <add>, %94, %cst_41 [1] : vector<1x144x64xf32> to vector<1x64xf32>
    %cst_42 = arith.constant 7.812500e-03 : f32
    %96 = vector.broadcast %cst_42 : f32 to vector<1x64xf32>
    %97 = arith.mulf %95, %96 : vector<1x64xf32>
    %c0_43 = arith.constant 0 : index
    %c0_44 = arith.constant 0 : index
    %98 = vector.load %arg8[%c0_43, %c0_44] : memref<1x64xf32, #tpu.memory_space<vmem>>, vector<1x64xf32>
    %cst_45 = arith.constant 9.99999974E-6 : f32
    %99 = vector.broadcast %cst_45 : f32 to vector<1x64xf32>
    %100 = arith.addf %97, %99 : vector<1x64xf32>
    %101 = math.rsqrt %100 : vector<1x64xf32>
    %102 = arith.mulf %98, %101 : vector<1x64xf32>
    %103 = vector.shape_cast %102 : vector<1x64xf32> to vector<1x1x64xf32>
    %104 = vector.broadcast %103 : vector<1x1x64xf32> to vector<1x144x64xf32>
    %105 = arith.mulf %93, %104 : vector<1x144x64xf32>
    %c0_46 = arith.constant 0 : index
    %c0_47 = arith.constant 0 : index
    %106 = vector.load %arg9[%c0_46, %c0_47] : memref<1x64xf32, #tpu.memory_space<vmem>>, vector<1x64xf32>
    %107 = vector.shape_cast %106 : vector<1x64xf32> to vector<1x1x64xf32>
    %108 = vector.broadcast %107 : vector<1x1x64xf32> to vector<1x144x64xf32>
    %109 = arith.addf %105, %108 : vector<1x144x64xf32>
    %cst_48 = arith.constant 0.000000e+00 : f32
    %110 = vector.broadcast %cst_48 : f32 to vector<1x144x64xf32>
    %111 = arith.subf %110, %109 : vector<1x144x64xf32>
    %112 = math.exp %111 : vector<1x144x64xf32>
    %cst_49 = arith.constant 1.000000e+00 : f32
    %113 = vector.broadcast %cst_49 : f32 to vector<1x144x64xf32>
    %114 = arith.addf %113, %112 : vector<1x144x64xf32>
    %cst_50 = arith.constant 1.000000e+00 : f32
    %115 = vector.broadcast %cst_50 : f32 to vector<1x144x64xf32>
    %116 = arith.divf %115, %114 : vector<1x144x64xf32>
    %117 = arith.mulf %109, %116 : vector<1x144x64xf32>
    %118 = vector.broadcast %9 : vector<1x144x1xf32> to vector<1x144x64xf32>
    %119 = arith.mulf %117, %118 : vector<1x144x64xf32>
    %120 = vector.shape_cast %119 : vector<1x144x64xf32> to vector<144x64xf32>
    %121 = arith.truncf %120 : vector<144x64xf32> to vector<144x64xbf16>
    %c16_51 = arith.constant 16 : index
    %c0_52 = arith.constant 0 : index
    %122 = vector.load %arg21[%c16_51, %c0_52] : memref<176x64xbf16, #tpu.memory_space<vmem>>, vector<144x64xbf16>
    tpu.vector_store %arg21[%c16_51, %c0_52], %121 {strides = array<i32>} : memref<176x64xbf16, #tpu.memory_space<vmem>>, vector<144x64xbf16>,
    %c14 = arith.constant 14 : index
    %c0_53 = arith.constant 0 : index
    %123 = vector.load %arg21[%c14, %c0_53] : memref<176x64xbf16, #tpu.memory_space<vmem>>, vector<144x64xbf16>
    %c0_54 = arith.constant 0 : index
    %c0_55 = arith.constant 0 : index
    %c0_56 = arith.constant 0 : index
    %124 = vector.load %arg10[%c0_54, %c0_55, %c0_56] : memref<5x64x64xbf16, #tpu.memory_space<vmem>>, vector<1x64x64xbf16>
    %125 = vector.shape_cast %124 : vector<1x64x64xbf16> to vector<64x64xbf16>
    %cst_57 = arith.constant dense<0.000000e+00> : vector<144x64xf32>
    %126 = tpu.matmul %123, %125, %cst_57 {dimension_numbers = #tpu.dot_dimension_numbers<[1], [0], [0], [1], [0, 0, 1, 1], [], []>} : vector<144x64xbf16>, vector<64x64xbf16>, vector<144x64xf32> -> vector<144x64xf32>
    %c15_58 = arith.constant 15 : index
    %c0_59 = arith.constant 0 : index
    %127 = vector.load %arg21[%c15_58, %c0_59] : memref<176x64xbf16, #tpu.memory_space<vmem>>, vector<144x64xbf16>
    %c1_60 = arith.constant 1 : index
    %c0_61 = arith.constant 0 : index
    %c0_62 = arith.constant 0 : index
    %128 = vector.load %arg10[%c1_60, %c0_61, %c0_62] : memref<5x64x64xbf16, #tpu.memory_space<vmem>>, vector<1x64x64xbf16>
    %129 = vector.shape_cast %128 : vector<1x64x64xbf16> to vector<64x64xbf16>
    %cst_63 = arith.constant dense<0.000000e+00> : vector<144x64xf32>
    %130 = tpu.matmul %127, %129, %cst_63 {dimension_numbers = #tpu.dot_dimension_numbers<[1], [0], [0], [1], [0, 0, 1, 1], [], []>} : vector<144x64xbf16>, vector<64x64xbf16>, vector<144x64xf32> -> vector<144x64xf32>
    %131 = arith.addf %126, %130 : vector<144x64xf32>
    %c16_64 = arith.constant 16 : index
    %c0_65 = arith.constant 0 : index
    %132 = vector.load %arg21[%c16_64, %c0_65] : memref<176x64xbf16, #tpu.memory_space<vmem>>, vector<144x64xbf16>
    %c2_66 = arith.constant 2 : index
    %c0_67 = arith.constant 0 : index
    %c0_68 = arith.constant 0 : index
    %133 = vector.load %arg10[%c2_66, %c0_67, %c0_68] : memref<5x64x64xbf16, #tpu.memory_space<vmem>>, vector<1x64x64xbf16>
    %134 = vector.shape_cast %133 : vector<1x64x64xbf16> to vector<64x64xbf16>
    %cst_69 = arith.constant dense<0.000000e+00> : vector<144x64xf32>
    %135 = tpu.matmul %132, %134, %cst_69 {dimension_numbers = #tpu.dot_dimension_numbers<[1], [0], [0], [1], [0, 0, 1, 1], [], []>} : vector<144x64xbf16>, vector<64x64xbf16>, vector<144x64xf32> -> vector<144x64xf32>
    %136 = arith.addf %131, %135 : vector<144x64xf32>
    %c17_70 = arith.constant 17 : index
    %c0_71 = arith.constant 0 : index
    %137 = vector.load %arg21[%c17_70, %c0_71] : memref<176x64xbf16, #tpu.memory_space<vmem>>, vector<144x64xbf16>
    %c3 = arith.constant 3 : index
    %c0_72 = arith.constant 0 : index
    %c0_73 = arith.constant 0 : index
    %138 = vector.load %arg10[%c3, %c0_72, %c0_73] : memref<5x64x64xbf16, #tpu.memory_space<vmem>>, vector<1x64x64xbf16>
    %139 = vector.shape_cast %138 : vector<1x64x64xbf16> to vector<64x64xbf16>
    %cst_74 = arith.constant dense<0.000000e+00> : vector<144x64xf32>
    %140 = tpu.matmul %137, %139, %cst_74 {dimension_numbers = #tpu.dot_dimension_numbers<[1], [0], [0], [1], [0, 0, 1, 1], [], []>} : vector<144x64xbf16>, vector<64x64xbf16>, vector<144x64xf32> -> vector<144x64xf32>
    %141 = arith.addf %136, %140 : vector<144x64xf32>
    %c18 = arith.constant 18 : index
    %c0_75 = arith.constant 0 : index
    %142 = vector.load %arg21[%c18, %c0_75] : memref<176x64xbf16, #tpu.memory_space<vmem>>, vector<144x64xbf16>
    %c4 = arith.constant 4 : index
    %c0_76 = arith.constant 0 : index
    %c0_77 = arith.constant 0 : index
    %143 = vector.load %arg10[%c4, %c0_76, %c0_77] : memref<5x64x64xbf16, #tpu.memory_space<vmem>>, vector<1x64x64xbf16>
    %144 = vector.shape_cast %143 : vector<1x64x64xbf16> to vector<64x64xbf16>
    %cst_78 = arith.constant dense<0.000000e+00> : vector<144x64xf32>
    %145 = tpu.matmul %142, %144, %cst_78 {dimension_numbers = #tpu.dot_dimension_numbers<[1], [0], [0], [1], [0, 0, 1, 1], [], []>} : vector<144x64xbf16>, vector<64x64xbf16>, vector<144x64xf32> -> vector<144x64xf32>
    %146 = arith.addf %141, %145 : vector<144x64xf32>
    %c0_79 = arith.constant 0 : index
    %c0_80 = arith.constant 0 : index
    %147 = vector.load %arg11[%c0_79, %c0_80] : memref<1x64xf32, #tpu.memory_space<vmem>>, vector<1x64xf32>
    %148 = vector.broadcast %147 : vector<1x64xf32> to vector<144x64xf32>
    %149 = arith.addf %146, %148 : vector<144x64xf32>
    %150 = vector.shape_cast %149 : vector<144x64xf32> to vector<1x144x64xf32>
    %151 = vector.broadcast %9 : vector<1x144x1xf32> to vector<1x144x64xf32>
    %152 = arith.mulf %150, %151 : vector<1x144x64xf32>
    %cst_81 = arith.constant dense<0.000000e+00> : vector<1x64xf32>
    %153 = vector.multi_reduction <add>, %152, %cst_81 [1] : vector<1x144x64xf32> to vector<1x64xf32>
    %cst_82 = arith.constant 7.812500e-03 : f32
    %154 = vector.broadcast %cst_82 : f32 to vector<1x64xf32>
    %155 = arith.mulf %153, %154 : vector<1x64xf32>
    %156 = vector.shape_cast %155 : vector<1x64xf32> to vector<1x1x64xf32>
    %157 = vector.broadcast %156 : vector<1x1x64xf32> to vector<1x144x64xf32>
    %158 = arith.subf %150, %157 : vector<1x144x64xf32>
    %159 = vector.broadcast %9 : vector<1x144x1xf32> to vector<1x144x64xf32>
    %160 = arith.mulf %158, %159 : vector<1x144x64xf32>
    %161 = arith.mulf %160, %160 : vector<1x144x64xf32>
    %cst_83 = arith.constant dense<0.000000e+00> : vector<1x64xf32>
    %162 = vector.multi_reduction <add>, %161, %cst_83 [1] : vector<1x144x64xf32> to vector<1x64xf32>
    %cst_84 = arith.constant 7.812500e-03 : f32
    %163 = vector.broadcast %cst_84 : f32 to vector<1x64xf32>
    %164 = arith.mulf %162, %163 : vector<1x64xf32>
    %c0_85 = arith.constant 0 : index
    %c0_86 = arith.constant 0 : index
    %165 = vector.load %arg12[%c0_85, %c0_86] : memref<1x64xf32, #tpu.memory_space<vmem>>, vector<1x64xf32>
    %cst_87 = arith.constant 9.99999974E-6 : f32
    %166 = vector.broadcast %cst_87 : f32 to vector<1x64xf32>
    %167 = arith.addf %164, %166 : vector<1x64xf32>
    %168 = math.rsqrt %167 : vector<1x64xf32>
    %169 = arith.mulf %165, %168 : vector<1x64xf32>
    %170 = vector.shape_cast %169 : vector<1x64xf32> to vector<1x1x64xf32>
    %171 = vector.broadcast %170 : vector<1x1x64xf32> to vector<1x144x64xf32>
    %172 = arith.mulf %160, %171 : vector<1x144x64xf32>
    %c0_88 = arith.constant 0 : index
    %c0_89 = arith.constant 0 : index
    %173 = vector.load %arg13[%c0_88, %c0_89] : memref<1x64xf32, #tpu.memory_space<vmem>>, vector<1x64xf32>
    %174 = vector.shape_cast %173 : vector<1x64xf32> to vector<1x1x64xf32>
    %175 = vector.broadcast %174 : vector<1x1x64xf32> to vector<1x144x64xf32>
    %176 = arith.addf %172, %175 : vector<1x144x64xf32>
    %cst_90 = arith.constant 0.000000e+00 : f32
    %177 = vector.broadcast %cst_90 : f32 to vector<1x144x64xf32>
    %178 = arith.subf %177, %176 : vector<1x144x64xf32>
    %179 = math.exp %178 : vector<1x144x64xf32>
    %cst_91 = arith.constant 1.000000e+00 : f32
    %180 = vector.broadcast %cst_91 : f32 to vector<1x144x64xf32>
    %181 = arith.addf %180, %179 : vector<1x144x64xf32>
    %cst_92 = arith.constant 1.000000e+00 : f32
    %182 = vector.broadcast %cst_92 : f32 to vector<1x144x64xf32>
    %183 = arith.divf %182, %181 : vector<1x144x64xf32>
    %184 = arith.mulf %176, %183 : vector<1x144x64xf32>
    %185 = vector.broadcast %9 : vector<1x144x1xf32> to vector<1x144x64xf32>
    %186 = arith.mulf %184, %185 : vector<1x144x64xf32>
    %187 = vector.shape_cast %186 : vector<1x144x64xf32> to vector<144x64xf32>
    %188 = arith.truncf %187 : vector<144x64xf32> to vector<144x64xbf16>
    %c16_93 = arith.constant 16 : index
    %c0_94 = arith.constant 0 : index
    %189 = vector.load %arg21[%c16_93, %c0_94] : memref<176x64xbf16, #tpu.memory_space<vmem>>, vector<144x64xbf16>
    tpu.vector_store %arg21[%c16_93, %c0_94], %188 {strides = array<i32>} : memref<176x64xbf16, #tpu.memory_space<vmem>>, vector<144x64xbf16>,
    %c15_95 = arith.constant 15 : index
    %c0_96 = arith.constant 0 : index
    %190 = vector.load %arg21[%c15_95, %c0_96] : memref<176x64xbf16, #tpu.memory_space<vmem>>, vector<144x64xbf16>
    %c0_97 = arith.constant 0 : index
    %c0_98 = arith.constant 0 : index
    %c0_99 = arith.constant 0 : index
    %191 = vector.load %arg14[%c0_97, %c0_98, %c0_99] : memref<3x64x64xbf16, #tpu.memory_space<vmem>>, vector<1x64x64xbf16>
    %192 = vector.shape_cast %191 : vector<1x64x64xbf16> to vector<64x64xbf16>
    %cst_100 = arith.constant dense<0.000000e+00> : vector<144x64xf32>
    %193 = tpu.matmul %190, %192, %cst_100 {dimension_numbers = #tpu.dot_dimension_numbers<[1], [0], [0], [1], [0, 0, 1, 1], [], []>} : vector<144x64xbf16>, vector<64x64xbf16>, vector<144x64xf32> -> vector<144x64xf32>
    %c16_101 = arith.constant 16 : index
    %c0_102 = arith.constant 0 : index
    %194 = vector.load %arg21[%c16_101, %c0_102] : memref<176x64xbf16, #tpu.memory_space<vmem>>, vector<144x64xbf16>
    %c1_103 = arith.constant 1 : index
    %c0_104 = arith.constant 0 : index
    %c0_105 = arith.constant 0 : index
    %195 = vector.load %arg14[%c1_103, %c0_104, %c0_105] : memref<3x64x64xbf16, #tpu.memory_space<vmem>>, vector<1x64x64xbf16>
    %196 = vector.shape_cast %195 : vector<1x64x64xbf16> to vector<64x64xbf16>
    %cst_106 = arith.constant dense<0.000000e+00> : vector<144x64xf32>
    %197 = tpu.matmul %194, %196, %cst_106 {dimension_numbers = #tpu.dot_dimension_numbers<[1], [0], [0], [1], [0, 0, 1, 1], [], []>} : vector<144x64xbf16>, vector<64x64xbf16>, vector<144x64xf32> -> vector<144x64xf32>
    %198 = arith.addf %193, %197 : vector<144x64xf32>
    %c17_107 = arith.constant 17 : index
    %c0_108 = arith.constant 0 : index
    %199 = vector.load %arg21[%c17_107, %c0_108] : memref<176x64xbf16, #tpu.memory_space<vmem>>, vector<144x64xbf16>
    %c2_109 = arith.constant 2 : index
    %c0_110 = arith.constant 0 : index
    %c0_111 = arith.constant 0 : index
    %200 = vector.load %arg14[%c2_109, %c0_110, %c0_111] : memref<3x64x64xbf16, #tpu.memory_space<vmem>>, vector<1x64x64xbf16>
    %201 = vector.shape_cast %200 : vector<1x64x64xbf16> to vector<64x64xbf16>
    %cst_112 = arith.constant dense<0.000000e+00> : vector<144x64xf32>
    %202 = tpu.matmul %199, %201, %cst_112 {dimension_numbers = #tpu.dot_dimension_numbers<[1], [0], [0], [1], [0, 0, 1, 1], [], []>} : vector<144x64xbf16>, vector<64x64xbf16>, vector<144x64xf32> -> vector<144x64xf32>
    %203 = arith.addf %198, %202 : vector<144x64xf32>
    %c0_113 = arith.constant 0 : index
    %c0_114 = arith.constant 0 : index
    %204 = vector.load %arg15[%c0_113, %c0_114] : memref<1x64xf32, #tpu.memory_space<vmem>>, vector<1x64xf32>
    %205 = vector.broadcast %204 : vector<1x64xf32> to vector<144x64xf32>
    %206 = arith.addf %203, %205 : vector<144x64xf32>
    %207 = vector.shape_cast %206 : vector<144x64xf32> to vector<1x144x64xf32>
    %208 = vector.broadcast %9 : vector<1x144x1xf32> to vector<1x144x64xf32>
    %209 = arith.mulf %207, %208 : vector<1x144x64xf32>
    %cst_115 = arith.constant dense<0.000000e+00> : vector<1x64xf32>
    %210 = vector.multi_reduction <add>, %209, %cst_115 [1] : vector<1x144x64xf32> to vector<1x64xf32>
    %211 = vector.extract_strided_slice %210 {offsets = [0, 0], sizes = [1, 32], strides = [1, 1]} : vector<1x64xf32> to vector<1x32xf32>
    %212 = vector.extract_strided_slice %210 {offsets = [0, 32], sizes = [1, 32], strides = [1, 1]} : vector<1x64xf32> to vector<1x32xf32>
    %213 = arith.addf %211, %212 : vector<1x32xf32>
    %214 = tpu.concatenate %213, %213 in 1 : vector<1x32xf32>, vector<1x32xf32> -> vector<1x64xf32>
    %cst_116 = arith.constant 3.906250e-03 : f32
    %215 = vector.broadcast %cst_116 : f32 to vector<1x64xf32>
    %216 = arith.mulf %214, %215 : vector<1x64xf32>
    %217 = vector.shape_cast %216 : vector<1x64xf32> to vector<1x1x64xf32>
    %218 = vector.broadcast %217 : vector<1x1x64xf32> to vector<1x144x64xf32>
    %219 = arith.subf %207, %218 : vector<1x144x64xf32>
    %220 = vector.broadcast %9 : vector<1x144x1xf32> to vector<1x144x64xf32>
    %221 = arith.mulf %219, %220 : vector<1x144x64xf32>
    %222 = arith.mulf %221, %221 : vector<1x144x64xf32>
    %cst_117 = arith.constant dense<0.000000e+00> : vector<1x64xf32>
    %223 = vector.multi_reduction <add>, %222, %cst_117 [1] : vector<1x144x64xf32> to vector<1x64xf32>
    %224 = vector.extract_strided_slice %223 {offsets = [0, 0], sizes = [1, 32], strides = [1, 1]} : vector<1x64xf32> to vector<1x32xf32>
    %225 = vector.extract_strided_slice %223 {offsets = [0, 32], sizes = [1, 32], strides = [1, 1]} : vector<1x64xf32> to vector<1x32xf32>
    %226 = arith.addf %224, %225 : vector<1x32xf32>
    %227 = tpu.concatenate %226, %226 in 1 : vector<1x32xf32>, vector<1x32xf32> -> vector<1x64xf32>
    %cst_118 = arith.constant 3.906250e-03 : f32
    %228 = vector.broadcast %cst_118 : f32 to vector<1x64xf32>
    %229 = arith.mulf %227, %228 : vector<1x64xf32>
    %c0_119 = arith.constant 0 : index
    %c0_120 = arith.constant 0 : index
    %230 = vector.load %arg16[%c0_119, %c0_120] : memref<1x64xf32, #tpu.memory_space<vmem>>, vector<1x64xf32>
    %cst_121 = arith.constant 9.99999974E-6 : f32
    %231 = vector.broadcast %cst_121 : f32 to vector<1x64xf32>
    %232 = arith.addf %229, %231 : vector<1x64xf32>
    %233 = math.rsqrt %232 : vector<1x64xf32>
    %234 = arith.mulf %230, %233 : vector<1x64xf32>
    %235 = vector.shape_cast %234 : vector<1x64xf32> to vector<1x1x64xf32>
    %236 = vector.broadcast %235 : vector<1x1x64xf32> to vector<1x144x64xf32>
    %237 = arith.mulf %221, %236 : vector<1x144x64xf32>
    %c0_122 = arith.constant 0 : index
    %c0_123 = arith.constant 0 : index
    %238 = vector.load %arg17[%c0_122, %c0_123] : memref<1x64xf32, #tpu.memory_space<vmem>>, vector<1x64xf32>
    %239 = vector.shape_cast %238 : vector<1x64xf32> to vector<1x1x64xf32>
    %240 = vector.broadcast %239 : vector<1x1x64xf32> to vector<1x144x64xf32>
    %241 = arith.addf %237, %240 : vector<1x144x64xf32>
    %cst_124 = arith.constant 0.000000e+00 : f32
    %242 = vector.broadcast %cst_124 : f32 to vector<1x144x64xf32>
    %243 = arith.subf %242, %241 : vector<1x144x64xf32>
    %244 = math.exp %243 : vector<1x144x64xf32>
    %cst_125 = arith.constant 1.000000e+00 : f32
    %245 = vector.broadcast %cst_125 : f32 to vector<1x144x64xf32>
    %246 = arith.addf %245, %244 : vector<1x144x64xf32>
    %cst_126 = arith.constant 1.000000e+00 : f32
    %247 = vector.broadcast %cst_126 : f32 to vector<1x144x64xf32>
    %248 = arith.divf %247, %246 : vector<1x144x64xf32>
    %249 = arith.mulf %241, %248 : vector<1x144x64xf32>
    %250 = vector.broadcast %9 : vector<1x144x1xf32> to vector<1x144x64xf32>
    %251 = arith.mulf %249, %250 : vector<1x144x64xf32>
    %252 = vector.shape_cast %251 : vector<1x144x64xf32> to vector<144x64xf32>
    %253 = arith.truncf %252 : vector<144x64xf32> to vector<144x64xbf16>
    %c16_127 = arith.constant 16 : index
    %c0_128 = arith.constant 0 : index
    %254 = vector.load %arg21[%c16_127, %c0_128] : memref<176x64xbf16, #tpu.memory_space<vmem>>, vector<144x64xbf16>
    tpu.vector_store %arg21[%c16_127, %c0_128], %253 {strides = array<i32>} : memref<176x64xbf16, #tpu.memory_space<vmem>>, vector<144x64xbf16>,
    %c12 = arith.constant 12 : index
    %c0_129 = arith.constant 0 : index
    %255 = vector.load %arg21[%c12, %c0_129] : memref<176x64xbf16, #tpu.memory_space<vmem>>, vector<144x64xbf16>
    %c0_130 = arith.constant 0 : index
    %c0_131 = arith.constant 0 : index
    %c0_132 = arith.constant 0 : index
    %256 = vector.load %arg18[%c0_130, %c0_131, %c0_132] : memref<9x64x2xbf16, #tpu.memory_space<vmem>>, vector<1x64x2xbf16>
    %257 = vector.shape_cast %256 : vector<1x64x2xbf16> to vector<64x2xbf16>
    %cst_133 = arith.constant dense<0.000000e+00> : vector<144x2xf32>
    %258 = tpu.matmul %255, %257, %cst_133 {dimension_numbers = #tpu.dot_dimension_numbers<[1], [0], [0], [1], [0, 0, 1, 1], [], []>} : vector<144x64xbf16>, vector<64x2xbf16>, vector<144x2xf32> -> vector<144x2xf32>
    %c13 = arith.constant 13 : index
    %c0_134 = arith.constant 0 : index
    %259 = vector.load %arg21[%c13, %c0_134] : memref<176x64xbf16, #tpu.memory_space<vmem>>, vector<144x64xbf16>
    %c1_135 = arith.constant 1 : index
    %c0_136 = arith.constant 0 : index
    %c0_137 = arith.constant 0 : index
    %260 = vector.load %arg18[%c1_135, %c0_136, %c0_137] : memref<9x64x2xbf16, #tpu.memory_space<vmem>>, vector<1x64x2xbf16>
    %261 = vector.shape_cast %260 : vector<1x64x2xbf16> to vector<64x2xbf16>
    %cst_138 = arith.constant dense<0.000000e+00> : vector<144x2xf32>
    %262 = tpu.matmul %259, %261, %cst_138 {dimension_numbers = #tpu.dot_dimension_numbers<[1], [0], [0], [1], [0, 0, 1, 1], [], []>} : vector<144x64xbf16>, vector<64x2xbf16>, vector<144x2xf32> -> vector<144x2xf32>
    %263 = arith.addf %258, %262 : vector<144x2xf32>
    %c14_139 = arith.constant 14 : index
    %c0_140 = arith.constant 0 : index
    %264 = vector.load %arg21[%c14_139, %c0_140] : memref<176x64xbf16, #tpu.memory_space<vmem>>, vector<144x64xbf16>
    %c2_141 = arith.constant 2 : index
    %c0_142 = arith.constant 0 : index
    %c0_143 = arith.constant 0 : index
    %265 = vector.load %arg18[%c2_141, %c0_142, %c0_143] : memref<9x64x2xbf16, #tpu.memory_space<vmem>>, vector<1x64x2xbf16>
    %266 = vector.shape_cast %265 : vector<1x64x2xbf16> to vector<64x2xbf16>
    %cst_144 = arith.constant dense<0.000000e+00> : vector<144x2xf32>
    %267 = tpu.matmul %264, %266, %cst_144 {dimension_numbers = #tpu.dot_dimension_numbers<[1], [0], [0], [1], [0, 0, 1, 1], [], []>} : vector<144x64xbf16>, vector<64x2xbf16>, vector<144x2xf32> -> vector<144x2xf32>
    %268 = arith.addf %263, %267 : vector<144x2xf32>
    %c15_145 = arith.constant 15 : index
    %c0_146 = arith.constant 0 : index
    %269 = vector.load %arg21[%c15_145, %c0_146] : memref<176x64xbf16, #tpu.memory_space<vmem>>, vector<144x64xbf16>
    %c3_147 = arith.constant 3 : index
    %c0_148 = arith.constant 0 : index
    %c0_149 = arith.constant 0 : index
    %270 = vector.load %arg18[%c3_147, %c0_148, %c0_149] : memref<9x64x2xbf16, #tpu.memory_space<vmem>>, vector<1x64x2xbf16>
    %271 = vector.shape_cast %270 : vector<1x64x2xbf16> to vector<64x2xbf16>
    %cst_150 = arith.constant dense<0.000000e+00> : vector<144x2xf32>
    %272 = tpu.matmul %269, %271, %cst_150 {dimension_numbers = #tpu.dot_dimension_numbers<[1], [0], [0], [1], [0, 0, 1, 1], [], []>} : vector<144x64xbf16>, vector<64x2xbf16>, vector<144x2xf32> -> vector<144x2xf32>
    %273 = arith.addf %268, %272 : vector<144x2xf32>
    %c16_151 = arith.constant 16 : index
    %c0_152 = arith.constant 0 : index
    %274 = vector.load %arg21[%c16_151, %c0_152] : memref<176x64xbf16, #tpu.memory_space<vmem>>, vector<144x64xbf16>
    %c4_153 = arith.constant 4 : index
    %c0_154 = arith.constant 0 : index
    %c0_155 = arith.constant 0 : index
    %275 = vector.load %arg18[%c4_153, %c0_154, %c0_155] : memref<9x64x2xbf16, #tpu.memory_space<vmem>>, vector<1x64x2xbf16>
    %276 = vector.shape_cast %275 : vector<1x64x2xbf16> to vector<64x2xbf16>
    %cst_156 = arith.constant dense<0.000000e+00> : vector<144x2xf32>
    %277 = tpu.matmul %274, %276, %cst_156 {dimension_numbers = #tpu.dot_dimension_numbers<[1], [0], [0], [1], [0, 0, 1, 1], [], []>} : vector<144x64xbf16>, vector<64x2xbf16>, vector<144x2xf32> -> vector<144x2xf32>
    %278 = arith.addf %273, %277 : vector<144x2xf32>
    %c17_157 = arith.constant 17 : index
    %c0_158 = arith.constant 0 : index
    %279 = vector.load %arg21[%c17_157, %c0_158] : memref<176x64xbf16, #tpu.memory_space<vmem>>, vector<144x64xbf16>
    %c5 = arith.constant 5 : index
    %c0_159 = arith.constant 0 : index
    %c0_160 = arith.constant 0 : index
    %280 = vector.load %arg18[%c5, %c0_159, %c0_160] : memref<9x64x2xbf16, #tpu.memory_space<vmem>>, vector<1x64x2xbf16>
    %281 = vector.shape_cast %280 : vector<1x64x2xbf16> to vector<64x2xbf16>
    %cst_161 = arith.constant dense<0.000000e+00> : vector<144x2xf32>
    %282 = tpu.matmul %279, %281, %cst_161 {dimension_numbers = #tpu.dot_dimension_numbers<[1], [0], [0], [1], [0, 0, 1, 1], [], []>} : vector<144x64xbf16>, vector<64x2xbf16>, vector<144x2xf32> -> vector<144x2xf32>
    %283 = arith.addf %278, %282 : vector<144x2xf32>
    %c18_162 = arith.constant 18 : index
    %c0_163 = arith.constant 0 : index
    %284 = vector.load %arg21[%c18_162, %c0_163] : memref<176x64xbf16, #tpu.memory_space<vmem>>, vector<144x64xbf16>
    %c6 = arith.constant 6 : index
    %c0_164 = arith.constant 0 : index
    %c0_165 = arith.constant 0 : index
    %285 = vector.load %arg18[%c6, %c0_164, %c0_165] : memref<9x64x2xbf16, #tpu.memory_space<vmem>>, vector<1x64x2xbf16>
    %286 = vector.shape_cast %285 : vector<1x64x2xbf16> to vector<64x2xbf16>
    %cst_166 = arith.constant dense<0.000000e+00> : vector<144x2xf32>
    %287 = tpu.matmul %284, %286, %cst_166 {dimension_numbers = #tpu.dot_dimension_numbers<[1], [0], [0], [1], [0, 0, 1, 1], [], []>} : vector<144x64xbf16>, vector<64x2xbf16>, vector<144x2xf32> -> vector<144x2xf32>
    %288 = arith.addf %283, %287 : vector<144x2xf32>
    %c19 = arith.constant 19 : index
    %c0_167 = arith.constant 0 : index
    %289 = vector.load %arg21[%c19, %c0_167] : memref<176x64xbf16, #tpu.memory_space<vmem>>, vector<144x64xbf16>
    %c7 = arith.constant 7 : index
    %c0_168 = arith.constant 0 : index
    %c0_169 = arith.constant 0 : index
    %290 = vector.load %arg18[%c7, %c0_168, %c0_169] : memref<9x64x2xbf16, #tpu.memory_space<vmem>>, vector<1x64x2xbf16>
    %291 = vector.shape_cast %290 : vector<1x64x2xbf16> to vector<64x2xbf16>
    %cst_170 = arith.constant dense<0.000000e+00> : vector<144x2xf32>
    %292 = tpu.matmul %289, %291, %cst_170 {dimension_numbers = #tpu.dot_dimension_numbers<[1], [0], [0], [1], [0, 0, 1, 1], [], []>} : vector<144x64xbf16>, vector<64x2xbf16>, vector<144x2xf32> -> vector<144x2xf32>
    %293 = arith.addf %288, %292 : vector<144x2xf32>
    %c20 = arith.constant 20 : index
    %c0_171 = arith.constant 0 : index
    %294 = vector.load %arg21[%c20, %c0_171] : memref<176x64xbf16, #tpu.memory_space<vmem>>, vector<144x64xbf16>
    %c8 = arith.constant 8 : index
    %c0_172 = arith.constant 0 : index
    %c0_173 = arith.constant 0 : index
    %295 = vector.load %arg18[%c8, %c0_172, %c0_173] : memref<9x64x2xbf16, #tpu.memory_space<vmem>>, vector<1x64x2xbf16>
    %296 = vector.shape_cast %295 : vector<1x64x2xbf16> to vector<64x2xbf16>
    %cst_174 = arith.constant dense<0.000000e+00> : vector<144x2xf32>
    %297 = tpu.matmul %294, %296, %cst_174 {dimension_numbers = #tpu.dot_dimension_numbers<[1], [0], [0], [1], [0, 0, 1, 1], [], []>} : vector<144x64xbf16>, vector<64x2xbf16>, vector<144x2xf32> -> vector<144x2xf32>
    %298 = arith.addf %293, %297 : vector<144x2xf32>
    %c0_175 = arith.constant 0 : index
    %c0_176 = arith.constant 0 : index
    %299 = vector.load %arg19[%c0_175, %c0_176] : memref<1x2xf32, #tpu.memory_space<vmem>>, vector<1x2xf32>
    %300 = vector.broadcast %299 : vector<1x2xf32> to vector<144x2xf32>
    %301 = arith.addf %298, %300 : vector<144x2xf32>
    %c0_177 = arith.constant 0 : index
    %c0_178 = arith.constant 0 : index
    %302 = vector.load %arg20[%c0_177, %c0_178] : memref<144x2xf32, #tpu.memory_space<vmem>>, vector<144x2xf32>
    tpu.vector_store %arg20[%c0_177, %c0_178], %301 {strides = array<i32>} : memref<144x2xf32, #tpu.memory_space<vmem>>, vector<144x2xf32>,
    return
  }
  func.func @transform_0(%arg0: i32) -> (i32, i32) {
    %c0_i32 = arith.constant 0 : i32
    %c0_i32_0 = arith.constant 0 : i32
    return %arg0, %c0_i32 : i32, i32
  }
  func.func @transform_1(%arg0: i32) -> (i32, i32) {
    %c0_i32 = arith.constant 0 : i32
    %c0_i32_0 = arith.constant 0 : i32
    %c0_i32_1 = arith.constant 0 : i32
    return %c0_i32, %c0_i32_0 : i32, i32
  }
  func.func @transform_2(%arg0: i32) -> (i32, i32) {
    %c0_i32 = arith.constant 0 : i32
    %c0_i32_0 = arith.constant 0 : i32
    %c0_i32_1 = arith.constant 0 : i32
    return %c0_i32, %c0_i32_0 : i32, i32
  }
  func.func @transform_3(%arg0: i32) -> (i32, i32) {
    %c0_i32 = arith.constant 0 : i32
    %c0_i32_0 = arith.constant 0 : i32
    %c0_i32_1 = arith.constant 0 : i32
    return %c0_i32, %c0_i32_0 : i32, i32
  }
  func.func @transform_4(%arg0: i32) -> (i32, i32) {
    %c0_i32 = arith.constant 0 : i32
    %c0_i32_0 = arith.constant 0 : i32
    %c0_i32_1 = arith.constant 0 : i32
    return %c0_i32, %c0_i32_0 : i32, i32
  }
  func.func @transform_5(%arg0: i32) -> (i32, i32, i32) {
    %c0_i32 = arith.constant 0 : i32
    %c0_i32_0 = arith.constant 0 : i32
    %c0_i32_1 = arith.constant 0 : i32
    %c0_i32_2 = arith.constant 0 : i32
    return %c0_i32, %c0_i32_0, %c0_i32_1 : i32, i32, i32
  }
  func.func @transform_6(%arg0: i32) -> (i32, i32) {
    %c0_i32 = arith.constant 0 : i32
    %c0_i32_0 = arith.constant 0 : i32
    %c0_i32_1 = arith.constant 0 : i32
    return %c0_i32, %c0_i32_0 : i32, i32
  }
  func.func @transform_7(%arg0: i32) -> (i32, i32) {
    %c0_i32 = arith.constant 0 : i32
    %c0_i32_0 = arith.constant 0 : i32
    %c0_i32_1 = arith.constant 0 : i32
    return %c0_i32, %c0_i32_0 : i32, i32
  }
  func.func @transform_8(%arg0: i32) -> (i32, i32) {
    %c0_i32 = arith.constant 0 : i32
    %c0_i32_0 = arith.constant 0 : i32
    %c0_i32_1 = arith.constant 0 : i32
    return %c0_i32, %c0_i32_0 : i32, i32
  }
  func.func @transform_9(%arg0: i32) -> (i32, i32, i32) {
    %c0_i32 = arith.constant 0 : i32
    %c0_i32_0 = arith.constant 0 : i32
    %c0_i32_1 = arith.constant 0 : i32
    %c0_i32_2 = arith.constant 0 : i32
    return %c0_i32, %c0_i32_0, %c0_i32_1 : i32, i32, i32
  }
  func.func @transform_10(%arg0: i32) -> (i32, i32) {
    %c0_i32 = arith.constant 0 : i32
    %c0_i32_0 = arith.constant 0 : i32
    %c0_i32_1 = arith.constant 0 : i32
    return %c0_i32, %c0_i32_0 : i32, i32
  }
  func.func @transform_11(%arg0: i32) -> (i32, i32) {
    %c0_i32 = arith.constant 0 : i32
    %c0_i32_0 = arith.constant 0 : i32
    %c0_i32_1 = arith.constant 0 : i32
    return %c0_i32, %c0_i32_0 : i32, i32
  }
  func.func @transform_12(%arg0: i32) -> (i32, i32) {
    %c0_i32 = arith.constant 0 : i32
    %c0_i32_0 = arith.constant 0 : i32
    %c0_i32_1 = arith.constant 0 : i32
    return %c0_i32, %c0_i32_0 : i32, i32
  }
  func.func @transform_13(%arg0: i32) -> (i32, i32, i32) {
    %c0_i32 = arith.constant 0 : i32
    %c0_i32_0 = arith.constant 0 : i32
    %c0_i32_1 = arith.constant 0 : i32
    %c0_i32_2 = arith.constant 0 : i32
    return %c0_i32, %c0_i32_0, %c0_i32_1 : i32, i32, i32
  }
  func.func @transform_14(%arg0: i32) -> (i32, i32) {
    %c0_i32 = arith.constant 0 : i32
    %c0_i32_0 = arith.constant 0 : i32
    %c0_i32_1 = arith.constant 0 : i32
    return %c0_i32, %c0_i32_0 : i32, i32
  }
  func.func @transform_15(%arg0: i32) -> (i32, i32) {
    %c0_i32 = arith.constant 0 : i32
    %c0_i32_0 = arith.constant 0 : i32
    %c0_i32_1 = arith.constant 0 : i32
    return %c0_i32, %c0_i32_0 : i32, i32
  }
  func.func @transform_16(%arg0: i32) -> (i32, i32) {
    %c0_i32 = arith.constant 0 : i32
    %c0_i32_0 = arith.constant 0 : i32
    %c0_i32_1 = arith.constant 0 : i32
    return %c0_i32, %c0_i32_0 : i32, i32
  }
  func.func @transform_17(%arg0: i32) -> (i32, i32, i32) {
    %c0_i32 = arith.constant 0 : i32
    %c0_i32_0 = arith.constant 0 : i32
    %c0_i32_1 = arith.constant 0 : i32
    %c0_i32_2 = arith.constant 0 : i32
    return %c0_i32, %c0_i32_0, %c0_i32_1 : i32, i32, i32
  }
  func.func @transform_18(%arg0: i32) -> (i32, i32) {
    %c0_i32 = arith.constant 0 : i32
    %c0_i32_0 = arith.constant 0 : i32
    %c0_i32_1 = arith.constant 0 : i32
    return %c0_i32, %c0_i32_0 : i32, i32
  }
  func.func @transform_19(%arg0: i32) -> (i32, i32) {
    %c0_i32 = arith.constant 0 : i32
    %c0_i32_0 = arith.constant 0 : i32
    return %arg0, %c0_i32 : i32, i32
  }
}

</mosaic_0001>

<llo_original>
// kernel: tpu_custom_call.1
$region0: #{tpu_custom_call.1}
  #allocation0 [shape = 'u32[]', space=smem, size = 0x4, offset = 0x4, fixed_abs, tag = 'smem constant byte address 0x4 - core index']
  #allocation1 [shape = 'u32[72,128]{1,0:T(1,128)}', space=vmem, size = 0x9000, scoped, tag = 'internal scratch']
  #allocation2 [shape = 'bf16[176,64]{1,0:T(8,128)(2,1)}', space=vmem, size = 0xb000, scoped, tag = 'scratch operand']
  %s0 = inlined_call_operand.vmem [shape: bf16[288,16], index: 0, kind: input, shape index: {}]
  %s1 = inlined_call_operand.vmem [shape: bf16[16,64], index: 1, kind: input, shape index: {}]
  %s2 = inlined_call_operand.vmem [shape: f32[1,64], index: 2, kind: input, shape index: {}]
  %s3 = inlined_call_operand.vmem [shape: f32[1,64], index: 3, kind: input, shape index: {}]
  %s4 = inlined_call_operand.vmem [shape: f32[1,64], index: 4, kind: input, shape index: {}]
  %s5 = inlined_call_operand.vmem [shape: bf16[3,64,64], index: 5, kind: input, shape index: {}]
  %s6 = inlined_call_operand.vmem [shape: f32[1,64], index: 6, kind: input, shape index: {}]
  %s7 = inlined_call_operand.vmem [shape: f32[1,64], index: 7, kind: input, shape index: {}]
  %s8 = inlined_call_operand.vmem [shape: f32[1,64], index: 8, kind: input, shape index: {}]
  %s9 = inlined_call_operand.vmem [shape: bf16[5,64,64], index: 9, kind: input, shape index: {}]
  %s10 = inlined_call_operand.vmem [shape: f32[1,64], index: 10, kind: input, shape index: {}]
  %s11 = inlined_call_operand.vmem [shape: f32[1,64], index: 11, kind: input, shape index: {}]
  %s12 = inlined_call_operand.vmem [shape: f32[1,64], index: 12, kind: input, shape index: {}]
  %s13 = inlined_call_operand.vmem [shape: bf16[3,64,64], index: 13, kind: input, shape index: {}]
  %s14 = inlined_call_operand.vmem [shape: f32[1,64], index: 14, kind: input, shape index: {}]
  %s15 = inlined_call_operand.vmem [shape: f32[1,64], index: 15, kind: input, shape index: {}]
  %s16 = inlined_call_operand.vmem [shape: f32[1,64], index: 16, kind: input, shape index: {}]
  %s17 = inlined_call_operand.vmem [shape: bf16[9,64,2], index: 17, kind: input, shape index: {}]
  %s18 = inlined_call_operand.vmem [shape: f32[1,2], index: 18, kind: input, shape index: {}]
  %s19 = inlined_call_operand.vmem [shape: f32[288,2], index: 19, kind: output, shape index: {}]
  %s20 = sld [smem:[#allocation0]]
  $region109: #{tpu_custom_call.1} parent=0
    _
  %s22 = ssub.s32 1, %s20
  %s23 = scalar_select 0, %s22, %s20
  loop: start=0, step=1, limit=4
  $region2: #{tpu_custom_call.1} parent=0 // loop_pre_header
    _
  $region3: #{tpu_custom_call.1} parent=0 // loop_header
    %s25 = sphi 0, %s29
    %p26 = scmp.ge.s32.totalorder %s25, 4
    %s35 = sphi 0, %s37
    %s38 = sphi 0, %s35
    %s39 = sphi 0, %s38
    %s55 = sphi 0, %s39
    %s59 = sphi 0, %s59
    %s61 = sphi 0, %s59
    %s62 = sphi 0, %s61
    %s76 = sphi 0, %s62
    %s80 = sphi 0, %s80
    %s82 = sphi 0, %s80
    %s83 = sphi 0, %s82
    %s97 = sphi 0, %s83
    %s101 = sphi 0, %s101
    %s103 = sphi 0, %s101
    %s104 = sphi 0, %s103
    %s118 = sphi 0, %s104
    %s122 = sphi 0, %s122
    %s124 = sphi 0, %s122
    %s125 = sphi 0, %s124
    %s139 = sphi 0, %s125
    %s143 = sphi 0, %s143
    %s145 = sphi 0, %s143
    %s146 = sphi 0, %s145
    %s160 = sphi 0, %s146
    %s164 = sphi 0, %s164
    %s166 = sphi 0, %s164
    %s167 = sphi 0, %s166
    %s181 = sphi 0, %s167
    %s185 = sphi 0, %s185
    %s187 = sphi 0, %s185
    %s188 = sphi 0, %s187
    %s202 = sphi 0, %s188
    %s206 = sphi 0, %s206
    %s208 = sphi 0, %s206
    %s209 = sphi 0, %s208
    %s223 = sphi 0, %s209
    %s227 = sphi 0, %s227
    %s229 = sphi 0, %s227
    %s230 = sphi 0, %s229
    %s244 = sphi 0, %s230
    %s248 = sphi 0, %s248
    %s250 = sphi 0, %s248
    %s251 = sphi 0, %s250
    %s265 = sphi 0, %s251
    %s269 = sphi 0, %s269
    %s271 = sphi 0, %s269
    %s272 = sphi 0, %s271
    %s286 = sphi 0, %s272
    %s290 = sphi 0, %s290
    %s292 = sphi 0, %s290
    %s293 = sphi 0, %s292
    %s307 = sphi 0, %s293
    %s311 = sphi 0, %s311
    %s313 = sphi 0, %s311
    %s314 = sphi 0, %s313
    %s328 = sphi 0, %s314
    %s332 = sphi 0, %s332
    %s334 = sphi 0, %s332
    %s335 = sphi 0, %s334
    %s349 = sphi 0, %s335
    %s353 = sphi 0, %s353
    %s355 = sphi 0, %s353
    %s356 = sphi 0, %s355
    %s370 = sphi 0, %s356
    %s374 = sphi 0, %s374
    %s376 = sphi 0, %s374
    %s377 = sphi 0, %s376
    %s391 = sphi 0, %s377
    %s395 = sphi 0, %s395
    %s397 = sphi 0, %s395
    %s398 = sphi 0, %s397
    %s412 = sphi 0, %s398
    %s416 = sphi 0, %s416
    %s418 = sphi 0, %s416
    %s419 = sphi 0, %s418
    %s433 = sphi 0, %s419
    %s439 = sphi 0, %s441
    %s442 = sphi 0, %s439
    %s443 = sphi 0, %s442
    %s459 = sphi 0, %s443
  $region4: #{tpu_custom_call.1} parent=0 // loop_header_branch
    %28 = sbr.rel (%p26) target = $region8
  $region5: #{tpu_custom_call.1} parent=0 // loop_body
    %s30 = ssub.s32 %s25, 1
    %s31 = ssub.s32 %s25, 2
    %s32 = sadd.s32 %s25, 1
    %s33 = ssub.s32 %s25, %s32
    %p34 = scmp.eq.s32.totalorder %s33, 0
    %s36 = sadd.s32 %s35, 1
    %s37 = scalar_select %p34, %s35, %s36
    %p40 = pneg %p34
    %p41 = scmp.eq.s32.totalorder %s25, 1
    %p42 = por %p40, %p41
    %p43 = scmp.ne.s32.totalorder %s35, %s38
    %p44 = scmp.eq.s32.totalorder %s25, 0
    %p45 = por %p43, %p44
    %p46 = scmp.ne.s32.totalorder %s35, %s38
    %p47 = scmp.eq.s32.totalorder %s30, 1
    %p48 = por %p46, %p47
    %p49 = scmp.ne.s32.totalorder %s38, %s39
    %p50 = scmp.eq.s32.totalorder %s30, 0
    %p51 = por %p49, %p50
    %p52 = scmp.ne.s32.totalorder %s38, %s39
    %p53 = scmp.eq.s32.totalorder %s31, 1
    %p54 = por %p52, %p53
    %p56 = scmp.ne.s32.totalorder %s39, %s55
    %p57 = scmp.eq.s32.totalorder %s31, 0
    %p58 = por %p56, %p57
    %s60 = sadd.s32 %s59, 1
    %p63 = scmp.eq.s32.totalorder %s25, 1
    %p64 = scmp.ne.s32.totalorder %s59, %s61
    %p65 = scmp.eq.s32.totalorder %s25, 0
    %p66 = por %p64, %p65
    %p67 = scmp.ne.s32.totalorder %s59, %s61
    %p68 = scmp.eq.s32.totalorder %s30, 1
    %p69 = por %p67, %p68
    %p70 = scmp.ne.s32.totalorder %s61, %s62
    %p71 = scmp.eq.s32.totalorder %s30, 0
    %p72 = por %p70, %p71
    %p73 = scmp.ne.s32.totalorder %s61, %s62
    %p74 = scmp.eq.s32.totalorder %s31, 1
    %p75 = por %p73, %p74
    %p77 = scmp.ne.s32.totalorder %s62, %s76
    %p78 = scmp.eq.s32.totalorder %s31, 0
    %p79 = por %p77, %p78
    %s81 = sadd.s32 %s80, 1
    %p84 = scmp.eq.s32.totalorder %s25, 1
    %p85 = scmp.ne.s32.totalorder %s80, %s82
    %p86 = scmp.eq.s32.totalorder %s25, 0
    %p87 = por %p85, %p86
    %p88 = scmp.ne.s32.totalorder %s80, %s82
    %p89 = scmp.eq.s32.totalorder %s30, 1
    %p90 = por %p88, %p89
    %p91 = scmp.ne.s32.totalorder %s82, %s83
    %p92 = scmp.eq.s32.totalorder %s30, 0
    %p93 = por %p91, %p92
    %p94 = scmp.ne.s32.totalorder %s82, %s83
    %p95 = scmp.eq.s32.totalorder %s31, 1
    %p96 = por %p94, %p95
    %p98 = scmp.ne.s32.totalorder %s83, %s97
    %p99 = scmp.eq.s32.totalorder %s31, 0
    %p100 = por %p98, %p99
    %s102 = sadd.s32 %s101, 1
    %p105 = scmp.eq.s32.totalorder %s25, 1
    %p106 = scmp.ne.s32.totalorder %s101, %s103
    %p107 = scmp.eq.s32.totalorder %s25, 0
    %p108 = por %p106, %p107
    %p109 = scmp.ne.s32.totalorder %s101, %s103
    %p110 = scmp.eq.s32.totalorder %s30, 1
    %p111 = por %p109, %p110
    %p112 = scmp.ne.s32.totalorder %s103, %s104
    %p113 = scmp.eq.s32.totalorder %s30, 0
    %p114 = por %p112, %p113
    %p115 = scmp.ne.s32.totalorder %s103, %s104
    %p116 = scmp.eq.s32.totalorder %s31, 1
    %p117 = por %p115, %p116
    %p119 = scmp.ne.s32.totalorder %s104, %s118
    %p120 = scmp.eq.s32.totalorder %s31, 0
    %p121 = por %p119, %p120
    %s123 = sadd.s32 %s122, 1
    %p126 = scmp.eq.s32.totalorder %s25, 1
    %p127 = scmp.ne.s32.totalorder %s122, %s124
    %p128 = scmp.eq.s32.totalorder %s25, 0
    %p129 = por %p127, %p128
    %p130 = scmp.ne.s32.totalorder %s122, %s124
    %p131 = scmp.eq.s32.totalorder %s30, 1
    %p132 = por %p130, %p131
    %p133 = scmp.ne.s32.totalorder %s124, %s125
    %p134 = scmp.eq.s32.totalorder %s30, 0
    %p135 = por %p133, %p134
    %p136 = scmp.ne.s32.totalorder %s124, %s125
    %p137 = scmp.eq.s32.totalorder %s31, 1
    %p138 = por %p136, %p137
    %p140 = scmp.ne.s32.totalorder %s125, %s139
    %p141 = scmp.eq.s32.totalorder %s31, 0
    %p142 = por %p140, %p141
    %s144 = sadd.s32 %s143, 1
    %p147 = scmp.eq.s32.totalorder %s25, 1
    %p148 = scmp.ne.s32.totalorder %s143, %s145
    %p149 = scmp.eq.s32.totalorder %s25, 0
    %p150 = por %p148, %p149
    %p151 = scmp.ne.s32.totalorder %s143, %s145
    %p152 = scmp.eq.s32.totalorder %s30, 1
    %p153 = por %p151, %p152
    %p154 = scmp.ne.s32.totalorder %s145, %s146
    %p155 = scmp.eq.s32.totalorder %s30, 0
    %p156 = por %p154, %p155
    %p157 = scmp.ne.s32.totalorder %s145, %s146
    %p158 = scmp.eq.s32.totalorder %s31, 1
    %p159 = por %p157, %p158
    %p161 = scmp.ne.s32.totalorder %s146, %s160
    %p162 = scmp.eq.s32.totalorder %s31, 0
    %p163 = por %p161, %p162
    %s165 = sadd.s32 %s164, 1
    %p168 = scmp.eq.s32.totalorder %s25, 1
    %p169 = scmp.ne.s32.totalorder %s164, %s166
    %p170 = scmp.eq.s32.totalorder %s25, 0
    %p171 = por %p169, %p170
    %p172 = scmp.ne.s32.totalorder %s164, %s166
    %p173 = scmp.eq.s32.totalorder %s30, 1
    %p174 = por %p172, %p173
    %p175 = scmp.ne.s32.totalorder %s166, %s167
    %p176 = scmp.eq.s32.totalorder %s30, 0
    %p177 = por %p175, %p176
    %p178 = scmp.ne.s32.totalorder %s166, %s167
    %p179 = scmp.eq.s32.totalorder %s31, 1
    %p180 = por %p178, %p179
    %p182 = scmp.ne.s32.totalorder %s167, %s181
    %p183 = scmp.eq.s32.totalorder %s31, 0
    %p184 = por %p182, %p183
    %s186 = sadd.s32 %s185, 1
    %p189 = scmp.eq.s32.totalorder %s25, 1
    %p190 = scmp.ne.s32.totalorder %s185, %s187
    %p191 = scmp.eq.s32.totalorder %s25, 0
    %p192 = por %p190, %p191
    %p193 = scmp.ne.s32.totalorder %s185, %s187
    %p194 = scmp.eq.s32.totalorder %s30, 1
    %p195 = por %p193, %p194
    %p196 = scmp.ne.s32.totalorder %s187, %s188
    %p197 = scmp.eq.s32.totalorder %s30, 0
    %p198 = por %p196, %p197
    %p199 = scmp.ne.s32.totalorder %s187, %s188
    %p200 = scmp.eq.s32.totalorder %s31, 1
    %p201 = por %p199, %p200
    %p203 = scmp.ne.s32.totalorder %s188, %s202
    %p204 = scmp.eq.s32.totalorder %s31, 0
    %p205 = por %p203, %p204
    %s207 = sadd.s32 %s206, 1
    %p210 = scmp.eq.s32.totalorder %s25, 1
    %p211 = scmp.ne.s32.totalorder %s206, %s208
    %p212 = scmp.eq.s32.totalorder %s25, 0
    %p213 = por %p211, %p212
    %p214 = scmp.ne.s32.totalorder %s206, %s208
    %p215 = scmp.eq.s32.totalorder %s30, 1
    %p216 = por %p214, %p215
    %p217 = scmp.ne.s32.totalorder %s208, %s209
    %p218 = scmp.eq.s32.totalorder %s30, 0
    %p219 = por %p217, %p218
    %p220 = scmp.ne.s32.totalorder %s208, %s209
    %p221 = scmp.eq.s32.totalorder %s31, 1
    %p222 = por %p220, %p221
    %p224 = scmp.ne.s32.totalorder %s209, %s223
    %p225 = scmp.eq.s32.totalorder %s31, 0
    %p226 = por %p224, %p225
    %s228 = sadd.s32 %s227, 1
    %p231 = scmp.eq.s32.totalorder %s25, 1
    %p232 = scmp.ne.s32.totalorder %s227, %s229
    %p233 = scmp.eq.s32.totalorder %s25, 0
    %p234 = por %p232, %p233
    %p235 = scmp.ne.s32.totalorder %s227, %s229
    %p236 = scmp.eq.s32.totalorder %s30, 1
    %p237 = por %p235, %p236
    %p238 = scmp.ne.s32.totalorder %s229, %s230
    %p239 = scmp.eq.s32.totalorder %s30, 0
    %p240 = por %p238, %p239
    %p241 = scmp.ne.s32.totalorder %s229, %s230
    %p242 = scmp.eq.s32.totalorder %s31, 1
    %p243 = por %p241, %p242
    %p245 = scmp.ne.s32.totalorder %s230, %s244
    %p246 = scmp.eq.s32.totalorder %s31, 0
    %p247 = por %p245, %p246
    %s249 = sadd.s32 %s248, 1
    %p252 = scmp.eq.s32.totalorder %s25, 1
    %p253 = scmp.ne.s32.totalorder %s248, %s250
    %p254 = scmp.eq.s32.totalorder %s25, 0
    %p255 = por %p253, %p254
    %p256 = scmp.ne.s32.totalorder %s248, %s250
    %p257 = scmp.eq.s32.totalorder %s30, 1
    %p258 = por %p256, %p257
    %p259 = scmp.ne.s32.totalorder %s250, %s251
    %p260 = scmp.eq.s32.totalorder %s30, 0
    %p261 = por %p259, %p260
    %p262 = scmp.ne.s32.totalorder %s250, %s251
    %p263 = scmp.eq.s32.totalorder %s31, 1
    %p264 = por %p262, %p263
    %p266 = scmp.ne.s32.totalorder %s251, %s265
    %p267 = scmp.eq.s32.totalorder %s31, 0
    %p268 = por %p266, %p267
    %s270 = sadd.s32 %s269, 1
    %p273 = scmp.eq.s32.totalorder %s25, 1
    %p274 = scmp.ne.s32.totalorder %s269, %s271
    %p275 = scmp.eq.s32.totalorder %s25, 0
    %p276 = por %p274, %p275
    %p277 = scmp.ne.s32.totalorder %s269, %s271
    %p278 = scmp.eq.s32.totalorder %s30, 1
    %p279 = por %p277, %p278
    %p280 = scmp.ne.s32.totalorder %s271, %s272
    %p281 = scmp.eq.s32.totalorder %s30, 0
    %p282 = por %p280, %p281
    %p283 = scmp.ne.s32.totalorder %s271, %s272
    %p284 = scmp.eq.s32.totalorder %s31, 1
    %p285 = por %p283, %p284
    %p287 = scmp.ne.s32.totalorder %s272, %s286
    %p288 = scmp.eq.s32.totalorder %s31, 0
    %p289 = por %p287, %p288
    %s291 = sadd.s32 %s290, 1
    %p294 = scmp.eq.s32.totalorder %s25, 1
    %p295 = scmp.ne.s32.totalorder %s290, %s292
    %p296 = scmp.eq.s32.totalorder %s25, 0
    %p297 = por %p295, %p296
    %p298 = scmp.ne.s32.totalorder %s290, %s292
    %p299 = scmp.eq.s32.totalorder %s30, 1
    %p300 = por %p298, %p299
    %p301 = scmp.ne.s32.totalorder %s292, %s293
    %p302 = scmp.eq.s32.totalorder %s30, 0
    %p303 = por %p301, %p302
    %p304 = scmp.ne.s32.totalorder %s292, %s293
    %p305 = scmp.eq.s32.totalorder %s31, 1
    %p306 = por %p304, %p305
    %p308 = scmp.ne.s32.totalorder %s293, %s307
    %p309 = scmp.eq.s32.totalorder %s31, 0
    %p310 = por %p308, %p309
    %s312 = sadd.s32 %s311, 1
    %p315 = scmp.eq.s32.totalorder %s25, 1
    %p316 = scmp.ne.s32.totalorder %s311, %s313
    %p317 = scmp.eq.s32.totalorder %s25, 0
    %p318 = por %p316, %p317
    %p319 = scmp.ne.s32.totalorder %s311, %s313
    %p320 = scmp.eq.s32.totalorder %s30, 1
    %p321 = por %p319, %p320
    %p322 = scmp.ne.s32.totalorder %s313, %s314
    %p323 = scmp.eq.s32.totalorder %s30, 0
    %p324 = por %p322, %p323
    %p325 = scmp.ne.s32.totalorder %s313, %s314
    %p326 = scmp.eq.s32.totalorder %s31, 1
    %p327 = por %p325, %p326
    %p329 = scmp.ne.s32.totalorder %s314, %s328
    %p330 = scmp.eq.s32.totalorder %s31, 0
    %p331 = por %p329, %p330
    %s333 = sadd.s32 %s332, 1
    %p336 = scmp.eq.s32.totalorder %s25, 1
    %p337 = scmp.ne.s32.totalorder %s332, %s334
    %p338 = scmp.eq.s32.totalorder %s25, 0
    %p339 = por %p337, %p338
    %p340 = scmp.ne.s32.totalorder %s332, %s334
    %p341 = scmp.eq.s32.totalorder %s30, 1
    %p342 = por %p340, %p341
    %p343 = scmp.ne.s32.totalorder %s334, %s335
    %p344 = scmp.eq.s32.totalorder %s30, 0
    %p345 = por %p343, %p344
    %p346 = scmp.ne.s32.totalorder %s334, %s335
    %p347 = scmp.eq.s32.totalorder %s31, 1
    %p348 = por %p346, %p347
    %p350 = scmp.ne.s32.totalorder %s335, %s349
    %p351 = scmp.eq.s32.totalorder %s31, 0
    %p352 = por %p350, %p351
    %s354 = sadd.s32 %s353, 1
    %p357 = scmp.eq.s32.totalorder %s25, 1
    %p358 = scmp.ne.s32.totalorder %s353, %s355
    %p359 = scmp.eq.s32.totalorder %s25, 0
    %p360 = por %p358, %p359
    %p361 = scmp.ne.s32.totalorder %s353, %s355
    %p362 = scmp.eq.s32.totalorder %s30, 1
    %p363 = por %p361, %p362
    %p364 = scmp.ne.s32.totalorder %s355, %s356
    %p365 = scmp.eq.s32.totalorder %s30, 0
    %p366 = por %p364, %p365
    %p367 = scmp.ne.s32.totalorder %s355, %s356
    %p368 = scmp.eq.s32.totalorder %s31, 1
    %p369 = por %p367, %p368
    %p371 = scmp.ne.s32.totalorder %s356, %s370
    %p372 = scmp.eq.s32.totalorder %s31, 0
    %p373 = por %p371, %p372
    %s375 = sadd.s32 %s374, 1
    %p378 = scmp.eq.s32.totalorder %s25, 1
    %p379 = scmp.ne.s32.totalorder %s374, %s376
    %p380 = scmp.eq.s32.totalorder %s25, 0
    %p381 = por %p379, %p380
    %p382 = scmp.ne.s32.totalorder %s374, %s376
    %p383 = scmp.eq.s32.totalorder %s30, 1
    %p384 = por %p382, %p383
    %p385 = scmp.ne.s32.totalorder %s376, %s377
    %p386 = scmp.eq.s32.totalorder %s30, 0
    %p387 = por %p385, %p386
    %p388 = scmp.ne.s32.totalorder %s376, %s377
    %p389 = scmp.eq.s32.totalorder %s31, 1
    %p390 = por %p388, %p389
    %p392 = scmp.ne.s32.totalorder %s377, %s391
    %p393 = scmp.eq.s32.totalorder %s31, 0
    %p394 = por %p392, %p393
    %s396 = sadd.s32 %s395, 1
    %p399 = scmp.eq.s32.totalorder %s25, 1
    %p400 = scmp.ne.s32.totalorder %s395, %s397
    %p401 = scmp.eq.s32.totalorder %s25, 0
    %p402 = por %p400, %p401
    %p403 = scmp.ne.s32.totalorder %s395, %s397
    %p404 = scmp.eq.s32.totalorder %s30, 1
    %p405 = por %p403, %p404
    %p406 = scmp.ne.s32.totalorder %s397, %s398
    %p407 = scmp.eq.s32.totalorder %s30, 0
    %p408 = por %p406, %p407
    %p409 = scmp.ne.s32.totalorder %s397, %s398
    %p410 = scmp.eq.s32.totalorder %s31, 1
    %p411 = por %p409, %p410
    %p413 = scmp.ne.s32.totalorder %s398, %s412
    %p414 = scmp.eq.s32.totalorder %s31, 0
    %p415 = por %p413, %p414
    %s417 = sadd.s32 %s416, 1
    %p420 = scmp.eq.s32.totalorder %s25, 1
    %p421 = scmp.ne.s32.totalorder %s416, %s418
    %p422 = scmp.eq.s32.totalorder %s25, 0
    %p423 = por %p421, %p422
    %p424 = scmp.ne.s32.totalorder %s416, %s418
    %p425 = scmp.eq.s32.totalorder %s30, 1
    %p426 = por %p424, %p425
    %p427 = scmp.ne.s32.totalorder %s418, %s419
    %p428 = scmp.eq.s32.totalorder %s30, 0
    %p429 = por %p427, %p428
    %p430 = scmp.ne.s32.totalorder %s418, %s419
    %p431 = scmp.eq.s32.totalorder %s31, 1
    %p432 = por %p430, %p431
    %p434 = scmp.ne.s32.totalorder %s419, %s433
    %p435 = scmp.eq.s32.totalorder %s31, 0
    %p436 = por %p434, %p435
    %s437 = ssub.s32 %s25, %s32
    %p438 = scmp.eq.s32.totalorder %s437, 0
    %s440 = sadd.s32 %s439, 1
    %s441 = scalar_select %p438, %s439, %s440
    %p444 = pneg %p438
    %p445 = scmp.eq.s32.totalorder %s25, 1
    %p446 = por %p444, %p445
    %p447 = scmp.ne.s32.totalorder %s439, %s442
    %p448 = scmp.eq.s32.totalorder %s25, 0
    %p449 = por %p447, %p448
    %p450 = scmp.ne.s32.totalorder %s439, %s442
    %p451 = scmp.eq.s32.totalorder %s30, 1
    %p452 = por %p450, %p451
    %p453 = scmp.ne.s32.totalorder %s442, %s443
    %p454 = scmp.eq.s32.totalorder %s30, 0
    %p455 = por %p453, %p454
    %p456 = scmp.ne.s32.totalorder %s442, %s443
    %p457 = scmp.eq.s32.totalorder %s31, 1
    %p458 = por %p456, %p457
    %p460 = scmp.ne.s32.totalorder %s443, %s459
    %p461 = scmp.eq.s32.totalorder %s31, 0
    %p462 = por %p460, %p461
    %p463 = scmp.le.s32.totalorder 1, %s25
    %p464 = scmp.lt.s32.totalorder %s25, 3
    %p465 = pnand %p463, %p464
    %p466 = pneg %p465
    // Predicated region
    $region9: #{tpu_custom_call.1} parent=5 // pred_check
      _
    $region10: #{tpu_custom_call.1} parent=5 // pred_check_branch
      %468 = sbr.rel (%p465) target = $region12
    $region11: #{tpu_custom_call.1} parent=5 // pred_region
      %s469 = ssub.s32 %s25, 1
      // Predicated region
      $region13: #{tpu_custom_call.1} parent=11 // pred_check
        %p470 = pneg %p72
      $region14: #{tpu_custom_call.1} parent=11 // pred_check_branch
        %472 = sbr.rel (%p470) target = $region16
      $region15: #{tpu_custom_call.1} parent=11 // pred_region
        _
      $region16: #{tpu_custom_call.1} parent=11 // pred_fallthru
        _
      // Predicated region
      $region17: #{tpu_custom_call.1} parent=11 // pred_check
        %p473 = pneg %p93
      $region18: #{tpu_custom_call.1} parent=11 // pred_check_branch
        %475 = sbr.rel (%p473) target = $region20
      $region19: #{tpu_custom_call.1} parent=11 // pred_region
        _
      $region20: #{tpu_custom_call.1} parent=11 // pred_fallthru
        _
      // Predicated region
      $region21: #{tpu_custom_call.1} parent=11 // pred_check
        %p476 = pneg %p114
      $region22: #{tpu_custom_call.1} parent=11 // pred_check_branch
        %478 = sbr.rel (%p476) target = $region24
      $region23: #{tpu_custom_call.1} parent=11 // pred_region
        _
      $region24: #{tpu_custom_call.1} parent=11 // pred_fallthru
        _
      // Predicated region
      $region25: #{tpu_custom_call.1} parent=11 // pred_check
        %p479 = pneg %p135
      $region26: #{tpu_custom_call.1} parent=11 // pred_check_branch
        %481 = sbr.rel (%p479) target = $region28
      $region27: #{tpu_custom_call.1} parent=11 // pred_region
        _
      $region28: #{tpu_custom_call.1} parent=11 // pred_fallthru
        _
      // Predicated region
      $region29: #{tpu_custom_call.1} parent=11 // pred_check
        %p482 = pneg %p156
      $region30: #{tpu_custom_call.1} parent=11 // pred_check_branch
        %484 = sbr.rel (%p482) target = $region32
      $region31: #{tpu_custom_call.1} parent=11 // pred_region
        _
      $region32: #{tpu_custom_call.1} parent=11 // pred_fallthru
        _
      // Predicated region
      $region33: #{tpu_custom_call.1} parent=11 // pred_check
        %p485 = pneg %p177
      $region34: #{tpu_custom_call.1} parent=11 // pred_check_branch
        %487 = sbr.rel (%p485) target = $region36
      $region35: #{tpu_custom_call.1} parent=11 // pred_region
        _
      $region36: #{tpu_custom_call.1} parent=11 // pred_fallthru
        _
      // Predicated region
      $region37: #{tpu_custom_call.1} parent=11 // pred_check
        %p488 = pneg %p198
      $region38: #{tpu_custom_call.1} parent=11 // pred_check_branch
        %490 = sbr.rel (%p488) target = $region40
      $region39: #{tpu_custom_call.1} parent=11 // pred_region
        _
      $region40: #{tpu_custom_call.1} parent=11 // pred_fallthru
        _
      // Predicated region
      $region41: #{tpu_custom_call.1} parent=11 // pred_check
        %p491 = pneg %p219
      $region42: #{tpu_custom_call.1} parent=11 // pred_check_branch
        %493 = sbr.rel (%p491) target = $region44
      $region43: #{tpu_custom_call.1} parent=11 // pred_region
        _
      $region44: #{tpu_custom_call.1} parent=11 // pred_fallthru
        _
      // Predicated region
      $region45: #{tpu_custom_call.1} parent=11 // pred_check
        %p494 = pneg %p240
      $region46: #{tpu_custom_call.1} parent=11 // pred_check_branch
        %496 = sbr.rel (%p494) target = $region48
      $region47: #{tpu_custom_call.1} parent=11 // pred_region
        _
      $region48: #{tpu_custom_call.1} parent=11 // pred_fallthru
        _
      // Predicated region
      $region49: #{tpu_custom_call.1} parent=11 // pred_check
        %p497 = pneg %p261
      $region50: #{tpu_custom_call.1} parent=11 // pred_check_branch
        %499 = sbr.rel (%p497) target = $region52
      $region51: #{tpu_custom_call.1} parent=11 // pred_region
        _
      $region52: #{tpu_custom_call.1} parent=11 // pred_fallthru
        _
      // Predicated region
      $region53: #{tpu_custom_call.1} parent=11 // pred_check
        %p500 = pneg %p282
      $region54: #{tpu_custom_call.1} parent=11 // pred_check_branch
        %502 = sbr.rel (%p500) target = $region56
      $region55: #{tpu_custom_call.1} parent=11 // pred_region
        _
      $region56: #{tpu_custom_call.1} parent=11 // pred_fallthru
        _
      // Predicated region
      $region57: #{tpu_custom_call.1} parent=11 // pred_check
        %p503 = pneg %p303
      $region58: #{tpu_custom_call.1} parent=11 // pred_check_branch
        %505 = sbr.rel (%p503) target = $region60
      $region59: #{tpu_custom_call.1} parent=11 // pred_region
        _
      $region60: #{tpu_custom_call.1} parent=11 // pred_fallthru
        _
      // Predicated region
      $region61: #{tpu_custom_call.1} parent=11 // pred_check
        %p506 = pneg %p324
      $region62: #{tpu_custom_call.1} parent=11 // pred_check_branch
        %508 = sbr.rel (%p506) target = $region64
      $region63: #{tpu_custom_call.1} parent=11 // pred_region
        _
      $region64: #{tpu_custom_call.1} parent=11 // pred_fallthru
        _
      // Predicated region
      $region65: #{tpu_custom_call.1} parent=11 // pred_check
        %p509 = pneg %p345
      $region66: #{tpu_custom_call.1} parent=11 // pred_check_branch
        %511 = sbr.rel (%p509) target = $region68
      $region67: #{tpu_custom_call.1} parent=11 // pred_region
        _
      $region68: #{tpu_custom_call.1} parent=11 // pred_fallthru
        _
      // Predicated region
      $region69: #{tpu_custom_call.1} parent=11 // pred_check
        %p512 = pneg %p366
      $region70: #{tpu_custom_call.1} parent=11 // pred_check_branch
        %514 = sbr.rel (%p512) target = $region72
      $region71: #{tpu_custom_call.1} parent=11 // pred_region
        _
      $region72: #{tpu_custom_call.1} parent=11 // pred_fallthru
        _
      // Predicated region
      $region73: #{tpu_custom_call.1} parent=11 // pred_check
        %p515 = pneg %p387
      $region74: #{tpu_custom_call.1} parent=11 // pred_check_branch
        %517 = sbr.rel (%p515) target = $region76
      $region75: #{tpu_custom_call.1} parent=11 // pred_region
        _
      $region76: #{tpu_custom_call.1} parent=11 // pred_fallthru
        _
      // Predicated region
      $region77: #{tpu_custom_call.1} parent=11 // pred_check
        %p518 = pneg %p408
      $region78: #{tpu_custom_call.1} parent=11 // pred_check_branch
        %520 = sbr.rel (%p518) target = $region80
      $region79: #{tpu_custom_call.1} parent=11 // pred_region
        _
      $region80: #{tpu_custom_call.1} parent=11 // pred_fallthru
        _
      // Predicated region
      $region81: #{tpu_custom_call.1} parent=11 // pred_check
        %p521 = pneg %p429
      $region82: #{tpu_custom_call.1} parent=11 // pred_check_branch
        %523 = sbr.rel (%p521) target = $region84
      $region83: #{tpu_custom_call.1} parent=11 // pred_region
        _
      $region84: #{tpu_custom_call.1} parent=11 // pred_fallthru
        _
    $region12: #{tpu_custom_call.1} parent=5 // pred_fallthru
      _
    %p524 = scmp.lt.s32.totalorder %s25, 2
    // Predicated region
    $region85: #{tpu_custom_call.1} parent=5 // pred_check
      %p525 = pneg %p524
    $region86: #{tpu_custom_call.1} parent=5 // pred_check_branch
      %527 = sbr.rel (%p525) target = $region88
    $region87: #{tpu_custom_call.1} parent=5 // pred_region
      // Predicated region
      $region89: #{tpu_custom_call.1} parent=87 // pred_check
        %p528 = pneg %p45
      $region90: #{tpu_custom_call.1} parent=87 // pred_check_branch
        %530 = sbr.rel (%p528) target = $region92
      $region91: #{tpu_custom_call.1} parent=87 // pred_region
        %s531 = smul.u32 18, %s25
        %p532 = scmp.lt.s32.totalorder %s531, 35
        %s533 = scalar_select %p532, %s531, 35
        %s534 = smul.addr %s533, 4
        %s535 = scalar_lea.vmem %s0, %s534
        %s536 = smul.u32 18, %s25
      $region92: #{tpu_custom_call.1} parent=87 // pred_fallthru
        _
    $region88: #{tpu_custom_call.1} parent=5 // pred_fallthru
      _
    %p537 = scmp.le.s32.totalorder 1, %s25
    %p538 = scmp.lt.s32.totalorder %s25, 3
    %p539 = pnand %p537, %p538
    %p540 = pneg %p539
    // Predicated region
    $region93: #{tpu_custom_call.1} parent=5 // pred_check
      _
    $region94: #{tpu_custom_call.1} parent=5 // pred_check_branch
      %542 = sbr.rel (%p539) target = $region96
    $region95: #{tpu_custom_call.1} parent=5 // pred_region
      %s543 = ssub.s32 %s25, 1
      %s544 = smul.u32 18, %s30
      %p545 = scmp.lt.s32.totalorder %s544, 35
      %s546 = scalar_select %p545, %s544, 35
      %s547 = smul.addr %s546, 4
      %s548 = scalar_lea.vmem %s0, %s547
      %p549 = pneg %p51
      %p550 = pneg %p48
      %p551 = pneg %p72
      %p552 = pneg %p69
      %p553 = pneg %p93
      %p554 = pneg %p90
      %p555 = pneg %p114
      %p556 = pneg %p111
      %p557 = pneg %p135
      %p558 = pneg %p132
      %p559 = pneg %p156
      %p560 = pneg %p153
      %p561 = pneg %p177
      %p562 = pneg %p174
      %p563 = pneg %p198
      %p564 = pneg %p195
      %p565 = pneg %p219
      %p566 = pneg %p216
      %p567 = pneg %p240
      %p568 = pneg %p237
      %p569 = pneg %p261
      %p570 = pneg %p258
      %p571 = pneg %p282
      %p572 = pneg %p279
      %p573 = pneg %p303
      %p574 = pneg %p300
      %p575 = pneg %p324
      %p576 = pneg %p321
      %p577 = pneg %p345
      %p578 = pneg %p342
      %p579 = pneg %p366
      %p580 = pneg %p363
      %p581 = pneg %p387
      %p582 = pneg %p384
      %p583 = pneg %p408
      %p584 = pneg %p405
      %p585 = pneg %p429
      %p586 = pneg %p426
      %p587 = pneg %p455
      %p588 = pneg %p452
      %s589 = smul.u32 18, %s30
      %p590 = scmp.lt.s32.totalorder %s589, 35
      %s591 = scalar_select %p590, %s589, 35
      %s592 = smul.addr %s591, 8
      %s593 = scalar_lea.vmem %s19, %s592
      %s594 = smul.u32 18, %s30
      %p595 = scmp.lt.s32.totalorder %s594, 35
      %s596 = scalar_select %p595, %s594, 35
      %s597 = smul.addr %s596, 4
      %s598 = scalar_lea.vmem %s0, %s597
      %s599 = smul.u32 18, %s30
      %s600 = smul.u32 18, %s30
      %p601 = scmp.lt.s32.totalorder %s600, 35
      %s602 = scalar_select %p601, %s600, 35
      %s603 = smul.addr %s602, 8
      %s604 = scalar_lea.vmem %s19, %s603
      %s605 = smul.u32 18, %s30
      %v607 = vlaneseq
      %v608 = vshrl.u32 %v607, 7
      %v609 = vadd.s32 %v608, 8
      %v610 = vadd.s32 %v608, 16
      %v611 = vadd.s32 %v608, 24
      %v612 = vadd.s32 %v608, 32
      %v613 = vadd.s32 %v608, 40
      %v614 = vadd.s32 %v608, 48
      %v615 = vadd.s32 %v608, 56
      %v616 = vadd.s32 %v608, 64
      %v617 = vadd.s32 %v608, 72
      %v618 = vadd.s32 %v608, 80
      %v619 = vadd.s32 %v608, 88
      %v620 = vadd.s32 %v608, 96
      %v621 = vadd.s32 %v608, 104
      %v622 = vadd.s32 %v608, 112
      %v623 = vadd.s32 %v608, 120
      %v624 = vadd.s32 %v608, 128
      %v625 = vadd.s32 %v608, 136
      %vm626 = vcmp.ge.s32.totalorder %v608, 8
      %vm627 = vcmp.ge.s32.totalorder %v609, 8
      %vm628 = vcmp.ge.s32.totalorder %v610, 8
      %vm629 = vcmp.ge.s32.totalorder %v611, 8
      %vm630 = vcmp.ge.s32.totalorder %v612, 8
      %vm631 = vcmp.ge.s32.totalorder %v613, 8
      %vm632 = vcmp.ge.s32.totalorder %v614, 8
      %vm633 = vcmp.ge.s32.totalorder %v615, 8
      %vm634 = vcmp.ge.s32.totalorder %v616, 8
      %vm635 = vcmp.ge.s32.totalorder %v617, 8
      %vm636 = vcmp.ge.s32.totalorder %v618, 8
      %vm637 = vcmp.ge.s32.totalorder %v619, 8
      %vm638 = vcmp.ge.s32.totalorder %v620, 8
      %vm639 = vcmp.ge.s32.totalorder %v621, 8
      %vm640 = vcmp.ge.s32.totalorder %v622, 8
      %vm641 = vcmp.ge.s32.totalorder %v623, 8
      %vm642 = vcmp.ge.s32.totalorder %v624, 8
      %vm643 = vcmp.ge.s32.totalorder %v625, 8
      %vm644 = vcmp.lt.s32.totalorder %v608, 136
      %vm645 = vcmp.lt.s32.totalorder %v609, 136
      %vm646 = vcmp.lt.s32.totalorder %v610, 136
      %vm647 = vcmp.lt.s32.totalorder %v611, 136
      %vm648 = vcmp.lt.s32.totalorder %v612, 136
      %vm649 = vcmp.lt.s32.totalorder %v613, 136
      %vm650 = vcmp.lt.s32.totalorder %v614, 136
      %vm651 = vcmp.lt.s32.totalorder %v615, 136
      %vm652 = vcmp.lt.s32.totalorder %v616, 136
      %vm653 = vcmp.lt.s32.totalorder %v617, 136
      %vm654 = vcmp.lt.s32.totalorder %v618, 136
      %vm655 = vcmp.lt.s32.totalorder %v619, 136
      %vm656 = vcmp.lt.s32.totalorder %v620, 136
      %vm657 = vcmp.lt.s32.totalorder %v621, 136
      %vm658 = vcmp.lt.s32.totalorder %v622, 136
      %vm659 = vcmp.lt.s32.totalorder %v623, 136
      %vm660 = vcmp.lt.s32.totalorder %v624, 136
      %vm661 = vcmp.lt.s32.totalorder %v625, 136
      %vm662 = vmand %vm626, %vm644
      %vm663 = vmand %vm627, %vm645
      %vm664 = vmand %vm628, %vm646
      %vm665 = vmand %vm629, %vm647
      %vm666 = vmand %vm630, %vm648
      %vm667 = vmand %vm631, %vm649
      %vm668 = vmand %vm632, %vm650
      %vm669 = vmand %vm633, %vm651
      %vm670 = vmand %vm634, %vm652
      %vm671 = vmand %vm635, %vm653
      %vm672 = vmand %vm636, %vm654
      %vm673 = vmand %vm637, %vm655
      %vm674 = vmand %vm638, %vm656
      %vm675 = vmand %vm639, %vm657
      %vm676 = vmand %vm640, %vm658
      %vm677 = vmand %vm641, %vm659
      %vm678 = vmand %vm642, %vm660
      %vm679 = vmand %vm643, %vm661
      %v680 = vsel %vm662, 1.0, 0.0
      %v681 = vsel %vm663, 1.0, 0.0
      %v682 = vsel %vm664, 1.0, 0.0
      %v683 = vsel %vm665, 1.0, 0.0
      %v684 = vsel %vm666, 1.0, 0.0
      %v685 = vsel %vm667, 1.0, 0.0
      %v686 = vsel %vm668, 1.0, 0.0
      %v687 = vsel %vm669, 1.0, 0.0
      %v688 = vsel %vm670, 1.0, 0.0
      %v689 = vsel %vm671, 1.0, 0.0
      %v690 = vsel %vm672, 1.0, 0.0
      %v691 = vsel %vm673, 1.0, 0.0
      %v692 = vsel %vm674, 1.0, 0.0
      %v693 = vsel %vm675, 1.0, 0.0
      %v694 = vsel %vm676, 1.0, 0.0
      %v695 = vsel %vm677, 1.0, 0.0
      %v696 = vsel %vm678, 1.0, 0.0
      %v697 = vsel %vm679, 1.0, 0.0
      %vm698 = vcmask 519168
      %699 = vst.msk [vmem:[#allocation2] sm:$0xf] %vm698, 0
      %700 = vst.msk [vmem:[#allocation2 + $0x4] sm:$0xf] %vm698, 0
      %701 = vst.msk [vmem:[#allocation2 + $0x8] sm:$0xf] %vm698, 0
      %702 = vst.msk [vmem:[#allocation2 + $0xc] sm:$0xf] %vm698, 0
      %703 = vst.msk [vmem:[#allocation2 + $0x10] sm:$0xf] %vm698, 0
      %704 = vst.msk [vmem:[#allocation2 + $0x14] sm:$0xf] %vm698, 0
      %705 = vst.msk [vmem:[#allocation2 + $0x18] sm:$0xf] %vm698, 0
      %706 = vst.msk [vmem:[#allocation2 + $0x1c] sm:$0xf] %vm698, 0
      %707 = vst.msk [vmem:[#allocation2 + $0x20] sm:$0xf] %vm698, 0
      %708 = vst.msk [vmem:[#allocation2 + $0x24] sm:$0xf] %vm698, 0
      %709 = vst.msk [vmem:[#allocation2 + $0x28] sm:$0xf] %vm698, 0
      %710 = vst.msk [vmem:[#allocation2 + $0x2c] sm:$0xf] %vm698, 0
      %711 = vst.msk [vmem:[#allocation2 + $0x30] sm:$0xf] %vm698, 0
      %712 = vst.msk [vmem:[#allocation2 + $0x34] sm:$0xf] %vm698, 0
      %713 = vst.msk [vmem:[#allocation2 + $0x38] sm:$0xf] %vm698, 0
      %714 = vst.msk [vmem:[#allocation2 + $0x3c] sm:$0xf] %vm698, 0
      %715 = vst.msk [vmem:[#allocation2 + $0x40] sm:$0xf] %vm698, 0
      %716 = vst.msk [vmem:[#allocation2 + $0x44] sm:$0xf] %vm698, 0
      %717 = vst.msk [vmem:[#allocation2 + $0x48] sm:$0xf] %vm698, 0
      %718 = vst.msk [vmem:[#allocation2 + $0x4c] sm:$0xf] %vm698, 0
      %719 = vst.msk [vmem:[#allocation2 + $0x50] sm:$0xf] %vm698, 0
      %720 = vst.msk [vmem:[#allocation2 + $0x54] sm:$0xf] %vm698, 0
      %v721 = vld [vmem:[%s598] sm:$0xf]
      %v722 = vld [vmem:[%s598 + $0x4] sm:$0xf]
      %v723 = vld [vmem:[%s598 + $0x8] sm:$0xf]
      %v724 = vld [vmem:[%s598 + $0xc] sm:$0xf]
      %v725 = vld [vmem:[%s598 + $0x10] sm:$0xf]
      %v726 = vld [vmem:[%s598 + $0x14] sm:$0xf]
      %v727 = vld [vmem:[%s598 + $0x18] sm:$0xf]
      %v728 = vld [vmem:[%s598 + $0x1c] sm:$0xf]
      %v729 = vld [vmem:[%s598 + $0x20] sm:$0xf]
      %v730 = vld [vmem:[%s598 + $0x24] sm:$0xf]
      %v731 = vld [vmem:[%s598 + $0x28] sm:$0xf]
      %v732 = vld [vmem:[%s598 + $0x2c] sm:$0xf]
      %v733 = vld [vmem:[%s598 + $0x30] sm:$0xf]
      %v734 = vld [vmem:[%s598 + $0x34] sm:$0xf]
      %v735 = vld [vmem:[%s598 + $0x38] sm:$0xf]
      %v736 = vld [vmem:[%s598 + $0x3c] sm:$0xf]
      %v737 = vld [vmem:[%s598 + $0x40] sm:$0xf]
      %v738 = vld [vmem:[%s598 + $0x44] sm:$0xf]
      %v739 = vld [vmem:[%s1] sm:$0xf]
      %v740 = vld [vmem:[%s1 + $0x4] sm:$0xf]
      %v741 = vld [vmem:[%s2] sm:$0x1]
      %v743 = vperm.slane %v741, 0
      %v763 = vunpack.c.l.b16 %v721
      %v764 = vunpack.c.l.b16 %v722
      %v765 = vunpack.c.l.b16 %v723
      %v766 = vunpack.c.l.b16 %v724
      %v767 = vunpack.c.l.b16 %v725
      %v768 = vunpack.c.l.b16 %v726
      %v769 = vunpack.c.l.b16 %v727
      %v770 = vunpack.c.l.b16 %v728
      %v771 = vunpack.c.l.b16 %v729
      %v772 = vunpack.c.l.b16 %v730
      %v773 = vunpack.c.l.b16 %v731
      %v774 = vunpack.c.l.b16 %v732
      %v775 = vunpack.c.l.b16 %v733
      %v776 = vunpack.c.l.b16 %v734
      %v777 = vunpack.c.l.b16 %v735
      %v778 = vunpack.c.l.b16 %v736
      %v779 = vunpack.c.l.b16 %v737
      %v780 = vunpack.c.l.b16 %v738
      %v781 = vpack.c.b16 %v764, %v763
      %v782 = vpack.c.b16 %v766, %v765
      %v783 = vpack.c.b16 %v768, %v767
      %v784 = vpack.c.b16 %v770, %v769
      %v785 = vpack.c.b16 %v772, %v771
      %v786 = vpack.c.b16 %v774, %v773
      %v787 = vpack.c.b16 %v776, %v775
      %v788 = vpack.c.b16 %v778, %v777
      %v789 = vpack.c.b16 %v780, %v779
      %v792 = vunpack.c.l.b16 %v739
      %v793 = vunpack.c.l.b16 %v740
      %v794 = vpack.c.b16 %v793, %v792
      %vm796 = vcmask 130048
      %v798 = vsel %vm796, %v781, 0
      %v801 = vsel %vm796, %v782, 0
      %v804 = vsel %vm796, %v783, 0
      %v807 = vsel %vm796, %v784, 0
      %v810 = vsel %vm796, %v785, 0
      %v813 = vsel %vm796, %v786, 0
      %v816 = vsel %vm796, %v787, 0
      %v819 = vsel %vm796, %v788, 0
      %v822 = vsel %vm796, %v789, 0
      %824 = vmatpush.bf16.msra.mxu0 0
      %825 = vmatpush.bf16.msra.mxu0 0
      %826 = vmatpush.bf16.msra.mxu0 0
      %827 = vmatpush.bf16.msra.mxu0 0
      %828 = vmatpush.bf16.msra.mxu0 0
      %829 = vmatpush.bf16.msra.mxu0 0
      %830 = vmatpush.bf16.msra.mxu0 0
      %831 = vmatpush.bf16.msra.mxu0 %v794
      %832 = vmatmul.bf16.gmra.mxu0 %v798
      %v833 = vpop.f32.mrf.mxu0
      %v834 = vadd.f32 %v743, %v833
      %v835 = vpop.f32.mrf.mxu0
      %v836 = vadd.f32 %v743, %v835
      %837 = vmatmul.bf16.gmra.mxu0 %v801
      %v838 = vpop.f32.mrf.mxu0
      %v839 = vadd.f32 %v743, %v838
      %v840 = vpop.f32.mrf.mxu0
      %v841 = vadd.f32 %v743, %v840
      %842 = vmatmul.bf16.gmra.mxu0 %v804
      %v843 = vpop.f32.mrf.mxu0
      %v844 = vadd.f32 %v743, %v843
      %v845 = vpop.f32.mrf.mxu0
      %v846 = vadd.f32 %v743, %v845
      %847 = vmatmul.bf16.gmra.mxu0 %v807
      %v848 = vpop.f32.mrf.mxu0
      %v849 = vadd.f32 %v743, %v848
      %v850 = vpop.f32.mrf.mxu0
      %v851 = vadd.f32 %v743, %v850
      %852 = vmatmul.bf16.gmra.mxu0 %v810
      %v853 = vpop.f32.mrf.mxu0
      %v854 = vadd.f32 %v743, %v853
      %v855 = vpop.f32.mrf.mxu0
      %v856 = vadd.f32 %v743, %v855
      %857 = vmatmul.bf16.gmra.mxu0 %v813
      %v858 = vpop.f32.mrf.mxu0
      %v859 = vadd.f32 %v743, %v858
      %v860 = vpop.f32.mrf.mxu0
      %v861 = vadd.f32 %v743, %v860
      %862 = vmatmul.bf16.gmra.mxu0 %v816
      %v863 = vpop.f32.mrf.mxu0
      %v864 = vadd.f32 %v743, %v863
      %v865 = vpop.f32.mrf.mxu0
      %v866 = vadd.f32 %v743, %v865
      %867 = vmatmul.bf16.gmra.mxu0 %v819
      %v868 = vpop.f32.mrf.mxu0
      %v869 = vadd.f32 %v743, %v868
      %v870 = vpop.f32.mrf.mxu0
      %v871 = vadd.f32 %v743, %v870
      %872 = vmatmul.bf16.gmra.mxu0 %v822
      %v873 = vpop.f32.mrf.mxu0
      %v874 = vadd.f32 %v743, %v873
      %v875 = vpop.f32.mrf.mxu0
      %v876 = vadd.f32 %v743, %v875
      %877 = vdwg.mxu0
      %v878 = vmul.f32 %v834, %v680
      %v879 = vmul.f32 %v836, %v681
      %v880 = vmul.f32 %v839, %v682
      %v881 = vmul.f32 %v841, %v683
      %v882 = vmul.f32 %v844, %v684
      %v883 = vmul.f32 %v846, %v685
      %v884 = vmul.f32 %v849, %v686
      %v885 = vmul.f32 %v851, %v687
      %v886 = vmul.f32 %v854, %v688
      %v887 = vmul.f32 %v856, %v689
      %v888 = vmul.f32 %v859, %v690
      %v889 = vmul.f32 %v861, %v691
      %v890 = vmul.f32 %v864, %v692
      %v891 = vmul.f32 %v866, %v693
      %v892 = vmul.f32 %v869, %v694
      %v893 = vmul.f32 %v871, %v695
      %v894 = vmul.f32 %v874, %v696
      %v895 = vmul.f32 %v876, %v697
      %vm896 = vcmask 523264
      %v897 = vsel %vm896, %v878, 0.0
      %v898 = vsel %vm896, %v879, 0.0
      %v899 = vadd.f32 %v897, %v898
      %v900 = vsel %vm896, %v880, 0.0
      %v901 = vadd.f32 %v899, %v900
      %v902 = vsel %vm896, %v881, 0.0
      %v903 = vadd.f32 %v901, %v902
      %v904 = vsel %vm896, %v882, 0.0
      %v905 = vadd.f32 %v903, %v904
      %v906 = vsel %vm896, %v883, 0.0
      %v907 = vadd.f32 %v905, %v906
      %v908 = vsel %vm896, %v884, 0.0
      %v909 = vadd.f32 %v907, %v908
      %v910 = vsel %vm896, %v885, 0.0
      %v911 = vadd.f32 %v909, %v910
      %v912 = vsel %vm896, %v886, 0.0
      %v913 = vadd.f32 %v911, %v912
      %v914 = vsel %vm896, %v887, 0.0
      %v915 = vadd.f32 %v913, %v914
      %v916 = vsel %vm896, %v888, 0.0
      %v917 = vadd.f32 %v915, %v916
      %v918 = vsel %vm896, %v889, 0.0
      %v919 = vadd.f32 %v917, %v918
      %v920 = vsel %vm896, %v890, 0.0
      %v921 = vadd.f32 %v919, %v920
      %v922 = vsel %vm896, %v891, 0.0
      %v923 = vadd.f32 %v921, %v922
      %v924 = vsel %vm896, %v892, 0.0
      %v925 = vadd.f32 %v923, %v924
      %v926 = vsel %vm896, %v893, 0.0
      %v927 = vadd.f32 %v925, %v926
      %v928 = vsel %vm896, %v894, 0.0
      %v929 = vadd.f32 %v927, %v928
      %v930 = vsel %vm896, %v895, 0.0
      %v931 = vadd.f32 %v929, %v930
      %v932 = vrot.slane %v931, 4
      %v933 = vadd.f32 %v931, %v932
      %v934 = vrot.slane %v933, 2
      %v935 = vadd.f32 %v933, %v934
      %v936 = vrot.slane %v935, 1
      %v937 = vadd.f32 %v935, %v936
      %939 = vrot.lane.b32.xlu0 %v937, 96
      %v940 = vpop.permute.xlu0 %939
      %v942 = vadd.f32 %v937, %v940
      %944 = vrot.lane.b32.xlu0 %v942, 32
      %v945 = vpop.permute.xlu0 %944
      %vm947 = vcmask 261120
      %v948 = vsel %vm947, %v942, %v945
      %v949 = vmul.f32 %v948, 0.00390625
      %v950 = vperm.slane %v949, 0
      %v951 = vsub.f32 %v834, %v950
      %v952 = vsub.f32 %v836, %v950
      %v953 = vsub.f32 %v839, %v950
      %v954 = vsub.f32 %v841, %v950
      %v955 = vsub.f32 %v844, %v950
      %v956 = vsub.f32 %v846, %v950
      %v957 = vsub.f32 %v849, %v950
      %v958 = vsub.f32 %v851, %v950
      %v959 = vsub.f32 %v854, %v950
      %v960 = vsub.f32 %v856, %v950
      %v961 = vsub.f32 %v859, %v950
      %v962 = vsub.f32 %v861, %v950
      %v963 = vsub.f32 %v864, %v950
      %v964 = vsub.f32 %v866, %v950
      %v965 = vsub.f32 %v869, %v950
      %v966 = vsub.f32 %v871, %v950
      %v967 = vsub.f32 %v874, %v950
      %v968 = vsub.f32 %v876, %v950
      %v969 = vmul.f32 %v951, %v680
      %v970 = vmul.f32 %v952, %v681
      %v971 = vmul.f32 %v953, %v682
      %v972 = vmul.f32 %v954, %v683
      %v973 = vmul.f32 %v955, %v684
      %v974 = vmul.f32 %v956, %v685
      %v975 = vmul.f32 %v957, %v686
      %v976 = vmul.f32 %v958, %v687
      %v977 = vmul.f32 %v959, %v688
      %v978 = vmul.f32 %v960, %v689
      %v979 = vmul.f32 %v961, %v690
      %v980 = vmul.f32 %v962, %v691
      %v981 = vmul.f32 %v963, %v692
      %v982 = vmul.f32 %v964, %v693
      %v983 = vmul.f32 %v965, %v694
      %v984 = vmul.f32 %v966, %v695
      %v985 = vmul.f32 %v967, %v696
      %v986 = vmul.f32 %v968, %v697
      %v987 = vmul.f32 %v969, %v969
      %v988 = vmul.f32 %v970, %v970
      %v989 = vmul.f32 %v971, %v971
      %v990 = vmul.f32 %v972, %v972
      %v991 = vmul.f32 %v973, %v973
      %v992 = vmul.f32 %v974, %v974
      %v993 = vmul.f32 %v975, %v975
      %v994 = vmul.f32 %v976, %v976
      %v995 = vmul.f32 %v977, %v977
      %v996 = vmul.f32 %v978, %v978
      %v997 = vmul.f32 %v979, %v979
      %v998 = vmul.f32 %v980, %v980
      %v999 = vmul.f32 %v981, %v981
      %v1000 = vmul.f32 %v982, %v982
      %v1001 = vmul.f32 %v983, %v983
      %v1002 = vmul.f32 %v984, %v984
      %v1003 = vmul.f32 %v985, %v985
      %v1004 = vmul.f32 %v986, %v986
      %v1005 = vsel %vm896, %v987, 0.0
      %v1006 = vsel %vm896, %v988, 0.0
      %v1007 = vadd.f32 %v1005, %v1006
      %v1008 = vsel %vm896, %v989, 0.0
      %v1009 = vadd.f32 %v1007, %v1008
      %v1010 = vsel %vm896, %v990, 0.0
      %v1011 = vadd.f32 %v1009, %v1010
      %v1012 = vsel %vm896, %v991, 0.0
      %v1013 = vadd.f32 %v1011, %v1012
      %v1014 = vsel %vm896, %v992, 0.0
      %v1015 = vadd.f32 %v1013, %v1014
      %v1016 = vsel %vm896, %v993, 0.0
      %v1017 = vadd.f32 %v1015, %v1016
      %v1018 = vsel %vm896, %v994, 0.0
      %v1019 = vadd.f32 %v1017, %v1018
      %v1020 = vsel %vm896, %v995, 0.0
      %v1021 = vadd.f32 %v1019, %v1020
      %v1022 = vsel %vm896, %v996, 0.0
      %v1023 = vadd.f32 %v1021, %v1022
      %v1024 = vsel %vm896, %v997, 0.0
      %v1025 = vadd.f32 %v1023, %v1024
      %v1026 = vsel %vm896, %v998, 0.0
      %v1027 = vadd.f32 %v1025, %v1026
      %v1028 = vsel %vm896, %v999, 0.0
      %v1029 = vadd.f32 %v1027, %v1028
      %v1030 = vsel %vm896, %v1000, 0.0
      %v1031 = vadd.f32 %v1029, %v1030
      %v1032 = vsel %vm896, %v1001, 0.0
      %v1033 = vadd.f32 %v1031, %v1032
      %v1034 = vsel %vm896, %v1002, 0.0
      %v1035 = vadd.f32 %v1033, %v1034
      %v1036 = vsel %vm896, %v1003, 0.0
      %v1037 = vadd.f32 %v1035, %v1036
      %v1038 = vsel %vm896, %v1004, 0.0
      %v1039 = vadd.f32 %v1037, %v1038
      %v1040 = vrot.slane %v1039, 4
      %v1041 = vadd.f32 %v1039, %v1040
      %v1042 = vrot.slane %v1041, 2
      %v1043 = vadd.f32 %v1041, %v1042
      %v1044 = vrot.slane %v1043, 1
      %v1045 = vadd.f32 %v1043, %v1044
      %1047 = vrot.lane.b32.xlu0 %v1045, 96
      %v1048 = vpop.permute.xlu0 %1047
      %v1050 = vadd.f32 %v1045, %v1048
      %1052 = vrot.lane.b32.xlu0 %v1050, 32
      %v1053 = vpop.permute.xlu0 %1052
      %v1055 = vsel %vm947, %v1050, %v1053
      %v1056 = vmul.f32 %v1055, 0.00390625
      %v1057 = vld [vmem:[%s3] sm:$0x1]
      %v1058 = vadd.f32 %v1056, 1e-05
      %v1059 = vrsqrt.pop %v1058
      %v1060 = vmul.f32 %v1059, %v1058
      %v1061 = vmul.f32 %v1060, %v1059
      %v1062 = vmul.f32 0.5, %v1061
      %v1063 = vsub.f32 1.5, %v1062
      %v1064 = vmul.f32 %v1059, %v1063
      %vm1065 = vweird.f32 %v1058
      %vm1066 = vweird.f32 %v1059
      %vm1067 = vmor %vm1065, %vm1066
      %v1068 = vsel %vm1067, %v1059, %v1064
      %v1069 = vmul.f32 %v1057, %v1068
      %v1071 = vperm.slane %v1069, 0
      %v1073 = vmul.f32 %v969, %v1071
      %v1074 = vmul.f32 %v970, %v1071
      %v1075 = vmul.f32 %v971, %v1071
      %v1076 = vmul.f32 %v972, %v1071
      %v1077 = vmul.f32 %v973, %v1071
      %v1078 = vmul.f32 %v974, %v1071
      %v1079 = vmul.f32 %v975, %v1071
      %v1080 = vmul.f32 %v976, %v1071
      %v1081 = vmul.f32 %v977, %v1071
      %v1082 = vmul.f32 %v978, %v1071
      %v1083 = vmul.f32 %v979, %v1071
      %v1084 = vmul.f32 %v980, %v1071
      %v1085 = vmul.f32 %v981, %v1071
      %v1086 = vmul.f32 %v982, %v1071
      %v1087 = vmul.f32 %v983, %v1071
      %v1088 = vmul.f32 %v984, %v1071
      %v1089 = vmul.f32 %v985, %v1071
      %v1090 = vmul.f32 %v986, %v1071
      %v1091 = vld [vmem:[%s4] sm:$0x1]
      %v1093 = vperm.slane %v1091, 0
      %v1095 = vadd.f32 %v1073, %v1093
      %v1096 = vadd.f32 %v1074, %v1093
      %v1097 = vadd.f32 %v1075, %v1093
      %v1098 = vadd.f32 %v1076, %v1093
      %v1099 = vadd.f32 %v1077, %v1093
      %v1100 = vadd.f32 %v1078, %v1093
      %v1101 = vadd.f32 %v1079, %v1093
      %v1102 = vadd.f32 %v1080, %v1093
      %v1103 = vadd.f32 %v1081, %v1093
      %v1104 = vadd.f32 %v1082, %v1093
      %v1105 = vadd.f32 %v1083, %v1093
      %v1106 = vadd.f32 %v1084, %v1093
      %v1107 = vadd.f32 %v1085, %v1093
      %v1108 = vadd.f32 %v1086, %v1093
      %v1109 = vadd.f32 %v1087, %v1093
      %v1110 = vadd.f32 %v1088, %v1093
      %v1111 = vadd.f32 %v1089, %v1093
      %v1112 = vadd.f32 %v1090, %v1093
      %v1113 = vsub.f32 0.0, %v1095
      %v1114 = vsub.f32 0.0, %v1096
      %v1115 = vsub.f32 0.0, %v1097
      %v1116 = vsub.f32 0.0, %v1098
      %v1117 = vsub.f32 0.0, %v1099
      %v1118 = vsub.f32 0.0, %v1100
      %v1119 = vsub.f32 0.0, %v1101
      %v1120 = vsub.f32 0.0, %v1102
      %v1121 = vsub.f32 0.0, %v1103
      %v1122 = vsub.f32 0.0, %v1104
      %v1123 = vsub.f32 0.0, %v1105
      %v1124 = vsub.f32 0.0, %v1106
      %v1125 = vsub.f32 0.0, %v1107
      %v1126 = vsub.f32 0.0, %v1108
      %v1127 = vsub.f32 0.0, %v1109
      %v1128 = vsub.f32 0.0, %v1110
      %v1129 = vsub.f32 0.0, %v1111
      %v1130 = vsub.f32 0.0, %v1112
      %v1131 = vmul.f32 %v1113, 1.442695
      %v1132 = vpow.pop %v1131
      %v1133 = vmul.f32 %v1114, 1.442695
      %v1134 = vpow.pop %v1133
      %v1135 = vmul.f32 %v1115, 1.442695
      %v1136 = vpow.pop %v1135
      %v1137 = vmul.f32 %v1116, 1.442695
      %v1138 = vpow.pop %v1137
      %v1139 = vmul.f32 %v1117, 1.442695
      %v1140 = vpow.pop %v1139
      %v1141 = vmul.f32 %v1118, 1.442695
      %v1142 = vpow.pop %v1141
      %v1143 = vmul.f32 %v1119, 1.442695
      %v1144 = vpow.pop %v1143
      %v1145 = vmul.f32 %v1120, 1.442695
      %v1146 = vpow.pop %v1145
      %v1147 = vmul.f32 %v1121, 1.442695
      %v1148 = vpow.pop %v1147
      %v1149 = vmul.f32 %v1122, 1.442695
      %v1150 = vpow.pop %v1149
      %v1151 = vmul.f32 %v1123, 1.442695
      %v1152 = vpow.pop %v1151
      %v1153 = vmul.f32 %v1124, 1.442695
      %v1154 = vpow.pop %v1153
      %v1155 = vmul.f32 %v1125, 1.442695
      %v1156 = vpow.pop %v1155
      %v1157 = vmul.f32 %v1126, 1.442695
      %v1158 = vpow.pop %v1157
      %v1159 = vmul.f32 %v1127, 1.442695
      %v1160 = vpow.pop %v1159
      %v1161 = vmul.f32 %v1128, 1.442695
      %v1162 = vpow.pop %v1161
      %v1163 = vmul.f32 %v1129, 1.442695
      %v1164 = vpow.pop %v1163
      %v1165 = vmul.f32 %v1130, 1.442695
      %v1166 = vpow.pop %v1165
      %v1167 = vadd.f32 %v1132, 1.0
      %v1168 = vadd.f32 %v1134, 1.0
      %v1169 = vadd.f32 %v1136, 1.0
      %v1170 = vadd.f32 %v1138, 1.0
      %v1171 = vadd.f32 %v1140, 1.0
      %v1172 = vadd.f32 %v1142, 1.0
      %v1173 = vadd.f32 %v1144, 1.0
      %v1174 = vadd.f32 %v1146, 1.0
      %v1175 = vadd.f32 %v1148, 1.0
      %v1176 = vadd.f32 %v1150, 1.0
      %v1177 = vadd.f32 %v1152, 1.0
      %v1178 = vadd.f32 %v1154, 1.0
      %v1179 = vadd.f32 %v1156, 1.0
      %v1180 = vadd.f32 %v1158, 1.0
      %v1181 = vadd.f32 %v1160, 1.0
      %v1182 = vadd.f32 %v1162, 1.0
      %v1183 = vadd.f32 %v1164, 1.0
      %v1184 = vadd.f32 %v1166, 1.0
      %v1185 = vrcp.pop %v1167
      %v1186 = vmul.f32 %v1167, %v1185
      %v1187 = vsub.f32 1.0, %v1186
      %v1188 = vmul.f32 %v1185, %v1187
      %v1189 = vadd.f32 %v1185, %v1188
      %vm1190 = vweird.f32 %v1167
      %vm1191 = vweird.f32 %v1185
      %vm1192 = vmor %vm1190, %vm1191
      %v1193 = vsel %vm1192, %v1185, %v1189
      %v1194 = vand.u32 2147483647, %v1167
      %vm1195 = vcmp.eq.f32.partialorder %v1194, 8.507059e+37
      %v1196 = vand.u32 %v1167, 2147483648
      %v1197 = vor.u32 1.1754944e-38, %v1196
      %v1198 = vsel %vm1195, %v1197, %v1193
      %v1199 = vmul.f32 1.0, %v1198
      %v1200 = vrcp.pop %v1168
      %v1201 = vmul.f32 %v1168, %v1200
      %v1202 = vsub.f32 1.0, %v1201
      %v1203 = vmul.f32 %v1200, %v1202
      %v1204 = vadd.f32 %v1200, %v1203
      %vm1205 = vweird.f32 %v1168
      %vm1206 = vweird.f32 %v1200
      %vm1207 = vmor %vm1205, %vm1206
      %v1208 = vsel %vm1207, %v1200, %v1204
      %v1209 = vand.u32 2147483647, %v1168
      %vm1210 = vcmp.eq.f32.partialorder %v1209, 8.507059e+37
      %v1211 = vand.u32 %v1168, 2147483648
      %v1212 = vor.u32 1.1754944e-38, %v1211
      %v1213 = vsel %vm1210, %v1212, %v1208
      %v1214 = vmul.f32 1.0, %v1213
      %v1215 = vrcp.pop %v1169
      %v1216 = vmul.f32 %v1169, %v1215
      %v1217 = vsub.f32 1.0, %v1216
      %v1218 = vmul.f32 %v1215, %v1217
      %v1219 = vadd.f32 %v1215, %v1218
      %vm1220 = vweird.f32 %v1169
      %vm1221 = vweird.f32 %v1215
      %vm1222 = vmor %vm1220, %vm1221
      %v1223 = vsel %vm1222, %v1215, %v1219
      %v1224 = vand.u32 2147483647, %v1169
      %vm1225 = vcmp.eq.f32.partialorder %v1224, 8.507059e+37
      %v1226 = vand.u32 %v1169, 2147483648
      %v1227 = vor.u32 1.1754944e-38, %v1226
      %v1228 = vsel %vm1225, %v1227, %v1223
      %v1229 = vmul.f32 1.0, %v1228
      %v1230 = vrcp.pop %v1170
      %v1231 = vmul.f32 %v1170, %v1230
      %v1232 = vsub.f32 1.0, %v1231
      %v1233 = vmul.f32 %v1230, %v1232
      %v1234 = vadd.f32 %v1230, %v1233
      %vm1235 = vweird.f32 %v1170
      %vm1236 = vweird.f32 %v1230
      %vm1237 = vmor %vm1235, %vm1236
      %v1238 = vsel %vm1237, %v1230, %v1234
      %v1239 = vand.u32 2147483647, %v1170
      %vm1240 = vcmp.eq.f32.partialorder %v1239, 8.507059e+37
      %v1241 = vand.u32 %v1170, 2147483648
      %v1242 = vor.u32 1.1754944e-38, %v1241
      %v1243 = vsel %vm1240, %v1242, %v1238
      %v1244 = vmul.f32 1.0, %v1243
      %v1245 = vrcp.pop %v1171
      %v1246 = vmul.f32 %v1171, %v1245
      %v1247 = vsub.f32 1.0, %v1246
      %v1248 = vmul.f32 %v1245, %v1247
      %v1249 = vadd.f32 %v1245, %v1248
      %vm1250 = vweird.f32 %v1171
      %vm1251 = vweird.f32 %v1245
      %vm1252 = vmor %vm1250, %vm1251
      %v1253 = vsel %vm1252, %v1245, %v1249
      %v1254 = vand.u32 2147483647, %v1171
      %vm1255 = vcmp.eq.f32.partialorder %v1254, 8.507059e+37
      %v1256 = vand.u32 %v1171, 2147483648
      %v1257 = vor.u32 1.1754944e-38, %v1256
      %v1258 = vsel %vm1255, %v1257, %v1253
      %v1259 = vmul.f32 1.0, %v1258
      %v1260 = vrcp.pop %v1172
      %v1261 = vmul.f32 %v1172, %v1260
      %v1262 = vsub.f32 1.0, %v1261
      %v1263 = vmul.f32 %v1260, %v1262
      %v1264 = vadd.f32 %v1260, %v1263
      %vm1265 = vweird.f32 %v1172
      %vm1266 = vweird.f32 %v1260
      %vm1267 = vmor %vm1265, %vm1266
      %v1268 = vsel %vm1267, %v1260, %v1264
      %v1269 = vand.u32 2147483647, %v1172
      %vm1270 = vcmp.eq.f32.partialorder %v1269, 8.507059e+37
      %v1271 = vand.u32 %v1172, 2147483648
      %v1272 = vor.u32 1.1754944e-38, %v1271
      %v1273 = vsel %vm1270, %v1272, %v1268
      %v1274 = vmul.f32 1.0, %v1273
      %v1275 = vrcp.pop %v1173
      %v1276 = vmul.f32 %v1173, %v1275
      %v1277 = vsub.f32 1.0, %v1276
      %v1278 = vmul.f32 %v1275, %v1277
      %v1279 = vadd.f32 %v1275, %v1278
      %vm1280 = vweird.f32 %v1173
      %vm1281 = vweird.f32 %v1275
      %vm1282 = vmor %vm1280, %vm1281
      %v1283 = vsel %vm1282, %v1275, %v1279
      %v1284 = vand.u32 2147483647, %v1173
      %vm1285 = vcmp.eq.f32.partialorder %v1284, 8.507059e+37
      %v1286 = vand.u32 %v1173, 2147483648
      %v1287 = vor.u32 1.1754944e-38, %v1286
      %v1288 = vsel %vm1285, %v1287, %v1283
      %v1289 = vmul.f32 1.0, %v1288
      %v1290 = vrcp.pop %v1174
      %v1291 = vmul.f32 %v1174, %v1290
      %v1292 = vsub.f32 1.0, %v1291
      %v1293 = vmul.f32 %v1290, %v1292
      %v1294 = vadd.f32 %v1290, %v1293
      %vm1295 = vweird.f32 %v1174
      %vm1296 = vweird.f32 %v1290
      %vm1297 = vmor %vm1295, %vm1296
      %v1298 = vsel %vm1297, %v1290, %v1294
      %v1299 = vand.u32 2147483647, %v1174
      %vm1300 = vcmp.eq.f32.partialorder %v1299, 8.507059e+37
      %v1301 = vand.u32 %v1174, 2147483648
      %v1302 = vor.u32 1.1754944e-38, %v1301
      %v1303 = vsel %vm1300, %v1302, %v1298
      %v1304 = vmul.f32 1.0, %v1303
      %v1305 = vrcp.pop %v1175
      %v1306 = vmul.f32 %v1175, %v1305
      %v1307 = vsub.f32 1.0, %v1306
      %v1308 = vmul.f32 %v1305, %v1307
      %v1309 = vadd.f32 %v1305, %v1308
      %vm1310 = vweird.f32 %v1175
      %vm1311 = vweird.f32 %v1305
      %vm1312 = vmor %vm1310, %vm1311
      %v1313 = vsel %vm1312, %v1305, %v1309
      %v1314 = vand.u32 2147483647, %v1175
      %vm1315 = vcmp.eq.f32.partialorder %v1314, 8.507059e+37
      %v1316 = vand.u32 %v1175, 2147483648
      %v1317 = vor.u32 1.1754944e-38, %v1316
      %v1318 = vsel %vm1315, %v1317, %v1313
      %v1319 = vmul.f32 1.0, %v1318
      %v1320 = vrcp.pop %v1176
      %v1321 = vmul.f32 %v1176, %v1320
      %v1322 = vsub.f32 1.0, %v1321
      %v1323 = vmul.f32 %v1320, %v1322
      %v1324 = vadd.f32 %v1320, %v1323
      %vm1325 = vweird.f32 %v1176
      %vm1326 = vweird.f32 %v1320
      %vm1327 = vmor %vm1325, %vm1326
      %v1328 = vsel %vm1327, %v1320, %v1324
      %v1329 = vand.u32 2147483647, %v1176
      %vm1330 = vcmp.eq.f32.partialorder %v1329, 8.507059e+37
      %v1331 = vand.u32 %v1176, 2147483648
      %v1332 = vor.u32 1.1754944e-38, %v1331
      %v1333 = vsel %vm1330, %v1332, %v1328
      %v1334 = vmul.f32 1.0, %v1333
      %v1335 = vrcp.pop %v1177
      %v1336 = vmul.f32 %v1177, %v1335
      %v1337 = vsub.f32 1.0, %v1336
      %v1338 = vmul.f32 %v1335, %v1337
      %v1339 = vadd.f32 %v1335, %v1338
      %vm1340 = vweird.f32 %v1177
      %vm1341 = vweird.f32 %v1335
      %vm1342 = vmor %vm1340, %vm1341
      %v1343 = vsel %vm1342, %v1335, %v1339
      %v1344 = vand.u32 2147483647, %v1177
      %vm1345 = vcmp.eq.f32.partialorder %v1344, 8.507059e+37
      %v1346 = vand.u32 %v1177, 2147483648
      %v1347 = vor.u32 1.1754944e-38, %v1346
      %v1348 = vsel %vm1345, %v1347, %v1343
      %v1349 = vmul.f32 1.0, %v1348
      %v1350 = vrcp.pop %v1178
      %v1351 = vmul.f32 %v1178, %v1350
      %v1352 = vsub.f32 1.0, %v1351
      %v1353 = vmul.f32 %v1350, %v1352
      %v1354 = vadd.f32 %v1350, %v1353
      %vm1355 = vweird.f32 %v1178
      %vm1356 = vweird.f32 %v1350
      %vm1357 = vmor %vm1355, %vm1356
      %v1358 = vsel %vm1357, %v1350, %v1354
      %v1359 = vand.u32 2147483647, %v1178
      %vm1360 = vcmp.eq.f32.partialorder %v1359, 8.507059e+37
      %v1361 = vand.u32 %v1178, 2147483648
      %v1362 = vor.u32 1.1754944e-38, %v1361
      %v1363 = vsel %vm1360, %v1362, %v1358
      %v1364 = vmul.f32 1.0, %v1363
      %v1365 = vrcp.pop %v1179
      %v1366 = vmul.f32 %v1179, %v1365
      %v1367 = vsub.f32 1.0, %v1366
      %v1368 = vmul.f32 %v1365, %v1367
      %v1369 = vadd.f32 %v1365, %v1368
      %vm1370 = vweird.f32 %v1179
      %vm1371 = vweird.f32 %v1365
      %vm1372 = vmor %vm1370, %vm1371
      %v1373 = vsel %vm1372, %v1365, %v1369
      %v1374 = vand.u32 2147483647, %v1179
      %vm1375 = vcmp.eq.f32.partialorder %v1374, 8.507059e+37
      %v1376 = vand.u32 %v1179, 2147483648
      %v1377 = vor.u32 1.1754944e-38, %v1376
      %v1378 = vsel %vm1375, %v1377, %v1373
      %v1379 = vmul.f32 1.0, %v1378
      %v1380 = vrcp.pop %v1180
      %v1381 = vmul.f32 %v1180, %v1380
      %v1382 = vsub.f32 1.0, %v1381
      %v1383 = vmul.f32 %v1380, %v1382
      %v1384 = vadd.f32 %v1380, %v1383
      %vm1385 = vweird.f32 %v1180
      %vm1386 = vweird.f32 %v1380
      %vm1387 = vmor %vm1385, %vm1386
      %v1388 = vsel %vm1387, %v1380, %v1384
      %v1389 = vand.u32 2147483647, %v1180
      %vm1390 = vcmp.eq.f32.partialorder %v1389, 8.507059e+37
      %v1391 = vand.u32 %v1180, 2147483648
      %v1392 = vor.u32 1.1754944e-38, %v1391
      %v1393 = vsel %vm1390, %v1392, %v1388
      %v1394 = vmul.f32 1.0, %v1393
      %v1395 = vrcp.pop %v1181
      %v1396 = vmul.f32 %v1181, %v1395
      %v1397 = vsub.f32 1.0, %v1396
      %v1398 = vmul.f32 %v1395, %v1397
      %v1399 = vadd.f32 %v1395, %v1398
      %vm1400 = vweird.f32 %v1181
      %vm1401 = vweird.f32 %v1395
      %vm1402 = vmor %vm1400, %vm1401
      %v1403 = vsel %vm1402, %v1395, %v1399
      %v1404 = vand.u32 2147483647, %v1181
      %vm1405 = vcmp.eq.f32.partialorder %v1404, 8.507059e+37
      %v1406 = vand.u32 %v1181, 2147483648
      %v1407 = vor.u32 1.1754944e-38, %v1406
      %v1408 = vsel %vm1405, %v1407, %v1403
      %v1409 = vmul.f32 1.0, %v1408
      %v1410 = vrcp.pop %v1182
      %v1411 = vmul.f32 %v1182, %v1410
      %v1412 = vsub.f32 1.0, %v1411
      %v1413 = vmul.f32 %v1410, %v1412
      %v1414 = vadd.f32 %v1410, %v1413
      %vm1415 = vweird.f32 %v1182
      %vm1416 = vweird.f32 %v1410
      %vm1417 = vmor %vm1415, %vm1416
      %v1418 = vsel %vm1417, %v1410, %v1414
      %v1419 = vand.u32 2147483647, %v1182
      %vm1420 = vcmp.eq.f32.partialorder %v1419, 8.507059e+37
      %v1421 = vand.u32 %v1182, 2147483648
      %v1422 = vor.u32 1.1754944e-38, %v1421
      %v1423 = vsel %vm1420, %v1422, %v1418
      %v1424 = vmul.f32 1.0, %v1423
      %v1425 = vrcp.pop %v1183
      %v1426 = vmul.f32 %v1183, %v1425
      %v1427 = vsub.f32 1.0, %v1426
      %v1428 = vmul.f32 %v1425, %v1427
      %v1429 = vadd.f32 %v1425, %v1428
      %vm1430 = vweird.f32 %v1183
      %vm1431 = vweird.f32 %v1425
      %vm1432 = vmor %vm1430, %vm1431
      %v1433 = vsel %vm1432, %v1425, %v1429
      %v1434 = vand.u32 2147483647, %v1183
      %vm1435 = vcmp.eq.f32.partialorder %v1434, 8.507059e+37
      %v1436 = vand.u32 %v1183, 2147483648
      %v1437 = vor.u32 1.1754944e-38, %v1436
      %v1438 = vsel %vm1435, %v1437, %v1433
      %v1439 = vmul.f32 1.0, %v1438
      %v1440 = vrcp.pop %v1184
      %v1441 = vmul.f32 %v1184, %v1440
      %v1442 = vsub.f32 1.0, %v1441
      %v1443 = vmul.f32 %v1440, %v1442
      %v1444 = vadd.f32 %v1440, %v1443
      %vm1445 = vweird.f32 %v1184
      %vm1446 = vweird.f32 %v1440
      %vm1447 = vmor %vm1445, %vm1446
      %v1448 = vsel %vm1447, %v1440, %v1444
      %v1449 = vand.u32 2147483647, %v1184
      %vm1450 = vcmp.eq.f32.partialorder %v1449, 8.507059e+37
      %v1451 = vand.u32 %v1184, 2147483648
      %v1452 = vor.u32 1.1754944e-38, %v1451
      %v1453 = vsel %vm1450, %v1452, %v1448
      %v1454 = vmul.f32 1.0, %v1453
      %v1455 = vmul.f32 %v1095, %v1199
      %v1456 = vmul.f32 %v1096, %v1214
      %v1457 = vmul.f32 %v1097, %v1229
      %v1458 = vmul.f32 %v1098, %v1244
      %v1459 = vmul.f32 %v1099, %v1259
      %v1460 = vmul.f32 %v1100, %v1274
      %v1461 = vmul.f32 %v1101, %v1289
      %v1462 = vmul.f32 %v1102, %v1304
      %v1463 = vmul.f32 %v1103, %v1319
      %v1464 = vmul.f32 %v1104, %v1334
      %v1465 = vmul.f32 %v1105, %v1349
      %v1466 = vmul.f32 %v1106, %v1364
      %v1467 = vmul.f32 %v1107, %v1379
      %v1468 = vmul.f32 %v1108, %v1394
      %v1469 = vmul.f32 %v1109, %v1409
      %v1470 = vmul.f32 %v1110, %v1424
      %v1471 = vmul.f32 %v1111, %v1439
      %v1472 = vmul.f32 %v1112, %v1454
      %v1473 = vmul.f32 %v1455, %v680
      %v1474 = vmul.f32 %v1456, %v681
      %v1475 = vmul.f32 %v1457, %v682
      %v1476 = vmul.f32 %v1458, %v683
      %v1477 = vmul.f32 %v1459, %v684
      %v1478 = vmul.f32 %v1460, %v685
      %v1479 = vmul.f32 %v1461, %v686
      %v1480 = vmul.f32 %v1462, %v687
      %v1481 = vmul.f32 %v1463, %v688
      %v1482 = vmul.f32 %v1464, %v689
      %v1483 = vmul.f32 %v1465, %v690
      %v1484 = vmul.f32 %v1466, %v691
      %v1485 = vmul.f32 %v1467, %v692
      %v1486 = vmul.f32 %v1468, %v693
      %v1487 = vmul.f32 %v1469, %v694
      %v1488 = vmul.f32 %v1470, %v695
      %v1489 = vmul.f32 %v1471, %v696
      %v1490 = vmul.f32 %v1472, %v697
      %v1491 = vpack.c.bf16 %v1473, %v1473
      %v1492 = vpack.c.bf16 %v1474, %v1474
      %v1493 = vpack.c.bf16 %v1475, %v1475
      %v1494 = vpack.c.bf16 %v1476, %v1476
      %v1495 = vpack.c.bf16 %v1477, %v1477
      %v1496 = vpack.c.bf16 %v1478, %v1478
      %v1497 = vpack.c.bf16 %v1479, %v1479
      %v1498 = vpack.c.bf16 %v1480, %v1480
      %v1499 = vpack.c.bf16 %v1481, %v1481
      %v1500 = vpack.c.bf16 %v1482, %v1482
      %v1501 = vpack.c.bf16 %v1483, %v1483
      %v1502 = vpack.c.bf16 %v1484, %v1484
      %v1503 = vpack.c.bf16 %v1485, %v1485
      %v1504 = vpack.c.bf16 %v1486, %v1486
      %v1505 = vpack.c.bf16 %v1487, %v1487
      %v1506 = vpack.c.bf16 %v1488, %v1488
      %v1507 = vpack.c.bf16 %v1489, %v1489
      %v1508 = vpack.c.bf16 %v1490, %v1490
      %1509 = vst.msk [vmem:[#allocation2 + $0x8] sm:$0xf] %vm698, %v1491
      %1510 = vst.msk [vmem:[#allocation2 + $0xc] sm:$0xf] %vm698, %v1492
      %1511 = vst.msk [vmem:[#allocation2 + $0x10] sm:$0xf] %vm698, %v1493
      %1512 = vst.msk [vmem:[#allocation2 + $0x14] sm:$0xf] %vm698, %v1494
      %1513 = vst.msk [vmem:[#allocation2 + $0x18] sm:$0xf] %vm698, %v1495
      %1514 = vst.msk [vmem:[#allocation2 + $0x1c] sm:$0xf] %vm698, %v1496
      %1515 = vst.msk [vmem:[#allocation2 + $0x20] sm:$0xf] %vm698, %v1497
      %1516 = vst.msk [vmem:[#allocation2 + $0x24] sm:$0xf] %vm698, %v1498
      %1517 = vst.msk [vmem:[#allocation2 + $0x28] sm:$0xf] %vm698, %v1499
      %1518 = vst.msk [vmem:[#allocation2 + $0x2c] sm:$0xf] %vm698, %v1500
      %1519 = vst.msk [vmem:[#allocation2 + $0x30] sm:$0xf] %vm698, %v1501
      %1520 = vst.msk [vmem:[#allocation2 + $0x34] sm:$0xf] %vm698, %v1502
      %1521 = vst.msk [vmem:[#allocation2 + $0x38] sm:$0xf] %vm698, %v1503
      %1522 = vst.msk [vmem:[#allocation2 + $0x3c] sm:$0xf] %vm698, %v1504
      %1523 = vst.msk [vmem:[#allocation2 + $0x40] sm:$0xf] %vm698, %v1505
      %1524 = vst.msk [vmem:[#allocation2 + $0x44] sm:$0xf] %vm698, %v1506
      %1525 = vst.msk [vmem:[#allocation2 + $0x48] sm:$0xf] %vm698, %v1507
      %1526 = vst.msk [vmem:[#allocation2 + $0x4c] sm:$0xf] %vm698, %v1508
      %v1527 = vld [vmem:[#allocation2 + $0x4] sm:$0x8]
      %v1528 = vld [vmem:[#allocation2 + $0x8] sm:$0xf]
      %v1529 = vld [vmem:[#allocation2 + $0xc] sm:$0xf]
      %v1530 = vld [vmem:[#allocation2 + $0x10] sm:$0xf]
      %v1531 = vld [vmem:[#allocation2 + $0x14] sm:$0xf]
      %v1532 = vld [vmem:[#allocation2 + $0x18] sm:$0xf]
      %v1533 = vld [vmem:[#allocation2 + $0x1c] sm:$0xf]
      %v1534 = vld [vmem:[#allocation2 + $0x20] sm:$0xf]
      %v1535 = vld [vmem:[#allocation2 + $0x24] sm:$0xf]
      %v1536 = vld [vmem:[#allocation2 + $0x28] sm:$0xf]
      %v1537 = vld [vmem:[#allocation2 + $0x2c] sm:$0xf]
      %v1538 = vld [vmem:[#allocation2 + $0x30] sm:$0xf]
      %v1539 = vld [vmem:[#allocation2 + $0x34] sm:$0xf]
      %v1540 = vld [vmem:[#allocation2 + $0x38] sm:$0xf]
      %v1541 = vld [vmem:[#allocation2 + $0x3c] sm:$0xf]
      %v1542 = vld [vmem:[#allocation2 + $0x40] sm:$0xf]
      %v1543 = vld [vmem:[#allocation2 + $0x44] sm:$0xf]
      %v1544 = vld [vmem:[#allocation2 + $0x48] sm:$0xf]
      %v1545 = vld [vmem:[#allocation2 + $0x4c] sm:$0xf]
      %v1546 = vld [vmem:[%s5] sm:$0xf]
      %v1547 = vld [vmem:[%s5 + $0x4] sm:$0xf]
      %v1548 = vld [vmem:[%s5 + $0x8] sm:$0xf]
      %v1549 = vld [vmem:[%s5 + $0xc] sm:$0xf]
      %v1550 = vld [vmem:[%s5 + $0x10] sm:$0xf]
      %v1551 = vld [vmem:[%s5 + $0x14] sm:$0xf]
      %v1552 = vld [vmem:[%s5 + $0x18] sm:$0xf]
      %v1553 = vld [vmem:[%s5 + $0x1c] sm:$0xf]
      %s1554 = scalar_lea.vmem %s5, 32
      %v1555 = vld [vmem:[%s1554] sm:$0xf]
      %v1556 = vld [vmem:[%s1554 + $0x4] sm:$0xf]
      %v1557 = vld [vmem:[%s1554 + $0x8] sm:$0xf]
      %v1558 = vld [vmem:[%s1554 + $0xc] sm:$0xf]
      %v1559 = vld [vmem:[%s1554 + $0x10] sm:$0xf]
      %v1560 = vld [vmem:[%s1554 + $0x14] sm:$0xf]
      %v1561 = vld [vmem:[%s1554 + $0x18] sm:$0xf]
      %v1562 = vld [vmem:[%s1554 + $0x1c] sm:$0xf]
      %v1581 = vunpack.c.l.b16 %v1528
      %v1582 = vunpack.c.l.b16 %v1529
      %v1583 = vunpack.c.l.b16 %v1530
      %v1584 = vunpack.c.l.b16 %v1531
      %v1585 = vunpack.c.l.b16 %v1532
      %v1586 = vunpack.c.l.b16 %v1533
      %v1587 = vunpack.c.l.b16 %v1534
      %v1588 = vunpack.c.l.b16 %v1535
      %v1589 = vunpack.c.l.b16 %v1536
      %v1590 = vunpack.c.l.b16 %v1537
      %v1591 = vunpack.c.l.b16 %v1538
      %v1592 = vunpack.c.l.b16 %v1539
      %v1593 = vunpack.c.l.b16 %v1540
      %v1594 = vunpack.c.l.b16 %v1541
      %v1595 = vunpack.c.l.b16 %v1542
      %v1596 = vunpack.c.l.b16 %v1543
      %v1597 = vunpack.c.l.b16 %v1544
      %v1598 = vunpack.c.l.b16 %v1545
      %v1599 = vpack.c.b16 %v1582, %v1581
      %v1600 = vpack.c.b16 %v1584, %v1583
      %v1601 = vpack.c.b16 %v1586, %v1585
      %v1602 = vpack.c.b16 %v1588, %v1587
      %v1603 = vpack.c.b16 %v1590, %v1589
      %v1604 = vpack.c.b16 %v1592, %v1591
      %v1605 = vpack.c.b16 %v1594, %v1593
      %v1606 = vpack.c.b16 %v1596, %v1595
      %v1607 = vpack.c.b16 %v1598, %v1597
      %v1616 = vunpack.c.l.b16 %v1555
      %v1617 = vunpack.c.l.b16 %v1556
      %v1618 = vunpack.c.l.b16 %v1557
      %v1619 = vunpack.c.l.b16 %v1558
      %v1620 = vunpack.c.l.b16 %v1559
      %v1621 = vunpack.c.l.b16 %v1560
      %v1622 = vunpack.c.l.b16 %v1561
      %v1623 = vunpack.c.l.b16 %v1562
      %v1624 = vpack.c.b16 %v1617, %v1616
      %v1625 = vpack.c.b16 %v1619, %v1618
      %v1626 = vpack.c.b16 %v1621, %v1620
      %v1627 = vpack.c.b16 %v1623, %v1622
      %v1633 = vsel %vm896, %v1599, 0
      %v1636 = vsel %vm896, %v1600, 0
      %v1639 = vsel %vm896, %v1601, 0
      %v1642 = vsel %vm896, %v1602, 0
      %v1645 = vsel %vm896, %v1603, 0
      %v1648 = vsel %vm896, %v1604, 0
      %v1651 = vsel %vm896, %v1605, 0
      %v1654 = vsel %vm896, %v1606, 0
      %v1657 = vsel %vm896, %v1607, 0
      %1659 = vmatpush.bf16.msra.mxu0 0
      %1660 = vmatpush.bf16.msra.mxu0 0
      %1661 = vmatpush.bf16.msra.mxu0 0
      %1662 = vmatpush.bf16.msra.mxu0 0
      %1663 = vmatpush.bf16.msra.mxu0 %v1627
      %1664 = vmatpush.bf16.msra.mxu0 %v1626
      %1665 = vmatpush.bf16.msra.mxu0 %v1625
      %1666 = vmatpush.bf16.msra.mxu0 %v1624
      %1667 = vmatmul.bf16.gmra.mxu0 %v1633
      %v1668 = vpop.f32.mrf.mxu0
      %v1669 = vadd.f32 0.0, %v1668
      %v1670 = vpop.f32.mrf.mxu0
      %v1671 = vadd.f32 0.0, %v1670
      %1672 = vmatmul.bf16.gmra.mxu0 %v1636
      %v1673 = vpop.f32.mrf.mxu0
      %v1674 = vadd.f32 0.0, %v1673
      %v1675 = vpop.f32.mrf.mxu0
      %v1676 = vadd.f32 0.0, %v1675
      %1677 = vmatmul.bf16.gmra.mxu0 %v1639
      %v1678 = vpop.f32.mrf.mxu0
      %v1679 = vadd.f32 0.0, %v1678
      %v1680 = vpop.f32.mrf.mxu0
      %v1681 = vadd.f32 0.0, %v1680
      %1682 = vmatmul.bf16.gmra.mxu0 %v1642
      %v1683 = vpop.f32.mrf.mxu0
      %v1684 = vadd.f32 0.0, %v1683
      %v1685 = vpop.f32.mrf.mxu0
      %v1686 = vadd.f32 0.0, %v1685
      %1687 = vmatmul.bf16.gmra.mxu0 %v1645
      %v1688 = vpop.f32.mrf.mxu0
      %v1689 = vadd.f32 0.0, %v1688
      %v1690 = vpop.f32.mrf.mxu0
      %v1691 = vadd.f32 0.0, %v1690
      %1692 = vmatmul.bf16.gmra.mxu0 %v1648
      %v1693 = vpop.f32.mrf.mxu0
      %v1694 = vadd.f32 0.0, %v1693
      %v1695 = vpop.f32.mrf.mxu0
      %v1696 = vadd.f32 0.0, %v1695
      %1697 = vmatmul.bf16.gmra.mxu0 %v1651
      %v1698 = vpop.f32.mrf.mxu0
      %v1699 = vadd.f32 0.0, %v1698
      %v1700 = vpop.f32.mrf.mxu0
      %v1701 = vadd.f32 0.0, %v1700
      %1702 = vmatmul.bf16.gmra.mxu0 %v1654
      %v1703 = vpop.f32.mrf.mxu0
      %v1704 = vadd.f32 0.0, %v1703
      %v1705 = vpop.f32.mrf.mxu0
      %v1706 = vadd.f32 0.0, %v1705
      %1707 = vmatmul.bf16.gmra.mxu0 %v1657
      %v1708 = vpop.f32.mrf.mxu0
      %v1709 = vadd.f32 0.0, %v1708
      %v1710 = vpop.f32.mrf.mxu0
      %v1711 = vadd.f32 0.0, %v1710
      %1712 = vdwg.mxu0
      %v1714 = vunpack.c.l.b16 %v1527
      %v1715 = vpack.c.b16 %v1581, %v1714
      %v1716 = vpack.c.b16 %v1583, %v1582
      %v1717 = vpack.c.b16 %v1585, %v1584
      %v1718 = vpack.c.b16 %v1587, %v1586
      %v1719 = vpack.c.b16 %v1589, %v1588
      %v1720 = vpack.c.b16 %v1591, %v1590
      %v1721 = vpack.c.b16 %v1593, %v1592
      %v1722 = vpack.c.b16 %v1595, %v1594
      %v1723 = vpack.c.b16 %v1597, %v1596
      %v1724 = vpack.c.b16 %v1598, %v1598
      %vm1725 = vsmask.f32 4352
      %v1727 = vshrl.u32 %v1715, 16
      %v1729 = vrot.slane %v1727, 3
      %v1730 = vshll.u32 %v1715, 16
      %v1732 = vrot.slane %v1730, 4
      %v1733 = vor.u32 %v1729, %v1732
      %v1735 = vshrl.u32 %v1716, 16
      %v1737 = vrot.slane %v1735, 3
      %v1738 = vshll.u32 %v1716, 16
      %v1740 = vrot.slane %v1738, 4
      %v1741 = vor.u32 %v1737, %v1740
      %v1742 = vsel %vm1725, %v1733, %v1741
      %v1744 = vshrl.u32 %v1717, 16
      %v1746 = vrot.slane %v1744, 3
      %v1747 = vshll.u32 %v1717, 16
      %v1749 = vrot.slane %v1747, 4
      %v1750 = vor.u32 %v1746, %v1749
      %v1751 = vsel %vm1725, %v1741, %v1750
      %v1753 = vshrl.u32 %v1718, 16
      %v1755 = vrot.slane %v1753, 3
      %v1756 = vshll.u32 %v1718, 16
      %v1758 = vrot.slane %v1756, 4
      %v1759 = vor.u32 %v1755, %v1758
      %v1760 = vsel %vm1725, %v1750, %v1759
      %v1762 = vshrl.u32 %v1719, 16
      %v1764 = vrot.slane %v1762, 3
      %v1765 = vshll.u32 %v1719, 16
      %v1767 = vrot.slane %v1765, 4
      %v1768 = vor.u32 %v1764, %v1767
      %v1769 = vsel %vm1725, %v1759, %v1768
      %v1771 = vshrl.u32 %v1720, 16
      %v1773 = vrot.slane %v1771, 3
      %v1774 = vshll.u32 %v1720, 16
      %v1776 = vrot.slane %v1774, 4
      %v1777 = vor.u32 %v1773, %v1776
      %v1778 = vsel %vm1725, %v1768, %v1777
      %v1780 = vshrl.u32 %v1721, 16
      %v1782 = vrot.slane %v1780, 3
      %v1783 = vshll.u32 %v1721, 16
      %v1785 = vrot.slane %v1783, 4
      %v1786 = vor.u32 %v1782, %v1785
      %v1787 = vsel %vm1725, %v1777, %v1786
      %v1789 = vshrl.u32 %v1722, 16
      %v1791 = vrot.slane %v1789, 3
      %v1792 = vshll.u32 %v1722, 16
      %v1794 = vrot.slane %v1792, 4
      %v1795 = vor.u32 %v1791, %v1794
      %v1796 = vsel %vm1725, %v1786, %v1795
      %v1798 = vshrl.u32 %v1723, 16
      %v1800 = vrot.slane %v1798, 3
      %v1801 = vshll.u32 %v1723, 16
      %v1803 = vrot.slane %v1801, 4
      %v1804 = vor.u32 %v1800, %v1803
      %v1805 = vsel %vm1725, %v1795, %v1804
      %v1807 = vshrl.u32 %v1724, 16
      %v1809 = vrot.slane %v1807, 3
      %v1810 = vshll.u32 %v1724, 16
      %v1812 = vrot.slane %v1810, 4
      %v1813 = vor.u32 %v1809, %v1812
      %v1814 = vsel %vm1725, %v1804, %v1813
      %v1823 = vunpack.c.l.b16 %v1546
      %v1824 = vunpack.c.l.b16 %v1547
      %v1825 = vunpack.c.l.b16 %v1548
      %v1826 = vunpack.c.l.b16 %v1549
      %v1827 = vunpack.c.l.b16 %v1550
      %v1828 = vunpack.c.l.b16 %v1551
      %v1829 = vunpack.c.l.b16 %v1552
      %v1830 = vunpack.c.l.b16 %v1553
      %v1831 = vpack.c.b16 %v1824, %v1823
      %v1832 = vpack.c.b16 %v1826, %v1825
      %v1833 = vpack.c.b16 %v1828, %v1827
      %v1834 = vpack.c.b16 %v1830, %v1829
      %v1840 = vsel %vm896, %v1742, 0
      %v1843 = vsel %vm896, %v1751, 0
      %v1846 = vsel %vm896, %v1760, 0
      %v1849 = vsel %vm896, %v1769, 0
      %v1852 = vsel %vm896, %v1778, 0
      %v1855 = vsel %vm896, %v1787, 0
      %v1858 = vsel %vm896, %v1796, 0
      %v1861 = vsel %vm896, %v1805, 0
      %v1864 = vsel %vm896, %v1814, 0
      %1866 = vmatpush.bf16.msra.mxu0 0
      %1867 = vmatpush.bf16.msra.mxu0 0
      %1868 = vmatpush.bf16.msra.mxu0 0
      %1869 = vmatpush.bf16.msra.mxu0 0
      %1870 = vmatpush.bf16.msra.mxu0 %v1834
      %1871 = vmatpush.bf16.msra.mxu0 %v1833
      %1872 = vmatpush.bf16.msra.mxu0 %v1832
      %1873 = vmatpush.bf16.msra.mxu0 %v1831
      %1874 = vmatmul.bf16.gmra.mxu0 %v1840
      %v1875 = vpop.f32.mrf.mxu0
      %v1876 = vadd.f32 %v1669, %v1875
      %v1877 = vpop.f32.mrf.mxu0
      %v1878 = vadd.f32 %v1671, %v1877
      %1879 = vmatmul.bf16.gmra.mxu0 %v1843
      %v1880 = vpop.f32.mrf.mxu0
      %v1881 = vadd.f32 %v1674, %v1880
      %v1882 = vpop.f32.mrf.mxu0
      %v1883 = vadd.f32 %v1676, %v1882
      %1884 = vmatmul.bf16.gmra.mxu0 %v1846
      %v1885 = vpop.f32.mrf.mxu0
      %v1886 = vadd.f32 %v1679, %v1885
      %v1887 = vpop.f32.mrf.mxu0
      %v1888 = vadd.f32 %v1681, %v1887
      %1889 = vmatmul.bf16.gmra.mxu0 %v1849
      %v1890 = vpop.f32.mrf.mxu0
      %v1891 = vadd.f32 %v1684, %v1890
      %v1892 = vpop.f32.mrf.mxu0
      %v1893 = vadd.f32 %v1686, %v1892
      %1894 = vmatmul.bf16.gmra.mxu0 %v1852
      %v1895 = vpop.f32.mrf.mxu0
      %v1896 = vadd.f32 %v1689, %v1895
      %v1897 = vpop.f32.mrf.mxu0
      %v1898 = vadd.f32 %v1691, %v1897
      %1899 = vmatmul.bf16.gmra.mxu0 %v1855
      %v1900 = vpop.f32.mrf.mxu0
      %v1901 = vadd.f32 %v1694, %v1900
      %v1902 = vpop.f32.mrf.mxu0
      %v1903 = vadd.f32 %v1696, %v1902
      %1904 = vmatmul.bf16.gmra.mxu0 %v1858
      %v1905 = vpop.f32.mrf.mxu0
      %v1906 = vadd.f32 %v1699, %v1905
      %v1907 = vpop.f32.mrf.mxu0
      %v1908 = vadd.f32 %v1701, %v1907
      %1909 = vmatmul.bf16.gmra.mxu0 %v1861
      %v1910 = vpop.f32.mrf.mxu0
      %v1911 = vadd.f32 %v1704, %v1910
      %v1912 = vpop.f32.mrf.mxu0
      %v1913 = vadd.f32 %v1706, %v1912
      %1914 = vmatmul.bf16.gmra.mxu0 %v1864
      %v1915 = vpop.f32.mrf.mxu0
      %v1916 = vadd.f32 %v1709, %v1915
      %v1917 = vpop.f32.mrf.mxu0
      %v1918 = vadd.f32 %v1711, %v1917
      %1919 = vdwg.mxu0
      %v1920 = vld [vmem:[#allocation2 + $0x8] sm:$0xf]
      %v1921 = vld [vmem:[#allocation2 + $0xc] sm:$0xf]
      %v1922 = vld [vmem:[#allocation2 + $0x10] sm:$0xf]
      %v1923 = vld [vmem:[#allocation2 + $0x14] sm:$0xf]
      %v1924 = vld [vmem:[#allocation2 + $0x18] sm:$0xf]
      %v1925 = vld [vmem:[#allocation2 + $0x1c] sm:$0xf]
      %v1926 = vld [vmem:[#allocation2 + $0x20] sm:$0xf]
      %v1927 = vld [vmem:[#allocation2 + $0x24] sm:$0xf]
      %v1928 = vld [vmem:[#allocation2 + $0x28] sm:$0xf]
      %v1929 = vld [vmem:[#allocation2 + $0x2c] sm:$0xf]
      %v1930 = vld [vmem:[#allocation2 + $0x30] sm:$0xf]
      %v1931 = vld [vmem:[#allocation2 + $0x34] sm:$0xf]
      %v1932 = vld [vmem:[#allocation2 + $0x38] sm:$0xf]
      %v1933 = vld [vmem:[#allocation2 + $0x3c] sm:$0xf]
      %v1934 = vld [vmem:[#allocation2 + $0x40] sm:$0xf]
      %v1935 = vld [vmem:[#allocation2 + $0x44] sm:$0xf]
      %v1936 = vld [vmem:[#allocation2 + $0x48] sm:$0xf]
      %v1937 = vld [vmem:[#allocation2 + $0x4c] sm:$0xf]
      %v1938 = vld [vmem:[#allocation2 + $0x50] sm:$0x1]
      %s1939 = scalar_lea.vmem %s5, 64
      %v1940 = vld [vmem:[%s1939] sm:$0xf]
      %v1941 = vld [vmem:[%s1939 + $0x4] sm:$0xf]
      %v1942 = vld [vmem:[%s1939 + $0x8] sm:$0xf]
      %v1943 = vld [vmem:[%s1939 + $0xc] sm:$0xf]
      %v1944 = vld [vmem:[%s1939 + $0x10] sm:$0xf]
      %v1945 = vld [vmem:[%s1939 + $0x14] sm:$0xf]
      %v1946 = vld [vmem:[%s1939 + $0x18] sm:$0xf]
      %v1947 = vld [vmem:[%s1939 + $0x1c] sm:$0xf]
      %v1967 = vunpack.c.l.b16 %v1920
      %v1968 = vunpack.c.l.b16 %v1921
      %v1969 = vunpack.c.l.b16 %v1922
      %v1970 = vunpack.c.l.b16 %v1923
      %v1971 = vunpack.c.l.b16 %v1924
      %v1972 = vunpack.c.l.b16 %v1925
      %v1973 = vunpack.c.l.b16 %v1926
      %v1974 = vunpack.c.l.b16 %v1927
      %v1975 = vunpack.c.l.b16 %v1928
      %v1976 = vunpack.c.l.b16 %v1929
      %v1977 = vunpack.c.l.b16 %v1930
      %v1978 = vunpack.c.l.b16 %v1931
      %v1979 = vunpack.c.l.b16 %v1932
      %v1980 = vunpack.c.l.b16 %v1933
      %v1981 = vunpack.c.l.b16 %v1934
      %v1982 = vunpack.c.l.b16 %v1935
      %v1983 = vunpack.c.l.b16 %v1936
      %v1984 = vunpack.c.l.b16 %v1937
      %v1985 = vunpack.c.l.b16 %v1938
      %v1986 = vpack.c.b16 %v1968, %v1967
      %v1987 = vpack.c.b16 %v1970, %v1969
      %v1988 = vpack.c.b16 %v1972, %v1971
      %v1989 = vpack.c.b16 %v1974, %v1973
      %v1990 = vpack.c.b16 %v1976, %v1975
      %v1991 = vpack.c.b16 %v1978, %v1977
      %v1992 = vpack.c.b16 %v1980, %v1979
      %v1993 = vpack.c.b16 %v1982, %v1981
      %v1994 = vpack.c.b16 %v1984, %v1983
      %v1995 = vpack.c.b16 %v1985, %v1985
      %vm1996 = vsmask.f32 7424
      %v1998 = vshrl.u32 %v1986, 16
      %v2000 = vshll.u32 %v1986, 16
      %v2002 = vrot.slane %v2000, 1
      %v2003 = vor.u32 %v1998, %v2002
      %v2005 = vshll.u32 %v1987, 16
      %v2007 = vrot.slane %v2005, 1
      %v2008 = vsel %vm1996, %v2003, %v2007
      %v2009 = vshrl.u32 %v1987, 16
      %v2011 = vor.u32 %v2009, %v2007
      %v2013 = vshll.u32 %v1988, 16
      %v2015 = vrot.slane %v2013, 1
      %v2016 = vsel %vm1996, %v2011, %v2015
      %v2017 = vshrl.u32 %v1988, 16
      %v2019 = vor.u32 %v2017, %v2015
      %v2021 = vshll.u32 %v1989, 16
      %v2023 = vrot.slane %v2021, 1
      %v2024 = vsel %vm1996, %v2019, %v2023
      %v2025 = vshrl.u32 %v1989, 16
      %v2027 = vor.u32 %v2025, %v2023
      %v2029 = vshll.u32 %v1990, 16
      %v2031 = vrot.slane %v2029, 1
      %v2032 = vsel %vm1996, %v2027, %v2031
      %v2033 = vshrl.u32 %v1990, 16
      %v2035 = vor.u32 %v2033, %v2031
      %v2037 = vshll.u32 %v1991, 16
      %v2039 = vrot.slane %v2037, 1
      %v2040 = vsel %vm1996, %v2035, %v2039
      %v2041 = vshrl.u32 %v1991, 16
      %v2043 = vor.u32 %v2041, %v2039
      %v2045 = vshll.u32 %v1992, 16
      %v2047 = vrot.slane %v2045, 1
      %v2048 = vsel %vm1996, %v2043, %v2047
      %v2049 = vshrl.u32 %v1992, 16
      %v2051 = vor.u32 %v2049, %v2047
      %v2053 = vshll.u32 %v1993, 16
      %v2055 = vrot.slane %v2053, 1
      %v2056 = vsel %vm1996, %v2051, %v2055
      %v2057 = vshrl.u32 %v1993, 16
      %v2059 = vor.u32 %v2057, %v2055
      %v2061 = vshll.u32 %v1994, 16
      %v2063 = vrot.slane %v2061, 1
      %v2064 = vsel %vm1996, %v2059, %v2063
      %v2065 = vshrl.u32 %v1994, 16
      %v2067 = vor.u32 %v2065, %v2063
      %v2069 = vshll.u32 %v1995, 16
      %v2071 = vrot.slane %v2069, 1
      %v2072 = vsel %vm1996, %v2067, %v2071
      %v2081 = vunpack.c.l.b16 %v1940
      %v2082 = vunpack.c.l.b16 %v1941
      %v2083 = vunpack.c.l.b16 %v1942
      %v2084 = vunpack.c.l.b16 %v1943
      %v2085 = vunpack.c.l.b16 %v1944
      %v2086 = vunpack.c.l.b16 %v1945
      %v2087 = vunpack.c.l.b16 %v1946
      %v2088 = vunpack.c.l.b16 %v1947
      %v2089 = vpack.c.b16 %v2082, %v2081
      %v2090 = vpack.c.b16 %v2084, %v2083
      %v2091 = vpack.c.b16 %v2086, %v2085
      %v2092 = vpack.c.b16 %v2088, %v2087
      %v2098 = vsel %vm896, %v2008, 0
      %v2101 = vsel %vm896, %v2016, 0
      %v2104 = vsel %vm896, %v2024, 0
      %v2107 = vsel %vm896, %v2032, 0
      %v2110 = vsel %vm896, %v2040, 0
      %v2113 = vsel %vm896, %v2048, 0
      %v2116 = vsel %vm896, %v2056, 0
      %v2119 = vsel %vm896, %v2064, 0
      %v2122 = vsel %vm896, %v2072, 0
      %2124 = vmatpush.bf16.msra.mxu0 0
      %2125 = vmatpush.bf16.msra.mxu0 0
      %2126 = vmatpush.bf16.msra.mxu0 0
      %2127 = vmatpush.bf16.msra.mxu0 0
      %2128 = vmatpush.bf16.msra.mxu0 %v2092
      %2129 = vmatpush.bf16.msra.mxu0 %v2091
      %2130 = vmatpush.bf16.msra.mxu0 %v2090
      %2131 = vmatpush.bf16.msra.mxu0 %v2089
      %2132 = vmatmul.bf16.gmra.mxu0 %v2098
      %v2133 = vpop.f32.mrf.mxu0
      %v2134 = vadd.f32 0.0, %v2133
      %v2135 = vpop.f32.mrf.mxu0
      %v2136 = vadd.f32 0.0, %v2135
      %2137 = vmatmul.bf16.gmra.mxu0 %v2101
      %v2138 = vpop.f32.mrf.mxu0
      %v2139 = vadd.f32 0.0, %v2138
      %v2140 = vpop.f32.mrf.mxu0
      %v2141 = vadd.f32 0.0, %v2140
      %2142 = vmatmul.bf16.gmra.mxu0 %v2104
      %v2143 = vpop.f32.mrf.mxu0
      %v2144 = vadd.f32 0.0, %v2143
      %v2145 = vpop.f32.mrf.mxu0
      %v2146 = vadd.f32 0.0, %v2145
      %2147 = vmatmul.bf16.gmra.mxu0 %v2107
      %v2148 = vpop.f32.mrf.mxu0
      %v2149 = vadd.f32 0.0, %v2148
      %v2150 = vpop.f32.mrf.mxu0
      %v2151 = vadd.f32 0.0, %v2150
      %2152 = vmatmul.bf16.gmra.mxu0 %v2110
      %v2153 = vpop.f32.mrf.mxu0
      %v2154 = vadd.f32 0.0, %v2153
      %v2155 = vpop.f32.mrf.mxu0
      %v2156 = vadd.f32 0.0, %v2155
      %2157 = vmatmul.bf16.gmra.mxu0 %v2113
      %v2158 = vpop.f32.mrf.mxu0
      %v2159 = vadd.f32 0.0, %v2158
      %v2160 = vpop.f32.mrf.mxu0
      %v2161 = vadd.f32 0.0, %v2160
      %2162 = vmatmul.bf16.gmra.mxu0 %v2116
      %v2163 = vpop.f32.mrf.mxu0
      %v2164 = vadd.f32 0.0, %v2163
      %v2165 = vpop.f32.mrf.mxu0
      %v2166 = vadd.f32 0.0, %v2165
      %2167 = vmatmul.bf16.gmra.mxu0 %v2119
      %v2168 = vpop.f32.mrf.mxu0
      %v2169 = vadd.f32 0.0, %v2168
      %v2170 = vpop.f32.mrf.mxu0
      %v2171 = vadd.f32 0.0, %v2170
      %2172 = vmatmul.bf16.gmra.mxu0 %v2122
      %v2173 = vpop.f32.mrf.mxu0
      %v2174 = vadd.f32 0.0, %v2173
      %v2175 = vpop.f32.mrf.mxu0
      %v2176 = vadd.f32 0.0, %v2175
      %2177 = vdwg.mxu0
      %v2178 = vadd.f32 %v1876, %v2134
      %v2179 = vadd.f32 %v1878, %v2136
      %v2180 = vadd.f32 %v1881, %v2139
      %v2181 = vadd.f32 %v1883, %v2141
      %v2182 = vadd.f32 %v1886, %v2144
      %v2183 = vadd.f32 %v1888, %v2146
      %v2184 = vadd.f32 %v1891, %v2149
      %v2185 = vadd.f32 %v1893, %v2151
      %v2186 = vadd.f32 %v1896, %v2154
      %v2187 = vadd.f32 %v1898, %v2156
      %v2188 = vadd.f32 %v1901, %v2159
      %v2189 = vadd.f32 %v1903, %v2161
      %v2190 = vadd.f32 %v1906, %v2164
      %v2191 = vadd.f32 %v1908, %v2166
      %v2192 = vadd.f32 %v1911, %v2169
      %v2193 = vadd.f32 %v1913, %v2171
      %v2194 = vadd.f32 %v1916, %v2174
      %v2195 = vadd.f32 %v1918, %v2176
      %v2196 = vld [vmem:[%s6] sm:$0x1]
      %v2198 = vperm.slane %v2196, 0
      %v2200 = vadd.f32 %v2178, %v2198
      %v2201 = vadd.f32 %v2179, %v2198
      %v2202 = vadd.f32 %v2180, %v2198
      %v2203 = vadd.f32 %v2181, %v2198
      %v2204 = vadd.f32 %v2182, %v2198
      %v2205 = vadd.f32 %v2183, %v2198
      %v2206 = vadd.f32 %v2184, %v2198
      %v2207 = vadd.f32 %v2185, %v2198
      %v2208 = vadd.f32 %v2186, %v2198
      %v2209 = vadd.f32 %v2187, %v2198
      %v2210 = vadd.f32 %v2188, %v2198
      %v2211 = vadd.f32 %v2189, %v2198
      %v2212 = vadd.f32 %v2190, %v2198
      %v2213 = vadd.f32 %v2191, %v2198
      %v2214 = vadd.f32 %v2192, %v2198
      %v2215 = vadd.f32 %v2193, %v2198
      %v2216 = vadd.f32 %v2194, %v2198
      %v2217 = vadd.f32 %v2195, %v2198
      %v2218 = vmul.f32 %v2200, %v680
      %v2219 = vmul.f32 %v2201, %v681
      %v2220 = vmul.f32 %v2202, %v682
      %v2221 = vmul.f32 %v2203, %v683
      %v2222 = vmul.f32 %v2204, %v684
      %v2223 = vmul.f32 %v2205, %v685
      %v2224 = vmul.f32 %v2206, %v686
      %v2225 = vmul.f32 %v2207, %v687
      %v2226 = vmul.f32 %v2208, %v688
      %v2227 = vmul.f32 %v2209, %v689
      %v2228 = vmul.f32 %v2210, %v690
      %v2229 = vmul.f32 %v2211, %v691
      %v2230 = vmul.f32 %v2212, %v692
      %v2231 = vmul.f32 %v2213, %v693
      %v2232 = vmul.f32 %v2214, %v694
      %v2233 = vmul.f32 %v2215, %v695
      %v2234 = vmul.f32 %v2216, %v696
      %v2235 = vmul.f32 %v2217, %v697
      %v2236 = vsel %vm896, %v2218, 0.0
      %v2237 = vsel %vm896, %v2219, 0.0
      %v2238 = vadd.f32 %v2236, %v2237
      %v2239 = vsel %vm896, %v2220, 0.0
      %v2240 = vadd.f32 %v2238, %v2239
      %v2241 = vsel %vm896, %v2221, 0.0
      %v2242 = vadd.f32 %v2240, %v2241
      %v2243 = vsel %vm896, %v2222, 0.0
      %v2244 = vadd.f32 %v2242, %v2243
      %v2245 = vsel %vm896, %v2223, 0.0
      %v2246 = vadd.f32 %v2244, %v2245
      %v2247 = vsel %vm896, %v2224, 0.0
      %v2248 = vadd.f32 %v2246, %v2247
      %v2249 = vsel %vm896, %v2225, 0.0
      %v2250 = vadd.f32 %v2248, %v2249
      %v2251 = vsel %vm896, %v2226, 0.0
      %v2252 = vadd.f32 %v2250, %v2251
      %v2253 = vsel %vm896, %v2227, 0.0
      %v2254 = vadd.f32 %v2252, %v2253
      %v2255 = vsel %vm896, %v2228, 0.0
      %v2256 = vadd.f32 %v2254, %v2255
      %v2257 = vsel %vm896, %v2229, 0.0
      %v2258 = vadd.f32 %v2256, %v2257
      %v2259 = vsel %vm896, %v2230, 0.0
      %v2260 = vadd.f32 %v2258, %v2259
      %v2261 = vsel %vm896, %v2231, 0.0
      %v2262 = vadd.f32 %v2260, %v2261
      %v2263 = vsel %vm896, %v2232, 0.0
      %v2264 = vadd.f32 %v2262, %v2263
      %v2265 = vsel %vm896, %v2233, 0.0
      %v2266 = vadd.f32 %v2264, %v2265
      %v2267 = vsel %vm896, %v2234, 0.0
      %v2268 = vadd.f32 %v2266, %v2267
      %v2269 = vsel %vm896, %v2235, 0.0
      %v2270 = vadd.f32 %v2268, %v2269
      %v2271 = vrot.slane %v2270, 4
      %v2272 = vadd.f32 %v2270, %v2271
      %v2273 = vrot.slane %v2272, 2
      %v2274 = vadd.f32 %v2272, %v2273
      %v2275 = vrot.slane %v2274, 1
      %v2276 = vadd.f32 %v2274, %v2275
      %v2277 = vmul.f32 %v2276, 0.0078125
      %v2278 = vsub.f32 %v2200, %v2277
      %v2279 = vsub.f32 %v2201, %v2277
      %v2280 = vsub.f32 %v2202, %v2277
      %v2281 = vsub.f32 %v2203, %v2277
      %v2282 = vsub.f32 %v2204, %v2277
      %v2283 = vsub.f32 %v2205, %v2277
      %v2284 = vsub.f32 %v2206, %v2277
      %v2285 = vsub.f32 %v2207, %v2277
      %v2286 = vsub.f32 %v2208, %v2277
      %v2287 = vsub.f32 %v2209, %v2277
      %v2288 = vsub.f32 %v2210, %v2277
      %v2289 = vsub.f32 %v2211, %v2277
      %v2290 = vsub.f32 %v2212, %v2277
      %v2291 = vsub.f32 %v2213, %v2277
      %v2292 = vsub.f32 %v2214, %v2277
      %v2293 = vsub.f32 %v2215, %v2277
      %v2294 = vsub.f32 %v2216, %v2277
      %v2295 = vsub.f32 %v2217, %v2277
      %v2296 = vmul.f32 %v2278, %v680
      %v2297 = vmul.f32 %v2279, %v681
      %v2298 = vmul.f32 %v2280, %v682
      %v2299 = vmul.f32 %v2281, %v683
      %v2300 = vmul.f32 %v2282, %v684
      %v2301 = vmul.f32 %v2283, %v685
      %v2302 = vmul.f32 %v2284, %v686
      %v2303 = vmul.f32 %v2285, %v687
      %v2304 = vmul.f32 %v2286, %v688
      %v2305 = vmul.f32 %v2287, %v689
      %v2306 = vmul.f32 %v2288, %v690
      %v2307 = vmul.f32 %v2289, %v691
      %v2308 = vmul.f32 %v2290, %v692
      %v2309 = vmul.f32 %v2291, %v693
      %v2310 = vmul.f32 %v2292, %v694
      %v2311 = vmul.f32 %v2293, %v695
      %v2312 = vmul.f32 %v2294, %v696
      %v2313 = vmul.f32 %v2295, %v697
      %v2314 = vmul.f32 %v2296, %v2296
      %v2315 = vmul.f32 %v2297, %v2297
      %v2316 = vmul.f32 %v2298, %v2298
      %v2317 = vmul.f32 %v2299, %v2299
      %v2318 = vmul.f32 %v2300, %v2300
      %v2319 = vmul.f32 %v2301, %v2301
      %v2320 = vmul.f32 %v2302, %v2302
      %v2321 = vmul.f32 %v2303, %v2303
      %v2322 = vmul.f32 %v2304, %v2304
      %v2323 = vmul.f32 %v2305, %v2305
      %v2324 = vmul.f32 %v2306, %v2306
      %v2325 = vmul.f32 %v2307, %v2307
      %v2326 = vmul.f32 %v2308, %v2308
      %v2327 = vmul.f32 %v2309, %v2309
      %v2328 = vmul.f32 %v2310, %v2310
      %v2329 = vmul.f32 %v2311, %v2311
      %v2330 = vmul.f32 %v2312, %v2312
      %v2331 = vmul.f32 %v2313, %v2313
      %v2332 = vsel %vm896, %v2314, 0.0
      %v2333 = vsel %vm896, %v2315, 0.0
      %v2334 = vadd.f32 %v2332, %v2333
      %v2335 = vsel %vm896, %v2316, 0.0
      %v2336 = vadd.f32 %v2334, %v2335
      %v2337 = vsel %vm896, %v2317, 0.0
      %v2338 = vadd.f32 %v2336, %v2337
      %v2339 = vsel %vm896, %v2318, 0.0
      %v2340 = vadd.f32 %v2338, %v2339
      %v2341 = vsel %vm896, %v2319, 0.0
      %v2342 = vadd.f32 %v2340, %v2341
      %v2343 = vsel %vm896, %v2320, 0.0
      %v2344 = vadd.f32 %v2342, %v2343
      %v2345 = vsel %vm896, %v2321, 0.0
      %v2346 = vadd.f32 %v2344, %v2345
      %v2347 = vsel %vm896, %v2322, 0.0
      %v2348 = vadd.f32 %v2346, %v2347
      %v2349 = vsel %vm896, %v2323, 0.0
      %v2350 = vadd.f32 %v2348, %v2349
      %v2351 = vsel %vm896, %v2324, 0.0
      %v2352 = vadd.f32 %v2350, %v2351
      %v2353 = vsel %vm896, %v2325, 0.0
      %v2354 = vadd.f32 %v2352, %v2353
      %v2355 = vsel %vm896, %v2326, 0.0
      %v2356 = vadd.f32 %v2354, %v2355
      %v2357 = vsel %vm896, %v2327, 0.0
      %v2358 = vadd.f32 %v2356, %v2357
      %v2359 = vsel %vm896, %v2328, 0.0
      %v2360 = vadd.f32 %v2358, %v2359
      %v2361 = vsel %vm896, %v2329, 0.0
      %v2362 = vadd.f32 %v2360, %v2361
      %v2363 = vsel %vm896, %v2330, 0.0
      %v2364 = vadd.f32 %v2362, %v2363
      %v2365 = vsel %vm896, %v2331, 0.0
      %v2366 = vadd.f32 %v2364, %v2365
      %v2367 = vrot.slane %v2366, 4
      %v2368 = vadd.f32 %v2366, %v2367
      %v2369 = vrot.slane %v2368, 2
      %v2370 = vadd.f32 %v2368, %v2369
      %v2371 = vrot.slane %v2370, 1
      %v2372 = vadd.f32 %v2370, %v2371
      %v2373 = vmul.f32 %v2372, 0.0078125
      %v2374 = vld [vmem:[%s7] sm:$0x1]
      %v2375 = vadd.f32 %v2373, 1e-05
      %v2376 = vrsqrt.pop %v2375
      %v2377 = vmul.f32 %v2376, %v2375
      %v2378 = vmul.f32 %v2377, %v2376
      %v2379 = vmul.f32 0.5, %v2378
      %v2380 = vsub.f32 1.5, %v2379
      %v2381 = vmul.f32 %v2376, %v2380
      %vm2382 = vweird.f32 %v2375
      %vm2383 = vweird.f32 %v2376
      %vm2384 = vmor %vm2382, %vm2383
      %v2385 = vsel %vm2384, %v2376, %v2381
      %v2386 = vmul.f32 %v2374, %v2385
      %v2388 = vperm.slane %v2386, 0
      %v2390 = vmul.f32 %v2296, %v2388
      %v2391 = vmul.f32 %v2297, %v2388
      %v2392 = vmul.f32 %v2298, %v2388
      %v2393 = vmul.f32 %v2299, %v2388
      %v2394 = vmul.f32 %v2300, %v2388
      %v2395 = vmul.f32 %v2301, %v2388
      %v2396 = vmul.f32 %v2302, %v2388
      %v2397 = vmul.f32 %v2303, %v2388
      %v2398 = vmul.f32 %v2304, %v2388
      %v2399 = vmul.f32 %v2305, %v2388
      %v2400 = vmul.f32 %v2306, %v2388
      %v2401 = vmul.f32 %v2307, %v2388
      %v2402 = vmul.f32 %v2308, %v2388
      %v2403 = vmul.f32 %v2309, %v2388
      %v2404 = vmul.f32 %v2310, %v2388
      %v2405 = vmul.f32 %v2311, %v2388
      %v2406 = vmul.f32 %v2312, %v2388
      %v2407 = vmul.f32 %v2313, %v2388
      %v2408 = vld [vmem:[%s8] sm:$0x1]
      %v2410 = vperm.slane %v2408, 0
      %v2412 = vadd.f32 %v2390, %v2410
      %v2413 = vadd.f32 %v2391, %v2410
      %v2414 = vadd.f32 %v2392, %v2410
      %v2415 = vadd.f32 %v2393, %v2410
      %v2416 = vadd.f32 %v2394, %v2410
      %v2417 = vadd.f32 %v2395, %v2410
      %v2418 = vadd.f32 %v2396, %v2410
      %v2419 = vadd.f32 %v2397, %v2410
      %v2420 = vadd.f32 %v2398, %v2410
      %v2421 = vadd.f32 %v2399, %v2410
      %v2422 = vadd.f32 %v2400, %v2410
      %v2423 = vadd.f32 %v2401, %v2410
      %v2424 = vadd.f32 %v2402, %v2410
      %v2425 = vadd.f32 %v2403, %v2410
      %v2426 = vadd.f32 %v2404, %v2410
      %v2427 = vadd.f32 %v2405, %v2410
      %v2428 = vadd.f32 %v2406, %v2410
      %v2429 = vadd.f32 %v2407, %v2410
      %v2430 = vsub.f32 0.0, %v2412
      %v2431 = vsub.f32 0.0, %v2413
      %v2432 = vsub.f32 0.0, %v2414
      %v2433 = vsub.f32 0.0, %v2415
      %v2434 = vsub.f32 0.0, %v2416
      %v2435 = vsub.f32 0.0, %v2417
      %v2436 = vsub.f32 0.0, %v2418
      %v2437 = vsub.f32 0.0, %v2419
      %v2438 = vsub.f32 0.0, %v2420
      %v2439 = vsub.f32 0.0, %v2421
      %v2440 = vsub.f32 0.0, %v2422
      %v2441 = vsub.f32 0.0, %v2423
      %v2442 = vsub.f32 0.0, %v2424
      %v2443 = vsub.f32 0.0, %v2425
      %v2444 = vsub.f32 0.0, %v2426
      %v2445 = vsub.f32 0.0, %v2427
      %v2446 = vsub.f32 0.0, %v2428
      %v2447 = vsub.f32 0.0, %v2429
      %v2448 = vmul.f32 %v2430, 1.442695
      %v2449 = vpow.pop %v2448
      %v2450 = vmul.f32 %v2431, 1.442695
      %v2451 = vpow.pop %v2450
      %v2452 = vmul.f32 %v2432, 1.442695
      %v2453 = vpow.pop %v2452
      %v2454 = vmul.f32 %v2433, 1.442695
      %v2455 = vpow.pop %v2454
      %v2456 = vmul.f32 %v2434, 1.442695
      %v2457 = vpow.pop %v2456
      %v2458 = vmul.f32 %v2435, 1.442695
      %v2459 = vpow.pop %v2458
      %v2460 = vmul.f32 %v2436, 1.442695
      %v2461 = vpow.pop %v2460
      %v2462 = vmul.f32 %v2437, 1.442695
      %v2463 = vpow.pop %v2462
      %v2464 = vmul.f32 %v2438, 1.442695
      %v2465 = vpow.pop %v2464
      %v2466 = vmul.f32 %v2439, 1.442695
      %v2467 = vpow.pop %v2466
      %v2468 = vmul.f32 %v2440, 1.442695
      %v2469 = vpow.pop %v2468
      %v2470 = vmul.f32 %v2441, 1.442695
      %v2471 = vpow.pop %v2470
      %v2472 = vmul.f32 %v2442, 1.442695
      %v2473 = vpow.pop %v2472
      %v2474 = vmul.f32 %v2443, 1.442695
      %v2475 = vpow.pop %v2474
      %v2476 = vmul.f32 %v2444, 1.442695
      %v2477 = vpow.pop %v2476
      %v2478 = vmul.f32 %v2445, 1.442695
      %v2479 = vpow.pop %v2478
      %v2480 = vmul.f32 %v2446, 1.442695
      %v2481 = vpow.pop %v2480
      %v2482 = vmul.f32 %v2447, 1.442695
      %v2483 = vpow.pop %v2482
      %v2484 = vadd.f32 %v2449, 1.0
      %v2485 = vadd.f32 %v2451, 1.0
      %v2486 = vadd.f32 %v2453, 1.0
      %v2487 = vadd.f32 %v2455, 1.0
      %v2488 = vadd.f32 %v2457, 1.0
      %v2489 = vadd.f32 %v2459, 1.0
      %v2490 = vadd.f32 %v2461, 1.0
      %v2491 = vadd.f32 %v2463, 1.0
      %v2492 = vadd.f32 %v2465, 1.0
      %v2493 = vadd.f32 %v2467, 1.0
      %v2494 = vadd.f32 %v2469, 1.0
      %v2495 = vadd.f32 %v2471, 1.0
      %v2496 = vadd.f32 %v2473, 1.0
      %v2497 = vadd.f32 %v2475, 1.0
      %v2498 = vadd.f32 %v2477, 1.0
      %v2499 = vadd.f32 %v2479, 1.0
      %v2500 = vadd.f32 %v2481, 1.0
      %v2501 = vadd.f32 %v2483, 1.0
      %v2502 = vrcp.pop %v2484
      %v2503 = vmul.f32 %v2484, %v2502
      %v2504 = vsub.f32 1.0, %v2503
      %v2505 = vmul.f32 %v2502, %v2504
      %v2506 = vadd.f32 %v2502, %v2505
      %vm2507 = vweird.f32 %v2484
      %vm2508 = vweird.f32 %v2502
      %vm2509 = vmor %vm2507, %vm2508
      %v2510 = vsel %vm2509, %v2502, %v2506
      %v2511 = vand.u32 2147483647, %v2484
      %vm2512 = vcmp.eq.f32.partialorder %v2511, 8.507059e+37
      %v2513 = vand.u32 %v2484, 2147483648
      %v2514 = vor.u32 1.1754944e-38, %v2513
      %v2515 = vsel %vm2512, %v2514, %v2510
      %v2516 = vmul.f32 1.0, %v2515
      %v2517 = vrcp.pop %v2485
      %v2518 = vmul.f32 %v2485, %v2517
      %v2519 = vsub.f32 1.0, %v2518
      %v2520 = vmul.f32 %v2517, %v2519
      %v2521 = vadd.f32 %v2517, %v2520
      %vm2522 = vweird.f32 %v2485
      %vm2523 = vweird.f32 %v2517
      %vm2524 = vmor %vm2522, %vm2523
      %v2525 = vsel %vm2524, %v2517, %v2521
      %v2526 = vand.u32 2147483647, %v2485
      %vm2527 = vcmp.eq.f32.partialorder %v2526, 8.507059e+37
      %v2528 = vand.u32 %v2485, 2147483648
      %v2529 = vor.u32 1.1754944e-38, %v2528
      %v2530 = vsel %vm2527, %v2529, %v2525
      %v2531 = vmul.f32 1.0, %v2530
      %v2532 = vrcp.pop %v2486
      %v2533 = vmul.f32 %v2486, %v2532
      %v2534 = vsub.f32 1.0, %v2533
      %v2535 = vmul.f32 %v2532, %v2534
      %v2536 = vadd.f32 %v2532, %v2535
      %vm2537 = vweird.f32 %v2486
      %vm2538 = vweird.f32 %v2532
      %vm2539 = vmor %vm2537, %vm2538
      %v2540 = vsel %vm2539, %v2532, %v2536
      %v2541 = vand.u32 2147483647, %v2486
      %vm2542 = vcmp.eq.f32.partialorder %v2541, 8.507059e+37
      %v2543 = vand.u32 %v2486, 2147483648
      %v2544 = vor.u32 1.1754944e-38, %v2543
      %v2545 = vsel %vm2542, %v2544, %v2540
      %v2546 = vmul.f32 1.0, %v2545
      %v2547 = vrcp.pop %v2487
      %v2548 = vmul.f32 %v2487, %v2547
      %v2549 = vsub.f32 1.0, %v2548
      %v2550 = vmul.f32 %v2547, %v2549
      %v2551 = vadd.f32 %v2547, %v2550
      %vm2552 = vweird.f32 %v2487
      %vm2553 = vweird.f32 %v2547
      %vm2554 = vmor %vm2552, %vm2553
      %v2555 = vsel %vm2554, %v2547, %v2551
      %v2556 = vand.u32 2147483647, %v2487
      %vm2557 = vcmp.eq.f32.partialorder %v2556, 8.507059e+37
      %v2558 = vand.u32 %v2487, 2147483648
      %v2559 = vor.u32 1.1754944e-38, %v2558
      %v2560 = vsel %vm2557, %v2559, %v2555
      %v2561 = vmul.f32 1.0, %v2560
      %v2562 = vrcp.pop %v2488
      %v2563 = vmul.f32 %v2488, %v2562
      %v2564 = vsub.f32 1.0, %v2563
      %v2565 = vmul.f32 %v2562, %v2564
      %v2566 = vadd.f32 %v2562, %v2565
      %vm2567 = vweird.f32 %v2488
      %vm2568 = vweird.f32 %v2562
      %vm2569 = vmor %vm2567, %vm2568
      %v2570 = vsel %vm2569, %v2562, %v2566
      %v2571 = vand.u32 2147483647, %v2488
      %vm2572 = vcmp.eq.f32.partialorder %v2571, 8.507059e+37
      %v2573 = vand.u32 %v2488, 2147483648
      %v2574 = vor.u32 1.1754944e-38, %v2573
      %v2575 = vsel %vm2572, %v2574, %v2570
      %v2576 = vmul.f32 1.0, %v2575
      %v2577 = vrcp.pop %v2489
      %v2578 = vmul.f32 %v2489, %v2577
      %v2579 = vsub.f32 1.0, %v2578
      %v2580 = vmul.f32 %v2577, %v2579
      %v2581 = vadd.f32 %v2577, %v2580
      %vm2582 = vweird.f32 %v2489
      %vm2583 = vweird.f32 %v2577
      %vm2584 = vmor %vm2582, %vm2583
      %v2585 = vsel %vm2584, %v2577, %v2581
      %v2586 = vand.u32 2147483647, %v2489
      %vm2587 = vcmp.eq.f32.partialorder %v2586, 8.507059e+37
      %v2588 = vand.u32 %v2489, 2147483648
      %v2589 = vor.u32 1.1754944e-38, %v2588
      %v2590 = vsel %vm2587, %v2589, %v2585
      %v2591 = vmul.f32 1.0, %v2590
      %v2592 = vrcp.pop %v2490
      %v2593 = vmul.f32 %v2490, %v2592
      %v2594 = vsub.f32 1.0, %v2593
      %v2595 = vmul.f32 %v2592, %v2594
      %v2596 = vadd.f32 %v2592, %v2595
      %vm2597 = vweird.f32 %v2490
      %vm2598 = vweird.f32 %v2592
      %vm2599 = vmor %vm2597, %vm2598
      %v2600 = vsel %vm2599, %v2592, %v2596
      %v2601 = vand.u32 2147483647, %v2490
      %vm2602 = vcmp.eq.f32.partialorder %v2601, 8.507059e+37
      %v2603 = vand.u32 %v2490, 2147483648
      %v2604 = vor.u32 1.1754944e-38, %v2603
      %v2605 = vsel %vm2602, %v2604, %v2600
      %v2606 = vmul.f32 1.0, %v2605
      %v2607 = vrcp.pop %v2491
      %v2608 = vmul.f32 %v2491, %v2607
      %v2609 = vsub.f32 1.0, %v2608
      %v2610 = vmul.f32 %v2607, %v2609
      %v2611 = vadd.f32 %v2607, %v2610
      %vm2612 = vweird.f32 %v2491
      %vm2613 = vweird.f32 %v2607
      %vm2614 = vmor %vm2612, %vm2613
      %v2615 = vsel %vm2614, %v2607, %v2611
      %v2616 = vand.u32 2147483647, %v2491
      %vm2617 = vcmp.eq.f32.partialorder %v2616, 8.507059e+37
      %v2618 = vand.u32 %v2491, 2147483648
      %v2619 = vor.u32 1.1754944e-38, %v2618
      %v2620 = vsel %vm2617, %v2619, %v2615
      %v2621 = vmul.f32 1.0, %v2620
      %v2622 = vrcp.pop %v2492
      %v2623 = vmul.f32 %v2492, %v2622
      %v2624 = vsub.f32 1.0, %v2623
      %v2625 = vmul.f32 %v2622, %v2624
      %v2626 = vadd.f32 %v2622, %v2625
      %vm2627 = vweird.f32 %v2492
      %vm2628 = vweird.f32 %v2622
      %vm2629 = vmor %vm2627, %vm2628
      %v2630 = vsel %vm2629, %v2622, %v2626
      %v2631 = vand.u32 2147483647, %v2492
      %vm2632 = vcmp.eq.f32.partialorder %v2631, 8.507059e+37
      %v2633 = vand.u32 %v2492, 2147483648
      %v2634 = vor.u32 1.1754944e-38, %v2633
      %v2635 = vsel %vm2632, %v2634, %v2630
      %v2636 = vmul.f32 1.0, %v2635
      %v2637 = vrcp.pop %v2493
      %v2638 = vmul.f32 %v2493, %v2637
      %v2639 = vsub.f32 1.0, %v2638
      %v2640 = vmul.f32 %v2637, %v2639
      %v2641 = vadd.f32 %v2637, %v2640
      %vm2642 = vweird.f32 %v2493
      %vm2643 = vweird.f32 %v2637
      %vm2644 = vmor %vm2642, %vm2643
      %v2645 = vsel %vm2644, %v2637, %v2641
      %v2646 = vand.u32 2147483647, %v2493
      %vm2647 = vcmp.eq.f32.partialorder %v2646, 8.507059e+37
      %v2648 = vand.u32 %v2493, 2147483648
      %v2649 = vor.u32 1.1754944e-38, %v2648
      %v2650 = vsel %vm2647, %v2649, %v2645
      %v2651 = vmul.f32 1.0, %v2650
      %v2652 = vrcp.pop %v2494
      %v2653 = vmul.f32 %v2494, %v2652
      %v2654 = vsub.f32 1.0, %v2653
      %v2655 = vmul.f32 %v2652, %v2654
      %v2656 = vadd.f32 %v2652, %v2655
      %vm2657 = vweird.f32 %v2494
      %vm2658 = vweird.f32 %v2652
      %vm2659 = vmor %vm2657, %vm2658
      %v2660 = vsel %vm2659, %v2652, %v2656
      %v2661 = vand.u32 2147483647, %v2494
      %vm2662 = vcmp.eq.f32.partialorder %v2661, 8.507059e+37
      %v2663 = vand.u32 %v2494, 2147483648
      %v2664 = vor.u32 1.1754944e-38, %v2663
      %v2665 = vsel %vm2662, %v2664, %v2660
      %v2666 = vmul.f32 1.0, %v2665
      %v2667 = vrcp.pop %v2495
      %v2668 = vmul.f32 %v2495, %v2667
      %v2669 = vsub.f32 1.0, %v2668
      %v2670 = vmul.f32 %v2667, %v2669
      %v2671 = vadd.f32 %v2667, %v2670
      %vm2672 = vweird.f32 %v2495
      %vm2673 = vweird.f32 %v2667
      %vm2674 = vmor %vm2672, %vm2673
      %v2675 = vsel %vm2674, %v2667, %v2671
      %v2676 = vand.u32 2147483647, %v2495
      %vm2677 = vcmp.eq.f32.partialorder %v2676, 8.507059e+37
      %v2678 = vand.u32 %v2495, 2147483648
      %v2679 = vor.u32 1.1754944e-38, %v2678
      %v2680 = vsel %vm2677, %v2679, %v2675
      %v2681 = vmul.f32 1.0, %v2680
      %v2682 = vrcp.pop %v2496
      %v2683 = vmul.f32 %v2496, %v2682
      %v2684 = vsub.f32 1.0, %v2683
      %v2685 = vmul.f32 %v2682, %v2684
      %v2686 = vadd.f32 %v2682, %v2685
      %vm2687 = vweird.f32 %v2496
      %vm2688 = vweird.f32 %v2682
      %vm2689 = vmor %vm2687, %vm2688
      %v2690 = vsel %vm2689, %v2682, %v2686
      %v2691 = vand.u32 2147483647, %v2496
      %vm2692 = vcmp.eq.f32.partialorder %v2691, 8.507059e+37
      %v2693 = vand.u32 %v2496, 2147483648
      %v2694 = vor.u32 1.1754944e-38, %v2693
      %v2695 = vsel %vm2692, %v2694, %v2690
      %v2696 = vmul.f32 1.0, %v2695
      %v2697 = vrcp.pop %v2497
      %v2698 = vmul.f32 %v2497, %v2697
      %v2699 = vsub.f32 1.0, %v2698
      %v2700 = vmul.f32 %v2697, %v2699
      %v2701 = vadd.f32 %v2697, %v2700
      %vm2702 = vweird.f32 %v2497
      %vm2703 = vweird.f32 %v2697
      %vm2704 = vmor %vm2702, %vm2703
      %v2705 = vsel %vm2704, %v2697, %v2701
      %v2706 = vand.u32 2147483647, %v2497
      %vm2707 = vcmp.eq.f32.partialorder %v2706, 8.507059e+37
      %v2708 = vand.u32 %v2497, 2147483648
      %v2709 = vor.u32 1.1754944e-38, %v2708
      %v2710 = vsel %vm2707, %v2709, %v2705
      %v2711 = vmul.f32 1.0, %v2710
      %v2712 = vrcp.pop %v2498
      %v2713 = vmul.f32 %v2498, %v2712
      %v2714 = vsub.f32 1.0, %v2713
      %v2715 = vmul.f32 %v2712, %v2714
      %v2716 = vadd.f32 %v2712, %v2715
      %vm2717 = vweird.f32 %v2498
      %vm2718 = vweird.f32 %v2712
      %vm2719 = vmor %vm2717, %vm2718
      %v2720 = vsel %vm2719, %v2712, %v2716
      %v2721 = vand.u32 2147483647, %v2498
      %vm2722 = vcmp.eq.f32.partialorder %v2721, 8.507059e+37
      %v2723 = vand.u32 %v2498, 2147483648
      %v2724 = vor.u32 1.1754944e-38, %v2723
      %v2725 = vsel %vm2722, %v2724, %v2720
      %v2726 = vmul.f32 1.0, %v2725
      %v2727 = vrcp.pop %v2499
      %v2728 = vmul.f32 %v2499, %v2727
      %v2729 = vsub.f32 1.0, %v2728
      %v2730 = vmul.f32 %v2727, %v2729
      %v2731 = vadd.f32 %v2727, %v2730
      %vm2732 = vweird.f32 %v2499
      %vm2733 = vweird.f32 %v2727
      %vm2734 = vmor %vm2732, %vm2733
      %v2735 = vsel %vm2734, %v2727, %v2731
      %v2736 = vand.u32 2147483647, %v2499
      %vm2737 = vcmp.eq.f32.partialorder %v2736, 8.507059e+37
      %v2738 = vand.u32 %v2499, 2147483648
      %v2739 = vor.u32 1.1754944e-38, %v2738
      %v2740 = vsel %vm2737, %v2739, %v2735
      %v2741 = vmul.f32 1.0, %v2740
      %v2742 = vrcp.pop %v2500
      %v2743 = vmul.f32 %v2500, %v2742
      %v2744 = vsub.f32 1.0, %v2743
      %v2745 = vmul.f32 %v2742, %v2744
      %v2746 = vadd.f32 %v2742, %v2745
      %vm2747 = vweird.f32 %v2500
      %vm2748 = vweird.f32 %v2742
      %vm2749 = vmor %vm2747, %vm2748
      %v2750 = vsel %vm2749, %v2742, %v2746
      %v2751 = vand.u32 2147483647, %v2500
      %vm2752 = vcmp.eq.f32.partialorder %v2751, 8.507059e+37
      %v2753 = vand.u32 %v2500, 2147483648
      %v2754 = vor.u32 1.1754944e-38, %v2753
      %v2755 = vsel %vm2752, %v2754, %v2750
      %v2756 = vmul.f32 1.0, %v2755
      %v2757 = vrcp.pop %v2501
      %v2758 = vmul.f32 %v2501, %v2757
      %v2759 = vsub.f32 1.0, %v2758
      %v2760 = vmul.f32 %v2757, %v2759
      %v2761 = vadd.f32 %v2757, %v2760
      %vm2762 = vweird.f32 %v2501
      %vm2763 = vweird.f32 %v2757
      %vm2764 = vmor %vm2762, %vm2763
      %v2765 = vsel %vm2764, %v2757, %v2761
      %v2766 = vand.u32 2147483647, %v2501
      %vm2767 = vcmp.eq.f32.partialorder %v2766, 8.507059e+37
      %v2768 = vand.u32 %v2501, 2147483648
      %v2769 = vor.u32 1.1754944e-38, %v2768
      %v2770 = vsel %vm2767, %v2769, %v2765
      %v2771 = vmul.f32 1.0, %v2770
      %v2772 = vmul.f32 %v2412, %v2516
      %v2773 = vmul.f32 %v2413, %v2531
      %v2774 = vmul.f32 %v2414, %v2546
      %v2775 = vmul.f32 %v2415, %v2561
      %v2776 = vmul.f32 %v2416, %v2576
      %v2777 = vmul.f32 %v2417, %v2591
      %v2778 = vmul.f32 %v2418, %v2606
      %v2779 = vmul.f32 %v2419, %v2621
      %v2780 = vmul.f32 %v2420, %v2636
      %v2781 = vmul.f32 %v2421, %v2651
      %v2782 = vmul.f32 %v2422, %v2666
      %v2783 = vmul.f32 %v2423, %v2681
      %v2784 = vmul.f32 %v2424, %v2696
      %v2785 = vmul.f32 %v2425, %v2711
      %v2786 = vmul.f32 %v2426, %v2726
      %v2787 = vmul.f32 %v2427, %v2741
      %v2788 = vmul.f32 %v2428, %v2756
      %v2789 = vmul.f32 %v2429, %v2771
      %v2790 = vmul.f32 %v2772, %v680
      %v2791 = vmul.f32 %v2773, %v681
      %v2792 = vmul.f32 %v2774, %v682
      %v2793 = vmul.f32 %v2775, %v683
      %v2794 = vmul.f32 %v2776, %v684
      %v2795 = vmul.f32 %v2777, %v685
      %v2796 = vmul.f32 %v2778, %v686
      %v2797 = vmul.f32 %v2779, %v687
      %v2798 = vmul.f32 %v2780, %v688
      %v2799 = vmul.f32 %v2781, %v689
      %v2800 = vmul.f32 %v2782, %v690
      %v2801 = vmul.f32 %v2783, %v691
      %v2802 = vmul.f32 %v2784, %v692
      %v2803 = vmul.f32 %v2785, %v693
      %v2804 = vmul.f32 %v2786, %v694
      %v2805 = vmul.f32 %v2787, %v695
      %v2806 = vmul.f32 %v2788, %v696
      %v2807 = vmul.f32 %v2789, %v697
      %v2808 = vpack.c.bf16 %v2790, %v2790
      %v2809 = vpack.c.bf16 %v2791, %v2791
      %v2810 = vpack.c.bf16 %v2792, %v2792
      %v2811 = vpack.c.bf16 %v2793, %v2793
      %v2812 = vpack.c.bf16 %v2794, %v2794
      %v2813 = vpack.c.bf16 %v2795, %v2795
      %v2814 = vpack.c.bf16 %v2796, %v2796
      %v2815 = vpack.c.bf16 %v2797, %v2797
      %v2816 = vpack.c.bf16 %v2798, %v2798
      %v2817 = vpack.c.bf16 %v2799, %v2799
      %v2818 = vpack.c.bf16 %v2800, %v2800
      %v2819 = vpack.c.bf16 %v2801, %v2801
      %v2820 = vpack.c.bf16 %v2802, %v2802
      %v2821 = vpack.c.bf16 %v2803, %v2803
      %v2822 = vpack.c.bf16 %v2804, %v2804
      %v2823 = vpack.c.bf16 %v2805, %v2805
      %v2824 = vpack.c.bf16 %v2806, %v2806
      %v2825 = vpack.c.bf16 %v2807, %v2807
      %2826 = vst.msk [vmem:[#allocation2 + $0x8] sm:$0xf] %vm698, %v2808
      %2827 = vst.msk [vmem:[#allocation2 + $0xc] sm:$0xf] %vm698, %v2809
      %2828 = vst.msk [vmem:[#allocation2 + $0x10] sm:$0xf] %vm698, %v2810
      %2829 = vst.msk [vmem:[#allocation2 + $0x14] sm:$0xf] %vm698, %v2811
      %2830 = vst.msk [vmem:[#allocation2 + $0x18] sm:$0xf] %vm698, %v2812
      %2831 = vst.msk [vmem:[#allocation2 + $0x1c] sm:$0xf] %vm698, %v2813
      %2832 = vst.msk [vmem:[#allocation2 + $0x20] sm:$0xf] %vm698, %v2814
      %2833 = vst.msk [vmem:[#allocation2 + $0x24] sm:$0xf] %vm698, %v2815
      %2834 = vst.msk [vmem:[#allocation2 + $0x28] sm:$0xf] %vm698, %v2816
      %2835 = vst.msk [vmem:[#allocation2 + $0x2c] sm:$0xf] %vm698, %v2817
      %2836 = vst.msk [vmem:[#allocation2 + $0x30] sm:$0xf] %vm698, %v2818
      %2837 = vst.msk [vmem:[#allocation2 + $0x34] sm:$0xf] %vm698, %v2819
      %2838 = vst.msk [vmem:[#allocation2 + $0x38] sm:$0xf] %vm698, %v2820
      %2839 = vst.msk [vmem:[#allocation2 + $0x3c] sm:$0xf] %vm698, %v2821
      %2840 = vst.msk [vmem:[#allocation2 + $0x40] sm:$0xf] %vm698, %v2822
      %2841 = vst.msk [vmem:[#allocation2 + $0x44] sm:$0xf] %vm698, %v2823
      %2842 = vst.msk [vmem:[#allocation2 + $0x48] sm:$0xf] %vm698, %v2824
      %2843 = vst.msk [vmem:[#allocation2 + $0x4c] sm:$0xf] %vm698, %v2825
      %v2844 = vld [vmem:[#allocation2 + $0x4] sm:$0x8]
      %v2845 = vld [vmem:[#allocation2 + $0x8] sm:$0xf]
      %v2846 = vld [vmem:[#allocation2 + $0xc] sm:$0xf]
      %v2847 = vld [vmem:[#allocation2 + $0x10] sm:$0xf]
      %v2848 = vld [vmem:[#allocation2 + $0x14] sm:$0xf]
      %v2849 = vld [vmem:[#allocation2 + $0x18] sm:$0xf]
      %v2850 = vld [vmem:[#allocation2 + $0x1c] sm:$0xf]
      %v2851 = vld [vmem:[#allocation2 + $0x20] sm:$0xf]
      %v2852 = vld [vmem:[#allocation2 + $0x24] sm:$0xf]
      %v2853 = vld [vmem:[#allocation2 + $0x28] sm:$0xf]
      %v2854 = vld [vmem:[#allocation2 + $0x2c] sm:$0xf]
      %v2855 = vld [vmem:[#allocation2 + $0x30] sm:$0xf]
      %v2856 = vld [vmem:[#allocation2 + $0x34] sm:$0xf]
      %v2857 = vld [vmem:[#allocation2 + $0x38] sm:$0xf]
      %v2858 = vld [vmem:[#allocation2 + $0x3c] sm:$0xf]
      %v2859 = vld [vmem:[#allocation2 + $0x40] sm:$0xf]
      %v2860 = vld [vmem:[#allocation2 + $0x44] sm:$0xf]
      %v2861 = vld [vmem:[#allocation2 + $0x48] sm:$0xf]
      %v2862 = vld [vmem:[#allocation2 + $0x4c] sm:$0x7]
      %v2863 = vld [vmem:[%s9] sm:$0xf]
      %v2864 = vld [vmem:[%s9 + $0x4] sm:$0xf]
      %v2865 = vld [vmem:[%s9 + $0x8] sm:$0xf]
      %v2866 = vld [vmem:[%s9 + $0xc] sm:$0xf]
      %v2867 = vld [vmem:[%s9 + $0x10] sm:$0xf]
      %v2868 = vld [vmem:[%s9 + $0x14] sm:$0xf]
      %v2869 = vld [vmem:[%s9 + $0x18] sm:$0xf]
      %v2870 = vld [vmem:[%s9 + $0x1c] sm:$0xf]
      %v2871 = vld [vmem:[#allocation2 + $0x4c] sm:$0xf]
      %s2872 = scalar_lea.vmem %s9, 32
      %v2873 = vld [vmem:[%s2872] sm:$0xf]
      %v2874 = vld [vmem:[%s2872 + $0x4] sm:$0xf]
      %v2875 = vld [vmem:[%s2872 + $0x8] sm:$0xf]
      %v2876 = vld [vmem:[%s2872 + $0xc] sm:$0xf]
      %v2877 = vld [vmem:[%s2872 + $0x10] sm:$0xf]
      %v2878 = vld [vmem:[%s2872 + $0x14] sm:$0xf]
      %v2879 = vld [vmem:[%s2872 + $0x18] sm:$0xf]
      %v2880 = vld [vmem:[%s2872 + $0x1c] sm:$0xf]
      %v2900 = vunpack.c.l.b16 %v2844
      %v2901 = vunpack.c.l.b16 %v2845
      %v2902 = vunpack.c.l.b16 %v2846
      %v2903 = vunpack.c.l.b16 %v2847
      %v2904 = vunpack.c.l.b16 %v2848
      %v2905 = vunpack.c.l.b16 %v2849
      %v2906 = vunpack.c.l.b16 %v2850
      %v2907 = vunpack.c.l.b16 %v2851
      %v2908 = vunpack.c.l.b16 %v2852
      %v2909 = vunpack.c.l.b16 %v2853
      %v2910 = vunpack.c.l.b16 %v2854
      %v2911 = vunpack.c.l.b16 %v2855
      %v2912 = vunpack.c.l.b16 %v2856
      %v2913 = vunpack.c.l.b16 %v2857
      %v2914 = vunpack.c.l.b16 %v2858
      %v2915 = vunpack.c.l.b16 %v2859
      %v2916 = vunpack.c.l.b16 %v2860
      %v2917 = vunpack.c.l.b16 %v2861
      %v2918 = vunpack.c.l.b16 %v2871
      %v2919 = vpack.c.b16 %v2901, %v2900
      %v2920 = vpack.c.b16 %v2903, %v2902
      %v2921 = vpack.c.b16 %v2905, %v2904
      %v2922 = vpack.c.b16 %v2907, %v2906
      %v2923 = vpack.c.b16 %v2909, %v2908
      %v2924 = vpack.c.b16 %v2911, %v2910
      %v2925 = vpack.c.b16 %v2913, %v2912
      %v2926 = vpack.c.b16 %v2915, %v2914
      %v2927 = vpack.c.b16 %v2917, %v2916
      %v2928 = vpack.c.b16 %v2918, %v2918
      %v2930 = vshrl.u32 %v2919, 16
      %v2932 = vrot.slane %v2930, 3
      %v2933 = vshll.u32 %v2919, 16
      %v2935 = vrot.slane %v2933, 4
      %v2936 = vor.u32 %v2932, %v2935
      %v2938 = vshrl.u32 %v2920, 16
      %v2940 = vrot.slane %v2938, 3
      %v2941 = vshll.u32 %v2920, 16
      %v2943 = vrot.slane %v2941, 4
      %v2944 = vor.u32 %v2940, %v2943
      %v2945 = vsel %vm1725, %v2936, %v2944
      %v2947 = vshrl.u32 %v2921, 16
      %v2949 = vrot.slane %v2947, 3
      %v2950 = vshll.u32 %v2921, 16
      %v2952 = vrot.slane %v2950, 4
      %v2953 = vor.u32 %v2949, %v2952
      %v2954 = vsel %vm1725, %v2944, %v2953
      %v2956 = vshrl.u32 %v2922, 16
      %v2958 = vrot.slane %v2956, 3
      %v2959 = vshll.u32 %v2922, 16
      %v2961 = vrot.slane %v2959, 4
      %v2962 = vor.u32 %v2958, %v2961
      %v2963 = vsel %vm1725, %v2953, %v2962
      %v2965 = vshrl.u32 %v2923, 16
      %v2967 = vrot.slane %v2965, 3
      %v2968 = vshll.u32 %v2923, 16
      %v2970 = vrot.slane %v2968, 4
      %v2971 = vor.u32 %v2967, %v2970
      %v2972 = vsel %vm1725, %v2962, %v2971
      %v2974 = vshrl.u32 %v2924, 16
      %v2976 = vrot.slane %v2974, 3
      %v2977 = vshll.u32 %v2924, 16
      %v2979 = vrot.slane %v2977, 4
      %v2980 = vor.u32 %v2976, %v2979
      %v2981 = vsel %vm1725, %v2971, %v2980
      %v2983 = vshrl.u32 %v2925, 16
      %v2985 = vrot.slane %v2983, 3
      %v2986 = vshll.u32 %v2925, 16
      %v2988 = vrot.slane %v2986, 4
      %v2989 = vor.u32 %v2985, %v2988
      %v2990 = vsel %vm1725, %v2980, %v2989
      %v2992 = vshrl.u32 %v2926, 16
      %v2994 = vrot.slane %v2992, 3
      %v2995 = vshll.u32 %v2926, 16
      %v2997 = vrot.slane %v2995, 4
      %v2998 = vor.u32 %v2994, %v2997
      %v2999 = vsel %vm1725, %v2989, %v2998
      %v3001 = vshrl.u32 %v2927, 16
      %v3003 = vrot.slane %v3001, 3
      %v3004 = vshll.u32 %v2927, 16
      %v3006 = vrot.slane %v3004, 4
      %v3007 = vor.u32 %v3003, %v3006
      %v3008 = vsel %vm1725, %v2998, %v3007
      %v3010 = vshrl.u32 %v2928, 16
      %v3012 = vrot.slane %v3010, 3
      %v3013 = vshll.u32 %v2928, 16
      %v3015 = vrot.slane %v3013, 4
      %v3016 = vor.u32 %v3012, %v3015
      %v3017 = vsel %vm1725, %v3007, %v3016
      %v3026 = vunpack.c.l.b16 %v2873
      %v3027 = vunpack.c.l.b16 %v2874
      %v3028 = vunpack.c.l.b16 %v2875
      %v3029 = vunpack.c.l.b16 %v2876
      %v3030 = vunpack.c.l.b16 %v2877
      %v3031 = vunpack.c.l.b16 %v2878
      %v3032 = vunpack.c.l.b16 %v2879
      %v3033 = vunpack.c.l.b16 %v2880
      %v3034 = vpack.c.b16 %v3027, %v3026
      %v3035 = vpack.c.b16 %v3029, %v3028
      %v3036 = vpack.c.b16 %v3031, %v3030
      %v3037 = vpack.c.b16 %v3033, %v3032
      %v3043 = vsel %vm896, %v2945, 0
      %v3046 = vsel %vm896, %v2954, 0
      %v3049 = vsel %vm896, %v2963, 0
      %v3052 = vsel %vm896, %v2972, 0
      %v3055 = vsel %vm896, %v2981, 0
      %v3058 = vsel %vm896, %v2990, 0
      %v3061 = vsel %vm896, %v2999, 0
      %v3064 = vsel %vm896, %v3008, 0
      %v3067 = vsel %vm896, %v3017, 0
      %3069 = vmatpush.bf16.msra.mxu0 0
      %3070 = vmatpush.bf16.msra.mxu0 0
      %3071 = vmatpush.bf16.msra.mxu0 0
      %3072 = vmatpush.bf16.msra.mxu0 0
      %3073 = vmatpush.bf16.msra.mxu0 %v3037
      %3074 = vmatpush.bf16.msra.mxu0 %v3036
      %3075 = vmatpush.bf16.msra.mxu0 %v3035
      %3076 = vmatpush.bf16.msra.mxu0 %v3034
      %3077 = vmatmul.bf16.gmra.mxu0 %v3043
      %v3078 = vpop.f32.mrf.mxu0
      %v3079 = vadd.f32 0.0, %v3078
      %v3080 = vpop.f32.mrf.mxu0
      %v3081 = vadd.f32 0.0, %v3080
      %3082 = vmatmul.bf16.gmra.mxu0 %v3046
      %v3083 = vpop.f32.mrf.mxu0
      %v3084 = vadd.f32 0.0, %v3083
      %v3085 = vpop.f32.mrf.mxu0
      %v3086 = vadd.f32 0.0, %v3085
      %3087 = vmatmul.bf16.gmra.mxu0 %v3049
      %v3088 = vpop.f32.mrf.mxu0
      %v3089 = vadd.f32 0.0, %v3088
      %v3090 = vpop.f32.mrf.mxu0
      %v3091 = vadd.f32 0.0, %v3090
      %3092 = vmatmul.bf16.gmra.mxu0 %v3052
      %v3093 = vpop.f32.mrf.mxu0
      %v3094 = vadd.f32 0.0, %v3093
      %v3095 = vpop.f32.mrf.mxu0
      %v3096 = vadd.f32 0.0, %v3095
      %3097 = vmatmul.bf16.gmra.mxu0 %v3055
      %v3098 = vpop.f32.mrf.mxu0
      %v3099 = vadd.f32 0.0, %v3098
      %v3100 = vpop.f32.mrf.mxu0
      %v3101 = vadd.f32 0.0, %v3100
      %3102 = vmatmul.bf16.gmra.mxu0 %v3058
      %v3103 = vpop.f32.mrf.mxu0
      %v3104 = vadd.f32 0.0, %v3103
      %v3105 = vpop.f32.mrf.mxu0
      %v3106 = vadd.f32 0.0, %v3105
      %3107 = vmatmul.bf16.gmra.mxu0 %v3061
      %v3108 = vpop.f32.mrf.mxu0
      %v3109 = vadd.f32 0.0, %v3108
      %v3110 = vpop.f32.mrf.mxu0
      %v3111 = vadd.f32 0.0, %v3110
      %3112 = vmatmul.bf16.gmra.mxu0 %v3064
      %v3113 = vpop.f32.mrf.mxu0
      %v3114 = vadd.f32 0.0, %v3113
      %v3115 = vpop.f32.mrf.mxu0
      %v3116 = vadd.f32 0.0, %v3115
      %3117 = vmatmul.bf16.gmra.mxu0 %v3067
      %v3118 = vpop.f32.mrf.mxu0
      %v3119 = vadd.f32 0.0, %v3118
      %v3120 = vpop.f32.mrf.mxu0
      %v3121 = vadd.f32 0.0, %v3120
      %3122 = vdwg.mxu0
      %v3124 = vunpack.c.l.b16 %v2862
      %v3125 = vpack.c.b16 %v3124, %v3124
      %vm3126 = vcmask 1044480
      %v3127 = vrot.slane %v2919, 3
      %v3128 = vrot.slane %v2920, 3
      %v3129 = vsel %vm3126, %v3127, %v3128
      %v3130 = vrot.slane %v2921, 3
      %v3131 = vsel %vm3126, %v3128, %v3130
      %v3132 = vrot.slane %v2922, 3
      %v3133 = vsel %vm3126, %v3130, %v3132
      %v3134 = vrot.slane %v2923, 3
      %v3135 = vsel %vm3126, %v3132, %v3134
      %v3136 = vrot.slane %v2924, 3
      %v3137 = vsel %vm3126, %v3134, %v3136
      %v3138 = vrot.slane %v2925, 3
      %v3139 = vsel %vm3126, %v3136, %v3138
      %v3140 = vrot.slane %v2926, 3
      %v3141 = vsel %vm3126, %v3138, %v3140
      %v3142 = vrot.slane %v2927, 3
      %v3143 = vsel %vm3126, %v3140, %v3142
      %v3144 = vrot.slane %v3125, 3
      %v3145 = vsel %vm3126, %v3142, %v3144
      %v3154 = vunpack.c.l.b16 %v2863
      %v3155 = vunpack.c.l.b16 %v2864
      %v3156 = vunpack.c.l.b16 %v2865
      %v3157 = vunpack.c.l.b16 %v2866
      %v3158 = vunpack.c.l.b16 %v2867
      %v3159 = vunpack.c.l.b16 %v2868
      %v3160 = vunpack.c.l.b16 %v2869
      %v3161 = vunpack.c.l.b16 %v2870
      %v3162 = vpack.c.b16 %v3155, %v3154
      %v3163 = vpack.c.b16 %v3157, %v3156
      %v3164 = vpack.c.b16 %v3159, %v3158
      %v3165 = vpack.c.b16 %v3161, %v3160
      %v3171 = vsel %vm896, %v3129, 0
      %v3174 = vsel %vm896, %v3131, 0
      %v3177 = vsel %vm896, %v3133, 0
      %v3180 = vsel %vm896, %v3135, 0
      %v3183 = vsel %vm896, %v3137, 0
      %v3186 = vsel %vm896, %v3139, 0
      %v3189 = vsel %vm896, %v3141, 0
      %v3192 = vsel %vm896, %v3143, 0
      %v3195 = vsel %vm896, %v3145, 0
      %3197 = vmatpush.bf16.msra.mxu0 0
      %3198 = vmatpush.bf16.msra.mxu0 0
      %3199 = vmatpush.bf16.msra.mxu0 0
      %3200 = vmatpush.bf16.msra.mxu0 0
      %3201 = vmatpush.bf16.msra.mxu0 %v3165
      %3202 = vmatpush.bf16.msra.mxu0 %v3164
      %3203 = vmatpush.bf16.msra.mxu0 %v3163
      %3204 = vmatpush.bf16.msra.mxu0 %v3162
      %3205 = vmatmul.bf16.gmra.mxu0 %v3171
      %v3206 = vpop.f32.mrf.mxu0
      %v3207 = vadd.f32 %v3079, %v3206
      %v3208 = vpop.f32.mrf.mxu0
      %v3209 = vadd.f32 %v3081, %v3208
      %3210 = vmatmul.bf16.gmra.mxu0 %v3174
      %v3211 = vpop.f32.mrf.mxu0
      %v3212 = vadd.f32 %v3084, %v3211
      %v3213 = vpop.f32.mrf.mxu0
      %v3214 = vadd.f32 %v3086, %v3213
      %3215 = vmatmul.bf16.gmra.mxu0 %v3177
      %v3216 = vpop.f32.mrf.mxu0
      %v3217 = vadd.f32 %v3089, %v3216
      %v3218 = vpop.f32.mrf.mxu0
      %v3219 = vadd.f32 %v3091, %v3218
      %3220 = vmatmul.bf16.gmra.mxu0 %v3180
      %v3221 = vpop.f32.mrf.mxu0
      %v3222 = vadd.f32 %v3094, %v3221
      %v3223 = vpop.f32.mrf.mxu0
      %v3224 = vadd.f32 %v3096, %v3223
      %3225 = vmatmul.bf16.gmra.mxu0 %v3183
      %v3226 = vpop.f32.mrf.mxu0
      %v3227 = vadd.f32 %v3099, %v3226
      %v3228 = vpop.f32.mrf.mxu0
      %v3229 = vadd.f32 %v3101, %v3228
      %3230 = vmatmul.bf16.gmra.mxu0 %v3186
      %v3231 = vpop.f32.mrf.mxu0
      %v3232 = vadd.f32 %v3104, %v3231
      %v3233 = vpop.f32.mrf.mxu0
      %v3234 = vadd.f32 %v3106, %v3233
      %3235 = vmatmul.bf16.gmra.mxu0 %v3189
      %v3236 = vpop.f32.mrf.mxu0
      %v3237 = vadd.f32 %v3109, %v3236
      %v3238 = vpop.f32.mrf.mxu0
      %v3239 = vadd.f32 %v3111, %v3238
      %3240 = vmatmul.bf16.gmra.mxu0 %v3192
      %v3241 = vpop.f32.mrf.mxu0
      %v3242 = vadd.f32 %v3114, %v3241
      %v3243 = vpop.f32.mrf.mxu0
      %v3244 = vadd.f32 %v3116, %v3243
      %3245 = vmatmul.bf16.gmra.mxu0 %v3195
      %v3246 = vpop.f32.mrf.mxu0
      %v3247 = vadd.f32 %v3119, %v3246
      %v3248 = vpop.f32.mrf.mxu0
      %v3249 = vadd.f32 %v3121, %v3248
      %3250 = vdwg.mxu0
      %s3251 = scalar_lea.vmem %s9, 64
      %v3252 = vld [vmem:[%s3251] sm:$0xf]
      %v3253 = vld [vmem:[%s3251 + $0x4] sm:$0xf]
      %v3254 = vld [vmem:[%s3251 + $0x8] sm:$0xf]
      %v3255 = vld [vmem:[%s3251 + $0xc] sm:$0xf]
      %v3256 = vld [vmem:[%s3251 + $0x10] sm:$0xf]
      %v3257 = vld [vmem:[%s3251 + $0x14] sm:$0xf]
      %v3258 = vld [vmem:[%s3251 + $0x18] sm:$0xf]
      %v3259 = vld [vmem:[%s3251 + $0x1c] sm:$0xf]
      %v3260 = vpack.c.b16 %v2902, %v2901
      %v3261 = vpack.c.b16 %v2904, %v2903
      %v3262 = vpack.c.b16 %v2906, %v2905
      %v3263 = vpack.c.b16 %v2908, %v2907
      %v3264 = vpack.c.b16 %v2910, %v2909
      %v3265 = vpack.c.b16 %v2912, %v2911
      %v3266 = vpack.c.b16 %v2914, %v2913
      %v3267 = vpack.c.b16 %v2916, %v2915
      %v3268 = vpack.c.b16 %v2918, %v2917
      %v3277 = vunpack.c.l.b16 %v3252
      %v3278 = vunpack.c.l.b16 %v3253
      %v3279 = vunpack.c.l.b16 %v3254
      %v3280 = vunpack.c.l.b16 %v3255
      %v3281 = vunpack.c.l.b16 %v3256
      %v3282 = vunpack.c.l.b16 %v3257
      %v3283 = vunpack.c.l.b16 %v3258
      %v3284 = vunpack.c.l.b16 %v3259
      %v3285 = vpack.c.b16 %v3278, %v3277
      %v3286 = vpack.c.b16 %v3280, %v3279
      %v3287 = vpack.c.b16 %v3282, %v3281
      %v3288 = vpack.c.b16 %v3284, %v3283
      %v3294 = vsel %vm896, %v3260, 0
      %v3297 = vsel %vm896, %v3261, 0
      %v3300 = vsel %vm896, %v3262, 0
      %v3303 = vsel %vm896, %v3263, 0
      %v3306 = vsel %vm896, %v3264, 0
      %v3309 = vsel %vm896, %v3265, 0
      %v3312 = vsel %vm896, %v3266, 0
      %v3315 = vsel %vm896, %v3267, 0
      %v3318 = vsel %vm896, %v3268, 0
      %3320 = vmatpush.bf16.msra.mxu0 0
      %3321 = vmatpush.bf16.msra.mxu0 0
      %3322 = vmatpush.bf16.msra.mxu0 0
      %3323 = vmatpush.bf16.msra.mxu0 0
      %3324 = vmatpush.bf16.msra.mxu0 %v3288
      %3325 = vmatpush.bf16.msra.mxu0 %v3287
      %3326 = vmatpush.bf16.msra.mxu0 %v3286
      %3327 = vmatpush.bf16.msra.mxu0 %v3285
      %3328 = vmatmul.bf16.gmra.mxu0 %v3294
      %v3329 = vpop.f32.mrf.mxu0
      %v3330 = vadd.f32 0.0, %v3329
      %v3331 = vpop.f32.mrf.mxu0
      %v3332 = vadd.f32 0.0, %v3331
      %3333 = vmatmul.bf16.gmra.mxu0 %v3297
      %v3334 = vpop.f32.mrf.mxu0
      %v3335 = vadd.f32 0.0, %v3334
      %v3336 = vpop.f32.mrf.mxu0
      %v3337 = vadd.f32 0.0, %v3336
      %3338 = vmatmul.bf16.gmra.mxu0 %v3300
      %v3339 = vpop.f32.mrf.mxu0
      %v3340 = vadd.f32 0.0, %v3339
      %v3341 = vpop.f32.mrf.mxu0
      %v3342 = vadd.f32 0.0, %v3341
      %3343 = vmatmul.bf16.gmra.mxu0 %v3303
      %v3344 = vpop.f32.mrf.mxu0
      %v3345 = vadd.f32 0.0, %v3344
      %v3346 = vpop.f32.mrf.mxu0
      %v3347 = vadd.f32 0.0, %v3346
      %3348 = vmatmul.bf16.gmra.mxu0 %v3306
      %v3349 = vpop.f32.mrf.mxu0
      %v3350 = vadd.f32 0.0, %v3349
      %v3351 = vpop.f32.mrf.mxu0
      %v3352 = vadd.f32 0.0, %v3351
      %3353 = vmatmul.bf16.gmra.mxu0 %v3309
      %v3354 = vpop.f32.mrf.mxu0
      %v3355 = vadd.f32 0.0, %v3354
      %v3356 = vpop.f32.mrf.mxu0
      %v3357 = vadd.f32 0.0, %v3356
      %3358 = vmatmul.bf16.gmra.mxu0 %v3312
      %v3359 = vpop.f32.mrf.mxu0
      %v3360 = vadd.f32 0.0, %v3359
      %v3361 = vpop.f32.mrf.mxu0
      %v3362 = vadd.f32 0.0, %v3361
      %3363 = vmatmul.bf16.gmra.mxu0 %v3315
      %v3364 = vpop.f32.mrf.mxu0
      %v3365 = vadd.f32 0.0, %v3364
      %v3366 = vpop.f32.mrf.mxu0
      %v3367 = vadd.f32 0.0, %v3366
      %3368 = vmatmul.bf16.gmra.mxu0 %v3318
      %v3369 = vpop.f32.mrf.mxu0
      %v3370 = vadd.f32 0.0, %v3369
      %v3371 = vpop.f32.mrf.mxu0
      %v3372 = vadd.f32 0.0, %v3371
      %3373 = vdwg.mxu0
      %v3374 = vadd.f32 %v3207, %v3330
      %v3375 = vadd.f32 %v3209, %v3332
      %v3376 = vadd.f32 %v3212, %v3335
      %v3377 = vadd.f32 %v3214, %v3337
      %v3378 = vadd.f32 %v3217, %v3340
      %v3379 = vadd.f32 %v3219, %v3342
      %v3380 = vadd.f32 %v3222, %v3345
      %v3381 = vadd.f32 %v3224, %v3347
      %v3382 = vadd.f32 %v3227, %v3350
      %v3383 = vadd.f32 %v3229, %v3352
      %v3384 = vadd.f32 %v3232, %v3355
      %v3385 = vadd.f32 %v3234, %v3357
      %v3386 = vadd.f32 %v3237, %v3360
      %v3387 = vadd.f32 %v3239, %v3362
      %v3388 = vadd.f32 %v3242, %v3365
      %v3389 = vadd.f32 %v3244, %v3367
      %v3390 = vadd.f32 %v3247, %v3370
      %v3391 = vadd.f32 %v3249, %v3372
      %v3392 = vld [vmem:[#allocation2 + $0x8] sm:$0xf]
      %v3393 = vld [vmem:[#allocation2 + $0xc] sm:$0xf]
      %v3394 = vld [vmem:[#allocation2 + $0x10] sm:$0xf]
      %v3395 = vld [vmem:[#allocation2 + $0x14] sm:$0xf]
      %v3396 = vld [vmem:[#allocation2 + $0x18] sm:$0xf]
      %v3397 = vld [vmem:[#allocation2 + $0x1c] sm:$0xf]
      %v3398 = vld [vmem:[#allocation2 + $0x20] sm:$0xf]
      %v3399 = vld [vmem:[#allocation2 + $0x24] sm:$0xf]
      %v3400 = vld [vmem:[#allocation2 + $0x28] sm:$0xf]
      %v3401 = vld [vmem:[#allocation2 + $0x2c] sm:$0xf]
      %v3402 = vld [vmem:[#allocation2 + $0x30] sm:$0xf]
      %v3403 = vld [vmem:[#allocation2 + $0x34] sm:$0xf]
      %v3404 = vld [vmem:[#allocation2 + $0x38] sm:$0xf]
      %v3405 = vld [vmem:[#allocation2 + $0x3c] sm:$0xf]
      %v3406 = vld [vmem:[#allocation2 + $0x40] sm:$0xf]
      %v3407 = vld [vmem:[#allocation2 + $0x44] sm:$0xf]
      %v3408 = vld [vmem:[#allocation2 + $0x48] sm:$0xf]
      %v3409 = vld [vmem:[#allocation2 + $0x4c] sm:$0xf]
      %v3410 = vld [vmem:[#allocation2 + $0x50] sm:$0x1]
      %s3411 = scalar_lea.vmem %s9, 96
      %v3412 = vld [vmem:[%s3411] sm:$0xf]
      %v3413 = vld [vmem:[%s3411 + $0x4] sm:$0xf]
      %v3414 = vld [vmem:[%s3411 + $0x8] sm:$0xf]
      %v3415 = vld [vmem:[%s3411 + $0xc] sm:$0xf]
      %v3416 = vld [vmem:[%s3411 + $0x10] sm:$0xf]
      %v3417 = vld [vmem:[%s3411 + $0x14] sm:$0xf]
      %v3418 = vld [vmem:[%s3411 + $0x18] sm:$0xf]
      %v3419 = vld [vmem:[%s3411 + $0x1c] sm:$0xf]
      %v3439 = vunpack.c.l.b16 %v3392
      %v3440 = vunpack.c.l.b16 %v3393
      %v3441 = vunpack.c.l.b16 %v3394
      %v3442 = vunpack.c.l.b16 %v3395
      %v3443 = vunpack.c.l.b16 %v3396
      %v3444 = vunpack.c.l.b16 %v3397
      %v3445 = vunpack.c.l.b16 %v3398
      %v3446 = vunpack.c.l.b16 %v3399
      %v3447 = vunpack.c.l.b16 %v3400
      %v3448 = vunpack.c.l.b16 %v3401
      %v3449 = vunpack.c.l.b16 %v3402
      %v3450 = vunpack.c.l.b16 %v3403
      %v3451 = vunpack.c.l.b16 %v3404
      %v3452 = vunpack.c.l.b16 %v3405
      %v3453 = vunpack.c.l.b16 %v3406
      %v3454 = vunpack.c.l.b16 %v3407
      %v3455 = vunpack.c.l.b16 %v3408
      %v3456 = vunpack.c.l.b16 %v3409
      %v3457 = vunpack.c.l.b16 %v3410
      %v3458 = vpack.c.b16 %v3440, %v3439
      %v3459 = vpack.c.b16 %v3442, %v3441
      %v3460 = vpack.c.b16 %v3444, %v3443
      %v3461 = vpack.c.b16 %v3446, %v3445
      %v3462 = vpack.c.b16 %v3448, %v3447
      %v3463 = vpack.c.b16 %v3450, %v3449
      %v3464 = vpack.c.b16 %v3452, %v3451
      %v3465 = vpack.c.b16 %v3454, %v3453
      %v3466 = vpack.c.b16 %v3456, %v3455
      %v3467 = vpack.c.b16 %v3457, %v3457
      %v3469 = vshrl.u32 %v3458, 16
      %v3471 = vshll.u32 %v3458, 16
      %v3473 = vrot.slane %v3471, 1
      %v3474 = vor.u32 %v3469, %v3473
      %v3476 = vshll.u32 %v3459, 16
      %v3478 = vrot.slane %v3476, 1
      %v3479 = vsel %vm1996, %v3474, %v3478
      %v3480 = vshrl.u32 %v3459, 16
      %v3482 = vor.u32 %v3480, %v3478
      %v3484 = vshll.u32 %v3460, 16
      %v3486 = vrot.slane %v3484, 1
      %v3487 = vsel %vm1996, %v3482, %v3486
      %v3488 = vshrl.u32 %v3460, 16
      %v3490 = vor.u32 %v3488, %v3486
      %v3492 = vshll.u32 %v3461, 16
      %v3494 = vrot.slane %v3492, 1
      %v3495 = vsel %vm1996, %v3490, %v3494
      %v3496 = vshrl.u32 %v3461, 16
      %v3498 = vor.u32 %v3496, %v3494
      %v3500 = vshll.u32 %v3462, 16
      %v3502 = vrot.slane %v3500, 1
      %v3503 = vsel %vm1996, %v3498, %v3502
      %v3504 = vshrl.u32 %v3462, 16
      %v3506 = vor.u32 %v3504, %v3502
      %v3508 = vshll.u32 %v3463, 16
      %v3510 = vrot.slane %v3508, 1
      %v3511 = vsel %vm1996, %v3506, %v3510
      %v3512 = vshrl.u32 %v3463, 16
      %v3514 = vor.u32 %v3512, %v3510
      %v3516 = vshll.u32 %v3464, 16
      %v3518 = vrot.slane %v3516, 1
      %v3519 = vsel %vm1996, %v3514, %v3518
      %v3520 = vshrl.u32 %v3464, 16
      %v3522 = vor.u32 %v3520, %v3518
      %v3524 = vshll.u32 %v3465, 16
      %v3526 = vrot.slane %v3524, 1
      %v3527 = vsel %vm1996, %v3522, %v3526
      %v3528 = vshrl.u32 %v3465, 16
      %v3530 = vor.u32 %v3528, %v3526
      %v3532 = vshll.u32 %v3466, 16
      %v3534 = vrot.slane %v3532, 1
      %v3535 = vsel %vm1996, %v3530, %v3534
      %v3536 = vshrl.u32 %v3466, 16
      %v3538 = vor.u32 %v3536, %v3534
      %v3540 = vshll.u32 %v3467, 16
      %v3542 = vrot.slane %v3540, 1
      %v3543 = vsel %vm1996, %v3538, %v3542
      %v3552 = vunpack.c.l.b16 %v3412
      %v3553 = vunpack.c.l.b16 %v3413
      %v3554 = vunpack.c.l.b16 %v3414
      %v3555 = vunpack.c.l.b16 %v3415
      %v3556 = vunpack.c.l.b16 %v3416
      %v3557 = vunpack.c.l.b16 %v3417
      %v3558 = vunpack.c.l.b16 %v3418
      %v3559 = vunpack.c.l.b16 %v3419
      %v3560 = vpack.c.b16 %v3553, %v3552
      %v3561 = vpack.c.b16 %v3555, %v3554
      %v3562 = vpack.c.b16 %v3557, %v3556
      %v3563 = vpack.c.b16 %v3559, %v3558
      %v3569 = vsel %vm896, %v3479, 0
      %v3572 = vsel %vm896, %v3487, 0
      %v3575 = vsel %vm896, %v3495, 0
      %v3578 = vsel %vm896, %v3503, 0
      %v3581 = vsel %vm896, %v3511, 0
      %v3584 = vsel %vm896, %v3519, 0
      %v3587 = vsel %vm896, %v3527, 0
      %v3590 = vsel %vm896, %v3535, 0
      %v3593 = vsel %vm896, %v3543, 0
      %3595 = vmatpush.bf16.msra.mxu0 0
      %3596 = vmatpush.bf16.msra.mxu0 0
      %3597 = vmatpush.bf16.msra.mxu0 0
      %3598 = vmatpush.bf16.msra.mxu0 0
      %3599 = vmatpush.bf16.msra.mxu0 %v3563
      %3600 = vmatpush.bf16.msra.mxu0 %v3562
      %3601 = vmatpush.bf16.msra.mxu0 %v3561
      %3602 = vmatpush.bf16.msra.mxu0 %v3560
      %3603 = vmatmul.bf16.gmra.mxu0 %v3569
      %v3604 = vpop.f32.mrf.mxu0
      %v3605 = vadd.f32 0.0, %v3604
      %v3606 = vpop.f32.mrf.mxu0
      %v3607 = vadd.f32 0.0, %v3606
      %3608 = vmatmul.bf16.gmra.mxu0 %v3572
      %v3609 = vpop.f32.mrf.mxu0
      %v3610 = vadd.f32 0.0, %v3609
      %v3611 = vpop.f32.mrf.mxu0
      %v3612 = vadd.f32 0.0, %v3611
      %3613 = vmatmul.bf16.gmra.mxu0 %v3575
      %v3614 = vpop.f32.mrf.mxu0
      %v3615 = vadd.f32 0.0, %v3614
      %v3616 = vpop.f32.mrf.mxu0
      %v3617 = vadd.f32 0.0, %v3616
      %3618 = vmatmul.bf16.gmra.mxu0 %v3578
      %v3619 = vpop.f32.mrf.mxu0
      %v3620 = vadd.f32 0.0, %v3619
      %v3621 = vpop.f32.mrf.mxu0
      %v3622 = vadd.f32 0.0, %v3621
      %3623 = vmatmul.bf16.gmra.mxu0 %v3581
      %v3624 = vpop.f32.mrf.mxu0
      %v3625 = vadd.f32 0.0, %v3624
      %v3626 = vpop.f32.mrf.mxu0
      %v3627 = vadd.f32 0.0, %v3626
      %3628 = vmatmul.bf16.gmra.mxu0 %v3584
      %v3629 = vpop.f32.mrf.mxu0
      %v3630 = vadd.f32 0.0, %v3629
      %v3631 = vpop.f32.mrf.mxu0
      %v3632 = vadd.f32 0.0, %v3631
      %3633 = vmatmul.bf16.gmra.mxu0 %v3587
      %v3634 = vpop.f32.mrf.mxu0
      %v3635 = vadd.f32 0.0, %v3634
      %v3636 = vpop.f32.mrf.mxu0
      %v3637 = vadd.f32 0.0, %v3636
      %3638 = vmatmul.bf16.gmra.mxu0 %v3590
      %v3639 = vpop.f32.mrf.mxu0
      %v3640 = vadd.f32 0.0, %v3639
      %v3641 = vpop.f32.mrf.mxu0
      %v3642 = vadd.f32 0.0, %v3641
      %3643 = vmatmul.bf16.gmra.mxu0 %v3593
      %v3644 = vpop.f32.mrf.mxu0
      %v3645 = vadd.f32 0.0, %v3644
      %v3646 = vpop.f32.mrf.mxu0
      %v3647 = vadd.f32 0.0, %v3646
      %3648 = vdwg.mxu0
      %v3649 = vadd.f32 %v3374, %v3605
      %v3650 = vadd.f32 %v3375, %v3607
      %v3651 = vadd.f32 %v3376, %v3610
      %v3652 = vadd.f32 %v3377, %v3612
      %v3653 = vadd.f32 %v3378, %v3615
      %v3654 = vadd.f32 %v3379, %v3617
      %v3655 = vadd.f32 %v3380, %v3620
      %v3656 = vadd.f32 %v3381, %v3622
      %v3657 = vadd.f32 %v3382, %v3625
      %v3658 = vadd.f32 %v3383, %v3627
      %v3659 = vadd.f32 %v3384, %v3630
      %v3660 = vadd.f32 %v3385, %v3632
      %v3661 = vadd.f32 %v3386, %v3635
      %v3662 = vadd.f32 %v3387, %v3637
      %v3663 = vadd.f32 %v3388, %v3640
      %v3664 = vadd.f32 %v3389, %v3642
      %v3665 = vadd.f32 %v3390, %v3645
      %v3666 = vadd.f32 %v3391, %v3647
      %v3667 = vld [vmem:[#allocation2 + $0x8] sm:$0xe]
      %s3668 = scalar_lea.vmem %s9, 128
      %v3669 = vld [vmem:[%s3668] sm:$0xf]
      %v3670 = vld [vmem:[%s3668 + $0x4] sm:$0xf]
      %v3671 = vld [vmem:[%s3668 + $0x8] sm:$0xf]
      %v3672 = vld [vmem:[%s3668 + $0xc] sm:$0xf]
      %v3673 = vld [vmem:[%s3668 + $0x10] sm:$0xf]
      %v3674 = vld [vmem:[%s3668 + $0x14] sm:$0xf]
      %v3675 = vld [vmem:[%s3668 + $0x18] sm:$0xf]
      %v3676 = vld [vmem:[%s3668 + $0x1c] sm:$0xf]
      %v3678 = vunpack.c.l.b16 %v3667
      %v3679 = vpack.c.b16 %v3440, %v3678
      %vm3680 = vcmask 1046528
      %v3681 = vrot.slane %v3679, 1
      %v3682 = vrot.slane %v3459, 1
      %v3683 = vsel %vm3680, %v3681, %v3682
      %v3684 = vrot.slane %v3460, 1
      %v3685 = vsel %vm3680, %v3682, %v3684
      %v3686 = vrot.slane %v3461, 1
      %v3687 = vsel %vm3680, %v3684, %v3686
      %v3688 = vrot.slane %v3462, 1
      %v3689 = vsel %vm3680, %v3686, %v3688
      %v3690 = vrot.slane %v3463, 1
      %v3691 = vsel %vm3680, %v3688, %v3690
      %v3692 = vrot.slane %v3464, 1
      %v3693 = vsel %vm3680, %v3690, %v3692
      %v3694 = vrot.slane %v3465, 1
      %v3695 = vsel %vm3680, %v3692, %v3694
      %v3696 = vrot.slane %v3466, 1
      %v3697 = vsel %vm3680, %v3694, %v3696
      %v3698 = vrot.slane %v3467, 1
      %v3699 = vsel %vm3680, %v3696, %v3698
      %v3708 = vunpack.c.l.b16 %v3669
      %v3709 = vunpack.c.l.b16 %v3670
      %v3710 = vunpack.c.l.b16 %v3671
      %v3711 = vunpack.c.l.b16 %v3672
      %v3712 = vunpack.c.l.b16 %v3673
      %v3713 = vunpack.c.l.b16 %v3674
      %v3714 = vunpack.c.l.b16 %v3675
      %v3715 = vunpack.c.l.b16 %v3676
      %v3716 = vpack.c.b16 %v3709, %v3708
      %v3717 = vpack.c.b16 %v3711, %v3710
      %v3718 = vpack.c.b16 %v3713, %v3712
      %v3719 = vpack.c.b16 %v3715, %v3714
      %v3725 = vsel %vm896, %v3683, 0
      %v3728 = vsel %vm896, %v3685, 0
      %v3731 = vsel %vm896, %v3687, 0
      %v3734 = vsel %vm896, %v3689, 0
      %v3737 = vsel %vm896, %v3691, 0
      %v3740 = vsel %vm896, %v3693, 0
      %v3743 = vsel %vm896, %v3695, 0
      %v3746 = vsel %vm896, %v3697, 0
      %v3749 = vsel %vm896, %v3699, 0
      %3751 = vmatpush.bf16.msra.mxu0 0
      %3752 = vmatpush.bf16.msra.mxu0 0
      %3753 = vmatpush.bf16.msra.mxu0 0
      %3754 = vmatpush.bf16.msra.mxu0 0
      %3755 = vmatpush.bf16.msra.mxu0 %v3719
      %3756 = vmatpush.bf16.msra.mxu0 %v3718
      %3757 = vmatpush.bf16.msra.mxu0 %v3717
      %3758 = vmatpush.bf16.msra.mxu0 %v3716
      %3759 = vmatmul.bf16.gmra.mxu0 %v3725
      %v3760 = vpop.f32.mrf.mxu0
      %v3761 = vadd.f32 0.0, %v3760
      %v3762 = vpop.f32.mrf.mxu0
      %v3763 = vadd.f32 0.0, %v3762
      %3764 = vmatmul.bf16.gmra.mxu0 %v3728
      %v3765 = vpop.f32.mrf.mxu0
      %v3766 = vadd.f32 0.0, %v3765
      %v3767 = vpop.f32.mrf.mxu0
      %v3768 = vadd.f32 0.0, %v3767
      %3769 = vmatmul.bf16.gmra.mxu0 %v3731
      %v3770 = vpop.f32.mrf.mxu0
      %v3771 = vadd.f32 0.0, %v3770
      %v3772 = vpop.f32.mrf.mxu0
      %v3773 = vadd.f32 0.0, %v3772
      %3774 = vmatmul.bf16.gmra.mxu0 %v3734
      %v3775 = vpop.f32.mrf.mxu0
      %v3776 = vadd.f32 0.0, %v3775
      %v3777 = vpop.f32.mrf.mxu0
      %v3778 = vadd.f32 0.0, %v3777
      %3779 = vmatmul.bf16.gmra.mxu0 %v3737
      %v3780 = vpop.f32.mrf.mxu0
      %v3781 = vadd.f32 0.0, %v3780
      %v3782 = vpop.f32.mrf.mxu0
      %v3783 = vadd.f32 0.0, %v3782
      %3784 = vmatmul.bf16.gmra.mxu0 %v3740
      %v3785 = vpop.f32.mrf.mxu0
      %v3786 = vadd.f32 0.0, %v3785
      %v3787 = vpop.f32.mrf.mxu0
      %v3788 = vadd.f32 0.0, %v3787
      %3789 = vmatmul.bf16.gmra.mxu0 %v3743
      %v3790 = vpop.f32.mrf.mxu0
      %v3791 = vadd.f32 0.0, %v3790
      %v3792 = vpop.f32.mrf.mxu0
      %v3793 = vadd.f32 0.0, %v3792
      %3794 = vmatmul.bf16.gmra.mxu0 %v3746
      %v3795 = vpop.f32.mrf.mxu0
      %v3796 = vadd.f32 0.0, %v3795
      %v3797 = vpop.f32.mrf.mxu0
      %v3798 = vadd.f32 0.0, %v3797
      %3799 = vmatmul.bf16.gmra.mxu0 %v3749
      %v3800 = vpop.f32.mrf.mxu0
      %v3801 = vadd.f32 0.0, %v3800
      %v3802 = vpop.f32.mrf.mxu0
      %v3803 = vadd.f32 0.0, %v3802
      %3804 = vdwg.mxu0
      %v3805 = vadd.f32 %v3649, %v3761
      %v3806 = vadd.f32 %v3650, %v3763
      %v3807 = vadd.f32 %v3651, %v3766
      %v3808 = vadd.f32 %v3652, %v3768
      %v3809 = vadd.f32 %v3653, %v3771
      %v3810 = vadd.f32 %v3654, %v3773
      %v3811 = vadd.f32 %v3655, %v3776
      %v3812 = vadd.f32 %v3656, %v3778
      %v3813 = vadd.f32 %v3657, %v3781
      %v3814 = vadd.f32 %v3658, %v3783
      %v3815 = vadd.f32 %v3659, %v3786
      %v3816 = vadd.f32 %v3660, %v3788
      %v3817 = vadd.f32 %v3661, %v3791
      %v3818 = vadd.f32 %v3662, %v3793
      %v3819 = vadd.f32 %v3663, %v3796
      %v3820 = vadd.f32 %v3664, %v3798
      %v3821 = vadd.f32 %v3665, %v3801
      %v3822 = vadd.f32 %v3666, %v3803
      %v3823 = vld [vmem:[%s10] sm:$0x1]
      %v3825 = vperm.slane %v3823, 0
      %v3827 = vadd.f32 %v3805, %v3825
      %v3828 = vadd.f32 %v3806, %v3825
      %v3829 = vadd.f32 %v3807, %v3825
      %v3830 = vadd.f32 %v3808, %v3825
      %v3831 = vadd.f32 %v3809, %v3825
      %v3832 = vadd.f32 %v3810, %v3825
      %v3833 = vadd.f32 %v3811, %v3825
      %v3834 = vadd.f32 %v3812, %v3825
      %v3835 = vadd.f32 %v3813, %v3825
      %v3836 = vadd.f32 %v3814, %v3825
      %v3837 = vadd.f32 %v3815, %v3825
      %v3838 = vadd.f32 %v3816, %v3825
      %v3839 = vadd.f32 %v3817, %v3825
      %v3840 = vadd.f32 %v3818, %v3825
      %v3841 = vadd.f32 %v3819, %v3825
      %v3842 = vadd.f32 %v3820, %v3825
      %v3843 = vadd.f32 %v3821, %v3825
      %v3844 = vadd.f32 %v3822, %v3825
      %v3845 = vmul.f32 %v3827, %v680
      %v3846 = vmul.f32 %v3828, %v681
      %v3847 = vmul.f32 %v3829, %v682
      %v3848 = vmul.f32 %v3830, %v683
      %v3849 = vmul.f32 %v3831, %v684
      %v3850 = vmul.f32 %v3832, %v685
      %v3851 = vmul.f32 %v3833, %v686
      %v3852 = vmul.f32 %v3834, %v687
      %v3853 = vmul.f32 %v3835, %v688
      %v3854 = vmul.f32 %v3836, %v689
      %v3855 = vmul.f32 %v3837, %v690
      %v3856 = vmul.f32 %v3838, %v691
      %v3857 = vmul.f32 %v3839, %v692
      %v3858 = vmul.f32 %v3840, %v693
      %v3859 = vmul.f32 %v3841, %v694
      %v3860 = vmul.f32 %v3842, %v695
      %v3861 = vmul.f32 %v3843, %v696
      %v3862 = vmul.f32 %v3844, %v697
      %v3863 = vsel %vm896, %v3845, 0.0
      %v3864 = vsel %vm896, %v3846, 0.0
      %v3865 = vadd.f32 %v3863, %v3864
      %v3866 = vsel %vm896, %v3847, 0.0
      %v3867 = vadd.f32 %v3865, %v3866
      %v3868 = vsel %vm896, %v3848, 0.0
      %v3869 = vadd.f32 %v3867, %v3868
      %v3870 = vsel %vm896, %v3849, 0.0
      %v3871 = vadd.f32 %v3869, %v3870
      %v3872 = vsel %vm896, %v3850, 0.0
      %v3873 = vadd.f32 %v3871, %v3872
      %v3874 = vsel %vm896, %v3851, 0.0
      %v3875 = vadd.f32 %v3873, %v3874
      %v3876 = vsel %vm896, %v3852, 0.0
      %v3877 = vadd.f32 %v3875, %v3876
      %v3878 = vsel %vm896, %v3853, 0.0
      %v3879 = vadd.f32 %v3877, %v3878
      %v3880 = vsel %vm896, %v3854, 0.0
      %v3881 = vadd.f32 %v3879, %v3880
      %v3882 = vsel %vm896, %v3855, 0.0
      %v3883 = vadd.f32 %v3881, %v3882
      %v3884 = vsel %vm896, %v3856, 0.0
      %v3885 = vadd.f32 %v3883, %v3884
      %v3886 = vsel %vm896, %v3857, 0.0
      %v3887 = vadd.f32 %v3885, %v3886
      %v3888 = vsel %vm896, %v3858, 0.0
      %v3889 = vadd.f32 %v3887, %v3888
      %v3890 = vsel %vm896, %v3859, 0.0
      %v3891 = vadd.f32 %v3889, %v3890
      %v3892 = vsel %vm896, %v3860, 0.0
      %v3893 = vadd.f32 %v3891, %v3892
      %v3894 = vsel %vm896, %v3861, 0.0
      %v3895 = vadd.f32 %v3893, %v3894
      %v3896 = vsel %vm896, %v3862, 0.0
      %v3897 = vadd.f32 %v3895, %v3896
      %v3898 = vrot.slane %v3897, 4
      %v3899 = vadd.f32 %v3897, %v3898
      %v3900 = vrot.slane %v3899, 2
      %v3901 = vadd.f32 %v3899, %v3900
      %v3902 = vrot.slane %v3901, 1
      %v3903 = vadd.f32 %v3901, %v3902
      %v3904 = vmul.f32 %v3903, 0.0078125
      %v3905 = vsub.f32 %v3827, %v3904
      %v3906 = vsub.f32 %v3828, %v3904
      %v3907 = vsub.f32 %v3829, %v3904
      %v3908 = vsub.f32 %v3830, %v3904
      %v3909 = vsub.f32 %v3831, %v3904
      %v3910 = vsub.f32 %v3832, %v3904
      %v3911 = vsub.f32 %v3833, %v3904
      %v3912 = vsub.f32 %v3834, %v3904
      %v3913 = vsub.f32 %v3835, %v3904
      %v3914 = vsub.f32 %v3836, %v3904
      %v3915 = vsub.f32 %v3837, %v3904
      %v3916 = vsub.f32 %v3838, %v3904
      %v3917 = vsub.f32 %v3839, %v3904
      %v3918 = vsub.f32 %v3840, %v3904
      %v3919 = vsub.f32 %v3841, %v3904
      %v3920 = vsub.f32 %v3842, %v3904
      %v3921 = vsub.f32 %v3843, %v3904
      %v3922 = vsub.f32 %v3844, %v3904
      %v3923 = vmul.f32 %v3905, %v680
      %v3924 = vmul.f32 %v3906, %v681
      %v3925 = vmul.f32 %v3907, %v682
      %v3926 = vmul.f32 %v3908, %v683
      %v3927 = vmul.f32 %v3909, %v684
      %v3928 = vmul.f32 %v3910, %v685
      %v3929 = vmul.f32 %v3911, %v686
      %v3930 = vmul.f32 %v3912, %v687
      %v3931 = vmul.f32 %v3913, %v688
      %v3932 = vmul.f32 %v3914, %v689
      %v3933 = vmul.f32 %v3915, %v690
      %v3934 = vmul.f32 %v3916, %v691
      %v3935 = vmul.f32 %v3917, %v692
      %v3936 = vmul.f32 %v3918, %v693
      %v3937 = vmul.f32 %v3919, %v694
      %v3938 = vmul.f32 %v3920, %v695
      %v3939 = vmul.f32 %v3921, %v696
      %v3940 = vmul.f32 %v3922, %v697
      %v3941 = vmul.f32 %v3923, %v3923
      %v3942 = vmul.f32 %v3924, %v3924
      %v3943 = vmul.f32 %v3925, %v3925
      %v3944 = vmul.f32 %v3926, %v3926
      %v3945 = vmul.f32 %v3927, %v3927
      %v3946 = vmul.f32 %v3928, %v3928
      %v3947 = vmul.f32 %v3929, %v3929
      %v3948 = vmul.f32 %v3930, %v3930
      %v3949 = vmul.f32 %v3931, %v3931
      %v3950 = vmul.f32 %v3932, %v3932
      %v3951 = vmul.f32 %v3933, %v3933
      %v3952 = vmul.f32 %v3934, %v3934
      %v3953 = vmul.f32 %v3935, %v3935
      %v3954 = vmul.f32 %v3936, %v3936
      %v3955 = vmul.f32 %v3937, %v3937
      %v3956 = vmul.f32 %v3938, %v3938
      %v3957 = vmul.f32 %v3939, %v3939
      %v3958 = vmul.f32 %v3940, %v3940
      %v3959 = vsel %vm896, %v3941, 0.0
      %v3960 = vsel %vm896, %v3942, 0.0
      %v3961 = vadd.f32 %v3959, %v3960
      %v3962 = vsel %vm896, %v3943, 0.0
      %v3963 = vadd.f32 %v3961, %v3962
      %v3964 = vsel %vm896, %v3944, 0.0
      %v3965 = vadd.f32 %v3963, %v3964
      %v3966 = vsel %vm896, %v3945, 0.0
      %v3967 = vadd.f32 %v3965, %v3966
      %v3968 = vsel %vm896, %v3946, 0.0
      %v3969 = vadd.f32 %v3967, %v3968
      %v3970 = vsel %vm896, %v3947, 0.0
      %v3971 = vadd.f32 %v3969, %v3970
      %v3972 = vsel %vm896, %v3948, 0.0
      %v3973 = vadd.f32 %v3971, %v3972
      %v3974 = vsel %vm896, %v3949, 0.0
      %v3975 = vadd.f32 %v3973, %v3974
      %v3976 = vsel %vm896, %v3950, 0.0
      %v3977 = vadd.f32 %v3975, %v3976
      %v3978 = vsel %vm896, %v3951, 0.0
      %v3979 = vadd.f32 %v3977, %v3978
      %v3980 = vsel %vm896, %v3952, 0.0
      %v3981 = vadd.f32 %v3979, %v3980
      %v3982 = vsel %vm896, %v3953, 0.0
      %v3983 = vadd.f32 %v3981, %v3982
      %v3984 = vsel %vm896, %v3954, 0.0
      %v3985 = vadd.f32 %v3983, %v3984
      %v3986 = vsel %vm896, %v3955, 0.0
      %v3987 = vadd.f32 %v3985, %v3986
      %v3988 = vsel %vm896, %v3956, 0.0
      %v3989 = vadd.f32 %v3987, %v3988
      %v3990 = vsel %vm896, %v3957, 0.0
      %v3991 = vadd.f32 %v3989, %v3990
      %v3992 = vsel %vm896, %v3958, 0.0
      %v3993 = vadd.f32 %v3991, %v3992
      %v3994 = vrot.slane %v3993, 4
      %v3995 = vadd.f32 %v3993, %v3994
      %v3996 = vrot.slane %v3995, 2
      %v3997 = vadd.f32 %v3995, %v3996
      %v3998 = vrot.slane %v3997, 1
      %v3999 = vadd.f32 %v3997, %v3998
      %v4000 = vmul.f32 %v3999, 0.0078125
      %v4001 = vld [vmem:[%s11] sm:$0x1]
      %v4002 = vadd.f32 %v4000, 1e-05
      %v4003 = vrsqrt.pop %v4002
      %v4004 = vmul.f32 %v4003, %v4002
      %v4005 = vmul.f32 %v4004, %v4003
      %v4006 = vmul.f32 0.5, %v4005
      %v4007 = vsub.f32 1.5, %v4006
      %v4008 = vmul.f32 %v4003, %v4007
      %vm4009 = vweird.f32 %v4002
      %vm4010 = vweird.f32 %v4003
      %vm4011 = vmor %vm4009, %vm4010
      %v4012 = vsel %vm4011, %v4003, %v4008
      %v4013 = vmul.f32 %v4001, %v4012
      %v4015 = vperm.slane %v4013, 0
      %v4017 = vmul.f32 %v3923, %v4015
      %v4018 = vmul.f32 %v3924, %v4015
      %v4019 = vmul.f32 %v3925, %v4015
      %v4020 = vmul.f32 %v3926, %v4015
      %v4021 = vmul.f32 %v3927, %v4015
      %v4022 = vmul.f32 %v3928, %v4015
      %v4023 = vmul.f32 %v3929, %v4015
      %v4024 = vmul.f32 %v3930, %v4015
      %v4025 = vmul.f32 %v3931, %v4015
      %v4026 = vmul.f32 %v3932, %v4015
      %v4027 = vmul.f32 %v3933, %v4015
      %v4028 = vmul.f32 %v3934, %v4015
      %v4029 = vmul.f32 %v3935, %v4015
      %v4030 = vmul.f32 %v3936, %v4015
      %v4031 = vmul.f32 %v3937, %v4015
      %v4032 = vmul.f32 %v3938, %v4015
      %v4033 = vmul.f32 %v3939, %v4015
      %v4034 = vmul.f32 %v3940, %v4015
      %v4035 = vld [vmem:[%s12] sm:$0x1]
      %v4037 = vperm.slane %v4035, 0
      %v4039 = vadd.f32 %v4017, %v4037
      %v4040 = vadd.f32 %v4018, %v4037
      %v4041 = vadd.f32 %v4019, %v4037
      %v4042 = vadd.f32 %v4020, %v4037
      %v4043 = vadd.f32 %v4021, %v4037
      %v4044 = vadd.f32 %v4022, %v4037
      %v4045 = vadd.f32 %v4023, %v4037
      %v4046 = vadd.f32 %v4024, %v4037
      %v4047 = vadd.f32 %v4025, %v4037
      %v4048 = vadd.f32 %v4026, %v4037
      %v4049 = vadd.f32 %v4027, %v4037
      %v4050 = vadd.f32 %v4028, %v4037
      %v4051 = vadd.f32 %v4029, %v4037
      %v4052 = vadd.f32 %v4030, %v4037
      %v4053 = vadd.f32 %v4031, %v4037
      %v4054 = vadd.f32 %v4032, %v4037
      %v4055 = vadd.f32 %v4033, %v4037
      %v4056 = vadd.f32 %v4034, %v4037
      %v4057 = vsub.f32 0.0, %v4039
      %v4058 = vsub.f32 0.0, %v4040
      %v4059 = vsub.f32 0.0, %v4041
      %v4060 = vsub.f32 0.0, %v4042
      %v4061 = vsub.f32 0.0, %v4043
      %v4062 = vsub.f32 0.0, %v4044
      %v4063 = vsub.f32 0.0, %v4045
      %v4064 = vsub.f32 0.0, %v4046
      %v4065 = vsub.f32 0.0, %v4047
      %v4066 = vsub.f32 0.0, %v4048
      %v4067 = vsub.f32 0.0, %v4049
      %v4068 = vsub.f32 0.0, %v4050
      %v4069 = vsub.f32 0.0, %v4051
      %v4070 = vsub.f32 0.0, %v4052
      %v4071 = vsub.f32 0.0, %v4053
      %v4072 = vsub.f32 0.0, %v4054
      %v4073 = vsub.f32 0.0, %v4055
      %v4074 = vsub.f32 0.0, %v4056
      %v4075 = vmul.f32 %v4057, 1.442695
      %v4076 = vpow.pop %v4075
      %v4077 = vmul.f32 %v4058, 1.442695
      %v4078 = vpow.pop %v4077
      %v4079 = vmul.f32 %v4059, 1.442695
      %v4080 = vpow.pop %v4079
      %v4081 = vmul.f32 %v4060, 1.442695
      %v4082 = vpow.pop %v4081
      %v4083 = vmul.f32 %v4061, 1.442695
      %v4084 = vpow.pop %v4083
      %v4085 = vmul.f32 %v4062, 1.442695
      %v4086 = vpow.pop %v4085
      %v4087 = vmul.f32 %v4063, 1.442695
      %v4088 = vpow.pop %v4087
      %v4089 = vmul.f32 %v4064, 1.442695
      %v4090 = vpow.pop %v4089
      %v4091 = vmul.f32 %v4065, 1.442695
      %v4092 = vpow.pop %v4091
      %v4093 = vmul.f32 %v4066, 1.442695
      %v4094 = vpow.pop %v4093
      %v4095 = vmul.f32 %v4067, 1.442695
      %v4096 = vpow.pop %v4095
      %v4097 = vmul.f32 %v4068, 1.442695
      %v4098 = vpow.pop %v4097
      %v4099 = vmul.f32 %v4069, 1.442695
      %v4100 = vpow.pop %v4099
      %v4101 = vmul.f32 %v4070, 1.442695
      %v4102 = vpow.pop %v4101
      %v4103 = vmul.f32 %v4071, 1.442695
      %v4104 = vpow.pop %v4103
      %v4105 = vmul.f32 %v4072, 1.442695
      %v4106 = vpow.pop %v4105
      %v4107 = vmul.f32 %v4073, 1.442695
      %v4108 = vpow.pop %v4107
      %v4109 = vmul.f32 %v4074, 1.442695
      %v4110 = vpow.pop %v4109
      %v4111 = vadd.f32 %v4076, 1.0
      %v4112 = vadd.f32 %v4078, 1.0
      %v4113 = vadd.f32 %v4080, 1.0
      %v4114 = vadd.f32 %v4082, 1.0
      %v4115 = vadd.f32 %v4084, 1.0
      %v4116 = vadd.f32 %v4086, 1.0
      %v4117 = vadd.f32 %v4088, 1.0
      %v4118 = vadd.f32 %v4090, 1.0
      %v4119 = vadd.f32 %v4092, 1.0
      %v4120 = vadd.f32 %v4094, 1.0
      %v4121 = vadd.f32 %v4096, 1.0
      %v4122 = vadd.f32 %v4098, 1.0
      %v4123 = vadd.f32 %v4100, 1.0
      %v4124 = vadd.f32 %v4102, 1.0
      %v4125 = vadd.f32 %v4104, 1.0
      %v4126 = vadd.f32 %v4106, 1.0
      %v4127 = vadd.f32 %v4108, 1.0
      %v4128 = vadd.f32 %v4110, 1.0
      %v4129 = vrcp.pop %v4111
      %v4130 = vmul.f32 %v4111, %v4129
      %v4131 = vsub.f32 1.0, %v4130
      %v4132 = vmul.f32 %v4129, %v4131
      %v4133 = vadd.f32 %v4129, %v4132
      %vm4134 = vweird.f32 %v4111
      %vm4135 = vweird.f32 %v4129
      %vm4136 = vmor %vm4134, %vm4135
      %v4137 = vsel %vm4136, %v4129, %v4133
      %v4138 = vand.u32 2147483647, %v4111
      %vm4139 = vcmp.eq.f32.partialorder %v4138, 8.507059e+37
      %v4140 = vand.u32 %v4111, 2147483648
      %v4141 = vor.u32 1.1754944e-38, %v4140
      %v4142 = vsel %vm4139, %v4141, %v4137
      %v4143 = vmul.f32 1.0, %v4142
      %v4144 = vrcp.pop %v4112
      %v4145 = vmul.f32 %v4112, %v4144
      %v4146 = vsub.f32 1.0, %v4145
      %v4147 = vmul.f32 %v4144, %v4146
      %v4148 = vadd.f32 %v4144, %v4147
      %vm4149 = vweird.f32 %v4112
      %vm4150 = vweird.f32 %v4144
      %vm4151 = vmor %vm4149, %vm4150
      %v4152 = vsel %vm4151, %v4144, %v4148
      %v4153 = vand.u32 2147483647, %v4112
      %vm4154 = vcmp.eq.f32.partialorder %v4153, 8.507059e+37
      %v4155 = vand.u32 %v4112, 2147483648
      %v4156 = vor.u32 1.1754944e-38, %v4155
      %v4157 = vsel %vm4154, %v4156, %v4152
      %v4158 = vmul.f32 1.0, %v4157
      %v4159 = vrcp.pop %v4113
      %v4160 = vmul.f32 %v4113, %v4159
      %v4161 = vsub.f32 1.0, %v4160
      %v4162 = vmul.f32 %v4159, %v4161
      %v4163 = vadd.f32 %v4159, %v4162
      %vm4164 = vweird.f32 %v4113
      %vm4165 = vweird.f32 %v4159
      %vm4166 = vmor %vm4164, %vm4165
      %v4167 = vsel %vm4166, %v4159, %v4163
      %v4168 = vand.u32 2147483647, %v4113
      %vm4169 = vcmp.eq.f32.partialorder %v4168, 8.507059e+37
      %v4170 = vand.u32 %v4113, 2147483648
      %v4171 = vor.u32 1.1754944e-38, %v4170
      %v4172 = vsel %vm4169, %v4171, %v4167
      %v4173 = vmul.f32 1.0, %v4172
      %v4174 = vrcp.pop %v4114
      %v4175 = vmul.f32 %v4114, %v4174
      %v4176 = vsub.f32 1.0, %v4175
      %v4177 = vmul.f32 %v4174, %v4176
      %v4178 = vadd.f32 %v4174, %v4177
      %vm4179 = vweird.f32 %v4114
      %vm4180 = vweird.f32 %v4174
      %vm4181 = vmor %vm4179, %vm4180
      %v4182 = vsel %vm4181, %v4174, %v4178
      %v4183 = vand.u32 2147483647, %v4114
      %vm4184 = vcmp.eq.f32.partialorder %v4183, 8.507059e+37
      %v4185 = vand.u32 %v4114, 2147483648
      %v4186 = vor.u32 1.1754944e-38, %v4185
      %v4187 = vsel %vm4184, %v4186, %v4182
      %v4188 = vmul.f32 1.0, %v4187
      %v4189 = vrcp.pop %v4115
      %v4190 = vmul.f32 %v4115, %v4189
      %v4191 = vsub.f32 1.0, %v4190
      %v4192 = vmul.f32 %v4189, %v4191
      %v4193 = vadd.f32 %v4189, %v4192
      %vm4194 = vweird.f32 %v4115
      %vm4195 = vweird.f32 %v4189
      %vm4196 = vmor %vm4194, %vm4195
      %v4197 = vsel %vm4196, %v4189, %v4193
      %v4198 = vand.u32 2147483647, %v4115
      %vm4199 = vcmp.eq.f32.partialorder %v4198, 8.507059e+37
      %v4200 = vand.u32 %v4115, 2147483648
      %v4201 = vor.u32 1.1754944e-38, %v4200
      %v4202 = vsel %vm4199, %v4201, %v4197
      %v4203 = vmul.f32 1.0, %v4202
      %v4204 = vrcp.pop %v4116
      %v4205 = vmul.f32 %v4116, %v4204
      %v4206 = vsub.f32 1.0, %v4205
      %v4207 = vmul.f32 %v4204, %v4206
      %v4208 = vadd.f32 %v4204, %v4207
      %vm4209 = vweird.f32 %v4116
      %vm4210 = vweird.f32 %v4204
      %vm4211 = vmor %vm4209, %vm4210
      %v4212 = vsel %vm4211, %v4204, %v4208
      %v4213 = vand.u32 2147483647, %v4116
      %vm4214 = vcmp.eq.f32.partialorder %v4213, 8.507059e+37
      %v4215 = vand.u32 %v4116, 2147483648
      %v4216 = vor.u32 1.1754944e-38, %v4215
      %v4217 = vsel %vm4214, %v4216, %v4212
      %v4218 = vmul.f32 1.0, %v4217
      %v4219 = vrcp.pop %v4117
      %v4220 = vmul.f32 %v4117, %v4219
      %v4221 = vsub.f32 1.0, %v4220
      %v4222 = vmul.f32 %v4219, %v4221
      %v4223 = vadd.f32 %v4219, %v4222
      %vm4224 = vweird.f32 %v4117
      %vm4225 = vweird.f32 %v4219
      %vm4226 = vmor %vm4224, %vm4225
      %v4227 = vsel %vm4226, %v4219, %v4223
      %v4228 = vand.u32 2147483647, %v4117
      %vm4229 = vcmp.eq.f32.partialorder %v4228, 8.507059e+37
      %v4230 = vand.u32 %v4117, 2147483648
      %v4231 = vor.u32 1.1754944e-38, %v4230
      %v4232 = vsel %vm4229, %v4231, %v4227
      %v4233 = vmul.f32 1.0, %v4232
      %v4234 = vrcp.pop %v4118
      %v4235 = vmul.f32 %v4118, %v4234
      %v4236 = vsub.f32 1.0, %v4235
      %v4237 = vmul.f32 %v4234, %v4236
      %v4238 = vadd.f32 %v4234, %v4237
      %vm4239 = vweird.f32 %v4118
      %vm4240 = vweird.f32 %v4234
      %vm4241 = vmor %vm4239, %vm4240
      %v4242 = vsel %vm4241, %v4234, %v4238
      %v4243 = vand.u32 2147483647, %v4118
      %vm4244 = vcmp.eq.f32.partialorder %v4243, 8.507059e+37
      %v4245 = vand.u32 %v4118, 2147483648
      %v4246 = vor.u32 1.1754944e-38, %v4245
      %v4247 = vsel %vm4244, %v4246, %v4242
      %v4248 = vmul.f32 1.0, %v4247
      %v4249 = vrcp.pop %v4119
      %v4250 = vmul.f32 %v4119, %v4249
      %v4251 = vsub.f32 1.0, %v4250
      %v4252 = vmul.f32 %v4249, %v4251
      %v4253 = vadd.f32 %v4249, %v4252
      %vm4254 = vweird.f32 %v4119
      %vm4255 = vweird.f32 %v4249
      %vm4256 = vmor %vm4254, %vm4255
      %v4257 = vsel %vm4256, %v4249, %v4253
      %v4258 = vand.u32 2147483647, %v4119
      %vm4259 = vcmp.eq.f32.partialorder %v4258, 8.507059e+37
      %v4260 = vand.u32 %v4119, 2147483648
      %v4261 = vor.u32 1.1754944e-38, %v4260
      %v4262 = vsel %vm4259, %v4261, %v4257
      %v4263 = vmul.f32 1.0, %v4262
      %v4264 = vrcp.pop %v4120
      %v4265 = vmul.f32 %v4120, %v4264
      %v4266 = vsub.f32 1.0, %v4265
      %v4267 = vmul.f32 %v4264, %v4266
      %v4268 = vadd.f32 %v4264, %v4267
      %vm4269 = vweird.f32 %v4120
      %vm4270 = vweird.f32 %v4264
      %vm4271 = vmor %vm4269, %vm4270
      %v4272 = vsel %vm4271, %v4264, %v4268
      %v4273 = vand.u32 2147483647, %v4120
      %vm4274 = vcmp.eq.f32.partialorder %v4273, 8.507059e+37
      %v4275 = vand.u32 %v4120, 2147483648
      %v4276 = vor.u32 1.1754944e-38, %v4275
      %v4277 = vsel %vm4274, %v4276, %v4272
      %v4278 = vmul.f32 1.0, %v4277
      %v4279 = vrcp.pop %v4121
      %v4280 = vmul.f32 %v4121, %v4279
      %v4281 = vsub.f32 1.0, %v4280
      %v4282 = vmul.f32 %v4279, %v4281
      %v4283 = vadd.f32 %v4279, %v4282
      %vm4284 = vweird.f32 %v4121
      %vm4285 = vweird.f32 %v4279
      %vm4286 = vmor %vm4284, %vm4285
      %v4287 = vsel %vm4286, %v4279, %v4283
      %v4288 = vand.u32 2147483647, %v4121
      %vm4289 = vcmp.eq.f32.partialorder %v4288, 8.507059e+37
      %v4290 = vand.u32 %v4121, 2147483648
      %v4291 = vor.u32 1.1754944e-38, %v4290
      %v4292 = vsel %vm4289, %v4291, %v4287
      %v4293 = vmul.f32 1.0, %v4292
      %v4294 = vrcp.pop %v4122
      %v4295 = vmul.f32 %v4122, %v4294
      %v4296 = vsub.f32 1.0, %v4295
      %v4297 = vmul.f32 %v4294, %v4296
      %v4298 = vadd.f32 %v4294, %v4297
      %vm4299 = vweird.f32 %v4122
      %vm4300 = vweird.f32 %v4294
      %vm4301 = vmor %vm4299, %vm4300
      %v4302 = vsel %vm4301, %v4294, %v4298
      %v4303 = vand.u32 2147483647, %v4122
      %vm4304 = vcmp.eq.f32.partialorder %v4303, 8.507059e+37
      %v4305 = vand.u32 %v4122, 2147483648
      %v4306 = vor.u32 1.1754944e-38, %v4305
      %v4307 = vsel %vm4304, %v4306, %v4302
      %v4308 = vmul.f32 1.0, %v4307
      %v4309 = vrcp.pop %v4123
      %v4310 = vmul.f32 %v4123, %v4309
      %v4311 = vsub.f32 1.0, %v4310
      %v4312 = vmul.f32 %v4309, %v4311
      %v4313 = vadd.f32 %v4309, %v4312
      %vm4314 = vweird.f32 %v4123
      %vm4315 = vweird.f32 %v4309
      %vm4316 = vmor %vm4314, %vm4315
      %v4317 = vsel %vm4316, %v4309, %v4313
      %v4318 = vand.u32 2147483647, %v4123
      %vm4319 = vcmp.eq.f32.partialorder %v4318, 8.507059e+37
      %v4320 = vand.u32 %v4123, 2147483648
      %v4321 = vor.u32 1.1754944e-38, %v4320
      %v4322 = vsel %vm4319, %v4321, %v4317
      %v4323 = vmul.f32 1.0, %v4322
      %v4324 = vrcp.pop %v4124
      %v4325 = vmul.f32 %v4124, %v4324
      %v4326 = vsub.f32 1.0, %v4325
      %v4327 = vmul.f32 %v4324, %v4326
      %v4328 = vadd.f32 %v4324, %v4327
      %vm4329 = vweird.f32 %v4124
      %vm4330 = vweird.f32 %v4324
      %vm4331 = vmor %vm4329, %vm4330
      %v4332 = vsel %vm4331, %v4324, %v4328
      %v4333 = vand.u32 2147483647, %v4124
      %vm4334 = vcmp.eq.f32.partialorder %v4333, 8.507059e+37
      %v4335 = vand.u32 %v4124, 2147483648
      %v4336 = vor.u32 1.1754944e-38, %v4335
      %v4337 = vsel %vm4334, %v4336, %v4332
      %v4338 = vmul.f32 1.0, %v4337
      %v4339 = vrcp.pop %v4125
      %v4340 = vmul.f32 %v4125, %v4339
      %v4341 = vsub.f32 1.0, %v4340
      %v4342 = vmul.f32 %v4339, %v4341
      %v4343 = vadd.f32 %v4339, %v4342
      %vm4344 = vweird.f32 %v4125
      %vm4345 = vweird.f32 %v4339
      %vm4346 = vmor %vm4344, %vm4345
      %v4347 = vsel %vm4346, %v4339, %v4343
      %v4348 = vand.u32 2147483647, %v4125
      %vm4349 = vcmp.eq.f32.partialorder %v4348, 8.507059e+37
      %v4350 = vand.u32 %v4125, 2147483648
      %v4351 = vor.u32 1.1754944e-38, %v4350
      %v4352 = vsel %vm4349, %v4351, %v4347
      %v4353 = vmul.f32 1.0, %v4352
      %v4354 = vrcp.pop %v4126
      %v4355 = vmul.f32 %v4126, %v4354
      %v4356 = vsub.f32 1.0, %v4355
      %v4357 = vmul.f32 %v4354, %v4356
      %v4358 = vadd.f32 %v4354, %v4357
      %vm4359 = vweird.f32 %v4126
      %vm4360 = vweird.f32 %v4354
      %vm4361 = vmor %vm4359, %vm4360
      %v4362 = vsel %vm4361, %v4354, %v4358
      %v4363 = vand.u32 2147483647, %v4126
      %vm4364 = vcmp.eq.f32.partialorder %v4363, 8.507059e+37
      %v4365 = vand.u32 %v4126, 2147483648
      %v4366 = vor.u32 1.1754944e-38, %v4365
      %v4367 = vsel %vm4364, %v4366, %v4362
      %v4368 = vmul.f32 1.0, %v4367
      %v4369 = vrcp.pop %v4127
      %v4370 = vmul.f32 %v4127, %v4369
      %v4371 = vsub.f32 1.0, %v4370
      %v4372 = vmul.f32 %v4369, %v4371
      %v4373 = vadd.f32 %v4369, %v4372
      %vm4374 = vweird.f32 %v4127
      %vm4375 = vweird.f32 %v4369
      %vm4376 = vmor %vm4374, %vm4375
      %v4377 = vsel %vm4376, %v4369, %v4373
      %v4378 = vand.u32 2147483647, %v4127
      %vm4379 = vcmp.eq.f32.partialorder %v4378, 8.507059e+37
      %v4380 = vand.u32 %v4127, 2147483648
      %v4381 = vor.u32 1.1754944e-38, %v4380
      %v4382 = vsel %vm4379, %v4381, %v4377
      %v4383 = vmul.f32 1.0, %v4382
      %v4384 = vrcp.pop %v4128
      %v4385 = vmul.f32 %v4128, %v4384
      %v4386 = vsub.f32 1.0, %v4385
      %v4387 = vmul.f32 %v4384, %v4386
      %v4388 = vadd.f32 %v4384, %v4387
      %vm4389 = vweird.f32 %v4128
      %vm4390 = vweird.f32 %v4384
      %vm4391 = vmor %vm4389, %vm4390
      %v4392 = vsel %vm4391, %v4384, %v4388
      %v4393 = vand.u32 2147483647, %v4128
      %vm4394 = vcmp.eq.f32.partialorder %v4393, 8.507059e+37
      %v4395 = vand.u32 %v4128, 2147483648
      %v4396 = vor.u32 1.1754944e-38, %v4395
      %v4397 = vsel %vm4394, %v4396, %v4392
      %v4398 = vmul.f32 1.0, %v4397
      %v4399 = vmul.f32 %v4039, %v4143
      %v4400 = vmul.f32 %v4040, %v4158
      %v4401 = vmul.f32 %v4041, %v4173
      %v4402 = vmul.f32 %v4042, %v4188
      %v4403 = vmul.f32 %v4043, %v4203
      %v4404 = vmul.f32 %v4044, %v4218
      %v4405 = vmul.f32 %v4045, %v4233
      %v4406 = vmul.f32 %v4046, %v4248
      %v4407 = vmul.f32 %v4047, %v4263
      %v4408 = vmul.f32 %v4048, %v4278
      %v4409 = vmul.f32 %v4049, %v4293
      %v4410 = vmul.f32 %v4050, %v4308
      %v4411 = vmul.f32 %v4051, %v4323
      %v4412 = vmul.f32 %v4052, %v4338
      %v4413 = vmul.f32 %v4053, %v4353
      %v4414 = vmul.f32 %v4054, %v4368
      %v4415 = vmul.f32 %v4055, %v4383
      %v4416 = vmul.f32 %v4056, %v4398
      %v4417 = vmul.f32 %v4399, %v680
      %v4418 = vmul.f32 %v4400, %v681
      %v4419 = vmul.f32 %v4401, %v682
      %v4420 = vmul.f32 %v4402, %v683
      %v4421 = vmul.f32 %v4403, %v684
      %v4422 = vmul.f32 %v4404, %v685
      %v4423 = vmul.f32 %v4405, %v686
      %v4424 = vmul.f32 %v4406, %v687
      %v4425 = vmul.f32 %v4407, %v688
      %v4426 = vmul.f32 %v4408, %v689
      %v4427 = vmul.f32 %v4409, %v690
      %v4428 = vmul.f32 %v4410, %v691
      %v4429 = vmul.f32 %v4411, %v692
      %v4430 = vmul.f32 %v4412, %v693
      %v4431 = vmul.f32 %v4413, %v694
      %v4432 = vmul.f32 %v4414, %v695
      %v4433 = vmul.f32 %v4415, %v696
      %v4434 = vmul.f32 %v4416, %v697
      %v4435 = vpack.c.bf16 %v4417, %v4417
      %v4436 = vpack.c.bf16 %v4418, %v4418
      %v4437 = vpack.c.bf16 %v4419, %v4419
      %v4438 = vpack.c.bf16 %v4420, %v4420
      %v4439 = vpack.c.bf16 %v4421, %v4421
      %v4440 = vpack.c.bf16 %v4422, %v4422
      %v4441 = vpack.c.bf16 %v4423, %v4423
      %v4442 = vpack.c.bf16 %v4424, %v4424
      %v4443 = vpack.c.bf16 %v4425, %v4425
      %v4444 = vpack.c.bf16 %v4426, %v4426
      %v4445 = vpack.c.bf16 %v4427, %v4427
      %v4446 = vpack.c.bf16 %v4428, %v4428
      %v4447 = vpack.c.bf16 %v4429, %v4429
      %v4448 = vpack.c.bf16 %v4430, %v4430
      %v4449 = vpack.c.bf16 %v4431, %v4431
      %v4450 = vpack.c.bf16 %v4432, %v4432
      %v4451 = vpack.c.bf16 %v4433, %v4433
      %v4452 = vpack.c.bf16 %v4434, %v4434
      %4453 = vst.msk [vmem:[#allocation2 + $0x8] sm:$0xf] %vm698, %v4435
      %4454 = vst.msk [vmem:[#allocation2 + $0xc] sm:$0xf] %vm698, %v4436
      %4455 = vst.msk [vmem:[#allocation2 + $0x10] sm:$0xf] %vm698, %v4437
      %4456 = vst.msk [vmem:[#allocation2 + $0x14] sm:$0xf] %vm698, %v4438
      %4457 = vst.msk [vmem:[#allocation2 + $0x18] sm:$0xf] %vm698, %v4439
      %4458 = vst.msk [vmem:[#allocation2 + $0x1c] sm:$0xf] %vm698, %v4440
      %4459 = vst.msk [vmem:[#allocation2 + $0x20] sm:$0xf] %vm698, %v4441
      %4460 = vst.msk [vmem:[#allocation2 + $0x24] sm:$0xf] %vm698, %v4442
      %4461 = vst.msk [vmem:[#allocation2 + $0x28] sm:$0xf] %vm698, %v4443
      %4462 = vst.msk [vmem:[#allocation2 + $0x2c] sm:$0xf] %vm698, %v4444
      %4463 = vst.msk [vmem:[#allocation2 + $0x30] sm:$0xf] %vm698, %v4445
      %4464 = vst.msk [vmem:[#allocation2 + $0x34] sm:$0xf] %vm698, %v4446
      %4465 = vst.msk [vmem:[#allocation2 + $0x38] sm:$0xf] %vm698, %v4447
      %4466 = vst.msk [vmem:[#allocation2 + $0x3c] sm:$0xf] %vm698, %v4448
      %4467 = vst.msk [vmem:[#allocation2 + $0x40] sm:$0xf] %vm698, %v4449
      %4468 = vst.msk [vmem:[#allocation2 + $0x44] sm:$0xf] %vm698, %v4450
      %4469 = vst.msk [vmem:[#allocation2 + $0x48] sm:$0xf] %vm698, %v4451
      %4470 = vst.msk [vmem:[#allocation2 + $0x4c] sm:$0xf] %vm698, %v4452
      %v4471 = vld [vmem:[#allocation2 + $0x4] sm:$0x8]
      %v4472 = vld [vmem:[#allocation2 + $0x8] sm:$0xf]
      %v4473 = vld [vmem:[#allocation2 + $0xc] sm:$0xf]
      %v4474 = vld [vmem:[#allocation2 + $0x10] sm:$0xf]
      %v4475 = vld [vmem:[#allocation2 + $0x14] sm:$0xf]
      %v4476 = vld [vmem:[#allocation2 + $0x18] sm:$0xf]
      %v4477 = vld [vmem:[#allocation2 + $0x1c] sm:$0xf]
      %v4478 = vld [vmem:[#allocation2 + $0x20] sm:$0xf]
      %v4479 = vld [vmem:[#allocation2 + $0x24] sm:$0xf]
      %v4480 = vld [vmem:[#allocation2 + $0x28] sm:$0xf]
      %v4481 = vld [vmem:[#allocation2 + $0x2c] sm:$0xf]
      %v4482 = vld [vmem:[#allocation2 + $0x30] sm:$0xf]
      %v4483 = vld [vmem:[#allocation2 + $0x34] sm:$0xf]
      %v4484 = vld [vmem:[#allocation2 + $0x38] sm:$0xf]
      %v4485 = vld [vmem:[#allocation2 + $0x3c] sm:$0xf]
      %v4486 = vld [vmem:[#allocation2 + $0x40] sm:$0xf]
      %v4487 = vld [vmem:[#allocation2 + $0x44] sm:$0xf]
      %v4488 = vld [vmem:[#allocation2 + $0x48] sm:$0xf]
      %v4489 = vld [vmem:[#allocation2 + $0x4c] sm:$0xf]
      %v4490 = vld [vmem:[%s13] sm:$0xf]
      %v4491 = vld [vmem:[%s13 + $0x4] sm:$0xf]
      %v4492 = vld [vmem:[%s13 + $0x8] sm:$0xf]
      %v4493 = vld [vmem:[%s13 + $0xc] sm:$0xf]
      %v4494 = vld [vmem:[%s13 + $0x10] sm:$0xf]
      %v4495 = vld [vmem:[%s13 + $0x14] sm:$0xf]
      %v4496 = vld [vmem:[%s13 + $0x18] sm:$0xf]
      %v4497 = vld [vmem:[%s13 + $0x1c] sm:$0xf]
      %s4498 = scalar_lea.vmem %s13, 32
      %v4499 = vld [vmem:[%s4498] sm:$0xf]
      %v4500 = vld [vmem:[%s4498 + $0x4] sm:$0xf]
      %v4501 = vld [vmem:[%s4498 + $0x8] sm:$0xf]
      %v4502 = vld [vmem:[%s4498 + $0xc] sm:$0xf]
      %v4503 = vld [vmem:[%s4498 + $0x10] sm:$0xf]
      %v4504 = vld [vmem:[%s4498 + $0x14] sm:$0xf]
      %v4505 = vld [vmem:[%s4498 + $0x18] sm:$0xf]
      %v4506 = vld [vmem:[%s4498 + $0x1c] sm:$0xf]
      %v4525 = vunpack.c.l.b16 %v4472
      %v4526 = vunpack.c.l.b16 %v4473
      %v4527 = vunpack.c.l.b16 %v4474
      %v4528 = vunpack.c.l.b16 %v4475
      %v4529 = vunpack.c.l.b16 %v4476
      %v4530 = vunpack.c.l.b16 %v4477
      %v4531 = vunpack.c.l.b16 %v4478
      %v4532 = vunpack.c.l.b16 %v4479
      %v4533 = vunpack.c.l.b16 %v4480
      %v4534 = vunpack.c.l.b16 %v4481
      %v4535 = vunpack.c.l.b16 %v4482
      %v4536 = vunpack.c.l.b16 %v4483
      %v4537 = vunpack.c.l.b16 %v4484
      %v4538 = vunpack.c.l.b16 %v4485
      %v4539 = vunpack.c.l.b16 %v4486
      %v4540 = vunpack.c.l.b16 %v4487
      %v4541 = vunpack.c.l.b16 %v4488
      %v4542 = vunpack.c.l.b16 %v4489
      %v4543 = vpack.c.b16 %v4526, %v4525
      %v4544 = vpack.c.b16 %v4528, %v4527
      %v4545 = vpack.c.b16 %v4530, %v4529
      %v4546 = vpack.c.b16 %v4532, %v4531
      %v4547 = vpack.c.b16 %v4534, %v4533
      %v4548 = vpack.c.b16 %v4536, %v4535
      %v4549 = vpack.c.b16 %v4538, %v4537
      %v4550 = vpack.c.b16 %v4540, %v4539
      %v4551 = vpack.c.b16 %v4542, %v4541
      %v4560 = vunpack.c.l.b16 %v4499
      %v4561 = vunpack.c.l.b16 %v4500
      %v4562 = vunpack.c.l.b16 %v4501
      %v4563 = vunpack.c.l.b16 %v4502
      %v4564 = vunpack.c.l.b16 %v4503
      %v4565 = vunpack.c.l.b16 %v4504
      %v4566 = vunpack.c.l.b16 %v4505
      %v4567 = vunpack.c.l.b16 %v4506
      %v4568 = vpack.c.b16 %v4561, %v4560
      %v4569 = vpack.c.b16 %v4563, %v4562
      %v4570 = vpack.c.b16 %v4565, %v4564
      %v4571 = vpack.c.b16 %v4567, %v4566
      %v4577 = vsel %vm896, %v4543, 0
      %v4580 = vsel %vm896, %v4544, 0
      %v4583 = vsel %vm896, %v4545, 0
      %v4586 = vsel %vm896, %v4546, 0
      %v4589 = vsel %vm896, %v4547, 0
      %v4592 = vsel %vm896, %v4548, 0
      %v4595 = vsel %vm896, %v4549, 0
      %v4598 = vsel %vm896, %v4550, 0
      %v4601 = vsel %vm896, %v4551, 0
      %4603 = vmatpush.bf16.msra.mxu0 0
      %4604 = vmatpush.bf16.msra.mxu0 0
      %4605 = vmatpush.bf16.msra.mxu0 0
      %4606 = vmatpush.bf16.msra.mxu0 0
      %4607 = vmatpush.bf16.msra.mxu0 %v4571
      %4608 = vmatpush.bf16.msra.mxu0 %v4570
      %4609 = vmatpush.bf16.msra.mxu0 %v4569
      %4610 = vmatpush.bf16.msra.mxu0 %v4568
      %4611 = vmatmul.bf16.gmra.mxu0 %v4577
      %v4612 = vpop.f32.mrf.mxu0
      %v4613 = vadd.f32 0.0, %v4612
      %v4614 = vpop.f32.mrf.mxu0
      %v4615 = vadd.f32 0.0, %v4614
      %4616 = vmatmul.bf16.gmra.mxu0 %v4580
      %v4617 = vpop.f32.mrf.mxu0
      %v4618 = vadd.f32 0.0, %v4617
      %v4619 = vpop.f32.mrf.mxu0
      %v4620 = vadd.f32 0.0, %v4619
      %4621 = vmatmul.bf16.gmra.mxu0 %v4583
      %v4622 = vpop.f32.mrf.mxu0
      %v4623 = vadd.f32 0.0, %v4622
      %v4624 = vpop.f32.mrf.mxu0
      %v4625 = vadd.f32 0.0, %v4624
      %4626 = vmatmul.bf16.gmra.mxu0 %v4586
      %v4627 = vpop.f32.mrf.mxu0
      %v4628 = vadd.f32 0.0, %v4627
      %v4629 = vpop.f32.mrf.mxu0
      %v4630 = vadd.f32 0.0, %v4629
      %4631 = vmatmul.bf16.gmra.mxu0 %v4589
      %v4632 = vpop.f32.mrf.mxu0
      %v4633 = vadd.f32 0.0, %v4632
      %v4634 = vpop.f32.mrf.mxu0
      %v4635 = vadd.f32 0.0, %v4634
      %4636 = vmatmul.bf16.gmra.mxu0 %v4592
      %v4637 = vpop.f32.mrf.mxu0
      %v4638 = vadd.f32 0.0, %v4637
      %v4639 = vpop.f32.mrf.mxu0
      %v4640 = vadd.f32 0.0, %v4639
      %4641 = vmatmul.bf16.gmra.mxu0 %v4595
      %v4642 = vpop.f32.mrf.mxu0
      %v4643 = vadd.f32 0.0, %v4642
      %v4644 = vpop.f32.mrf.mxu0
      %v4645 = vadd.f32 0.0, %v4644
      %4646 = vmatmul.bf16.gmra.mxu0 %v4598
      %v4647 = vpop.f32.mrf.mxu0
      %v4648 = vadd.f32 0.0, %v4647
      %v4649 = vpop.f32.mrf.mxu0
      %v4650 = vadd.f32 0.0, %v4649
      %4651 = vmatmul.bf16.gmra.mxu0 %v4601
      %v4652 = vpop.f32.mrf.mxu0
      %v4653 = vadd.f32 0.0, %v4652
      %v4654 = vpop.f32.mrf.mxu0
      %v4655 = vadd.f32 0.0, %v4654
      %4656 = vdwg.mxu0
      %v4658 = vunpack.c.l.b16 %v4471
      %v4659 = vpack.c.b16 %v4525, %v4658
      %v4660 = vpack.c.b16 %v4527, %v4526
      %v4661 = vpack.c.b16 %v4529, %v4528
      %v4662 = vpack.c.b16 %v4531, %v4530
      %v4663 = vpack.c.b16 %v4533, %v4532
      %v4664 = vpack.c.b16 %v4535, %v4534
      %v4665 = vpack.c.b16 %v4537, %v4536
      %v4666 = vpack.c.b16 %v4539, %v4538
      %v4667 = vpack.c.b16 %v4541, %v4540
      %v4668 = vpack.c.b16 %v4542, %v4542
      %v4670 = vshrl.u32 %v4659, 16
      %v4672 = vrot.slane %v4670, 3
      %v4673 = vshll.u32 %v4659, 16
      %v4675 = vrot.slane %v4673, 4
      %v4676 = vor.u32 %v4672, %v4675
      %v4678 = vshrl.u32 %v4660, 16
      %v4680 = vrot.slane %v4678, 3
      %v4681 = vshll.u32 %v4660, 16
      %v4683 = vrot.slane %v4681, 4
      %v4684 = vor.u32 %v4680, %v4683
      %v4685 = vsel %vm1725, %v4676, %v4684
      %v4687 = vshrl.u32 %v4661, 16
      %v4689 = vrot.slane %v4687, 3
      %v4690 = vshll.u32 %v4661, 16
      %v4692 = vrot.slane %v4690, 4
      %v4693 = vor.u32 %v4689, %v4692
      %v4694 = vsel %vm1725, %v4684, %v4693
      %v4696 = vshrl.u32 %v4662, 16
      %v4698 = vrot.slane %v4696, 3
      %v4699 = vshll.u32 %v4662, 16
      %v4701 = vrot.slane %v4699, 4
      %v4702 = vor.u32 %v4698, %v4701
      %v4703 = vsel %vm1725, %v4693, %v4702
      %v4705 = vshrl.u32 %v4663, 16
      %v4707 = vrot.slane %v4705, 3
      %v4708 = vshll.u32 %v4663, 16
      %v4710 = vrot.slane %v4708, 4
      %v4711 = vor.u32 %v4707, %v4710
      %v4712 = vsel %vm1725, %v4702, %v4711
      %v4714 = vshrl.u32 %v4664, 16
      %v4716 = vrot.slane %v4714, 3
      %v4717 = vshll.u32 %v4664, 16
      %v4719 = vrot.slane %v4717, 4
      %v4720 = vor.u32 %v4716, %v4719
      %v4721 = vsel %vm1725, %v4711, %v4720
      %v4723 = vshrl.u32 %v4665, 16
      %v4725 = vrot.slane %v4723, 3
      %v4726 = vshll.u32 %v4665, 16
      %v4728 = vrot.slane %v4726, 4
      %v4729 = vor.u32 %v4725, %v4728
      %v4730 = vsel %vm1725, %v4720, %v4729
      %v4732 = vshrl.u32 %v4666, 16
      %v4734 = vrot.slane %v4732, 3
      %v4735 = vshll.u32 %v4666, 16
      %v4737 = vrot.slane %v4735, 4
      %v4738 = vor.u32 %v4734, %v4737
      %v4739 = vsel %vm1725, %v4729, %v4738
      %v4741 = vshrl.u32 %v4667, 16
      %v4743 = vrot.slane %v4741, 3
      %v4744 = vshll.u32 %v4667, 16
      %v4746 = vrot.slane %v4744, 4
      %v4747 = vor.u32 %v4743, %v4746
      %v4748 = vsel %vm1725, %v4738, %v4747
      %v4750 = vshrl.u32 %v4668, 16
      %v4752 = vrot.slane %v4750, 3
      %v4753 = vshll.u32 %v4668, 16
      %v4755 = vrot.slane %v4753, 4
      %v4756 = vor.u32 %v4752, %v4755
      %v4757 = vsel %vm1725, %v4747, %v4756
      %v4766 = vunpack.c.l.b16 %v4490
      %v4767 = vunpack.c.l.b16 %v4491
      %v4768 = vunpack.c.l.b16 %v4492
      %v4769 = vunpack.c.l.b16 %v4493
      %v4770 = vunpack.c.l.b16 %v4494
      %v4771 = vunpack.c.l.b16 %v4495
      %v4772 = vunpack.c.l.b16 %v4496
      %v4773 = vunpack.c.l.b16 %v4497
      %v4774 = vpack.c.b16 %v4767, %v4766
      %v4775 = vpack.c.b16 %v4769, %v4768
      %v4776 = vpack.c.b16 %v4771, %v4770
      %v4777 = vpack.c.b16 %v4773, %v4772
      %v4783 = vsel %vm896, %v4685, 0
      %v4786 = vsel %vm896, %v4694, 0
      %v4789 = vsel %vm896, %v4703, 0
      %v4792 = vsel %vm896, %v4712, 0
      %v4795 = vsel %vm896, %v4721, 0
      %v4798 = vsel %vm896, %v4730, 0
      %v4801 = vsel %vm896, %v4739, 0
      %v4804 = vsel %vm896, %v4748, 0
      %v4807 = vsel %vm896, %v4757, 0
      %4809 = vmatpush.bf16.msra.mxu0 0
      %4810 = vmatpush.bf16.msra.mxu0 0
      %4811 = vmatpush.bf16.msra.mxu0 0
      %4812 = vmatpush.bf16.msra.mxu0 0
      %4813 = vmatpush.bf16.msra.mxu0 %v4777
      %4814 = vmatpush.bf16.msra.mxu0 %v4776
      %4815 = vmatpush.bf16.msra.mxu0 %v4775
      %4816 = vmatpush.bf16.msra.mxu0 %v4774
      %4817 = vmatmul.bf16.gmra.mxu0 %v4783
      %v4818 = vpop.f32.mrf.mxu0
      %v4819 = vadd.f32 %v4613, %v4818
      %v4820 = vpop.f32.mrf.mxu0
      %v4821 = vadd.f32 %v4615, %v4820
      %4822 = vmatmul.bf16.gmra.mxu0 %v4786
      %v4823 = vpop.f32.mrf.mxu0
      %v4824 = vadd.f32 %v4618, %v4823
      %v4825 = vpop.f32.mrf.mxu0
      %v4826 = vadd.f32 %v4620, %v4825
      %4827 = vmatmul.bf16.gmra.mxu0 %v4789
      %v4828 = vpop.f32.mrf.mxu0
      %v4829 = vadd.f32 %v4623, %v4828
      %v4830 = vpop.f32.mrf.mxu0
      %v4831 = vadd.f32 %v4625, %v4830
      %4832 = vmatmul.bf16.gmra.mxu0 %v4792
      %v4833 = vpop.f32.mrf.mxu0
      %v4834 = vadd.f32 %v4628, %v4833
      %v4835 = vpop.f32.mrf.mxu0
      %v4836 = vadd.f32 %v4630, %v4835
      %4837 = vmatmul.bf16.gmra.mxu0 %v4795
      %v4838 = vpop.f32.mrf.mxu0
      %v4839 = vadd.f32 %v4633, %v4838
      %v4840 = vpop.f32.mrf.mxu0
      %v4841 = vadd.f32 %v4635, %v4840
      %4842 = vmatmul.bf16.gmra.mxu0 %v4798
      %v4843 = vpop.f32.mrf.mxu0
      %v4844 = vadd.f32 %v4638, %v4843
      %v4845 = vpop.f32.mrf.mxu0
      %v4846 = vadd.f32 %v4640, %v4845
      %4847 = vmatmul.bf16.gmra.mxu0 %v4801
      %v4848 = vpop.f32.mrf.mxu0
      %v4849 = vadd.f32 %v4643, %v4848
      %v4850 = vpop.f32.mrf.mxu0
      %v4851 = vadd.f32 %v4645, %v4850
      %4852 = vmatmul.bf16.gmra.mxu0 %v4804
      %v4853 = vpop.f32.mrf.mxu0
      %v4854 = vadd.f32 %v4648, %v4853
      %v4855 = vpop.f32.mrf.mxu0
      %v4856 = vadd.f32 %v4650, %v4855
      %4857 = vmatmul.bf16.gmra.mxu0 %v4807
      %v4858 = vpop.f32.mrf.mxu0
      %v4859 = vadd.f32 %v4653, %v4858
      %v4860 = vpop.f32.mrf.mxu0
      %v4861 = vadd.f32 %v4655, %v4860
      %4862 = vdwg.mxu0
      %v4863 = vld [vmem:[#allocation2 + $0x8] sm:$0xf]
      %v4864 = vld [vmem:[#allocation2 + $0xc] sm:$0xf]
      %v4865 = vld [vmem:[#allocation2 + $0x10] sm:$0xf]
      %v4866 = vld [vmem:[#allocation2 + $0x14] sm:$0xf]
      %v4867 = vld [vmem:[#allocation2 + $0x18] sm:$0xf]
      %v4868 = vld [vmem:[#allocation2 + $0x1c] sm:$0xf]
      %v4869 = vld [vmem:[#allocation2 + $0x20] sm:$0xf]
      %v4870 = vld [vmem:[#allocation2 + $0x24] sm:$0xf]
      %v4871 = vld [vmem:[#allocation2 + $0x28] sm:$0xf]
      %v4872 = vld [vmem:[#allocation2 + $0x2c] sm:$0xf]
      %v4873 = vld [vmem:[#allocation2 + $0x30] sm:$0xf]
      %v4874 = vld [vmem:[#allocation2 + $0x34] sm:$0xf]
      %v4875 = vld [vmem:[#allocation2 + $0x38] sm:$0xf]
      %v4876 = vld [vmem:[#allocation2 + $0x3c] sm:$0xf]
      %v4877 = vld [vmem:[#allocation2 + $0x40] sm:$0xf]
      %v4878 = vld [vmem:[#allocation2 + $0x44] sm:$0xf]
      %v4879 = vld [vmem:[#allocation2 + $0x48] sm:$0xf]
      %v4880 = vld [vmem:[#allocation2 + $0x4c] sm:$0xf]
      %v4881 = vld [vmem:[#allocation2 + $0x50] sm:$0x1]
      %s4882 = scalar_lea.vmem %s13, 64
      %v4883 = vld [vmem:[%s4882] sm:$0xf]
      %v4884 = vld [vmem:[%s4882 + $0x4] sm:$0xf]
      %v4885 = vld [vmem:[%s4882 + $0x8] sm:$0xf]
      %v4886 = vld [vmem:[%s4882 + $0xc] sm:$0xf]
      %v4887 = vld [vmem:[%s4882 + $0x10] sm:$0xf]
      %v4888 = vld [vmem:[%s4882 + $0x14] sm:$0xf]
      %v4889 = vld [vmem:[%s4882 + $0x18] sm:$0xf]
      %v4890 = vld [vmem:[%s4882 + $0x1c] sm:$0xf]
      %v4910 = vunpack.c.l.b16 %v4863
      %v4911 = vunpack.c.l.b16 %v4864
      %v4912 = vunpack.c.l.b16 %v4865
      %v4913 = vunpack.c.l.b16 %v4866
      %v4914 = vunpack.c.l.b16 %v4867
      %v4915 = vunpack.c.l.b16 %v4868
      %v4916 = vunpack.c.l.b16 %v4869
      %v4917 = vunpack.c.l.b16 %v4870
      %v4918 = vunpack.c.l.b16 %v4871
      %v4919 = vunpack.c.l.b16 %v4872
      %v4920 = vunpack.c.l.b16 %v4873
      %v4921 = vunpack.c.l.b16 %v4874
      %v4922 = vunpack.c.l.b16 %v4875
      %v4923 = vunpack.c.l.b16 %v4876
      %v4924 = vunpack.c.l.b16 %v4877
      %v4925 = vunpack.c.l.b16 %v4878
      %v4926 = vunpack.c.l.b16 %v4879
      %v4927 = vunpack.c.l.b16 %v4880
      %v4928 = vunpack.c.l.b16 %v4881
      %v4929 = vpack.c.b16 %v4911, %v4910
      %v4930 = vpack.c.b16 %v4913, %v4912
      %v4931 = vpack.c.b16 %v4915, %v4914
      %v4932 = vpack.c.b16 %v4917, %v4916
      %v4933 = vpack.c.b16 %v4919, %v4918
      %v4934 = vpack.c.b16 %v4921, %v4920
      %v4935 = vpack.c.b16 %v4923, %v4922
      %v4936 = vpack.c.b16 %v4925, %v4924
      %v4937 = vpack.c.b16 %v4927, %v4926
      %v4938 = vpack.c.b16 %v4928, %v4928
      %v4940 = vshrl.u32 %v4929, 16
      %v4942 = vshll.u32 %v4929, 16
      %v4944 = vrot.slane %v4942, 1
      %v4945 = vor.u32 %v4940, %v4944
      %v4947 = vshll.u32 %v4930, 16
      %v4949 = vrot.slane %v4947, 1
      %v4950 = vsel %vm1996, %v4945, %v4949
      %v4951 = vshrl.u32 %v4930, 16
      %v4953 = vor.u32 %v4951, %v4949
      %v4955 = vshll.u32 %v4931, 16
      %v4957 = vrot.slane %v4955, 1
      %v4958 = vsel %vm1996, %v4953, %v4957
      %v4959 = vshrl.u32 %v4931, 16
      %v4961 = vor.u32 %v4959, %v4957
      %v4963 = vshll.u32 %v4932, 16
      %v4965 = vrot.slane %v4963, 1
      %v4966 = vsel %vm1996, %v4961, %v4965
      %v4967 = vshrl.u32 %v4932, 16
      %v4969 = vor.u32 %v4967, %v4965
      %v4971 = vshll.u32 %v4933, 16
      %v4973 = vrot.slane %v4971, 1
      %v4974 = vsel %vm1996, %v4969, %v4973
      %v4975 = vshrl.u32 %v4933, 16
      %v4977 = vor.u32 %v4975, %v4973
      %v4979 = vshll.u32 %v4934, 16
      %v4981 = vrot.slane %v4979, 1
      %v4982 = vsel %vm1996, %v4977, %v4981
      %v4983 = vshrl.u32 %v4934, 16
      %v4985 = vor.u32 %v4983, %v4981
      %v4987 = vshll.u32 %v4935, 16
      %v4989 = vrot.slane %v4987, 1
      %v4990 = vsel %vm1996, %v4985, %v4989
      %v4991 = vshrl.u32 %v4935, 16
      %v4993 = vor.u32 %v4991, %v4989
      %v4995 = vshll.u32 %v4936, 16
      %v4997 = vrot.slane %v4995, 1
      %v4998 = vsel %vm1996, %v4993, %v4997
      %v4999 = vshrl.u32 %v4936, 16
      %v5001 = vor.u32 %v4999, %v4997
      %v5003 = vshll.u32 %v4937, 16
      %v5005 = vrot.slane %v5003, 1
      %v5006 = vsel %vm1996, %v5001, %v5005
      %v5007 = vshrl.u32 %v4937, 16
      %v5009 = vor.u32 %v5007, %v5005
      %v5011 = vshll.u32 %v4938, 16
      %v5013 = vrot.slane %v5011, 1
      %v5014 = vsel %vm1996, %v5009, %v5013
      %v5023 = vunpack.c.l.b16 %v4883
      %v5024 = vunpack.c.l.b16 %v4884
      %v5025 = vunpack.c.l.b16 %v4885
      %v5026 = vunpack.c.l.b16 %v4886
      %v5027 = vunpack.c.l.b16 %v4887
      %v5028 = vunpack.c.l.b16 %v4888
      %v5029 = vunpack.c.l.b16 %v4889
      %v5030 = vunpack.c.l.b16 %v4890
      %v5031 = vpack.c.b16 %v5024, %v5023
      %v5032 = vpack.c.b16 %v5026, %v5025
      %v5033 = vpack.c.b16 %v5028, %v5027
      %v5034 = vpack.c.b16 %v5030, %v5029
      %v5040 = vsel %vm896, %v4950, 0
      %v5043 = vsel %vm896, %v4958, 0
      %v5046 = vsel %vm896, %v4966, 0
      %v5049 = vsel %vm896, %v4974, 0
      %v5052 = vsel %vm896, %v4982, 0
      %v5055 = vsel %vm896, %v4990, 0
      %v5058 = vsel %vm896, %v4998, 0
      %v5061 = vsel %vm896, %v5006, 0
      %v5064 = vsel %vm896, %v5014, 0
      %5066 = vmatpush.bf16.msra.mxu0 0
      %5067 = vmatpush.bf16.msra.mxu0 0
      %5068 = vmatpush.bf16.msra.mxu0 0
      %5069 = vmatpush.bf16.msra.mxu0 0
      %5070 = vmatpush.bf16.msra.mxu0 %v5034
      %5071 = vmatpush.bf16.msra.mxu0 %v5033
      %5072 = vmatpush.bf16.msra.mxu0 %v5032
      %5073 = vmatpush.bf16.msra.mxu0 %v5031
      %5074 = vmatmul.bf16.gmra.mxu0 %v5040
      %v5075 = vpop.f32.mrf.mxu0
      %v5076 = vadd.f32 0.0, %v5075
      %v5077 = vpop.f32.mrf.mxu0
      %v5078 = vadd.f32 0.0, %v5077
      %5079 = vmatmul.bf16.gmra.mxu0 %v5043
      %v5080 = vpop.f32.mrf.mxu0
      %v5081 = vadd.f32 0.0, %v5080
      %v5082 = vpop.f32.mrf.mxu0
      %v5083 = vadd.f32 0.0, %v5082
      %5084 = vmatmul.bf16.gmra.mxu0 %v5046
      %v5085 = vpop.f32.mrf.mxu0
      %v5086 = vadd.f32 0.0, %v5085
      %v5087 = vpop.f32.mrf.mxu0
      %v5088 = vadd.f32 0.0, %v5087
      %5089 = vmatmul.bf16.gmra.mxu0 %v5049
      %v5090 = vpop.f32.mrf.mxu0
      %v5091 = vadd.f32 0.0, %v5090
      %v5092 = vpop.f32.mrf.mxu0
      %v5093 = vadd.f32 0.0, %v5092
      %5094 = vmatmul.bf16.gmra.mxu0 %v5052
      %v5095 = vpop.f32.mrf.mxu0
      %v5096 = vadd.f32 0.0, %v5095
      %v5097 = vpop.f32.mrf.mxu0
      %v5098 = vadd.f32 0.0, %v5097
      %5099 = vmatmul.bf16.gmra.mxu0 %v5055
      %v5100 = vpop.f32.mrf.mxu0
      %v5101 = vadd.f32 0.0, %v5100
      %v5102 = vpop.f32.mrf.mxu0
      %v5103 = vadd.f32 0.0, %v5102
      %5104 = vmatmul.bf16.gmra.mxu0 %v5058
      %v5105 = vpop.f32.mrf.mxu0
      %v5106 = vadd.f32 0.0, %v5105
      %v5107 = vpop.f32.mrf.mxu0
      %v5108 = vadd.f32 0.0, %v5107
      %5109 = vmatmul.bf16.gmra.mxu0 %v5061
      %v5110 = vpop.f32.mrf.mxu0
      %v5111 = vadd.f32 0.0, %v5110
      %v5112 = vpop.f32.mrf.mxu0
      %v5113 = vadd.f32 0.0, %v5112
      %5114 = vmatmul.bf16.gmra.mxu0 %v5064
      %v5115 = vpop.f32.mrf.mxu0
      %v5116 = vadd.f32 0.0, %v5115
      %v5117 = vpop.f32.mrf.mxu0
      %v5118 = vadd.f32 0.0, %v5117
      %5119 = vdwg.mxu0
      %v5120 = vadd.f32 %v4819, %v5076
      %v5121 = vadd.f32 %v4821, %v5078
      %v5122 = vadd.f32 %v4824, %v5081
      %v5123 = vadd.f32 %v4826, %v5083
      %v5124 = vadd.f32 %v4829, %v5086
      %v5125 = vadd.f32 %v4831, %v5088
      %v5126 = vadd.f32 %v4834, %v5091
      %v5127 = vadd.f32 %v4836, %v5093
      %v5128 = vadd.f32 %v4839, %v5096
      %v5129 = vadd.f32 %v4841, %v5098
      %v5130 = vadd.f32 %v4844, %v5101
      %v5131 = vadd.f32 %v4846, %v5103
      %v5132 = vadd.f32 %v4849, %v5106
      %v5133 = vadd.f32 %v4851, %v5108
      %v5134 = vadd.f32 %v4854, %v5111
      %v5135 = vadd.f32 %v4856, %v5113
      %v5136 = vadd.f32 %v4859, %v5116
      %v5137 = vadd.f32 %v4861, %v5118
      %v5138 = vld [vmem:[%s14] sm:$0x1]
      %v5140 = vperm.slane %v5138, 0
      %v5142 = vadd.f32 %v5120, %v5140
      %v5143 = vadd.f32 %v5121, %v5140
      %v5144 = vadd.f32 %v5122, %v5140
      %v5145 = vadd.f32 %v5123, %v5140
      %v5146 = vadd.f32 %v5124, %v5140
      %v5147 = vadd.f32 %v5125, %v5140
      %v5148 = vadd.f32 %v5126, %v5140
      %v5149 = vadd.f32 %v5127, %v5140
      %v5150 = vadd.f32 %v5128, %v5140
      %v5151 = vadd.f32 %v5129, %v5140
      %v5152 = vadd.f32 %v5130, %v5140
      %v5153 = vadd.f32 %v5131, %v5140
      %v5154 = vadd.f32 %v5132, %v5140
      %v5155 = vadd.f32 %v5133, %v5140
      %v5156 = vadd.f32 %v5134, %v5140
      %v5157 = vadd.f32 %v5135, %v5140
      %v5158 = vadd.f32 %v5136, %v5140
      %v5159 = vadd.f32 %v5137, %v5140
      %v5160 = vmul.f32 %v5142, %v680
      %v5161 = vmul.f32 %v5143, %v681
      %v5162 = vmul.f32 %v5144, %v682
      %v5163 = vmul.f32 %v5145, %v683
      %v5164 = vmul.f32 %v5146, %v684
      %v5165 = vmul.f32 %v5147, %v685
      %v5166 = vmul.f32 %v5148, %v686
      %v5167 = vmul.f32 %v5149, %v687
      %v5168 = vmul.f32 %v5150, %v688
      %v5169 = vmul.f32 %v5151, %v689
      %v5170 = vmul.f32 %v5152, %v690
      %v5171 = vmul.f32 %v5153, %v691
      %v5172 = vmul.f32 %v5154, %v692
      %v5173 = vmul.f32 %v5155, %v693
      %v5174 = vmul.f32 %v5156, %v694
      %v5175 = vmul.f32 %v5157, %v695
      %v5176 = vmul.f32 %v5158, %v696
      %v5177 = vmul.f32 %v5159, %v697
      %v5178 = vsel %vm896, %v5160, 0.0
      %v5179 = vsel %vm896, %v5161, 0.0
      %v5180 = vadd.f32 %v5178, %v5179
      %v5181 = vsel %vm896, %v5162, 0.0
      %v5182 = vadd.f32 %v5180, %v5181
      %v5183 = vsel %vm896, %v5163, 0.0
      %v5184 = vadd.f32 %v5182, %v5183
      %v5185 = vsel %vm896, %v5164, 0.0
      %v5186 = vadd.f32 %v5184, %v5185
      %v5187 = vsel %vm896, %v5165, 0.0
      %v5188 = vadd.f32 %v5186, %v5187
      %v5189 = vsel %vm896, %v5166, 0.0
      %v5190 = vadd.f32 %v5188, %v5189
      %v5191 = vsel %vm896, %v5167, 0.0
      %v5192 = vadd.f32 %v5190, %v5191
      %v5193 = vsel %vm896, %v5168, 0.0
      %v5194 = vadd.f32 %v5192, %v5193
      %v5195 = vsel %vm896, %v5169, 0.0
      %v5196 = vadd.f32 %v5194, %v5195
      %v5197 = vsel %vm896, %v5170, 0.0
      %v5198 = vadd.f32 %v5196, %v5197
      %v5199 = vsel %vm896, %v5171, 0.0
      %v5200 = vadd.f32 %v5198, %v5199
      %v5201 = vsel %vm896, %v5172, 0.0
      %v5202 = vadd.f32 %v5200, %v5201
      %v5203 = vsel %vm896, %v5173, 0.0
      %v5204 = vadd.f32 %v5202, %v5203
      %v5205 = vsel %vm896, %v5174, 0.0
      %v5206 = vadd.f32 %v5204, %v5205
      %v5207 = vsel %vm896, %v5175, 0.0
      %v5208 = vadd.f32 %v5206, %v5207
      %v5209 = vsel %vm896, %v5176, 0.0
      %v5210 = vadd.f32 %v5208, %v5209
      %v5211 = vsel %vm896, %v5177, 0.0
      %v5212 = vadd.f32 %v5210, %v5211
      %v5213 = vrot.slane %v5212, 4
      %v5214 = vadd.f32 %v5212, %v5213
      %v5215 = vrot.slane %v5214, 2
      %v5216 = vadd.f32 %v5214, %v5215
      %v5217 = vrot.slane %v5216, 1
      %v5218 = vadd.f32 %v5216, %v5217
      %5220 = vrot.lane.b32.xlu0 %v5218, 96
      %v5221 = vpop.permute.xlu0 %5220
      %v5223 = vadd.f32 %v5218, %v5221
      %5225 = vrot.lane.b32.xlu0 %v5223, 32
      %v5226 = vpop.permute.xlu0 %5225
      %v5228 = vsel %vm947, %v5223, %v5226
      %v5229 = vmul.f32 %v5228, 0.00390625
      %v5230 = vperm.slane %v5229, 0
      %v5231 = vsub.f32 %v5142, %v5230
      %v5232 = vsub.f32 %v5143, %v5230
      %v5233 = vsub.f32 %v5144, %v5230
      %v5234 = vsub.f32 %v5145, %v5230
      %v5235 = vsub.f32 %v5146, %v5230
      %v5236 = vsub.f32 %v5147, %v5230
      %v5237 = vsub.f32 %v5148, %v5230
      %v5238 = vsub.f32 %v5149, %v5230
      %v5239 = vsub.f32 %v5150, %v5230
      %v5240 = vsub.f32 %v5151, %v5230
      %v5241 = vsub.f32 %v5152, %v5230
      %v5242 = vsub.f32 %v5153, %v5230
      %v5243 = vsub.f32 %v5154, %v5230
      %v5244 = vsub.f32 %v5155, %v5230
      %v5245 = vsub.f32 %v5156, %v5230
      %v5246 = vsub.f32 %v5157, %v5230
      %v5247 = vsub.f32 %v5158, %v5230
      %v5248 = vsub.f32 %v5159, %v5230
      %v5249 = vmul.f32 %v5231, %v680
      %v5250 = vmul.f32 %v5232, %v681
      %v5251 = vmul.f32 %v5233, %v682
      %v5252 = vmul.f32 %v5234, %v683
      %v5253 = vmul.f32 %v5235, %v684
      %v5254 = vmul.f32 %v5236, %v685
      %v5255 = vmul.f32 %v5237, %v686
      %v5256 = vmul.f32 %v5238, %v687
      %v5257 = vmul.f32 %v5239, %v688
      %v5258 = vmul.f32 %v5240, %v689
      %v5259 = vmul.f32 %v5241, %v690
      %v5260 = vmul.f32 %v5242, %v691
      %v5261 = vmul.f32 %v5243, %v692
      %v5262 = vmul.f32 %v5244, %v693
      %v5263 = vmul.f32 %v5245, %v694
      %v5264 = vmul.f32 %v5246, %v695
      %v5265 = vmul.f32 %v5247, %v696
      %v5266 = vmul.f32 %v5248, %v697
      %v5267 = vmul.f32 %v5249, %v5249
      %v5268 = vmul.f32 %v5250, %v5250
      %v5269 = vmul.f32 %v5251, %v5251
      %v5270 = vmul.f32 %v5252, %v5252
      %v5271 = vmul.f32 %v5253, %v5253
      %v5272 = vmul.f32 %v5254, %v5254
      %v5273 = vmul.f32 %v5255, %v5255
      %v5274 = vmul.f32 %v5256, %v5256
      %v5275 = vmul.f32 %v5257, %v5257
      %v5276 = vmul.f32 %v5258, %v5258
      %v5277 = vmul.f32 %v5259, %v5259
      %v5278 = vmul.f32 %v5260, %v5260
      %v5279 = vmul.f32 %v5261, %v5261
      %v5280 = vmul.f32 %v5262, %v5262
      %v5281 = vmul.f32 %v5263, %v5263
      %v5282 = vmul.f32 %v5264, %v5264
      %v5283 = vmul.f32 %v5265, %v5265
      %v5284 = vmul.f32 %v5266, %v5266
      %v5285 = vsel %vm896, %v5267, 0.0
      %v5286 = vsel %vm896, %v5268, 0.0
      %v5287 = vadd.f32 %v5285, %v5286
      %v5288 = vsel %vm896, %v5269, 0.0
      %v5289 = vadd.f32 %v5287, %v5288
      %v5290 = vsel %vm896, %v5270, 0.0
      %v5291 = vadd.f32 %v5289, %v5290
      %v5292 = vsel %vm896, %v5271, 0.0
      %v5293 = vadd.f32 %v5291, %v5292
      %v5294 = vsel %vm896, %v5272, 0.0
      %v5295 = vadd.f32 %v5293, %v5294
      %v5296 = vsel %vm896, %v5273, 0.0
      %v5297 = vadd.f32 %v5295, %v5296
      %v5298 = vsel %vm896, %v5274, 0.0
      %v5299 = vadd.f32 %v5297, %v5298
      %v5300 = vsel %vm896, %v5275, 0.0
      %v5301 = vadd.f32 %v5299, %v5300
      %v5302 = vsel %vm896, %v5276, 0.0
      %v5303 = vadd.f32 %v5301, %v5302
      %v5304 = vsel %vm896, %v5277, 0.0
      %v5305 = vadd.f32 %v5303, %v5304
      %v5306 = vsel %vm896, %v5278, 0.0
      %v5307 = vadd.f32 %v5305, %v5306
      %v5308 = vsel %vm896, %v5279, 0.0
      %v5309 = vadd.f32 %v5307, %v5308
      %v5310 = vsel %vm896, %v5280, 0.0
      %v5311 = vadd.f32 %v5309, %v5310
      %v5312 = vsel %vm896, %v5281, 0.0
      %v5313 = vadd.f32 %v5311, %v5312
      %v5314 = vsel %vm896, %v5282, 0.0
      %v5315 = vadd.f32 %v5313, %v5314
      %v5316 = vsel %vm896, %v5283, 0.0
      %v5317 = vadd.f32 %v5315, %v5316
      %v5318 = vsel %vm896, %v5284, 0.0
      %v5319 = vadd.f32 %v5317, %v5318
      %v5320 = vrot.slane %v5319, 4
      %v5321 = vadd.f32 %v5319, %v5320
      %v5322 = vrot.slane %v5321, 2
      %v5323 = vadd.f32 %v5321, %v5322
      %v5324 = vrot.slane %v5323, 1
      %v5325 = vadd.f32 %v5323, %v5324
      %5327 = vrot.lane.b32.xlu0 %v5325, 96
      %v5328 = vpop.permute.xlu0 %5327
      %v5330 = vadd.f32 %v5325, %v5328
      %5332 = vrot.lane.b32.xlu0 %v5330, 32
      %v5333 = vpop.permute.xlu0 %5332
      %v5335 = vsel %vm947, %v5330, %v5333
      %v5336 = vmul.f32 %v5335, 0.00390625
      %v5337 = vld [vmem:[%s15] sm:$0x1]
      %v5338 = vadd.f32 %v5336, 1e-05
      %v5339 = vrsqrt.pop %v5338
      %v5340 = vmul.f32 %v5339, %v5338
      %v5341 = vmul.f32 %v5340, %v5339
      %v5342 = vmul.f32 0.5, %v5341
      %v5343 = vsub.f32 1.5, %v5342
      %v5344 = vmul.f32 %v5339, %v5343
      %vm5345 = vweird.f32 %v5338
      %vm5346 = vweird.f32 %v5339
      %vm5347 = vmor %vm5345, %vm5346
      %v5348 = vsel %vm5347, %v5339, %v5344
      %v5349 = vmul.f32 %v5337, %v5348
      %v5351 = vperm.slane %v5349, 0
      %v5353 = vmul.f32 %v5249, %v5351
      %v5354 = vmul.f32 %v5250, %v5351
      %v5355 = vmul.f32 %v5251, %v5351
      %v5356 = vmul.f32 %v5252, %v5351
      %v5357 = vmul.f32 %v5253, %v5351
      %v5358 = vmul.f32 %v5254, %v5351
      %v5359 = vmul.f32 %v5255, %v5351
      %v5360 = vmul.f32 %v5256, %v5351
      %v5361 = vmul.f32 %v5257, %v5351
      %v5362 = vmul.f32 %v5258, %v5351
      %v5363 = vmul.f32 %v5259, %v5351
      %v5364 = vmul.f32 %v5260, %v5351
      %v5365 = vmul.f32 %v5261, %v5351
      %v5366 = vmul.f32 %v5262, %v5351
      %v5367 = vmul.f32 %v5263, %v5351
      %v5368 = vmul.f32 %v5264, %v5351
      %v5369 = vmul.f32 %v5265, %v5351
      %v5370 = vmul.f32 %v5266, %v5351
      %v5371 = vld [vmem:[%s16] sm:$0x1]
      %v5373 = vperm.slane %v5371, 0
      %v5375 = vadd.f32 %v5353, %v5373
      %v5376 = vadd.f32 %v5354, %v5373
      %v5377 = vadd.f32 %v5355, %v5373
      %v5378 = vadd.f32 %v5356, %v5373
      %v5379 = vadd.f32 %v5357, %v5373
      %v5380 = vadd.f32 %v5358, %v5373
      %v5381 = vadd.f32 %v5359, %v5373
      %v5382 = vadd.f32 %v5360, %v5373
      %v5383 = vadd.f32 %v5361, %v5373
      %v5384 = vadd.f32 %v5362, %v5373
      %v5385 = vadd.f32 %v5363, %v5373
      %v5386 = vadd.f32 %v5364, %v5373
      %v5387 = vadd.f32 %v5365, %v5373
      %v5388 = vadd.f32 %v5366, %v5373
      %v5389 = vadd.f32 %v5367, %v5373
      %v5390 = vadd.f32 %v5368, %v5373
      %v5391 = vadd.f32 %v5369, %v5373
      %v5392 = vadd.f32 %v5370, %v5373
      %v5393 = vsub.f32 0.0, %v5375
      %v5394 = vsub.f32 0.0, %v5376
      %v5395 = vsub.f32 0.0, %v5377
      %v5396 = vsub.f32 0.0, %v5378
      %v5397 = vsub.f32 0.0, %v5379
      %v5398 = vsub.f32 0.0, %v5380
      %v5399 = vsub.f32 0.0, %v5381
      %v5400 = vsub.f32 0.0, %v5382
      %v5401 = vsub.f32 0.0, %v5383
      %v5402 = vsub.f32 0.0, %v5384
      %v5403 = vsub.f32 0.0, %v5385
      %v5404 = vsub.f32 0.0, %v5386
      %v5405 = vsub.f32 0.0, %v5387
      %v5406 = vsub.f32 0.0, %v5388
      %v5407 = vsub.f32 0.0, %v5389
      %v5408 = vsub.f32 0.0, %v5390
      %v5409 = vsub.f32 0.0, %v5391
      %v5410 = vsub.f32 0.0, %v5392
      %v5411 = vmul.f32 %v5393, 1.442695
      %v5412 = vpow.pop %v5411
      %v5413 = vmul.f32 %v5394, 1.442695
      %v5414 = vpow.pop %v5413
      %v5415 = vmul.f32 %v5395, 1.442695
      %v5416 = vpow.pop %v5415
      %v5417 = vmul.f32 %v5396, 1.442695
      %v5418 = vpow.pop %v5417
      %v5419 = vmul.f32 %v5397, 1.442695
      %v5420 = vpow.pop %v5419
      %v5421 = vmul.f32 %v5398, 1.442695
      %v5422 = vpow.pop %v5421
      %v5423 = vmul.f32 %v5399, 1.442695
      %v5424 = vpow.pop %v5423
      %v5425 = vmul.f32 %v5400, 1.442695
      %v5426 = vpow.pop %v5425
      %v5427 = vmul.f32 %v5401, 1.442695
      %v5428 = vpow.pop %v5427
      %v5429 = vmul.f32 %v5402, 1.442695
      %v5430 = vpow.pop %v5429
      %v5431 = vmul.f32 %v5403, 1.442695
      %v5432 = vpow.pop %v5431
      %v5433 = vmul.f32 %v5404, 1.442695
      %v5434 = vpow.pop %v5433
      %v5435 = vmul.f32 %v5405, 1.442695
      %v5436 = vpow.pop %v5435
      %v5437 = vmul.f32 %v5406, 1.442695
      %v5438 = vpow.pop %v5437
      %v5439 = vmul.f32 %v5407, 1.442695
      %v5440 = vpow.pop %v5439
      %v5441 = vmul.f32 %v5408, 1.442695
      %v5442 = vpow.pop %v5441
      %v5443 = vmul.f32 %v5409, 1.442695
      %v5444 = vpow.pop %v5443
      %v5445 = vmul.f32 %v5410, 1.442695
      %v5446 = vpow.pop %v5445
      %v5447 = vadd.f32 %v5412, 1.0
      %v5448 = vadd.f32 %v5414, 1.0
      %v5449 = vadd.f32 %v5416, 1.0
      %v5450 = vadd.f32 %v5418, 1.0
      %v5451 = vadd.f32 %v5420, 1.0
      %v5452 = vadd.f32 %v5422, 1.0
      %v5453 = vadd.f32 %v5424, 1.0
      %v5454 = vadd.f32 %v5426, 1.0
      %v5455 = vadd.f32 %v5428, 1.0
      %v5456 = vadd.f32 %v5430, 1.0
      %v5457 = vadd.f32 %v5432, 1.0
      %v5458 = vadd.f32 %v5434, 1.0
      %v5459 = vadd.f32 %v5436, 1.0
      %v5460 = vadd.f32 %v5438, 1.0
      %v5461 = vadd.f32 %v5440, 1.0
      %v5462 = vadd.f32 %v5442, 1.0
      %v5463 = vadd.f32 %v5444, 1.0
      %v5464 = vadd.f32 %v5446, 1.0
      %v5465 = vrcp.pop %v5447
      %v5466 = vmul.f32 %v5447, %v5465
      %v5467 = vsub.f32 1.0, %v5466
      %v5468 = vmul.f32 %v5465, %v5467
      %v5469 = vadd.f32 %v5465, %v5468
      %vm5470 = vweird.f32 %v5447
      %vm5471 = vweird.f32 %v5465
      %vm5472 = vmor %vm5470, %vm5471
      %v5473 = vsel %vm5472, %v5465, %v5469
      %v5474 = vand.u32 2147483647, %v5447
      %vm5475 = vcmp.eq.f32.partialorder %v5474, 8.507059e+37
      %v5476 = vand.u32 %v5447, 2147483648
      %v5477 = vor.u32 1.1754944e-38, %v5476
      %v5478 = vsel %vm5475, %v5477, %v5473
      %v5479 = vmul.f32 1.0, %v5478
      %v5480 = vrcp.pop %v5448
      %v5481 = vmul.f32 %v5448, %v5480
      %v5482 = vsub.f32 1.0, %v5481
      %v5483 = vmul.f32 %v5480, %v5482
      %v5484 = vadd.f32 %v5480, %v5483
      %vm5485 = vweird.f32 %v5448
      %vm5486 = vweird.f32 %v5480
      %vm5487 = vmor %vm5485, %vm5486
      %v5488 = vsel %vm5487, %v5480, %v5484
      %v5489 = vand.u32 2147483647, %v5448
      %vm5490 = vcmp.eq.f32.partialorder %v5489, 8.507059e+37
      %v5491 = vand.u32 %v5448, 2147483648
      %v5492 = vor.u32 1.1754944e-38, %v5491
      %v5493 = vsel %vm5490, %v5492, %v5488
      %v5494 = vmul.f32 1.0, %v5493
      %v5495 = vrcp.pop %v5449
      %v5496 = vmul.f32 %v5449, %v5495
      %v5497 = vsub.f32 1.0, %v5496
      %v5498 = vmul.f32 %v5495, %v5497
      %v5499 = vadd.f32 %v5495, %v5498
      %vm5500 = vweird.f32 %v5449
      %vm5501 = vweird.f32 %v5495
      %vm5502 = vmor %vm5500, %vm5501
      %v5503 = vsel %vm5502, %v5495, %v5499
      %v5504 = vand.u32 2147483647, %v5449
      %vm5505 = vcmp.eq.f32.partialorder %v5504, 8.507059e+37
      %v5506 = vand.u32 %v5449, 2147483648
      %v5507 = vor.u32 1.1754944e-38, %v5506
      %v5508 = vsel %vm5505, %v5507, %v5503
      %v5509 = vmul.f32 1.0, %v5508
      %v5510 = vrcp.pop %v5450
      %v5511 = vmul.f32 %v5450, %v5510
      %v5512 = vsub.f32 1.0, %v5511
      %v5513 = vmul.f32 %v5510, %v5512
      %v5514 = vadd.f32 %v5510, %v5513
      %vm5515 = vweird.f32 %v5450
      %vm5516 = vweird.f32 %v5510
      %vm5517 = vmor %vm5515, %vm5516
      %v5518 = vsel %vm5517, %v5510, %v5514
      %v5519 = vand.u32 2147483647, %v5450
      %vm5520 = vcmp.eq.f32.partialorder %v5519, 8.507059e+37
      %v5521 = vand.u32 %v5450, 2147483648
      %v5522 = vor.u32 1.1754944e-38, %v5521
      %v5523 = vsel %vm5520, %v5522, %v5518
      %v5524 = vmul.f32 1.0, %v5523
      %v5525 = vrcp.pop %v5451
      %v5526 = vmul.f32 %v5451, %v5525
      %v5527 = vsub.f32 1.0, %v5526
      %v5528 = vmul.f32 %v5525, %v5527
      %v5529 = vadd.f32 %v5525, %v5528
      %vm5530 = vweird.f32 %v5451
      %vm5531 = vweird.f32 %v5525
      %vm5532 = vmor %vm5530, %vm5531
      %v5533 = vsel %vm5532, %v5525, %v5529
      %v5534 = vand.u32 2147483647, %v5451
      %vm5535 = vcmp.eq.f32.partialorder %v5534, 8.507059e+37
      %v5536 = vand.u32 %v5451, 2147483648
      %v5537 = vor.u32 1.1754944e-38, %v5536
      %v5538 = vsel %vm5535, %v5537, %v5533
      %v5539 = vmul.f32 1.0, %v5538
      %v5540 = vrcp.pop %v5452
      %v5541 = vmul.f32 %v5452, %v5540
      %v5542 = vsub.f32 1.0, %v5541
      %v5543 = vmul.f32 %v5540, %v5542
      %v5544 = vadd.f32 %v5540, %v5543
      %vm5545 = vweird.f32 %v5452
      %vm5546 = vweird.f32 %v5540
      %vm5547 = vmor %vm5545, %vm5546
      %v5548 = vsel %vm5547, %v5540, %v5544
      %v5549 = vand.u32 2147483647, %v5452
      %vm5550 = vcmp.eq.f32.partialorder %v5549, 8.507059e+37
      %v5551 = vand.u32 %v5452, 2147483648
      %v5552 = vor.u32 1.1754944e-38, %v5551
      %v5553 = vsel %vm5550, %v5552, %v5548
      %v5554 = vmul.f32 1.0, %v5553
      %v5555 = vrcp.pop %v5453
      %v5556 = vmul.f32 %v5453, %v5555
      %v5557 = vsub.f32 1.0, %v5556
      %v5558 = vmul.f32 %v5555, %v5557
      %v5559 = vadd.f32 %v5555, %v5558
      %vm5560 = vweird.f32 %v5453
      %vm5561 = vweird.f32 %v5555
      %vm5562 = vmor %vm5560, %vm5561
      %v5563 = vsel %vm5562, %v5555, %v5559
      %v5564 = vand.u32 2147483647, %v5453
      %vm5565 = vcmp.eq.f32.partialorder %v5564, 8.507059e+37
      %v5566 = vand.u32 %v5453, 2147483648
      %v5567 = vor.u32 1.1754944e-38, %v5566
      %v5568 = vsel %vm5565, %v5567, %v5563
      %v5569 = vmul.f32 1.0, %v5568
      %v5570 = vrcp.pop %v5454
      %v5571 = vmul.f32 %v5454, %v5570
      %v5572 = vsub.f32 1.0, %v5571
      %v5573 = vmul.f32 %v5570, %v5572
      %v5574 = vadd.f32 %v5570, %v5573
      %vm5575 = vweird.f32 %v5454
      %vm5576 = vweird.f32 %v5570
      %vm5577 = vmor %vm5575, %vm5576
      %v5578 = vsel %vm5577, %v5570, %v5574
      %v5579 = vand.u32 2147483647, %v5454
      %vm5580 = vcmp.eq.f32.partialorder %v5579, 8.507059e+37
      %v5581 = vand.u32 %v5454, 2147483648
      %v5582 = vor.u32 1.1754944e-38, %v5581
      %v5583 = vsel %vm5580, %v5582, %v5578
      %v5584 = vmul.f32 1.0, %v5583
      %v5585 = vrcp.pop %v5455
      %v5586 = vmul.f32 %v5455, %v5585
      %v5587 = vsub.f32 1.0, %v5586
      %v5588 = vmul.f32 %v5585, %v5587
      %v5589 = vadd.f32 %v5585, %v5588
      %vm5590 = vweird.f32 %v5455
      %vm5591 = vweird.f32 %v5585
      %vm5592 = vmor %vm5590, %vm5591
      %v5593 = vsel %vm5592, %v5585, %v5589
      %v5594 = vand.u32 2147483647, %v5455
      %vm5595 = vcmp.eq.f32.partialorder %v5594, 8.507059e+37
      %v5596 = vand.u32 %v5455, 2147483648
      %v5597 = vor.u32 1.1754944e-38, %v5596
      %v5598 = vsel %vm5595, %v5597, %v5593
      %v5599 = vmul.f32 1.0, %v5598
      %v5600 = vrcp.pop %v5456
      %v5601 = vmul.f32 %v5456, %v5600
      %v5602 = vsub.f32 1.0, %v5601
      %v5603 = vmul.f32 %v5600, %v5602
      %v5604 = vadd.f32 %v5600, %v5603
      %vm5605 = vweird.f32 %v5456
      %vm5606 = vweird.f32 %v5600
      %vm5607 = vmor %vm5605, %vm5606
      %v5608 = vsel %vm5607, %v5600, %v5604
      %v5609 = vand.u32 2147483647, %v5456
      %vm5610 = vcmp.eq.f32.partialorder %v5609, 8.507059e+37
      %v5611 = vand.u32 %v5456, 2147483648
      %v5612 = vor.u32 1.1754944e-38, %v5611
      %v5613 = vsel %vm5610, %v5612, %v5608
      %v5614 = vmul.f32 1.0, %v5613
      %v5615 = vrcp.pop %v5457
      %v5616 = vmul.f32 %v5457, %v5615
      %v5617 = vsub.f32 1.0, %v5616
      %v5618 = vmul.f32 %v5615, %v5617
      %v5619 = vadd.f32 %v5615, %v5618
      %vm5620 = vweird.f32 %v5457
      %vm5621 = vweird.f32 %v5615
      %vm5622 = vmor %vm5620, %vm5621
      %v5623 = vsel %vm5622, %v5615, %v5619
      %v5624 = vand.u32 2147483647, %v5457
      %vm5625 = vcmp.eq.f32.partialorder %v5624, 8.507059e+37
      %v5626 = vand.u32 %v5457, 2147483648
      %v5627 = vor.u32 1.1754944e-38, %v5626
      %v5628 = vsel %vm5625, %v5627, %v5623
      %v5629 = vmul.f32 1.0, %v5628
      %v5630 = vrcp.pop %v5458
      %v5631 = vmul.f32 %v5458, %v5630
      %v5632 = vsub.f32 1.0, %v5631
      %v5633 = vmul.f32 %v5630, %v5632
      %v5634 = vadd.f32 %v5630, %v5633
      %vm5635 = vweird.f32 %v5458
      %vm5636 = vweird.f32 %v5630
      %vm5637 = vmor %vm5635, %vm5636
      %v5638 = vsel %vm5637, %v5630, %v5634
      %v5639 = vand.u32 2147483647, %v5458
      %vm5640 = vcmp.eq.f32.partialorder %v5639, 8.507059e+37
      %v5641 = vand.u32 %v5458, 2147483648
      %v5642 = vor.u32 1.1754944e-38, %v5641
      %v5643 = vsel %vm5640, %v5642, %v5638
      %v5644 = vmul.f32 1.0, %v5643
      %v5645 = vrcp.pop %v5459
      %v5646 = vmul.f32 %v5459, %v5645
      %v5647 = vsub.f32 1.0, %v5646
      %v5648 = vmul.f32 %v5645, %v5647
      %v5649 = vadd.f32 %v5645, %v5648
      %vm5650 = vweird.f32 %v5459
      %vm5651 = vweird.f32 %v5645
      %vm5652 = vmor %vm5650, %vm5651
      %v5653 = vsel %vm5652, %v5645, %v5649
      %v5654 = vand.u32 2147483647, %v5459
      %vm5655 = vcmp.eq.f32.partialorder %v5654, 8.507059e+37
      %v5656 = vand.u32 %v5459, 2147483648
      %v5657 = vor.u32 1.1754944e-38, %v5656
      %v5658 = vsel %vm5655, %v5657, %v5653
      %v5659 = vmul.f32 1.0, %v5658
      %v5660 = vrcp.pop %v5460
      %v5661 = vmul.f32 %v5460, %v5660
      %v5662 = vsub.f32 1.0, %v5661
      %v5663 = vmul.f32 %v5660, %v5662
      %v5664 = vadd.f32 %v5660, %v5663
      %vm5665 = vweird.f32 %v5460
      %vm5666 = vweird.f32 %v5660
      %vm5667 = vmor %vm5665, %vm5666
      %v5668 = vsel %vm5667, %v5660, %v5664
      %v5669 = vand.u32 2147483647, %v5460
      %vm5670 = vcmp.eq.f32.partialorder %v5669, 8.507059e+37
      %v5671 = vand.u32 %v5460, 2147483648
      %v5672 = vor.u32 1.1754944e-38, %v5671
      %v5673 = vsel %vm5670, %v5672, %v5668
      %v5674 = vmul.f32 1.0, %v5673
      %v5675 = vrcp.pop %v5461
      %v5676 = vmul.f32 %v5461, %v5675
      %v5677 = vsub.f32 1.0, %v5676
      %v5678 = vmul.f32 %v5675, %v5677
      %v5679 = vadd.f32 %v5675, %v5678
      %vm5680 = vweird.f32 %v5461
      %vm5681 = vweird.f32 %v5675
      %vm5682 = vmor %vm5680, %vm5681
      %v5683 = vsel %vm5682, %v5675, %v5679
      %v5684 = vand.u32 2147483647, %v5461
      %vm5685 = vcmp.eq.f32.partialorder %v5684, 8.507059e+37
      %v5686 = vand.u32 %v5461, 2147483648
      %v5687 = vor.u32 1.1754944e-38, %v5686
      %v5688 = vsel %vm5685, %v5687, %v5683
      %v5689 = vmul.f32 1.0, %v5688
      %v5690 = vrcp.pop %v5462
      %v5691 = vmul.f32 %v5462, %v5690
      %v5692 = vsub.f32 1.0, %v5691
      %v5693 = vmul.f32 %v5690, %v5692
      %v5694 = vadd.f32 %v5690, %v5693
      %vm5695 = vweird.f32 %v5462
      %vm5696 = vweird.f32 %v5690
      %vm5697 = vmor %vm5695, %vm5696
      %v5698 = vsel %vm5697, %v5690, %v5694
      %v5699 = vand.u32 2147483647, %v5462
      %vm5700 = vcmp.eq.f32.partialorder %v5699, 8.507059e+37
      %v5701 = vand.u32 %v5462, 2147483648
      %v5702 = vor.u32 1.1754944e-38, %v5701
      %v5703 = vsel %vm5700, %v5702, %v5698
      %v5704 = vmul.f32 1.0, %v5703
      %v5705 = vrcp.pop %v5463
      %v5706 = vmul.f32 %v5463, %v5705
      %v5707 = vsub.f32 1.0, %v5706
      %v5708 = vmul.f32 %v5705, %v5707
      %v5709 = vadd.f32 %v5705, %v5708
      %vm5710 = vweird.f32 %v5463
      %vm5711 = vweird.f32 %v5705
      %vm5712 = vmor %vm5710, %vm5711
      %v5713 = vsel %vm5712, %v5705, %v5709
      %v5714 = vand.u32 2147483647, %v5463
      %vm5715 = vcmp.eq.f32.partialorder %v5714, 8.507059e+37
      %v5716 = vand.u32 %v5463, 2147483648
      %v5717 = vor.u32 1.1754944e-38, %v5716
      %v5718 = vsel %vm5715, %v5717, %v5713
      %v5719 = vmul.f32 1.0, %v5718
      %v5720 = vrcp.pop %v5464
      %v5721 = vmul.f32 %v5464, %v5720
      %v5722 = vsub.f32 1.0, %v5721
      %v5723 = vmul.f32 %v5720, %v5722
      %v5724 = vadd.f32 %v5720, %v5723
      %vm5725 = vweird.f32 %v5464
      %vm5726 = vweird.f32 %v5720
      %vm5727 = vmor %vm5725, %vm5726
      %v5728 = vsel %vm5727, %v5720, %v5724
      %v5729 = vand.u32 2147483647, %v5464
      %vm5730 = vcmp.eq.f32.partialorder %v5729, 8.507059e+37
      %v5731 = vand.u32 %v5464, 2147483648
      %v5732 = vor.u32 1.1754944e-38, %v5731
      %v5733 = vsel %vm5730, %v5732, %v5728
      %v5734 = vmul.f32 1.0, %v5733
      %v5735 = vmul.f32 %v5375, %v5479
      %v5736 = vmul.f32 %v5376, %v5494
      %v5737 = vmul.f32 %v5377, %v5509
      %v5738 = vmul.f32 %v5378, %v5524
      %v5739 = vmul.f32 %v5379, %v5539
      %v5740 = vmul.f32 %v5380, %v5554
      %v5741 = vmul.f32 %v5381, %v5569
      %v5742 = vmul.f32 %v5382, %v5584
      %v5743 = vmul.f32 %v5383, %v5599
      %v5744 = vmul.f32 %v5384, %v5614
      %v5745 = vmul.f32 %v5385, %v5629
      %v5746 = vmul.f32 %v5386, %v5644
      %v5747 = vmul.f32 %v5387, %v5659
      %v5748 = vmul.f32 %v5388, %v5674
      %v5749 = vmul.f32 %v5389, %v5689
      %v5750 = vmul.f32 %v5390, %v5704
      %v5751 = vmul.f32 %v5391, %v5719
      %v5752 = vmul.f32 %v5392, %v5734
      %v5753 = vmul.f32 %v5735, %v680
      %v5754 = vmul.f32 %v5736, %v681
      %v5755 = vmul.f32 %v5737, %v682
      %v5756 = vmul.f32 %v5738, %v683
      %v5757 = vmul.f32 %v5739, %v684
      %v5758 = vmul.f32 %v5740, %v685
      %v5759 = vmul.f32 %v5741, %v686
      %v5760 = vmul.f32 %v5742, %v687
      %v5761 = vmul.f32 %v5743, %v688
      %v5762 = vmul.f32 %v5744, %v689
      %v5763 = vmul.f32 %v5745, %v690
      %v5764 = vmul.f32 %v5746, %v691
      %v5765 = vmul.f32 %v5747, %v692
      %v5766 = vmul.f32 %v5748, %v693
      %v5767 = vmul.f32 %v5749, %v694
      %v5768 = vmul.f32 %v5750, %v695
      %v5769 = vmul.f32 %v5751, %v696
      %v5770 = vmul.f32 %v5752, %v697
      %v5771 = vpack.c.bf16 %v5753, %v5753
      %v5772 = vpack.c.bf16 %v5754, %v5754
      %v5773 = vpack.c.bf16 %v5755, %v5755
      %v5774 = vpack.c.bf16 %v5756, %v5756
      %v5775 = vpack.c.bf16 %v5757, %v5757
      %v5776 = vpack.c.bf16 %v5758, %v5758
      %v5777 = vpack.c.bf16 %v5759, %v5759
      %v5778 = vpack.c.bf16 %v5760, %v5760
      %v5779 = vpack.c.bf16 %v5761, %v5761
      %v5780 = vpack.c.bf16 %v5762, %v5762
      %v5781 = vpack.c.bf16 %v5763, %v5763
      %v5782 = vpack.c.bf16 %v5764, %v5764
      %v5783 = vpack.c.bf16 %v5765, %v5765
      %v5784 = vpack.c.bf16 %v5766, %v5766
      %v5785 = vpack.c.bf16 %v5767, %v5767
      %v5786 = vpack.c.bf16 %v5768, %v5768
      %v5787 = vpack.c.bf16 %v5769, %v5769
      %v5788 = vpack.c.bf16 %v5770, %v5770
      %5789 = vst.msk [vmem:[#allocation2 + $0x8] sm:$0xf] %vm698, %v5771
      %5790 = vst.msk [vmem:[#allocation2 + $0xc] sm:$0xf] %vm698, %v5772
      %5791 = vst.msk [vmem:[#allocation2 + $0x10] sm:$0xf] %vm698, %v5773
      %5792 = vst.msk [vmem:[#allocation2 + $0x14] sm:$0xf] %vm698, %v5774
      %5793 = vst.msk [vmem:[#allocation2 + $0x18] sm:$0xf] %vm698, %v5775
      %5794 = vst.msk [vmem:[#allocation2 + $0x1c] sm:$0xf] %vm698, %v5776
      %5795 = vst.msk [vmem:[#allocation2 + $0x20] sm:$0xf] %vm698, %v5777
      %5796 = vst.msk [vmem:[#allocation2 + $0x24] sm:$0xf] %vm698, %v5778
      %5797 = vst.msk [vmem:[#allocation2 + $0x28] sm:$0xf] %vm698, %v5779
      %5798 = vst.msk [vmem:[#allocation2 + $0x2c] sm:$0xf] %vm698, %v5780
      %5799 = vst.msk [vmem:[#allocation2 + $0x30] sm:$0xf] %vm698, %v5781
      %5800 = vst.msk [vmem:[#allocation2 + $0x34] sm:$0xf] %vm698, %v5782
      %5801 = vst.msk [vmem:[#allocation2 + $0x38] sm:$0xf] %vm698, %v5783
      %5802 = vst.msk [vmem:[#allocation2 + $0x3c] sm:$0xf] %vm698, %v5784
      %5803 = vst.msk [vmem:[#allocation2 + $0x40] sm:$0xf] %vm698, %v5785
      %5804 = vst.msk [vmem:[#allocation2 + $0x44] sm:$0xf] %vm698, %v5786
      %5805 = vst.msk [vmem:[#allocation2 + $0x48] sm:$0xf] %vm698, %v5787
      %5806 = vst.msk [vmem:[#allocation2 + $0x4c] sm:$0xf] %vm698, %v5788
      %v5807 = vld [vmem:[#allocation2 + $0x4] sm:$0xc]
      %v5808 = vld [vmem:[#allocation2 + $0x8] sm:$0xf]
      %v5809 = vld [vmem:[#allocation2 + $0xc] sm:$0xf]
      %v5810 = vld [vmem:[#allocation2 + $0x10] sm:$0xf]
      %v5811 = vld [vmem:[#allocation2 + $0x14] sm:$0xf]
      %v5812 = vld [vmem:[#allocation2 + $0x18] sm:$0xf]
      %v5813 = vld [vmem:[#allocation2 + $0x1c] sm:$0xf]
      %v5814 = vld [vmem:[#allocation2 + $0x20] sm:$0xf]
      %v5815 = vld [vmem:[#allocation2 + $0x24] sm:$0xf]
      %v5816 = vld [vmem:[#allocation2 + $0x28] sm:$0xf]
      %v5817 = vld [vmem:[#allocation2 + $0x2c] sm:$0xf]
      %v5818 = vld [vmem:[#allocation2 + $0x30] sm:$0xf]
      %v5819 = vld [vmem:[#allocation2 + $0x34] sm:$0xf]
      %v5820 = vld [vmem:[#allocation2 + $0x38] sm:$0xf]
      %v5821 = vld [vmem:[#allocation2 + $0x3c] sm:$0xf]
      %v5822 = vld [vmem:[#allocation2 + $0x40] sm:$0xf]
      %v5823 = vld [vmem:[#allocation2 + $0x44] sm:$0xf]
      %v5824 = vld [vmem:[#allocation2 + $0x48] sm:$0xf]
      %v5825 = vld [vmem:[#allocation2 + $0x4c] sm:$0x3]
      %v5826 = vld [vmem:[%s17] sm:$0xf]
      %v5827 = vld [vmem:[%s17 + $0x4] sm:$0xf]
      %v5828 = vld [vmem:[%s17 + $0x8] sm:$0xf]
      %v5829 = vld [vmem:[%s17 + $0xc] sm:$0xf]
      %v5830 = vld [vmem:[%s17 + $0x10] sm:$0xf]
      %v5831 = vld [vmem:[%s17 + $0x14] sm:$0xf]
      %v5832 = vld [vmem:[%s17 + $0x18] sm:$0xf]
      %v5833 = vld [vmem:[%s17 + $0x1c] sm:$0xf]
      %v5834 = vld [vmem:[#allocation2 + $0x4c] sm:$0x7]
      %s5835 = scalar_lea.vmem %s17, 32
      %v5836 = vld [vmem:[%s5835] sm:$0xf]
      %v5837 = vld [vmem:[%s5835 + $0x4] sm:$0xf]
      %v5838 = vld [vmem:[%s5835 + $0x8] sm:$0xf]
      %v5839 = vld [vmem:[%s5835 + $0xc] sm:$0xf]
      %v5840 = vld [vmem:[%s5835 + $0x10] sm:$0xf]
      %v5841 = vld [vmem:[%s5835 + $0x14] sm:$0xf]
      %v5842 = vld [vmem:[%s5835 + $0x18] sm:$0xf]
      %v5843 = vld [vmem:[%s5835 + $0x1c] sm:$0xf]
      %v5863 = vunpack.c.l.b16 %v5807
      %v5864 = vunpack.c.l.b16 %v5808
      %v5865 = vunpack.c.l.b16 %v5809
      %v5866 = vunpack.c.l.b16 %v5810
      %v5867 = vunpack.c.l.b16 %v5811
      %v5868 = vunpack.c.l.b16 %v5812
      %v5869 = vunpack.c.l.b16 %v5813
      %v5870 = vunpack.c.l.b16 %v5814
      %v5871 = vunpack.c.l.b16 %v5815
      %v5872 = vunpack.c.l.b16 %v5816
      %v5873 = vunpack.c.l.b16 %v5817
      %v5874 = vunpack.c.l.b16 %v5818
      %v5875 = vunpack.c.l.b16 %v5819
      %v5876 = vunpack.c.l.b16 %v5820
      %v5877 = vunpack.c.l.b16 %v5821
      %v5878 = vunpack.c.l.b16 %v5822
      %v5879 = vunpack.c.l.b16 %v5823
      %v5880 = vunpack.c.l.b16 %v5824
      %v5881 = vunpack.c.l.b16 %v5834
      %v5882 = vpack.c.b16 %v5864, %v5863
      %v5883 = vpack.c.b16 %v5866, %v5865
      %v5884 = vpack.c.b16 %v5868, %v5867
      %v5885 = vpack.c.b16 %v5870, %v5869
      %v5886 = vpack.c.b16 %v5872, %v5871
      %v5887 = vpack.c.b16 %v5874, %v5873
      %v5888 = vpack.c.b16 %v5876, %v5875
      %v5889 = vpack.c.b16 %v5878, %v5877
      %v5890 = vpack.c.b16 %v5880, %v5879
      %v5891 = vpack.c.b16 %v5881, %v5881
      %vm5892 = vsmask.f32 5376
      %v5894 = vshrl.u32 %v5882, 16
      %v5896 = vrot.slane %v5894, 2
      %v5897 = vshll.u32 %v5882, 16
      %v5899 = vrot.slane %v5897, 3
      %v5900 = vor.u32 %v5896, %v5899
      %v5902 = vshrl.u32 %v5883, 16
      %v5904 = vrot.slane %v5902, 2
      %v5905 = vshll.u32 %v5883, 16
      %v5907 = vrot.slane %v5905, 3
      %v5908 = vor.u32 %v5904, %v5907
      %v5909 = vsel %vm5892, %v5900, %v5908
      %v5911 = vshrl.u32 %v5884, 16
      %v5913 = vrot.slane %v5911, 2
      %v5914 = vshll.u32 %v5884, 16
      %v5916 = vrot.slane %v5914, 3
      %v5917 = vor.u32 %v5913, %v5916
      %v5918 = vsel %vm5892, %v5908, %v5917
      %v5920 = vshrl.u32 %v5885, 16
      %v5922 = vrot.slane %v5920, 2
      %v5923 = vshll.u32 %v5885, 16
      %v5925 = vrot.slane %v5923, 3
      %v5926 = vor.u32 %v5922, %v5925
      %v5927 = vsel %vm5892, %v5917, %v5926
      %v5929 = vshrl.u32 %v5886, 16
      %v5931 = vrot.slane %v5929, 2
      %v5932 = vshll.u32 %v5886, 16
      %v5934 = vrot.slane %v5932, 3
      %v5935 = vor.u32 %v5931, %v5934
      %v5936 = vsel %vm5892, %v5926, %v5935
      %v5938 = vshrl.u32 %v5887, 16
      %v5940 = vrot.slane %v5938, 2
      %v5941 = vshll.u32 %v5887, 16
      %v5943 = vrot.slane %v5941, 3
      %v5944 = vor.u32 %v5940, %v5943
      %v5945 = vsel %vm5892, %v5935, %v5944
      %v5947 = vshrl.u32 %v5888, 16
      %v5949 = vrot.slane %v5947, 2
      %v5950 = vshll.u32 %v5888, 16
      %v5952 = vrot.slane %v5950, 3
      %v5953 = vor.u32 %v5949, %v5952
      %v5954 = vsel %vm5892, %v5944, %v5953
      %v5956 = vshrl.u32 %v5889, 16
      %v5958 = vrot.slane %v5956, 2
      %v5959 = vshll.u32 %v5889, 16
      %v5961 = vrot.slane %v5959, 3
      %v5962 = vor.u32 %v5958, %v5961
      %v5963 = vsel %vm5892, %v5953, %v5962
      %v5965 = vshrl.u32 %v5890, 16
      %v5967 = vrot.slane %v5965, 2
      %v5968 = vshll.u32 %v5890, 16
      %v5970 = vrot.slane %v5968, 3
      %v5971 = vor.u32 %v5967, %v5970
      %v5972 = vsel %vm5892, %v5962, %v5971
      %v5974 = vshrl.u32 %v5891, 16
      %v5976 = vrot.slane %v5974, 2
      %v5977 = vshll.u32 %v5891, 16
      %v5979 = vrot.slane %v5977, 3
      %v5980 = vor.u32 %v5976, %v5979
      %v5981 = vsel %vm5892, %v5971, %v5980
      %v5990 = vunpack.c.l.b16 %v5836
      %v5991 = vunpack.c.l.b16 %v5837
      %v5992 = vunpack.c.l.b16 %v5838
      %v5993 = vunpack.c.l.b16 %v5839
      %v5994 = vunpack.c.l.b16 %v5840
      %v5995 = vunpack.c.l.b16 %v5841
      %v5996 = vunpack.c.l.b16 %v5842
      %v5997 = vunpack.c.l.b16 %v5843
      %v5998 = vpack.c.b16 %v5991, %v5990
      %v5999 = vpack.c.b16 %v5993, %v5992
      %v6000 = vpack.c.b16 %v5995, %v5994
      %v6001 = vpack.c.b16 %v5997, %v5996
      %v6007 = vsel %vm896, %v5909, 0
      %v6010 = vsel %vm896, %v5918, 0
      %v6013 = vsel %vm896, %v5927, 0
      %v6016 = vsel %vm896, %v5936, 0
      %v6019 = vsel %vm896, %v5945, 0
      %v6022 = vsel %vm896, %v5954, 0
      %v6025 = vsel %vm896, %v5963, 0
      %v6028 = vsel %vm896, %v5972, 0
      %v6031 = vsel %vm896, %v5981, 0
      %6033 = vmatpush.bf16.msra.mxu0 0
      %6034 = vmatpush.bf16.msra.mxu0 0
      %6035 = vmatpush.bf16.msra.mxu0 0
      %6036 = vmatpush.bf16.msra.mxu0 0
      %6037 = vmatpush.bf16.msra.mxu0 %v6001
      %6038 = vmatpush.bf16.msra.mxu0 %v6000
      %6039 = vmatpush.bf16.msra.mxu0 %v5999
      %6040 = vmatpush.bf16.msra.mxu0 %v5998
      %6041 = vmatmul.bf16.gmra.mxu0 %v6007
      %v6042 = vpop.f32.mrf.mxu0
      %v6043 = vadd.f32 0.0, %v6042
      %v6044 = vpop.f32.mrf.mxu0
      %v6045 = vadd.f32 0.0, %v6044
      %6046 = vmatmul.bf16.gmra.mxu0 %v6010
      %v6047 = vpop.f32.mrf.mxu0
      %v6048 = vadd.f32 0.0, %v6047
      %v6049 = vpop.f32.mrf.mxu0
      %v6050 = vadd.f32 0.0, %v6049
      %6051 = vmatmul.bf16.gmra.mxu0 %v6013
      %v6052 = vpop.f32.mrf.mxu0
      %v6053 = vadd.f32 0.0, %v6052
      %v6054 = vpop.f32.mrf.mxu0
      %v6055 = vadd.f32 0.0, %v6054
      %6056 = vmatmul.bf16.gmra.mxu0 %v6016
      %v6057 = vpop.f32.mrf.mxu0
      %v6058 = vadd.f32 0.0, %v6057
      %v6059 = vpop.f32.mrf.mxu0
      %v6060 = vadd.f32 0.0, %v6059
      %6061 = vmatmul.bf16.gmra.mxu0 %v6019
      %v6062 = vpop.f32.mrf.mxu0
      %v6063 = vadd.f32 0.0, %v6062
      %v6064 = vpop.f32.mrf.mxu0
      %v6065 = vadd.f32 0.0, %v6064
      %6066 = vmatmul.bf16.gmra.mxu0 %v6022
      %v6067 = vpop.f32.mrf.mxu0
      %v6068 = vadd.f32 0.0, %v6067
      %v6069 = vpop.f32.mrf.mxu0
      %v6070 = vadd.f32 0.0, %v6069
      %6071 = vmatmul.bf16.gmra.mxu0 %v6025
      %v6072 = vpop.f32.mrf.mxu0
      %v6073 = vadd.f32 0.0, %v6072
      %v6074 = vpop.f32.mrf.mxu0
      %v6075 = vadd.f32 0.0, %v6074
      %6076 = vmatmul.bf16.gmra.mxu0 %v6028
      %v6077 = vpop.f32.mrf.mxu0
      %v6078 = vadd.f32 0.0, %v6077
      %v6079 = vpop.f32.mrf.mxu0
      %v6080 = vadd.f32 0.0, %v6079
      %6081 = vmatmul.bf16.gmra.mxu0 %v6031
      %v6082 = vpop.f32.mrf.mxu0
      %v6083 = vadd.f32 0.0, %v6082
      %v6084 = vpop.f32.mrf.mxu0
      %v6085 = vadd.f32 0.0, %v6084
      %6086 = vdwg.mxu0
      %v6088 = vunpack.c.l.b16 %v5825
      %v6089 = vpack.c.b16 %v6088, %v6088
      %vm6090 = vcmask 1045504
      %v6091 = vrot.slane %v5882, 2
      %v6092 = vrot.slane %v5883, 2
      %v6093 = vsel %vm6090, %v6091, %v6092
      %v6094 = vrot.slane %v5884, 2
      %v6095 = vsel %vm6090, %v6092, %v6094
      %v6096 = vrot.slane %v5885, 2
      %v6097 = vsel %vm6090, %v6094, %v6096
      %v6098 = vrot.slane %v5886, 2
      %v6099 = vsel %vm6090, %v6096, %v6098
      %v6100 = vrot.slane %v5887, 2
      %v6101 = vsel %vm6090, %v6098, %v6100
      %v6102 = vrot.slane %v5888, 2
      %v6103 = vsel %vm6090, %v6100, %v6102
      %v6104 = vrot.slane %v5889, 2
      %v6105 = vsel %vm6090, %v6102, %v6104
      %v6106 = vrot.slane %v5890, 2
      %v6107 = vsel %vm6090, %v6104, %v6106
      %v6108 = vrot.slane %v6089, 2
      %v6109 = vsel %vm6090, %v6106, %v6108
      %v6118 = vunpack.c.l.b16 %v5826
      %v6119 = vunpack.c.l.b16 %v5827
      %v6120 = vunpack.c.l.b16 %v5828
      %v6121 = vunpack.c.l.b16 %v5829
      %v6122 = vunpack.c.l.b16 %v5830
      %v6123 = vunpack.c.l.b16 %v5831
      %v6124 = vunpack.c.l.b16 %v5832
      %v6125 = vunpack.c.l.b16 %v5833
      %v6126 = vpack.c.b16 %v6119, %v6118
      %v6127 = vpack.c.b16 %v6121, %v6120
      %v6128 = vpack.c.b16 %v6123, %v6122
      %v6129 = vpack.c.b16 %v6125, %v6124
      %v6135 = vsel %vm896, %v6093, 0
      %v6138 = vsel %vm896, %v6095, 0
      %v6141 = vsel %vm896, %v6097, 0
      %v6144 = vsel %vm896, %v6099, 0
      %v6147 = vsel %vm896, %v6101, 0
      %v6150 = vsel %vm896, %v6103, 0
      %v6153 = vsel %vm896, %v6105, 0
      %v6156 = vsel %vm896, %v6107, 0
      %v6159 = vsel %vm896, %v6109, 0
      %6161 = vmatpush.bf16.msra.mxu0 0
      %6162 = vmatpush.bf16.msra.mxu0 0
      %6163 = vmatpush.bf16.msra.mxu0 0
      %6164 = vmatpush.bf16.msra.mxu0 0
      %6165 = vmatpush.bf16.msra.mxu0 %v6129
      %6166 = vmatpush.bf16.msra.mxu0 %v6128
      %6167 = vmatpush.bf16.msra.mxu0 %v6127
      %6168 = vmatpush.bf16.msra.mxu0 %v6126
      %6169 = vmatmul.bf16.gmra.mxu0 %v6135
      %v6170 = vpop.f32.mrf.mxu0
      %v6171 = vadd.f32 %v6043, %v6170
      %v6172 = vpop.f32.mrf.mxu0
      %v6173 = vadd.f32 %v6045, %v6172
      %6174 = vmatmul.bf16.gmra.mxu0 %v6138
      %v6175 = vpop.f32.mrf.mxu0
      %v6176 = vadd.f32 %v6048, %v6175
      %v6177 = vpop.f32.mrf.mxu0
      %v6178 = vadd.f32 %v6050, %v6177
      %6179 = vmatmul.bf16.gmra.mxu0 %v6141
      %v6180 = vpop.f32.mrf.mxu0
      %v6181 = vadd.f32 %v6053, %v6180
      %v6182 = vpop.f32.mrf.mxu0
      %v6183 = vadd.f32 %v6055, %v6182
      %6184 = vmatmul.bf16.gmra.mxu0 %v6144
      %v6185 = vpop.f32.mrf.mxu0
      %v6186 = vadd.f32 %v6058, %v6185
      %v6187 = vpop.f32.mrf.mxu0
      %v6188 = vadd.f32 %v6060, %v6187
      %6189 = vmatmul.bf16.gmra.mxu0 %v6147
      %v6190 = vpop.f32.mrf.mxu0
      %v6191 = vadd.f32 %v6063, %v6190
      %v6192 = vpop.f32.mrf.mxu0
      %v6193 = vadd.f32 %v6065, %v6192
      %6194 = vmatmul.bf16.gmra.mxu0 %v6150
      %v6195 = vpop.f32.mrf.mxu0
      %v6196 = vadd.f32 %v6068, %v6195
      %v6197 = vpop.f32.mrf.mxu0
      %v6198 = vadd.f32 %v6070, %v6197
      %6199 = vmatmul.bf16.gmra.mxu0 %v6153
      %v6200 = vpop.f32.mrf.mxu0
      %v6201 = vadd.f32 %v6073, %v6200
      %v6202 = vpop.f32.mrf.mxu0
      %v6203 = vadd.f32 %v6075, %v6202
      %6204 = vmatmul.bf16.gmra.mxu0 %v6156
      %v6205 = vpop.f32.mrf.mxu0
      %v6206 = vadd.f32 %v6078, %v6205
      %v6207 = vpop.f32.mrf.mxu0
      %v6208 = vadd.f32 %v6080, %v6207
      %6209 = vmatmul.bf16.gmra.mxu0 %v6159
      %v6210 = vpop.f32.mrf.mxu0
      %v6211 = vadd.f32 %v6083, %v6210
      %v6212 = vpop.f32.mrf.mxu0
      %v6213 = vadd.f32 %v6085, %v6212
      %6214 = vdwg.mxu0
      %v6215 = vld [vmem:[#allocation2 + $0x4] sm:$0x8]
      %s6216 = scalar_lea.vmem %s17, 64
      %v6217 = vld [vmem:[%s6216] sm:$0xf]
      %v6218 = vld [vmem:[%s6216 + $0x4] sm:$0xf]
      %v6219 = vld [vmem:[%s6216 + $0x8] sm:$0xf]
      %v6220 = vld [vmem:[%s6216 + $0xc] sm:$0xf]
      %v6221 = vld [vmem:[%s6216 + $0x10] sm:$0xf]
      %v6222 = vld [vmem:[%s6216 + $0x14] sm:$0xf]
      %v6223 = vld [vmem:[%s6216 + $0x18] sm:$0xf]
      %v6224 = vld [vmem:[%s6216 + $0x1c] sm:$0xf]
      %v6226 = vunpack.c.l.b16 %v6215
      %v6227 = vpack.c.b16 %v5864, %v6226
      %v6228 = vrot.slane %v6227, 3
      %v6229 = vrot.slane %v5883, 3
      %v6230 = vsel %vm3126, %v6228, %v6229
      %v6231 = vrot.slane %v5884, 3
      %v6232 = vsel %vm3126, %v6229, %v6231
      %v6233 = vrot.slane %v5885, 3
      %v6234 = vsel %vm3126, %v6231, %v6233
      %v6235 = vrot.slane %v5886, 3
      %v6236 = vsel %vm3126, %v6233, %v6235
      %v6237 = vrot.slane %v5887, 3
      %v6238 = vsel %vm3126, %v6235, %v6237
      %v6239 = vrot.slane %v5888, 3
      %v6240 = vsel %vm3126, %v6237, %v6239
      %v6241 = vrot.slane %v5889, 3
      %v6242 = vsel %vm3126, %v6239, %v6241
      %v6243 = vrot.slane %v5890, 3
      %v6244 = vsel %vm3126, %v6241, %v6243
      %v6245 = vrot.slane %v5891, 3
      %v6246 = vsel %vm3126, %v6243, %v6245
      %v6255 = vunpack.c.l.b16 %v6217
      %v6256 = vunpack.c.l.b16 %v6218
      %v6257 = vunpack.c.l.b16 %v6219
      %v6258 = vunpack.c.l.b16 %v6220
      %v6259 = vunpack.c.l.b16 %v6221
      %v6260 = vunpack.c.l.b16 %v6222
      %v6261 = vunpack.c.l.b16 %v6223
      %v6262 = vunpack.c.l.b16 %v6224
      %v6263 = vpack.c.b16 %v6256, %v6255
      %v6264 = vpack.c.b16 %v6258, %v6257
      %v6265 = vpack.c.b16 %v6260, %v6259
      %v6266 = vpack.c.b16 %v6262, %v6261
      %v6272 = vsel %vm896, %v6230, 0
      %v6275 = vsel %vm896, %v6232, 0
      %v6278 = vsel %vm896, %v6234, 0
      %v6281 = vsel %vm896, %v6236, 0
      %v6284 = vsel %vm896, %v6238, 0
      %v6287 = vsel %vm896, %v6240, 0
      %v6290 = vsel %vm896, %v6242, 0
      %v6293 = vsel %vm896, %v6244, 0
      %v6296 = vsel %vm896, %v6246, 0
      %6298 = vmatpush.bf16.msra.mxu0 0
      %6299 = vmatpush.bf16.msra.mxu0 0
      %6300 = vmatpush.bf16.msra.mxu0 0
      %6301 = vmatpush.bf16.msra.mxu0 0
      %6302 = vmatpush.bf16.msra.mxu0 %v6266
      %6303 = vmatpush.bf16.msra.mxu0 %v6265
      %6304 = vmatpush.bf16.msra.mxu0 %v6264
      %6305 = vmatpush.bf16.msra.mxu0 %v6263
      %6306 = vmatmul.bf16.gmra.mxu0 %v6272
      %v6307 = vpop.f32.mrf.mxu0
      %v6308 = vadd.f32 0.0, %v6307
      %v6309 = vpop.f32.mrf.mxu0
      %v6310 = vadd.f32 0.0, %v6309
      %6311 = vmatmul.bf16.gmra.mxu0 %v6275
      %v6312 = vpop.f32.mrf.mxu0
      %v6313 = vadd.f32 0.0, %v6312
      %v6314 = vpop.f32.mrf.mxu0
      %v6315 = vadd.f32 0.0, %v6314
      %6316 = vmatmul.bf16.gmra.mxu0 %v6278
      %v6317 = vpop.f32.mrf.mxu0
      %v6318 = vadd.f32 0.0, %v6317
      %v6319 = vpop.f32.mrf.mxu0
      %v6320 = vadd.f32 0.0, %v6319
      %6321 = vmatmul.bf16.gmra.mxu0 %v6281
      %v6322 = vpop.f32.mrf.mxu0
      %v6323 = vadd.f32 0.0, %v6322
      %v6324 = vpop.f32.mrf.mxu0
      %v6325 = vadd.f32 0.0, %v6324
      %6326 = vmatmul.bf16.gmra.mxu0 %v6284
      %v6327 = vpop.f32.mrf.mxu0
      %v6328 = vadd.f32 0.0, %v6327
      %v6329 = vpop.f32.mrf.mxu0
      %v6330 = vadd.f32 0.0, %v6329
      %6331 = vmatmul.bf16.gmra.mxu0 %v6287
      %v6332 = vpop.f32.mrf.mxu0
      %v6333 = vadd.f32 0.0, %v6332
      %v6334 = vpop.f32.mrf.mxu0
      %v6335 = vadd.f32 0.0, %v6334
      %6336 = vmatmul.bf16.gmra.mxu0 %v6290
      %v6337 = vpop.f32.mrf.mxu0
      %v6338 = vadd.f32 0.0, %v6337
      %v6339 = vpop.f32.mrf.mxu0
      %v6340 = vadd.f32 0.0, %v6339
      %6341 = vmatmul.bf16.gmra.mxu0 %v6293
      %v6342 = vpop.f32.mrf.mxu0
      %v6343 = vadd.f32 0.0, %v6342
      %v6344 = vpop.f32.mrf.mxu0
      %v6345 = vadd.f32 0.0, %v6344
      %6346 = vmatmul.bf16.gmra.mxu0 %v6296
      %v6347 = vpop.f32.mrf.mxu0
      %v6348 = vadd.f32 0.0, %v6347
      %v6349 = vpop.f32.mrf.mxu0
      %v6350 = vadd.f32 0.0, %v6349
      %6351 = vdwg.mxu0
      %v6352 = vadd.f32 %v6171, %v6308
      %v6353 = vadd.f32 %v6173, %v6310
      %v6354 = vadd.f32 %v6176, %v6313
      %v6355 = vadd.f32 %v6178, %v6315
      %v6356 = vadd.f32 %v6181, %v6318
      %v6357 = vadd.f32 %v6183, %v6320
      %v6358 = vadd.f32 %v6186, %v6323
      %v6359 = vadd.f32 %v6188, %v6325
      %v6360 = vadd.f32 %v6191, %v6328
      %v6361 = vadd.f32 %v6193, %v6330
      %v6362 = vadd.f32 %v6196, %v6333
      %v6363 = vadd.f32 %v6198, %v6335
      %v6364 = vadd.f32 %v6201, %v6338
      %v6365 = vadd.f32 %v6203, %v6340
      %v6366 = vadd.f32 %v6206, %v6343
      %v6367 = vadd.f32 %v6208, %v6345
      %v6368 = vadd.f32 %v6211, %v6348
      %v6369 = vadd.f32 %v6213, %v6350
      %v6370 = vld [vmem:[#allocation2 + $0x4c] sm:$0xf]
      %s6371 = scalar_lea.vmem %s17, 96
      %v6372 = vld [vmem:[%s6371] sm:$0xf]
      %v6373 = vld [vmem:[%s6371 + $0x4] sm:$0xf]
      %v6374 = vld [vmem:[%s6371 + $0x8] sm:$0xf]
      %v6375 = vld [vmem:[%s6371 + $0xc] sm:$0xf]
      %v6376 = vld [vmem:[%s6371 + $0x10] sm:$0xf]
      %v6377 = vld [vmem:[%s6371 + $0x14] sm:$0xf]
      %v6378 = vld [vmem:[%s6371 + $0x18] sm:$0xf]
      %v6379 = vld [vmem:[%s6371 + $0x1c] sm:$0xf]
      %v6381 = vunpack.c.l.b16 %v6370
      %v6382 = vpack.c.b16 %v6381, %v6381
      %v6384 = vshrl.u32 %v6227, 16
      %v6386 = vrot.slane %v6384, 3
      %v6387 = vshll.u32 %v6227, 16
      %v6389 = vrot.slane %v6387, 4
      %v6390 = vor.u32 %v6386, %v6389
      %v6391 = vrot.slane %v5902, 3
      %v6392 = vrot.slane %v5905, 4
      %v6393 = vor.u32 %v6391, %v6392
      %v6394 = vsel %vm1725, %v6390, %v6393
      %v6395 = vrot.slane %v5911, 3
      %v6396 = vrot.slane %v5914, 4
      %v6397 = vor.u32 %v6395, %v6396
      %v6398 = vsel %vm1725, %v6393, %v6397
      %v6399 = vrot.slane %v5920, 3
      %v6400 = vrot.slane %v5923, 4
      %v6401 = vor.u32 %v6399, %v6400
      %v6402 = vsel %vm1725, %v6397, %v6401
      %v6403 = vrot.slane %v5929, 3
      %v6404 = vrot.slane %v5932, 4
      %v6405 = vor.u32 %v6403, %v6404
      %v6406 = vsel %vm1725, %v6401, %v6405
      %v6407 = vrot.slane %v5938, 3
      %v6408 = vrot.slane %v5941, 4
      %v6409 = vor.u32 %v6407, %v6408
      %v6410 = vsel %vm1725, %v6405, %v6409
      %v6411 = vrot.slane %v5947, 3
      %v6412 = vrot.slane %v5950, 4
      %v6413 = vor.u32 %v6411, %v6412
      %v6414 = vsel %vm1725, %v6409, %v6413
      %v6415 = vrot.slane %v5956, 3
      %v6416 = vrot.slane %v5959, 4
      %v6417 = vor.u32 %v6415, %v6416
      %v6418 = vsel %vm1725, %v6413, %v6417
      %v6419 = vrot.slane %v5965, 3
      %v6420 = vrot.slane %v5968, 4
      %v6421 = vor.u32 %v6419, %v6420
      %v6422 = vsel %vm1725, %v6417, %v6421
      %v6424 = vshrl.u32 %v6382, 16
      %v6426 = vrot.slane %v6424, 3
      %v6427 = vshll.u32 %v6382, 16
      %v6429 = vrot.slane %v6427, 4
      %v6430 = vor.u32 %v6426, %v6429
      %v6431 = vsel %vm1725, %v6421, %v6430
      %v6440 = vunpack.c.l.b16 %v6372
      %v6441 = vunpack.c.l.b16 %v6373
      %v6442 = vunpack.c.l.b16 %v6374
      %v6443 = vunpack.c.l.b16 %v6375
      %v6444 = vunpack.c.l.b16 %v6376
      %v6445 = vunpack.c.l.b16 %v6377
      %v6446 = vunpack.c.l.b16 %v6378
      %v6447 = vunpack.c.l.b16 %v6379
      %v6448 = vpack.c.b16 %v6441, %v6440
      %v6449 = vpack.c.b16 %v6443, %v6442
      %v6450 = vpack.c.b16 %v6445, %v6444
      %v6451 = vpack.c.b16 %v6447, %v6446
      %v6457 = vsel %vm896, %v6394, 0
      %v6460 = vsel %vm896, %v6398, 0
      %v6463 = vsel %vm896, %v6402, 0
      %v6466 = vsel %vm896, %v6406, 0
      %v6469 = vsel %vm896, %v6410, 0
      %v6472 = vsel %vm896, %v6414, 0
      %v6475 = vsel %vm896, %v6418, 0
      %v6478 = vsel %vm896, %v6422, 0
      %v6481 = vsel %vm896, %v6431, 0
      %6483 = vmatpush.bf16.msra.mxu0 0
      %6484 = vmatpush.bf16.msra.mxu0 0
      %6485 = vmatpush.bf16.msra.mxu0 0
      %6486 = vmatpush.bf16.msra.mxu0 0
      %6487 = vmatpush.bf16.msra.mxu0 %v6451
      %6488 = vmatpush.bf16.msra.mxu0 %v6450
      %6489 = vmatpush.bf16.msra.mxu0 %v6449
      %6490 = vmatpush.bf16.msra.mxu0 %v6448
      %6491 = vmatmul.bf16.gmra.mxu0 %v6457
      %v6492 = vpop.f32.mrf.mxu0
      %v6493 = vadd.f32 0.0, %v6492
      %v6494 = vpop.f32.mrf.mxu0
      %v6495 = vadd.f32 0.0, %v6494
      %6496 = vmatmul.bf16.gmra.mxu0 %v6460
      %v6497 = vpop.f32.mrf.mxu0
      %v6498 = vadd.f32 0.0, %v6497
      %v6499 = vpop.f32.mrf.mxu0
      %v6500 = vadd.f32 0.0, %v6499
      %6501 = vmatmul.bf16.gmra.mxu0 %v6463
      %v6502 = vpop.f32.mrf.mxu0
      %v6503 = vadd.f32 0.0, %v6502
      %v6504 = vpop.f32.mrf.mxu0
      %v6505 = vadd.f32 0.0, %v6504
      %6506 = vmatmul.bf16.gmra.mxu0 %v6466
      %v6507 = vpop.f32.mrf.mxu0
      %v6508 = vadd.f32 0.0, %v6507
      %v6509 = vpop.f32.mrf.mxu0
      %v6510 = vadd.f32 0.0, %v6509
      %6511 = vmatmul.bf16.gmra.mxu0 %v6469
      %v6512 = vpop.f32.mrf.mxu0
      %v6513 = vadd.f32 0.0, %v6512
      %v6514 = vpop.f32.mrf.mxu0
      %v6515 = vadd.f32 0.0, %v6514
      %6516 = vmatmul.bf16.gmra.mxu0 %v6472
      %v6517 = vpop.f32.mrf.mxu0
      %v6518 = vadd.f32 0.0, %v6517
      %v6519 = vpop.f32.mrf.mxu0
      %v6520 = vadd.f32 0.0, %v6519
      %6521 = vmatmul.bf16.gmra.mxu0 %v6475
      %v6522 = vpop.f32.mrf.mxu0
      %v6523 = vadd.f32 0.0, %v6522
      %v6524 = vpop.f32.mrf.mxu0
      %v6525 = vadd.f32 0.0, %v6524
      %6526 = vmatmul.bf16.gmra.mxu0 %v6478
      %v6527 = vpop.f32.mrf.mxu0
      %v6528 = vadd.f32 0.0, %v6527
      %v6529 = vpop.f32.mrf.mxu0
      %v6530 = vadd.f32 0.0, %v6529
      %6531 = vmatmul.bf16.gmra.mxu0 %v6481
      %v6532 = vpop.f32.mrf.mxu0
      %v6533 = vadd.f32 0.0, %v6532
      %v6534 = vpop.f32.mrf.mxu0
      %v6535 = vadd.f32 0.0, %v6534
      %6536 = vdwg.mxu0
      %v6537 = vadd.f32 %v6352, %v6493
      %v6538 = vadd.f32 %v6353, %v6495
      %v6539 = vadd.f32 %v6354, %v6498
      %v6540 = vadd.f32 %v6355, %v6500
      %v6541 = vadd.f32 %v6356, %v6503
      %v6542 = vadd.f32 %v6357, %v6505
      %v6543 = vadd.f32 %v6358, %v6508
      %v6544 = vadd.f32 %v6359, %v6510
      %v6545 = vadd.f32 %v6360, %v6513
      %v6546 = vadd.f32 %v6361, %v6515
      %v6547 = vadd.f32 %v6362, %v6518
      %v6548 = vadd.f32 %v6363, %v6520
      %v6549 = vadd.f32 %v6364, %v6523
      %v6550 = vadd.f32 %v6365, %v6525
      %v6551 = vadd.f32 %v6366, %v6528
      %v6552 = vadd.f32 %v6367, %v6530
      %v6553 = vadd.f32 %v6368, %v6533
      %v6554 = vadd.f32 %v6369, %v6535
      %s6555 = scalar_lea.vmem %s17, 128
      %v6556 = vld [vmem:[%s6555] sm:$0xf]
      %v6557 = vld [vmem:[%s6555 + $0x4] sm:$0xf]
      %v6558 = vld [vmem:[%s6555 + $0x8] sm:$0xf]
      %v6559 = vld [vmem:[%s6555 + $0xc] sm:$0xf]
      %v6560 = vld [vmem:[%s6555 + $0x10] sm:$0xf]
      %v6561 = vld [vmem:[%s6555 + $0x14] sm:$0xf]
      %v6562 = vld [vmem:[%s6555 + $0x18] sm:$0xf]
      %v6563 = vld [vmem:[%s6555 + $0x1c] sm:$0xf]
      %v6564 = vpack.c.b16 %v5865, %v5864
      %v6565 = vpack.c.b16 %v5867, %v5866
      %v6566 = vpack.c.b16 %v5869, %v5868
      %v6567 = vpack.c.b16 %v5871, %v5870
      %v6568 = vpack.c.b16 %v5873, %v5872
      %v6569 = vpack.c.b16 %v5875, %v5874
      %v6570 = vpack.c.b16 %v5877, %v5876
      %v6571 = vpack.c.b16 %v5879, %v5878
      %v6572 = vpack.c.b16 %v6381, %v5880
      %v6581 = vunpack.c.l.b16 %v6556
      %v6582 = vunpack.c.l.b16 %v6557
      %v6583 = vunpack.c.l.b16 %v6558
      %v6584 = vunpack.c.l.b16 %v6559
      %v6585 = vunpack.c.l.b16 %v6560
      %v6586 = vunpack.c.l.b16 %v6561
      %v6587 = vunpack.c.l.b16 %v6562
      %v6588 = vunpack.c.l.b16 %v6563
      %v6589 = vpack.c.b16 %v6582, %v6581
      %v6590 = vpack.c.b16 %v6584, %v6583
      %v6591 = vpack.c.b16 %v6586, %v6585
      %v6592 = vpack.c.b16 %v6588, %v6587
      %v6598 = vsel %vm896, %v6564, 0
      %v6601 = vsel %vm896, %v6565, 0
      %v6604 = vsel %vm896, %v6566, 0
      %v6607 = vsel %vm896, %v6567, 0
      %v6610 = vsel %vm896, %v6568, 0
      %v6613 = vsel %vm896, %v6569, 0
      %v6616 = vsel %vm896, %v6570, 0
      %v6619 = vsel %vm896, %v6571, 0
      %v6622 = vsel %vm896, %v6572, 0
      %6624 = vmatpush.bf16.msra.mxu0 0
      %6625 = vmatpush.bf16.msra.mxu0 0
      %6626 = vmatpush.bf16.msra.mxu0 0
      %6627 = vmatpush.bf16.msra.mxu0 0
      %6628 = vmatpush.bf16.msra.mxu0 %v6592
      %6629 = vmatpush.bf16.msra.mxu0 %v6591
      %6630 = vmatpush.bf16.msra.mxu0 %v6590
      %6631 = vmatpush.bf16.msra.mxu0 %v6589
      %6632 = vmatmul.bf16.gmra.mxu0 %v6598
      %v6633 = vpop.f32.mrf.mxu0
      %v6634 = vadd.f32 0.0, %v6633
      %v6635 = vpop.f32.mrf.mxu0
      %v6636 = vadd.f32 0.0, %v6635
      %6637 = vmatmul.bf16.gmra.mxu0 %v6601
      %v6638 = vpop.f32.mrf.mxu0
      %v6639 = vadd.f32 0.0, %v6638
      %v6640 = vpop.f32.mrf.mxu0
      %v6641 = vadd.f32 0.0, %v6640
      %6642 = vmatmul.bf16.gmra.mxu0 %v6604
      %v6643 = vpop.f32.mrf.mxu0
      %v6644 = vadd.f32 0.0, %v6643
      %v6645 = vpop.f32.mrf.mxu0
      %v6646 = vadd.f32 0.0, %v6645
      %6647 = vmatmul.bf16.gmra.mxu0 %v6607
      %v6648 = vpop.f32.mrf.mxu0
      %v6649 = vadd.f32 0.0, %v6648
      %v6650 = vpop.f32.mrf.mxu0
      %v6651 = vadd.f32 0.0, %v6650
      %6652 = vmatmul.bf16.gmra.mxu0 %v6610
      %v6653 = vpop.f32.mrf.mxu0
      %v6654 = vadd.f32 0.0, %v6653
      %v6655 = vpop.f32.mrf.mxu0
      %v6656 = vadd.f32 0.0, %v6655
      %6657 = vmatmul.bf16.gmra.mxu0 %v6613
      %v6658 = vpop.f32.mrf.mxu0
      %v6659 = vadd.f32 0.0, %v6658
      %v6660 = vpop.f32.mrf.mxu0
      %v6661 = vadd.f32 0.0, %v6660
      %6662 = vmatmul.bf16.gmra.mxu0 %v6616
      %v6663 = vpop.f32.mrf.mxu0
      %v6664 = vadd.f32 0.0, %v6663
      %v6665 = vpop.f32.mrf.mxu0
      %v6666 = vadd.f32 0.0, %v6665
      %6667 = vmatmul.bf16.gmra.mxu0 %v6619
      %v6668 = vpop.f32.mrf.mxu0
      %v6669 = vadd.f32 0.0, %v6668
      %v6670 = vpop.f32.mrf.mxu0
      %v6671 = vadd.f32 0.0, %v6670
      %6672 = vmatmul.bf16.gmra.mxu0 %v6622
      %v6673 = vpop.f32.mrf.mxu0
      %v6674 = vadd.f32 0.0, %v6673
      %v6675 = vpop.f32.mrf.mxu0
      %v6676 = vadd.f32 0.0, %v6675
      %6677 = vdwg.mxu0
      %v6678 = vadd.f32 %v6537, %v6634
      %v6679 = vadd.f32 %v6538, %v6636
      %v6680 = vadd.f32 %v6539, %v6639
      %v6681 = vadd.f32 %v6540, %v6641
      %v6682 = vadd.f32 %v6541, %v6644
      %v6683 = vadd.f32 %v6542, %v6646
      %v6684 = vadd.f32 %v6543, %v6649
      %v6685 = vadd.f32 %v6544, %v6651
      %v6686 = vadd.f32 %v6545, %v6654
      %v6687 = vadd.f32 %v6546, %v6656
      %v6688 = vadd.f32 %v6547, %v6659
      %v6689 = vadd.f32 %v6548, %v6661
      %v6690 = vadd.f32 %v6549, %v6664
      %v6691 = vadd.f32 %v6550, %v6666
      %v6692 = vadd.f32 %v6551, %v6669
      %v6693 = vadd.f32 %v6552, %v6671
      %v6694 = vadd.f32 %v6553, %v6674
      %v6695 = vadd.f32 %v6554, %v6676
      %v6696 = vld [vmem:[#allocation2 + $0x8] sm:$0xf]
      %v6697 = vld [vmem:[#allocation2 + $0xc] sm:$0xf]
      %v6698 = vld [vmem:[#allocation2 + $0x10] sm:$0xf]
      %v6699 = vld [vmem:[#allocation2 + $0x14] sm:$0xf]
      %v6700 = vld [vmem:[#allocation2 + $0x18] sm:$0xf]
      %v6701 = vld [vmem:[#allocation2 + $0x1c] sm:$0xf]
      %v6702 = vld [vmem:[#allocation2 + $0x20] sm:$0xf]
      %v6703 = vld [vmem:[#allocation2 + $0x24] sm:$0xf]
      %v6704 = vld [vmem:[#allocation2 + $0x28] sm:$0xf]
      %v6705 = vld [vmem:[#allocation2 + $0x2c] sm:$0xf]
      %v6706 = vld [vmem:[#allocation2 + $0x30] sm:$0xf]
      %v6707 = vld [vmem:[#allocation2 + $0x34] sm:$0xf]
      %v6708 = vld [vmem:[#allocation2 + $0x38] sm:$0xf]
      %v6709 = vld [vmem:[#allocation2 + $0x3c] sm:$0xf]
      %v6710 = vld [vmem:[#allocation2 + $0x40] sm:$0xf]
      %v6711 = vld [vmem:[#allocation2 + $0x44] sm:$0xf]
      %v6712 = vld [vmem:[#allocation2 + $0x48] sm:$0xf]
      %v6713 = vld [vmem:[#allocation2 + $0x4c] sm:$0xf]
      %v6714 = vld [vmem:[#allocation2 + $0x50] sm:$0x1]
      %s6715 = scalar_lea.vmem %s17, 160
      %v6716 = vld [vmem:[%s6715] sm:$0xf]
      %v6717 = vld [vmem:[%s6715 + $0x4] sm:$0xf]
      %v6718 = vld [vmem:[%s6715 + $0x8] sm:$0xf]
      %v6719 = vld [vmem:[%s6715 + $0xc] sm:$0xf]
      %v6720 = vld [vmem:[%s6715 + $0x10] sm:$0xf]
      %v6721 = vld [vmem:[%s6715 + $0x14] sm:$0xf]
      %v6722 = vld [vmem:[%s6715 + $0x18] sm:$0xf]
      %v6723 = vld [vmem:[%s6715 + $0x1c] sm:$0xf]
      %v6743 = vunpack.c.l.b16 %v6696
      %v6744 = vunpack.c.l.b16 %v6697
      %v6745 = vunpack.c.l.b16 %v6698
      %v6746 = vunpack.c.l.b16 %v6699
      %v6747 = vunpack.c.l.b16 %v6700
      %v6748 = vunpack.c.l.b16 %v6701
      %v6749 = vunpack.c.l.b16 %v6702
      %v6750 = vunpack.c.l.b16 %v6703
      %v6751 = vunpack.c.l.b16 %v6704
      %v6752 = vunpack.c.l.b16 %v6705
      %v6753 = vunpack.c.l.b16 %v6706
      %v6754 = vunpack.c.l.b16 %v6707
      %v6755 = vunpack.c.l.b16 %v6708
      %v6756 = vunpack.c.l.b16 %v6709
      %v6757 = vunpack.c.l.b16 %v6710
      %v6758 = vunpack.c.l.b16 %v6711
      %v6759 = vunpack.c.l.b16 %v6712
      %v6760 = vunpack.c.l.b16 %v6713
      %v6761 = vunpack.c.l.b16 %v6714
      %v6762 = vpack.c.b16 %v6744, %v6743
      %v6763 = vpack.c.b16 %v6746, %v6745
      %v6764 = vpack.c.b16 %v6748, %v6747
      %v6765 = vpack.c.b16 %v6750, %v6749
      %v6766 = vpack.c.b16 %v6752, %v6751
      %v6767 = vpack.c.b16 %v6754, %v6753
      %v6768 = vpack.c.b16 %v6756, %v6755
      %v6769 = vpack.c.b16 %v6758, %v6757
      %v6770 = vpack.c.b16 %v6760, %v6759
      %v6771 = vpack.c.b16 %v6761, %v6761
      %v6773 = vshrl.u32 %v6762, 16
      %v6775 = vshll.u32 %v6762, 16
      %v6777 = vrot.slane %v6775, 1
      %v6778 = vor.u32 %v6773, %v6777
      %v6780 = vshll.u32 %v6763, 16
      %v6782 = vrot.slane %v6780, 1
      %v6783 = vsel %vm1996, %v6778, %v6782
      %v6784 = vshrl.u32 %v6763, 16
      %v6786 = vor.u32 %v6784, %v6782
      %v6788 = vshll.u32 %v6764, 16
      %v6790 = vrot.slane %v6788, 1
      %v6791 = vsel %vm1996, %v6786, %v6790
      %v6792 = vshrl.u32 %v6764, 16
      %v6794 = vor.u32 %v6792, %v6790
      %v6796 = vshll.u32 %v6765, 16
      %v6798 = vrot.slane %v6796, 1
      %v6799 = vsel %vm1996, %v6794, %v6798
      %v6800 = vshrl.u32 %v6765, 16
      %v6802 = vor.u32 %v6800, %v6798
      %v6804 = vshll.u32 %v6766, 16
      %v6806 = vrot.slane %v6804, 1
      %v6807 = vsel %vm1996, %v6802, %v6806
      %v6808 = vshrl.u32 %v6766, 16
      %v6810 = vor.u32 %v6808, %v6806
      %v6812 = vshll.u32 %v6767, 16
      %v6814 = vrot.slane %v6812, 1
      %v6815 = vsel %vm1996, %v6810, %v6814
      %v6816 = vshrl.u32 %v6767, 16
      %v6818 = vor.u32 %v6816, %v6814
      %v6820 = vshll.u32 %v6768, 16
      %v6822 = vrot.slane %v6820, 1
      %v6823 = vsel %vm1996, %v6818, %v6822
      %v6824 = vshrl.u32 %v6768, 16
      %v6826 = vor.u32 %v6824, %v6822
      %v6828 = vshll.u32 %v6769, 16
      %v6830 = vrot.slane %v6828, 1
      %v6831 = vsel %vm1996, %v6826, %v6830
      %v6832 = vshrl.u32 %v6769, 16
      %v6834 = vor.u32 %v6832, %v6830
      %v6836 = vshll.u32 %v6770, 16
      %v6838 = vrot.slane %v6836, 1
      %v6839 = vsel %vm1996, %v6834, %v6838
      %v6840 = vshrl.u32 %v6770, 16
      %v6842 = vor.u32 %v6840, %v6838
      %v6844 = vshll.u32 %v6771, 16
      %v6846 = vrot.slane %v6844, 1
      %v6847 = vsel %vm1996, %v6842, %v6846
      %v6856 = vunpack.c.l.b16 %v6716
      %v6857 = vunpack.c.l.b16 %v6717
      %v6858 = vunpack.c.l.b16 %v6718
      %v6859 = vunpack.c.l.b16 %v6719
      %v6860 = vunpack.c.l.b16 %v6720
      %v6861 = vunpack.c.l.b16 %v6721
      %v6862 = vunpack.c.l.b16 %v6722
      %v6863 = vunpack.c.l.b16 %v6723
      %v6864 = vpack.c.b16 %v6857, %v6856
      %v6865 = vpack.c.b16 %v6859, %v6858
      %v6866 = vpack.c.b16 %v6861, %v6860
      %v6867 = vpack.c.b16 %v6863, %v6862
      %v6873 = vsel %vm896, %v6783, 0
      %v6876 = vsel %vm896, %v6791, 0
      %v6879 = vsel %vm896, %v6799, 0
      %v6882 = vsel %vm896, %v6807, 0
      %v6885 = vsel %vm896, %v6815, 0
      %v6888 = vsel %vm896, %v6823, 0
      %v6891 = vsel %vm896, %v6831, 0
      %v6894 = vsel %vm896, %v6839, 0
      %v6897 = vsel %vm896, %v6847, 0
      %6899 = vmatpush.bf16.msra.mxu0 0
      %6900 = vmatpush.bf16.msra.mxu0 0
      %6901 = vmatpush.bf16.msra.mxu0 0
      %6902 = vmatpush.bf16.msra.mxu0 0
      %6903 = vmatpush.bf16.msra.mxu0 %v6867
      %6904 = vmatpush.bf16.msra.mxu0 %v6866
      %6905 = vmatpush.bf16.msra.mxu0 %v6865
      %6906 = vmatpush.bf16.msra.mxu0 %v6864
      %6907 = vmatmul.bf16.gmra.mxu0 %v6873
      %v6908 = vpop.f32.mrf.mxu0
      %v6909 = vadd.f32 0.0, %v6908
      %v6910 = vpop.f32.mrf.mxu0
      %v6911 = vadd.f32 0.0, %v6910
      %6912 = vmatmul.bf16.gmra.mxu0 %v6876
      %v6913 = vpop.f32.mrf.mxu0
      %v6914 = vadd.f32 0.0, %v6913
      %v6915 = vpop.f32.mrf.mxu0
      %v6916 = vadd.f32 0.0, %v6915
      %6917 = vmatmul.bf16.gmra.mxu0 %v6879
      %v6918 = vpop.f32.mrf.mxu0
      %v6919 = vadd.f32 0.0, %v6918
      %v6920 = vpop.f32.mrf.mxu0
      %v6921 = vadd.f32 0.0, %v6920
      %6922 = vmatmul.bf16.gmra.mxu0 %v6882
      %v6923 = vpop.f32.mrf.mxu0
      %v6924 = vadd.f32 0.0, %v6923
      %v6925 = vpop.f32.mrf.mxu0
      %v6926 = vadd.f32 0.0, %v6925
      %6927 = vmatmul.bf16.gmra.mxu0 %v6885
      %v6928 = vpop.f32.mrf.mxu0
      %v6929 = vadd.f32 0.0, %v6928
      %v6930 = vpop.f32.mrf.mxu0
      %v6931 = vadd.f32 0.0, %v6930
      %6932 = vmatmul.bf16.gmra.mxu0 %v6888
      %v6933 = vpop.f32.mrf.mxu0
      %v6934 = vadd.f32 0.0, %v6933
      %v6935 = vpop.f32.mrf.mxu0
      %v6936 = vadd.f32 0.0, %v6935
      %6937 = vmatmul.bf16.gmra.mxu0 %v6891
      %v6938 = vpop.f32.mrf.mxu0
      %v6939 = vadd.f32 0.0, %v6938
      %v6940 = vpop.f32.mrf.mxu0
      %v6941 = vadd.f32 0.0, %v6940
      %6942 = vmatmul.bf16.gmra.mxu0 %v6894
      %v6943 = vpop.f32.mrf.mxu0
      %v6944 = vadd.f32 0.0, %v6943
      %v6945 = vpop.f32.mrf.mxu0
      %v6946 = vadd.f32 0.0, %v6945
      %6947 = vmatmul.bf16.gmra.mxu0 %v6897
      %v6948 = vpop.f32.mrf.mxu0
      %v6949 = vadd.f32 0.0, %v6948
      %v6950 = vpop.f32.mrf.mxu0
      %v6951 = vadd.f32 0.0, %v6950
      %6952 = vdwg.mxu0
      %v6953 = vadd.f32 %v6678, %v6909
      %v6954 = vadd.f32 %v6679, %v6911
      %v6955 = vadd.f32 %v6680, %v6914
      %v6956 = vadd.f32 %v6681, %v6916
      %v6957 = vadd.f32 %v6682, %v6919
      %v6958 = vadd.f32 %v6683, %v6921
      %v6959 = vadd.f32 %v6684, %v6924
      %v6960 = vadd.f32 %v6685, %v6926
      %v6961 = vadd.f32 %v6686, %v6929
      %v6962 = vadd.f32 %v6687, %v6931
      %v6963 = vadd.f32 %v6688, %v6934
      %v6964 = vadd.f32 %v6689, %v6936
      %v6965 = vadd.f32 %v6690, %v6939
      %v6966 = vadd.f32 %v6691, %v6941
      %v6967 = vadd.f32 %v6692, %v6944
      %v6968 = vadd.f32 %v6693, %v6946
      %v6969 = vadd.f32 %v6694, %v6949
      %v6970 = vadd.f32 %v6695, %v6951
      %v6971 = vld [vmem:[#allocation2 + $0x8] sm:$0xe]
      %s6972 = scalar_lea.vmem %s17, 192
      %v6973 = vld [vmem:[%s6972] sm:$0xf]
      %v6974 = vld [vmem:[%s6972 + $0x4] sm:$0xf]
      %v6975 = vld [vmem:[%s6972 + $0x8] sm:$0xf]
      %v6976 = vld [vmem:[%s6972 + $0xc] sm:$0xf]
      %v6977 = vld [vmem:[%s6972 + $0x10] sm:$0xf]
      %v6978 = vld [vmem:[%s6972 + $0x14] sm:$0xf]
      %v6979 = vld [vmem:[%s6972 + $0x18] sm:$0xf]
      %v6980 = vld [vmem:[%s6972 + $0x1c] sm:$0xf]
      %v6982 = vunpack.c.l.b16 %v6971
      %v6983 = vpack.c.b16 %v6744, %v6982
      %v6984 = vrot.slane %v6983, 1
      %v6985 = vrot.slane %v6763, 1
      %v6986 = vsel %vm3680, %v6984, %v6985
      %v6987 = vrot.slane %v6764, 1
      %v6988 = vsel %vm3680, %v6985, %v6987
      %v6989 = vrot.slane %v6765, 1
      %v6990 = vsel %vm3680, %v6987, %v6989
      %v6991 = vrot.slane %v6766, 1
      %v6992 = vsel %vm3680, %v6989, %v6991
      %v6993 = vrot.slane %v6767, 1
      %v6994 = vsel %vm3680, %v6991, %v6993
      %v6995 = vrot.slane %v6768, 1
      %v6996 = vsel %vm3680, %v6993, %v6995
      %v6997 = vrot.slane %v6769, 1
      %v6998 = vsel %vm3680, %v6995, %v6997
      %v6999 = vrot.slane %v6770, 1
      %v7000 = vsel %vm3680, %v6997, %v6999
      %v7001 = vrot.slane %v6771, 1
      %v7002 = vsel %vm3680, %v6999, %v7001
      %v7011 = vunpack.c.l.b16 %v6973
      %v7012 = vunpack.c.l.b16 %v6974
      %v7013 = vunpack.c.l.b16 %v6975
      %v7014 = vunpack.c.l.b16 %v6976
      %v7015 = vunpack.c.l.b16 %v6977
      %v7016 = vunpack.c.l.b16 %v6978
      %v7017 = vunpack.c.l.b16 %v6979
      %v7018 = vunpack.c.l.b16 %v6980
      %v7019 = vpack.c.b16 %v7012, %v7011
      %v7020 = vpack.c.b16 %v7014, %v7013
      %v7021 = vpack.c.b16 %v7016, %v7015
      %v7022 = vpack.c.b16 %v7018, %v7017
      %v7028 = vsel %vm896, %v6986, 0
      %v7031 = vsel %vm896, %v6988, 0
      %v7034 = vsel %vm896, %v6990, 0
      %v7037 = vsel %vm896, %v6992, 0
      %v7040 = vsel %vm896, %v6994, 0
      %v7043 = vsel %vm896, %v6996, 0
      %v7046 = vsel %vm896, %v6998, 0
      %v7049 = vsel %vm896, %v7000, 0
      %v7052 = vsel %vm896, %v7002, 0
      %7054 = vmatpush.bf16.msra.mxu0 0
      %7055 = vmatpush.bf16.msra.mxu0 0
      %7056 = vmatpush.bf16.msra.mxu0 0
      %7057 = vmatpush.bf16.msra.mxu0 0
      %7058 = vmatpush.bf16.msra.mxu0 %v7022
      %7059 = vmatpush.bf16.msra.mxu0 %v7021
      %7060 = vmatpush.bf16.msra.mxu0 %v7020
      %7061 = vmatpush.bf16.msra.mxu0 %v7019
      %7062 = vmatmul.bf16.gmra.mxu0 %v7028
      %v7063 = vpop.f32.mrf.mxu0
      %v7064 = vadd.f32 0.0, %v7063
      %v7065 = vpop.f32.mrf.mxu0
      %v7066 = vadd.f32 0.0, %v7065
      %7067 = vmatmul.bf16.gmra.mxu0 %v7031
      %v7068 = vpop.f32.mrf.mxu0
      %v7069 = vadd.f32 0.0, %v7068
      %v7070 = vpop.f32.mrf.mxu0
      %v7071 = vadd.f32 0.0, %v7070
      %7072 = vmatmul.bf16.gmra.mxu0 %v7034
      %v7073 = vpop.f32.mrf.mxu0
      %v7074 = vadd.f32 0.0, %v7073
      %v7075 = vpop.f32.mrf.mxu0
      %v7076 = vadd.f32 0.0, %v7075
      %7077 = vmatmul.bf16.gmra.mxu0 %v7037
      %v7078 = vpop.f32.mrf.mxu0
      %v7079 = vadd.f32 0.0, %v7078
      %v7080 = vpop.f32.mrf.mxu0
      %v7081 = vadd.f32 0.0, %v7080
      %7082 = vmatmul.bf16.gmra.mxu0 %v7040
      %v7083 = vpop.f32.mrf.mxu0
      %v7084 = vadd.f32 0.0, %v7083
      %v7085 = vpop.f32.mrf.mxu0
      %v7086 = vadd.f32 0.0, %v7085
      %7087 = vmatmul.bf16.gmra.mxu0 %v7043
      %v7088 = vpop.f32.mrf.mxu0
      %v7089 = vadd.f32 0.0, %v7088
      %v7090 = vpop.f32.mrf.mxu0
      %v7091 = vadd.f32 0.0, %v7090
      %7092 = vmatmul.bf16.gmra.mxu0 %v7046
      %v7093 = vpop.f32.mrf.mxu0
      %v7094 = vadd.f32 0.0, %v7093
      %v7095 = vpop.f32.mrf.mxu0
      %v7096 = vadd.f32 0.0, %v7095
      %7097 = vmatmul.bf16.gmra.mxu0 %v7049
      %v7098 = vpop.f32.mrf.mxu0
      %v7099 = vadd.f32 0.0, %v7098
      %v7100 = vpop.f32.mrf.mxu0
      %v7101 = vadd.f32 0.0, %v7100
      %7102 = vmatmul.bf16.gmra.mxu0 %v7052
      %v7103 = vpop.f32.mrf.mxu0
      %v7104 = vadd.f32 0.0, %v7103
      %v7105 = vpop.f32.mrf.mxu0
      %v7106 = vadd.f32 0.0, %v7105
      %7107 = vdwg.mxu0
      %v7108 = vadd.f32 %v6953, %v7064
      %v7109 = vadd.f32 %v6954, %v7066
      %v7110 = vadd.f32 %v6955, %v7069
      %v7111 = vadd.f32 %v6956, %v7071
      %v7112 = vadd.f32 %v6957, %v7074
      %v7113 = vadd.f32 %v6958, %v7076
      %v7114 = vadd.f32 %v6959, %v7079
      %v7115 = vadd.f32 %v6960, %v7081
      %v7116 = vadd.f32 %v6961, %v7084
      %v7117 = vadd.f32 %v6962, %v7086
      %v7118 = vadd.f32 %v6963, %v7089
      %v7119 = vadd.f32 %v6964, %v7091
      %v7120 = vadd.f32 %v6965, %v7094
      %v7121 = vadd.f32 %v6966, %v7096
      %v7122 = vadd.f32 %v6967, %v7099
      %v7123 = vadd.f32 %v6968, %v7101
      %v7124 = vadd.f32 %v6969, %v7104
      %v7125 = vadd.f32 %v6970, %v7106
      %v7126 = vld [vmem:[#allocation2 + $0x50] sm:$0x3]
      %s7127 = scalar_lea.vmem %s17, 224
      %v7128 = vld [vmem:[%s7127] sm:$0xf]
      %v7129 = vld [vmem:[%s7127 + $0x4] sm:$0xf]
      %v7130 = vld [vmem:[%s7127 + $0x8] sm:$0xf]
      %v7131 = vld [vmem:[%s7127 + $0xc] sm:$0xf]
      %v7132 = vld [vmem:[%s7127 + $0x10] sm:$0xf]
      %v7133 = vld [vmem:[%s7127 + $0x14] sm:$0xf]
      %v7134 = vld [vmem:[%s7127 + $0x18] sm:$0xf]
      %v7135 = vld [vmem:[%s7127 + $0x1c] sm:$0xf]
      %v7137 = vunpack.c.l.b16 %v7126
      %v7138 = vpack.c.b16 %v7137, %v7137
      %vm7139 = vsmask.f32 6400
      %v7141 = vshrl.u32 %v6983, 16
      %v7143 = vrot.slane %v7141, 1
      %v7144 = vshll.u32 %v6983, 16
      %v7146 = vrot.slane %v7144, 2
      %v7147 = vor.u32 %v7143, %v7146
      %v7148 = vrot.slane %v6784, 1
      %v7149 = vrot.slane %v6780, 2
      %v7150 = vor.u32 %v7148, %v7149
      %v7151 = vsel %vm7139, %v7147, %v7150
      %v7152 = vrot.slane %v6792, 1
      %v7153 = vrot.slane %v6788, 2
      %v7154 = vor.u32 %v7152, %v7153
      %v7155 = vsel %vm7139, %v7150, %v7154
      %v7156 = vrot.slane %v6800, 1
      %v7157 = vrot.slane %v6796, 2
      %v7158 = vor.u32 %v7156, %v7157
      %v7159 = vsel %vm7139, %v7154, %v7158
      %v7160 = vrot.slane %v6808, 1
      %v7161 = vrot.slane %v6804, 2
      %v7162 = vor.u32 %v7160, %v7161
      %v7163 = vsel %vm7139, %v7158, %v7162
      %v7164 = vrot.slane %v6816, 1
      %v7165 = vrot.slane %v6812, 2
      %v7166 = vor.u32 %v7164, %v7165
      %v7167 = vsel %vm7139, %v7162, %v7166
      %v7168 = vrot.slane %v6824, 1
      %v7169 = vrot.slane %v6820, 2
      %v7170 = vor.u32 %v7168, %v7169
      %v7171 = vsel %vm7139, %v7166, %v7170
      %v7172 = vrot.slane %v6832, 1
      %v7173 = vrot.slane %v6828, 2
      %v7174 = vor.u32 %v7172, %v7173
      %v7175 = vsel %vm7139, %v7170, %v7174
      %v7176 = vrot.slane %v6840, 1
      %v7177 = vrot.slane %v6836, 2
      %v7178 = vor.u32 %v7176, %v7177
      %v7179 = vsel %vm7139, %v7174, %v7178
      %v7181 = vshrl.u32 %v7138, 16
      %v7183 = vrot.slane %v7181, 1
      %v7184 = vshll.u32 %v7138, 16
      %v7186 = vrot.slane %v7184, 2
      %v7187 = vor.u32 %v7183, %v7186
      %v7188 = vsel %vm7139, %v7178, %v7187
      %v7197 = vunpack.c.l.b16 %v7128
      %v7198 = vunpack.c.l.b16 %v7129
      %v7199 = vunpack.c.l.b16 %v7130
      %v7200 = vunpack.c.l.b16 %v7131
      %v7201 = vunpack.c.l.b16 %v7132
      %v7202 = vunpack.c.l.b16 %v7133
      %v7203 = vunpack.c.l.b16 %v7134
      %v7204 = vunpack.c.l.b16 %v7135
      %v7205 = vpack.c.b16 %v7198, %v7197
      %v7206 = vpack.c.b16 %v7200, %v7199
      %v7207 = vpack.c.b16 %v7202, %v7201
      %v7208 = vpack.c.b16 %v7204, %v7203
      %v7214 = vsel %vm896, %v7151, 0
      %v7217 = vsel %vm896, %v7155, 0
      %v7220 = vsel %vm896, %v7159, 0
      %v7223 = vsel %vm896, %v7163, 0
      %v7226 = vsel %vm896, %v7167, 0
      %v7229 = vsel %vm896, %v7171, 0
      %v7232 = vsel %vm896, %v7175, 0
      %v7235 = vsel %vm896, %v7179, 0
      %v7238 = vsel %vm896, %v7188, 0
      %7240 = vmatpush.bf16.msra.mxu0 0
      %7241 = vmatpush.bf16.msra.mxu0 0
      %7242 = vmatpush.bf16.msra.mxu0 0
      %7243 = vmatpush.bf16.msra.mxu0 0
      %7244 = vmatpush.bf16.msra.mxu0 %v7208
      %7245 = vmatpush.bf16.msra.mxu0 %v7207
      %7246 = vmatpush.bf16.msra.mxu0 %v7206
      %7247 = vmatpush.bf16.msra.mxu0 %v7205
      %7248 = vmatmul.bf16.gmra.mxu0 %v7214
      %v7249 = vpop.f32.mrf.mxu0
      %v7250 = vadd.f32 0.0, %v7249
      %v7251 = vpop.f32.mrf.mxu0
      %v7252 = vadd.f32 0.0, %v7251
      %7253 = vmatmul.bf16.gmra.mxu0 %v7217
      %v7254 = vpop.f32.mrf.mxu0
      %v7255 = vadd.f32 0.0, %v7254
      %v7256 = vpop.f32.mrf.mxu0
      %v7257 = vadd.f32 0.0, %v7256
      %7258 = vmatmul.bf16.gmra.mxu0 %v7220
      %v7259 = vpop.f32.mrf.mxu0
      %v7260 = vadd.f32 0.0, %v7259
      %v7261 = vpop.f32.mrf.mxu0
      %v7262 = vadd.f32 0.0, %v7261
      %7263 = vmatmul.bf16.gmra.mxu0 %v7223
      %v7264 = vpop.f32.mrf.mxu0
      %v7265 = vadd.f32 0.0, %v7264
      %v7266 = vpop.f32.mrf.mxu0
      %v7267 = vadd.f32 0.0, %v7266
      %7268 = vmatmul.bf16.gmra.mxu0 %v7226
      %v7269 = vpop.f32.mrf.mxu0
      %v7270 = vadd.f32 0.0, %v7269
      %v7271 = vpop.f32.mrf.mxu0
      %v7272 = vadd.f32 0.0, %v7271
      %7273 = vmatmul.bf16.gmra.mxu0 %v7229
      %v7274 = vpop.f32.mrf.mxu0
      %v7275 = vadd.f32 0.0, %v7274
      %v7276 = vpop.f32.mrf.mxu0
      %v7277 = vadd.f32 0.0, %v7276
      %7278 = vmatmul.bf16.gmra.mxu0 %v7232
      %v7279 = vpop.f32.mrf.mxu0
      %v7280 = vadd.f32 0.0, %v7279
      %v7281 = vpop.f32.mrf.mxu0
      %v7282 = vadd.f32 0.0, %v7281
      %7283 = vmatmul.bf16.gmra.mxu0 %v7235
      %v7284 = vpop.f32.mrf.mxu0
      %v7285 = vadd.f32 0.0, %v7284
      %v7286 = vpop.f32.mrf.mxu0
      %v7287 = vadd.f32 0.0, %v7286
      %7288 = vmatmul.bf16.gmra.mxu0 %v7238
      %v7289 = vpop.f32.mrf.mxu0
      %v7290 = vadd.f32 0.0, %v7289
      %v7291 = vpop.f32.mrf.mxu0
      %v7292 = vadd.f32 0.0, %v7291
      %7293 = vdwg.mxu0
      %v7294 = vadd.f32 %v7108, %v7250
      %v7295 = vadd.f32 %v7109, %v7252
      %v7296 = vadd.f32 %v7110, %v7255
      %v7297 = vadd.f32 %v7111, %v7257
      %v7298 = vadd.f32 %v7112, %v7260
      %v7299 = vadd.f32 %v7113, %v7262
      %v7300 = vadd.f32 %v7114, %v7265
      %v7301 = vadd.f32 %v7115, %v7267
      %v7302 = vadd.f32 %v7116, %v7270
      %v7303 = vadd.f32 %v7117, %v7272
      %v7304 = vadd.f32 %v7118, %v7275
      %v7305 = vadd.f32 %v7119, %v7277
      %v7306 = vadd.f32 %v7120, %v7280
      %v7307 = vadd.f32 %v7121, %v7282
      %v7308 = vadd.f32 %v7122, %v7285
      %v7309 = vadd.f32 %v7123, %v7287
      %v7310 = vadd.f32 %v7124, %v7290
      %v7311 = vadd.f32 %v7125, %v7292
      %v7312 = vld [vmem:[#allocation2 + $0x8] sm:$0xc]
      %s7313 = scalar_lea.vmem %s17, 256
      %v7314 = vld [vmem:[%s7313] sm:$0xf]
      %v7315 = vld [vmem:[%s7313 + $0x4] sm:$0xf]
      %v7316 = vld [vmem:[%s7313 + $0x8] sm:$0xf]
      %v7317 = vld [vmem:[%s7313 + $0xc] sm:$0xf]
      %v7318 = vld [vmem:[%s7313 + $0x10] sm:$0xf]
      %v7319 = vld [vmem:[%s7313 + $0x14] sm:$0xf]
      %v7320 = vld [vmem:[%s7313 + $0x18] sm:$0xf]
      %v7321 = vld [vmem:[%s7313 + $0x1c] sm:$0xf]
      %v7323 = vunpack.c.l.b16 %v7312
      %v7324 = vpack.c.b16 %v6744, %v7323
      %v7325 = vrot.slane %v7324, 2
      %v7326 = vrot.slane %v6763, 2
      %v7327 = vsel %vm6090, %v7325, %v7326
      %v7328 = vrot.slane %v6764, 2
      %v7329 = vsel %vm6090, %v7326, %v7328
      %v7330 = vrot.slane %v6765, 2
      %v7331 = vsel %vm6090, %v7328, %v7330
      %v7332 = vrot.slane %v6766, 2
      %v7333 = vsel %vm6090, %v7330, %v7332
      %v7334 = vrot.slane %v6767, 2
      %v7335 = vsel %vm6090, %v7332, %v7334
      %v7336 = vrot.slane %v6768, 2
      %v7337 = vsel %vm6090, %v7334, %v7336
      %v7338 = vrot.slane %v6769, 2
      %v7339 = vsel %vm6090, %v7336, %v7338
      %v7340 = vrot.slane %v6770, 2
      %v7341 = vsel %vm6090, %v7338, %v7340
      %v7342 = vrot.slane %v7138, 2
      %v7343 = vsel %vm6090, %v7340, %v7342
      %v7352 = vunpack.c.l.b16 %v7314
      %v7353 = vunpack.c.l.b16 %v7315
      %v7354 = vunpack.c.l.b16 %v7316
      %v7355 = vunpack.c.l.b16 %v7317
      %v7356 = vunpack.c.l.b16 %v7318
      %v7357 = vunpack.c.l.b16 %v7319
      %v7358 = vunpack.c.l.b16 %v7320
      %v7359 = vunpack.c.l.b16 %v7321
      %v7360 = vpack.c.b16 %v7353, %v7352
      %v7361 = vpack.c.b16 %v7355, %v7354
      %v7362 = vpack.c.b16 %v7357, %v7356
      %v7363 = vpack.c.b16 %v7359, %v7358
      %v7369 = vsel %vm896, %v7327, 0
      %v7372 = vsel %vm896, %v7329, 0
      %v7375 = vsel %vm896, %v7331, 0
      %v7378 = vsel %vm896, %v7333, 0
      %v7381 = vsel %vm896, %v7335, 0
      %v7384 = vsel %vm896, %v7337, 0
      %v7387 = vsel %vm896, %v7339, 0
      %v7390 = vsel %vm896, %v7341, 0
      %v7393 = vsel %vm896, %v7343, 0
      %7395 = vmatpush.bf16.msra.mxu0 0
      %7396 = vmatpush.bf16.msra.mxu0 0
      %7397 = vmatpush.bf16.msra.mxu0 0
      %7398 = vmatpush.bf16.msra.mxu0 0
      %7399 = vmatpush.bf16.msra.mxu0 %v7363
      %7400 = vmatpush.bf16.msra.mxu0 %v7362
      %7401 = vmatpush.bf16.msra.mxu0 %v7361
      %7402 = vmatpush.bf16.msra.mxu0 %v7360
      %7403 = vmatmul.bf16.gmra.mxu0 %v7369
      %v7404 = vpop.f32.mrf.mxu0
      %v7405 = vadd.f32 0.0, %v7404
      %v7406 = vpop.f32.mrf.mxu0
      %v7407 = vadd.f32 0.0, %v7406
      %7408 = vmatmul.bf16.gmra.mxu0 %v7372
      %v7409 = vpop.f32.mrf.mxu0
      %v7410 = vadd.f32 0.0, %v7409
      %v7411 = vpop.f32.mrf.mxu0
      %v7412 = vadd.f32 0.0, %v7411
      %7413 = vmatmul.bf16.gmra.mxu0 %v7375
      %v7414 = vpop.f32.mrf.mxu0
      %v7415 = vadd.f32 0.0, %v7414
      %v7416 = vpop.f32.mrf.mxu0
      %v7417 = vadd.f32 0.0, %v7416
      %7418 = vmatmul.bf16.gmra.mxu0 %v7378
      %v7419 = vpop.f32.mrf.mxu0
      %v7420 = vadd.f32 0.0, %v7419
      %v7421 = vpop.f32.mrf.mxu0
      %v7422 = vadd.f32 0.0, %v7421
      %7423 = vmatmul.bf16.gmra.mxu0 %v7381
      %v7424 = vpop.f32.mrf.mxu0
      %v7425 = vadd.f32 0.0, %v7424
      %v7426 = vpop.f32.mrf.mxu0
      %v7427 = vadd.f32 0.0, %v7426
      %7428 = vmatmul.bf16.gmra.mxu0 %v7384
      %v7429 = vpop.f32.mrf.mxu0
      %v7430 = vadd.f32 0.0, %v7429
      %v7431 = vpop.f32.mrf.mxu0
      %v7432 = vadd.f32 0.0, %v7431
      %7433 = vmatmul.bf16.gmra.mxu0 %v7387
      %v7434 = vpop.f32.mrf.mxu0
      %v7435 = vadd.f32 0.0, %v7434
      %v7436 = vpop.f32.mrf.mxu0
      %v7437 = vadd.f32 0.0, %v7436
      %7438 = vmatmul.bf16.gmra.mxu0 %v7390
      %v7439 = vpop.f32.mrf.mxu0
      %v7440 = vadd.f32 0.0, %v7439
      %v7441 = vpop.f32.mrf.mxu0
      %v7442 = vadd.f32 0.0, %v7441
      %7443 = vmatmul.bf16.gmra.mxu0 %v7393
      %v7444 = vpop.f32.mrf.mxu0
      %v7445 = vadd.f32 0.0, %v7444
      %v7446 = vpop.f32.mrf.mxu0
      %v7447 = vadd.f32 0.0, %v7446
      %7448 = vdwg.mxu0
      %v7449 = vadd.f32 %v7294, %v7405
      %v7450 = vadd.f32 %v7295, %v7407
      %v7451 = vadd.f32 %v7296, %v7410
      %v7452 = vadd.f32 %v7297, %v7412
      %v7453 = vadd.f32 %v7298, %v7415
      %v7454 = vadd.f32 %v7299, %v7417
      %v7455 = vadd.f32 %v7300, %v7420
      %v7456 = vadd.f32 %v7301, %v7422
      %v7457 = vadd.f32 %v7302, %v7425
      %v7458 = vadd.f32 %v7303, %v7427
      %v7459 = vadd.f32 %v7304, %v7430
      %v7460 = vadd.f32 %v7305, %v7432
      %v7461 = vadd.f32 %v7306, %v7435
      %v7462 = vadd.f32 %v7307, %v7437
      %v7463 = vadd.f32 %v7308, %v7440
      %v7464 = vadd.f32 %v7309, %v7442
      %v7465 = vadd.f32 %v7310, %v7445
      %v7466 = vadd.f32 %v7311, %v7447
      %v7467 = vld [vmem:[%s18] sm:$0x1]
      %v7469 = vperm.slane %v7467, 0
      %v7471 = vadd.f32 %v7449, %v7469
      %v7472 = vadd.f32 %v7450, %v7469
      %v7473 = vadd.f32 %v7451, %v7469
      %v7474 = vadd.f32 %v7452, %v7469
      %v7475 = vadd.f32 %v7453, %v7469
      %v7476 = vadd.f32 %v7454, %v7469
      %v7477 = vadd.f32 %v7455, %v7469
      %v7478 = vadd.f32 %v7456, %v7469
      %v7479 = vadd.f32 %v7457, %v7469
      %v7480 = vadd.f32 %v7458, %v7469
      %v7481 = vadd.f32 %v7459, %v7469
      %v7482 = vadd.f32 %v7460, %v7469
      %v7483 = vadd.f32 %v7461, %v7469
      %v7484 = vadd.f32 %v7462, %v7469
      %v7485 = vadd.f32 %v7463, %v7469
      %v7486 = vadd.f32 %v7464, %v7469
      %v7487 = vadd.f32 %v7465, %v7469
      %v7488 = vadd.f32 %v7466, %v7469
      %vm7489 = vcmask 15360
      %7490 = vst.msk [vmem:[%s604] sm:$0xff] %vm7489, %v7471
      %7491 = vst.msk [vmem:[%s604 + $0x8] sm:$0xff] %vm7489, %v7472
      %7492 = vst.msk [vmem:[%s604 + $0x10] sm:$0xff] %vm7489, %v7473
      %7493 = vst.msk [vmem:[%s604 + $0x18] sm:$0xff] %vm7489, %v7474
      %7494 = vst.msk [vmem:[%s604 + $0x20] sm:$0xff] %vm7489, %v7475
      %7495 = vst.msk [vmem:[%s604 + $0x28] sm:$0xff] %vm7489, %v7476
      %7496 = vst.msk [vmem:[%s604 + $0x30] sm:$0xff] %vm7489, %v7477
      %7497 = vst.msk [vmem:[%s604 + $0x38] sm:$0xff] %vm7489, %v7478
      %7498 = vst.msk [vmem:[%s604 + $0x40] sm:$0xff] %vm7489, %v7479
      %7499 = vst.msk [vmem:[%s604 + $0x48] sm:$0xff] %vm7489, %v7480
      %7500 = vst.msk [vmem:[%s604 + $0x50] sm:$0xff] %vm7489, %v7481
      %7501 = vst.msk [vmem:[%s604 + $0x58] sm:$0xff] %vm7489, %v7482
      %7502 = vst.msk [vmem:[%s604 + $0x60] sm:$0xff] %vm7489, %v7483
      %7503 = vst.msk [vmem:[%s604 + $0x68] sm:$0xff] %vm7489, %v7484
      %7504 = vst.msk [vmem:[%s604 + $0x70] sm:$0xff] %vm7489, %v7485
      %7505 = vst.msk [vmem:[%s604 + $0x78] sm:$0xff] %vm7489, %v7486
      %7506 = vst.msk [vmem:[%s604 + $0x80] sm:$0xff] %vm7489, %v7487
      %7507 = vst.msk [vmem:[%s604 + $0x88] sm:$0xff] %vm7489, %v7488
      %s7508 = smul.u32 18, %s30
      %p7509 = scmp.lt.s32.totalorder %s7508, 35
      %s7510 = scalar_select %p7509, %s7508, 35
      %s7511 = smul.addr %s7510, 8
      %s7512 = scalar_lea.vmem %s19, %s7511
      // Predicated region
      $region97: #{tpu_custom_call.1} parent=95 // pred_check
        %p7513 = pneg %p452
      $region98: #{tpu_custom_call.1} parent=95 // pred_check_branch
        %7515 = sbr.rel (%p7513) target = $region100
      $region99: #{tpu_custom_call.1} parent=95 // pred_region
        %s7516 = smul.u32 18, %s30
      $region100: #{tpu_custom_call.1} parent=95 // pred_fallthru
        _
    $region96: #{tpu_custom_call.1} parent=5 // pred_fallthru
      _
    %p7517 = scmp.le.s32.totalorder 2, %s25
    // Predicated region
    $region101: #{tpu_custom_call.1} parent=5 // pred_check
      %p7518 = pneg %p7517
    $region102: #{tpu_custom_call.1} parent=5 // pred_check_branch
      %7520 = sbr.rel (%p7518) target = $region104
    $region103: #{tpu_custom_call.1} parent=5 // pred_region
      %s7521 = ssub.s32 %s25, 2
      // Predicated region
      $region105: #{tpu_custom_call.1} parent=103 // pred_check
        %p7522 = pneg %p458
      $region106: #{tpu_custom_call.1} parent=103 // pred_check_branch
        %7524 = sbr.rel (%p7522) target = $region108
      $region107: #{tpu_custom_call.1} parent=103 // pred_region
        %s7525 = smul.u32 18, %s31
        %p7526 = scmp.lt.s32.totalorder %s7525, 35
        %s7527 = scalar_select %p7526, %s7525, 35
        %s7528 = smul.addr %s7527, 8
        %s7529 = scalar_lea.vmem %s19, %s7528
      $region108: #{tpu_custom_call.1} parent=103 // pred_fallthru
        _
    $region104: #{tpu_custom_call.1} parent=5 // pred_fallthru
      _
  $region6: #{tpu_custom_call.1} parent=0 // loop_footer
    %s29 = sadd.s32 1, %s25
  $region7: #{tpu_custom_call.1} parent=0 // loop_footer_branch
    %24 = sbr.rel target = $region3
  $region8: #{tpu_custom_call.1} parent=0 // loop_exit
    _

</llo_original>
